<compile_context>
chip_gen: v6e
topology: v6e:2x2x1
jax: 0.10.0
libtpu: 0.0.40
codegen_flags: <defaults>
</compile_context>

<pallas_src>
import numpy as np

import jax
import jax.numpy as jnp
from jax.experimental import pallas as pl
from jax.experimental.pallas import tpu as pltpu


def _rup8(n):
    return ((n + 7) // 8) * 8


# --------------------------------------------------------------------- in-kernel helpers

def _conv3x3_wide(xp, w_ref, wp, out_h, out_w):
    """3x3 / stride 1 / pad 1 conv via full-padded-width accumulation.

    xp    : (>= 2*wp + 2 + out_h*wp, Cin) bf16, zero-padded image flattened row-major with
            row stride `wp`, payload at spatial offset (1, 1).
    w_ref : (3, 3*Cin, Cout) bf16 ref -- the 3 kw taps of each kh row grouped along K.
    returns (out_h*out_w, Cout) f32.

    Each tap is a contiguous slice (no windowed gathers); the 3 horizontal taps are
    lane-concatenated so every MXU push has K = 3*Cin.  Rows at padded-column positions
    compute garbage and are sliced away once at the end.
    """
    cout = w_ref.shape[2]
    m = out_h * wp
    acc = jnp.zeros((m, cout), jnp.float32)
    for kh in range(3):
        base = kh * wp
        win = jnp.concatenate([xp[base:base + m],
                               xp[base + 1:base + 1 + m],
                               xp[base + 2:base + 2 + m]], axis=-1)
        acc = acc + jnp.dot(win, w_ref[kh], preferred_element_type=jnp.float32)
    return acc.reshape(out_h, wp, cout)[:, :out_w, :].reshape(out_h * out_w, cout)


def _style_post(h, noise_term, bias, ys, yb):
    """StyleAddNoise + Conv2dBias + LeakyReLU(0.2) + InstanceNorm + style modulation.
    h / noise_term: (P, C);  bias / ys / yb: (1, C) -- all f32, spatial flattened."""
    h = h + noise_term + bias
    h = jnp.where(h >= 0.0, h, 0.2 * h)
    mean = jnp.mean(h, axis=0, keepdims=True)
    hc = h - mean
    var = jnp.mean(hc * hc, axis=0, keepdims=True)
    hn = hc * jax.lax.rsqrt(var + 1e-5)          # nn.InstanceNorm2d default eps
    return hn * (ys + 1.0) + yb


# --------------------------------------------------------------------- fused kernel

def next_stage_kernel(h_ref, we_ref, mask_ref, xw_ref, nz_ref, padu_ref,
                      wc_ref,
                      w1_ref, sh1_ref, w2_ref, sh2_ref,
                      g0w_ref, g0nw_ref, g0b_ref, g0lw_ref, g0lb_ref,
                      g1w_ref, g1nw_ref, g1b_ref, g1lw_ref, g1lb_ref,
                      o_ref, a_ref,
                      scr_a, scr_c):
    ih, iw, C = h_ref.shape[1], h_ref.shape[2], h_ref.shape[3]
    Q = ih * iw
    oh, ow = 2 * ih, 2 * iw
    wp1 = _rup8(iw + 2)
    wp2 = _rup8(ow + 2)
    C2 = 2 * C

    # Padded-image scratches: pad rows/cols must read as exact zeros.  Zeroed every
    # iteration (cheap vst work) so "parallel" batch sharding across cores stays correct.
    scr_a[...] = jnp.zeros_like(scr_a)
    scr_c[...] = jnp.zeros_like(scr_c)

    def store_payload(scr, flat, n_rows, n_cols, wp):
        # padding by data movement: sliced stores of the payload into the zeroed scratch
        for y in range(n_rows):
            scr[pl.ds((y + 1) * wp + 1, n_cols), :] = flat[y * n_cols:(y + 1) * n_cols, :]

    h_flat = h_ref[0].reshape(Q, C)                                              # (Q, C)

    # ---- ATT_NET: 1x1 conv (cdf -> idf), masked softmax over words, weighted context.
    source = jnp.dot(wc_ref[...], we_ref[0], preferred_element_type=jnp.float32)   # (C, L)
    st = jax.lax.dot_general(source, h_flat, (((0,), (1,)), ((), ())),
                             preferred_element_type=jnp.float32)                   # (L, Q)
    msk = mask_ref[0]                                                              # (L, 1)
    # masked_fill(-inf)+softmax convention (finite fill: identical result, NaN-free)
    st = jnp.where(msk > 0, jnp.float32(-1e30), st)
    st = st - jnp.max(st, axis=0, keepdims=True)
    e = jnp.exp(st)
    attn_t = e * pl.reciprocal(jnp.sum(e, axis=0, keepdims=True), approx=True)     # (L, Q)
    a_ref[0] = attn_t
    c_flat = jax.lax.dot_general(attn_t, source, (((0,), (1,)), ((), ())),
                                 preferred_element_type=jnp.float32)               # (Q, C)

    # cat(h, c_code) is only an in-vreg lane concat (never a HBM concat)
    hc_flat = jnp.concatenate([h_flat, c_flat], axis=-1)                           # (Q, 2C)

    # ---- ResBlock (eval BatchNorms folded into weights): conv1 -> GLU -> conv2, +residual
    store_payload(scr_a, hc_flat, ih, iw, wp1)
    t = _conv3x3_wide(scr_a[...].astype(jnp.bfloat16), w1_ref, wp1, ih, iw) + sh1_ref[...]
    t = t[:, :C2] * jax.nn.sigmoid(t[:, C2:])                                      # GLU
    store_payload(scr_a, t, ih, iw, wp1)
    d = _conv3x3_wide(scr_a[...].astype(jnp.bfloat16), w2_ref, wp1, ih, iw) + sh2_ref[...]
    res = hc_flat + d                                                              # (Q, 2C)

    xw = xw_ref[0]                                                                 # (1, Dw)
    nz = nz_ref[0].astype(jnp.bfloat16)                                            # (8, 4Q)

    # ---- styled gen layer 0: nearest-2x upsample + zero pad as ONE bf16 0/1 gather
    # matmul (exact), conv, then noise/bias/lrelu/instance-norm/style epilogue.
    xpu = jnp.dot(padu_ref[...], res.astype(jnp.bfloat16),
                  preferred_element_type=jnp.float32).astype(jnp.bfloat16)
    g0 = _conv3x3_wide(xpu, g0w_ref, wp2, oh, ow)                                  # (4Q, C)
    nterm0 = jax.lax.dot_general(nz, g0nw_ref[...], (((0,), (0,)), ((), ())),
                                 preferred_element_type=jnp.float32)               # (4Q, C)
    y0 = jnp.dot(xw, g0lw_ref[...], preferred_element_type=jnp.float32) + g0lb_ref[...]
    g0 = _style_post(g0, nterm0, g0b_ref[...], y0[:, :C], y0[:, C:])

    # ---- styled gen layer 1
    store_payload(scr_c, g0, oh, ow, wp2)
    g1 = _conv3x3_wide(scr_c[...].astype(jnp.bfloat16), g1w_ref, wp2, oh, ow)
    nterm1 = jax.lax.dot_general(nz, g1nw_ref[...], (((0,), (0,)), ((), ())),
                                 preferred_element_type=jnp.float32)
    y1 = jnp.dot(xw, g1lw_ref[...], preferred_element_type=jnp.float32) + g1lb_ref[...]
    g1 = _style_post(g1, nterm1, g1b_ref[...], y1[:, :C], y1[:, C:])

    o_ref[0] = g1.reshape(oh, ow, C)


# --------------------------------------------------------------------- wrapper

def _upsample_pad_gather_bf16(h, w, extra_rows=8):
    """0/1 matrix mapping a flattened row-major (h, w) image to its nearest-2x upsampled,
    zero-padded, flattened image with row stride rup8(2w+2) and payload at (1, 1).
    `extra_rows` trailing zero rows let the conv accumulate over the full padded width with
    purely contiguous tap slices.  Entries are 0/1 -> exact in bf16."""
    oh, ow = 2 * h, 2 * w
    hp, wp = oh + 2, _rup8(ow + 2)
    mat = np.zeros((hp * wp + extra_rows, h * w), np.float32)
    for y in range(oh):
        for x in range(ow):
            mat[(y + 1) * wp + (x + 1), (y // 2) * w + (x // 2)] = 1.0
    return jnp.asarray(mat, dtype=jnp.bfloat16)


def next_stage_g_styled_forward(params, h_code_nchw, x_w, word_embs, mask, noise):
    """Mirrors NEXT_STAGE_G_STYLED.forward in eval mode.

    h_code_nchw: (B, ngf, ih, iw)   word_embs: (B, nef, L)   mask: (B, 1, L) float {0,1}
    x_w: (B, W_DIM)                 noise: list of (B, 2ih, 2iw, 1)
    returns (out (B, ngf, 2ih, 2iw), att (B, L, ih, iw)) in NCHW, like the PyTorch module.
    """
    # TODO(synk): training-only branches (cutoff_idx / style_mixing_stage / truncation
    # trick) and the optional blur op are not taken in this eval-mode forward.
    B, C, ih, iw = h_code_nchw.shape
    E, L = word_embs.shape[1], word_embs.shape[2]
    Dw = x_w.shape[1]
    Q = ih * iw
    oh, ow = 2 * ih, 2 * iw
    Q4 = oh * ow
    wp1 = _rup8(iw + 2)
    wp2 = _rup8(ow + 2)
    C2, C4 = 2 * C, 4 * C
    pr1 = (ih + 2) * wp1 + 8       # padded + overflow rows, stage 1
    pr2 = (oh + 2) * wp2 + 8       # padded + overflow rows, stage 2

    # tiny XLA glue: NCHW -> NHWC, mask -> (B, L, 1), latent reshaped, and both noise maps
    # packed lane-dense into ONE (B, 8, 4Q) tensor (rows 0/1 = layer-0/1 noise, rest zero).
    h_nhwc = jnp.transpose(h_code_nchw, (0, 2, 3, 1))
    mask_t = jnp.transpose(mask, (0, 2, 1)).astype(jnp.float32)
    xw3 = x_w.reshape(B, 1, Dw)
    nz = jnp.concatenate([noise[0].reshape(B, 1, Q4), noise[1].reshape(B, 1, Q4),
                          jnp.zeros((B, 6, Q4), jnp.float32)], axis=1)

    # Fold eval-mode BatchNorm into the bias-free conv weights (exact for running stats).
    def fold_bn(w, bn, eps=1e-5):
        gamma, beta, mean, var = bn
        scale = gamma * jax.lax.rsqrt(var + eps)                      # (1, Cout)
        return w * scale.reshape(1, 1, 1, -1), (beta - mean * scale).astype(jnp.float32)

    def group_taps(w):  # (3, 3, Cin, Cout) -> (3, 3*Cin, Cout) bf16, kw taps along K
        return w.reshape(3, 3 * w.shape[2], w.shape[3]).astype(jnp.bfloat16)

    w1f, sh1 = fold_bn(params["res_w1"], params["res_bn1"])
    w2f, sh2 = fold_bn(params["res_w2"], params["res_bn2"])
    w1r, w2r = group_taps(w1f), group_taps(w2f)
    g0wr = group_taps(params["g0_w"])
    g1wr = group_taps(params["g1_w"])

    # per-channel noise weights padded to a K=8 contraction so noise * weight becomes a
    # single MXU outer product inside the kernel (no (Q4, 1) lane-padded noise blocks).
    nwp0 = jnp.concatenate([params["g0_nw"], jnp.zeros((7, C), jnp.float32)],
                           axis=0).astype(jnp.bfloat16)
    nwp1 = jnp.concatenate([jnp.zeros((1, C), jnp.float32), params["g1_nw"],
                            jnp.zeros((6, C), jnp.float32)], axis=0).astype(jnp.bfloat16)

    padu = _upsample_pad_gather_bf16(ih, iw)               # (pr2, Q) bf16

    imap4 = lambda b: (b, 0, 0, 0)
    imap3 = lambda b: (b, 0, 0)
    imapw3 = lambda b: (0, 0, 0)
    imapw2 = lambda b: (0, 0)

    out_img, att_t = pl.pallas_call(
        next_stage_kernel,
        out_shape=(jax.ShapeDtypeStruct((B, oh, ow, C), jnp.float32),
                   jax.ShapeDtypeStruct((B, L, Q), jnp.float32)),
        grid=(B,),
        in_specs=[
            pl.BlockSpec((1, ih, iw, C), imap4),           # h_code (NHWC)
            pl.BlockSpec((1, E, L), imap3),                # word embeddings
            pl.BlockSpec((1, L, 1), imap3),                # mask (transposed)
            pl.BlockSpec((1, 1, Dw), imap3),               # disentangled latent w
            pl.BlockSpec((1, 8, Q4), imap3),               # packed noise (lane-dense)
            pl.BlockSpec((pr2, Q), imapw2),                # upsample+pad 0/1 gather (bf16)
            pl.BlockSpec((C, E), imapw2),                  # attention 1x1 conv weight
            pl.BlockSpec((3, 3 * C2, C4), imapw3),         # res conv1 (BN folded, kw-grouped)
            pl.BlockSpec((1, C4), imapw2),                 # res BN1 shift
            pl.BlockSpec((3, 3 * C2, C2), imapw3),         # res conv2 (BN folded)
            pl.BlockSpec((1, C2), imapw2),                 # res BN2 shift
            pl.BlockSpec((3, 3 * C2, C), imapw3),          # g0 conv (kw-grouped)
            pl.BlockSpec((8, C), imapw2),                  # g0 noise weight (K=8 padded)
            pl.BlockSpec((1, C), imapw2),                  # g0 Conv2dBias
            pl.BlockSpec((Dw, 2 * C), imapw2),             # g0 w->style weight
            pl.BlockSpec((1, 2 * C), imapw2),              # g0 w->style bias
            pl.BlockSpec((3, 3 * C, C), imapw3),           # g1 conv (kw-grouped)
            pl.BlockSpec((8, C), imapw2),                  # g1 noise weight
            pl.BlockSpec((1, C), imapw2),                  # g1 Conv2dBias
            pl.BlockSpec((Dw, 2 * C), imapw2),             # g1 w->style weight
            pl.BlockSpec((1, 2 * C), imapw2),              # g1 w->style bias
        ],
        out_specs=(pl.BlockSpec((1, oh, ow, C), imap4),
                   pl.BlockSpec((1, L, Q), imap3)),
        scratch_shapes=[pltpu.VMEM((pr1, C2), jnp.float32),   # padded stage-1 image
                        pltpu.VMEM((pr2, C), jnp.float32)],   # padded stage-2 image
        compiler_params=pltpu.CompilerParams(
            dimension_semantics=("parallel",),             # batch across TCs on v7x
            vmem_limit_bytes=32 * 1024 * 1024),
    )(h_nhwc, word_embs, mask_t, xw3, nz, padu,
      params["wc"],
      w1r, sh1, w2r, sh2,
      g0wr, nwp0, params["g0_bias"], params["g0_lw"], params["g0_lb"],
      g1wr, nwp1, params["g1_bias"], params["g1_lw"], params["g1_lb"])

    out = jnp.transpose(out_img, (0, 3, 1, 2))             # back to NCHW
    att = att_t.reshape(B, L, ih, iw)
    return out, att


# --------------------------------------------------------------------- params & main

def init_params(key, ngf, nef, w_dim):
    ks = list(jax.random.split(key, 16))

    def nrm(k, shape, scale):
        return scale * jax.random.normal(k, shape, jnp.float32)

    c2, c4 = 2 * ngf, 4 * ngf
    params = {
        # ATT_NET 1x1 conv (cdf -> idf), bias=False
        "wc": nrm(ks[0], (ngf, nef), (1.0 / nef) ** 0.5),
        # ResBlock convs (Conv2dEx, no bias), weights in (kh, kw, Cin, Cout) layout
        "res_w1": nrm(ks[1], (3, 3, c2, c4), (2.0 / (9 * c2)) ** 0.5),
        "res_w2": nrm(ks[2], (3, 3, c2, c2), (2.0 / (9 * c2)) ** 0.5),
        # BatchNorm (PyTorch defaults, eval mode): gamma=1, beta=0, mean=0, var=1
        "res_bn1": (jnp.ones((1, c4)), jnp.zeros((1, c4)),
                    jnp.zeros((1, c4)), jnp.ones((1, c4))),
        "res_bn2": (jnp.ones((1, c2)), jnp.zeros((1, c2)),
                    jnp.zeros((1, c2)), jnp.ones((1, c2))),
        # gen layer 0: upsample + conv(2ngf->ngf), noise weight, Conv2dBias, w->style linear
        "g0_w": nrm(ks[3], (3, 3, c2, ngf), (2.0 / (9 * c2)) ** 0.5),
        "g0_nw": nrm(ks[4], (1, ngf), 0.1),
        "g0_bias": nrm(ks[5], (1, ngf), 0.1),
        "g0_lw": nrm(ks[6], (w_dim, 2 * ngf), (1.0 / w_dim) ** 0.5),
        "g0_lb": nrm(ks[7], (1, 2 * ngf), 0.1),
        # gen layer 1: conv(ngf->ngf)
        "g1_w": nrm(ks[8], (3, 3, ngf, ngf), (2.0 / (9 * ngf)) ** 0.5),
        "g1_nw": nrm(ks[9], (1, ngf), 0.1),
        "g1_bias": nrm(ks[10], (1, ngf), 0.1),
        "g1_lw": nrm(ks[11], (w_dim, 2 * ngf), (1.0 / w_dim) ** 0.5),
        "g1_lb": nrm(ks[12], (1, 2 * ngf), 0.1),
    }
    return params


if __name__ == "__main__":
    B, ngf, nef, w_dim = 2, 32, 16, 32
    ih = iw = 8
    L = 8  # seq_len

    key = jax.random.PRNGKey(0)
    k_p, k_h, k_we, k_x, k_n0, k_n1 = jax.random.split(key, 6)

    params = init_params(k_p, ngf, nef, w_dim)

    h_code = jax.random.normal(k_h, (B, ngf, ih, iw), jnp.float32)      # NCHW input
    word_embs = jax.random.normal(k_we, (B, nef, L), jnp.float32)
    x_w = jax.random.normal(k_x, (B, w_dim), jnp.float32)               # disentangled latent
    # mask: 1.0 at padded word positions (lengths 5 and 7)
    lengths = jnp.array([5, 7])
    mask = (jnp.arange(L)[None, :] >= lengths[:, None]).astype(jnp.float32)[:, None, :]
    noise = [jax.random.normal(k_n0, (B, 2 * ih, 2 * iw, 1), jnp.float32),
             jax.random.normal(k_n1, (B, 2 * ih, 2 * iw, 1), jnp.float32)]

    fwd = jax.jit(next_stage_g_styled_forward)
    out, att = fwd(params, h_code, x_w, word_embs, mask, noise)
    jax.block_until_ready(out)
    jax.block_until_ready(att)

    assert out.shape == (B, ngf, 2 * ih, 2 * iw), out.shape
    assert att.shape == (B, L, ih, iw), att.shape
    assert bool(jnp.all(jnp.isfinite(out))) and bool(jnp.all(jnp.isfinite(att)))
    print("KERNEL_OK")
</pallas_src>

<mosaic_0001>
module attributes {stable_mosaic.version = 11 : i64} {
  func.func @next_stage_kernel(%arg0: i32, %arg1: memref<1x8x8x32xf32, #tpu.memory_space<vmem>>, %arg2: memref<1x16x8xf32, #tpu.memory_space<vmem>>, %arg3: memref<1x8x1xf32, #tpu.memory_space<vmem>>, %arg4: memref<1x1x32xf32, #tpu.memory_space<vmem>>, %arg5: memref<1x8x256xf32, #tpu.memory_space<vmem>>, %arg6: memref<440x64xbf16, #tpu.memory_space<vmem>>, %arg7: memref<32x16xf32, #tpu.memory_space<vmem>>, %arg8: memref<3x192x128xbf16, #tpu.memory_space<vmem>>, %arg9: memref<1x128xf32, #tpu.memory_space<vmem>>, %arg10: memref<3x192x64xbf16, #tpu.memory_space<vmem>>, %arg11: memref<1x64xf32, #tpu.memory_space<vmem>>, %arg12: memref<3x192x32xbf16, #tpu.memory_space<vmem>>, %arg13: memref<8x32xbf16, #tpu.memory_space<vmem>>, %arg14: memref<1x32xf32, #tpu.memory_space<vmem>>, %arg15: memref<32x64xf32, #tpu.memory_space<vmem>>, %arg16: memref<1x64xf32, #tpu.memory_space<vmem>>, %arg17: memref<3x96x32xbf16, #tpu.memory_space<vmem>>, %arg18: memref<8x32xbf16, #tpu.memory_space<vmem>>, %arg19: memref<1x32xf32, #tpu.memory_space<vmem>>, %arg20: memref<32x64xf32, #tpu.memory_space<vmem>>, %arg21: memref<1x64xf32, #tpu.memory_space<vmem>>, %arg22: memref<1x16x16x32xf32, #tpu.memory_space<vmem>>, %arg23: memref<1x8x64xf32, #tpu.memory_space<vmem>>, %arg24: memref<168x64xf32, #tpu.memory_space<vmem>>, %arg25: memref<440x32xf32, #tpu.memory_space<vmem>>) attributes {dimension_semantics = [#tpu.dimension_semantics<parallel>], iteration_bounds = array<i64: 2>, scalar_prefetch = 0 : i64, scratch_operands = 2 : i64, tpu.core_type = #tpu.core_type<tc>, window_params = [{transform_indices = @transform_0, window_bounds = array<i64: 1, 8, 8, 32>}, {transform_indices = @transform_1, window_bounds = array<i64: 1, 16, 8>}, {transform_indices = @transform_2, window_bounds = array<i64: 1, 8, 1>}, {transform_indices = @transform_3, window_bounds = array<i64: 1, 1, 32>}, {transform_indices = @transform_4, window_bounds = array<i64: 1, 8, 256>}, {pipeline_mode = #tpu.pipeline_mode<synchronous>, transform_indices = @transform_5, window_bounds = array<i64: 440, 64>}, {pipeline_mode = #tpu.pipeline_mode<synchronous>, transform_indices = @transform_6, window_bounds = array<i64: 32, 16>}, {pipeline_mode = #tpu.pipeline_mode<synchronous>, transform_indices = @transform_7, window_bounds = array<i64: 3, 192, 128>}, {pipeline_mode = #tpu.pipeline_mode<synchronous>, transform_indices = @transform_8, window_bounds = array<i64: 1, 128>}, {pipeline_mode = #tpu.pipeline_mode<synchronous>, transform_indices = @transform_9, window_bounds = array<i64: 3, 192, 64>}, {pipeline_mode = #tpu.pipeline_mode<synchronous>, transform_indices = @transform_10, window_bounds = array<i64: 1, 64>}, {pipeline_mode = #tpu.pipeline_mode<synchronous>, transform_indices = @transform_11, window_bounds = array<i64: 3, 192, 32>}, {pipeline_mode = #tpu.pipeline_mode<synchronous>, transform_indices = @transform_12, window_bounds = array<i64: 8, 32>}, {pipeline_mode = #tpu.pipeline_mode<synchronous>, transform_indices = @transform_13, window_bounds = array<i64: 1, 32>}, {pipeline_mode = #tpu.pipeline_mode<synchronous>, transform_indices = @transform_14, window_bounds = array<i64: 32, 64>}, {pipeline_mode = #tpu.pipeline_mode<synchronous>, transform_indices = @transform_15, window_bounds = array<i64: 1, 64>}, {pipeline_mode = #tpu.pipeline_mode<synchronous>, transform_indices = @transform_16, window_bounds = array<i64: 3, 96, 32>}, {pipeline_mode = #tpu.pipeline_mode<synchronous>, transform_indices = @transform_17, window_bounds = array<i64: 8, 32>}, {pipeline_mode = #tpu.pipeline_mode<synchronous>, transform_indices = @transform_18, window_bounds = array<i64: 1, 32>}, {pipeline_mode = #tpu.pipeline_mode<synchronous>, transform_indices = @transform_19, window_bounds = array<i64: 32, 64>}, {pipeline_mode = #tpu.pipeline_mode<synchronous>, transform_indices = @transform_20, window_bounds = array<i64: 1, 64>}, {transform_indices = @transform_21, window_bounds = array<i64: 1, 16, 16, 32>}, {transform_indices = @transform_22, window_bounds = array<i64: 1, 8, 64>}]} {
    %cst = arith.constant 0.000000e+00 : f32
    %0 = vector.broadcast %cst : f32 to vector<168x64xf32>
    %c0 = arith.constant 0 : index
    %c0_0 = arith.constant 0 : index
    %1 = vector.load %arg24[%c0, %c0_0] : memref<168x64xf32, #tpu.memory_space<vmem>>, vector<168x64xf32>
    tpu.vector_store %arg24[%c0, %c0_0], %0 {strides = array<i32>} : memref<168x64xf32, #tpu.memory_space<vmem>>, vector<168x64xf32>,
    %cst_1 = arith.constant 0.000000e+00 : f32
    %2 = vector.broadcast %cst_1 : f32 to vector<440x32xf32>
    %c0_2 = arith.constant 0 : index
    %c0_3 = arith.constant 0 : index
    %3 = vector.load %arg25[%c0_2, %c0_3] : memref<440x32xf32, #tpu.memory_space<vmem>>, vector<440x32xf32>
    tpu.vector_store %arg25[%c0_2, %c0_3], %2 {strides = array<i32>} : memref<440x32xf32, #tpu.memory_space<vmem>>, vector<440x32xf32>,
    %c0_4 = arith.constant 0 : index
    %c0_5 = arith.constant 0 : index
    %c0_6 = arith.constant 0 : index
    %c0_7 = arith.constant 0 : index
    %4 = vector.load %arg1[%c0_4, %c0_5, %c0_6, %c0_7] : memref<1x8x8x32xf32, #tpu.memory_space<vmem>>, vector<1x8x8x32xf32>
    %5 = vector.shape_cast %4 : vector<1x8x8x32xf32> to vector<8x8x32xf32>
    %6 = vector.shape_cast %5 : vector<8x8x32xf32> to vector<64x32xf32>
    %c0_8 = arith.constant 0 : index
    %c0_9 = arith.constant 0 : index
    %7 = vector.load %arg7[%c0_8, %c0_9] : memref<32x16xf32, #tpu.memory_space<vmem>>, vector<32x16xf32>
    %c0_10 = arith.constant 0 : index
    %c0_11 = arith.constant 0 : index
    %c0_12 = arith.constant 0 : index
    %8 = vector.load %arg2[%c0_10, %c0_11, %c0_12] : memref<1x16x8xf32, #tpu.memory_space<vmem>>, vector<1x16x8xf32>
    %9 = vector.shape_cast %8 : vector<1x16x8xf32> to vector<16x8xf32>
    %cst_13 = arith.constant dense<0.000000e+00> : vector<32x8xf32>
    %10 = tpu.matmul %7, %9, %cst_13 {dimension_numbers = #tpu.dot_dimension_numbers<[1], [0], [0], [1], [0, 0, 1, 1], [], []>} : vector<32x16xf32>, vector<16x8xf32>, vector<32x8xf32> -> vector<32x8xf32>
    %cst_14 = arith.constant dense<0.000000e+00> : vector<8x64xf32>
    %11 = tpu.matmul %10, %6, %cst_14 {dimension_numbers = #tpu.dot_dimension_numbers<[0], [1], [1], [0], [0, 1, 1, 0], [], []>} : vector<32x8xf32>, vector<64x32xf32>, vector<8x64xf32> -> vector<8x64xf32>
    %c0_15 = arith.constant 0 : index
    %c0_16 = arith.constant 0 : index
    %c0_17 = arith.constant 0 : index
    %12 = vector.load %arg3[%c0_15, %c0_16, %c0_17] : memref<1x8x1xf32, #tpu.memory_space<vmem>>, vector<1x8x1xf32>
    %13 = vector.shape_cast %12 : vector<1x8x1xf32> to vector<8x1xf32>
    %cst_18 = arith.constant 0.000000e+00 : f32
    %14 = vector.broadcast %cst_18 : f32 to vector<8x1xf32>
    %15 = arith.cmpf ogt, %13, %14 : vector<8x1xf32>
    %cst_19 = arith.constant -1.000000e+30 : f32
    %16 = vector.shape_cast %15 : vector<8x1xi1> to vector<8x1xi1>
    %17 = vector.broadcast %16 : vector<8x1xi1> to vector<8x64xi1>
    %18 = vector.broadcast %cst_19 : f32 to vector<8x64xf32>
    %19 = arith.select %17, %18, %11 : vector<8x64xi1>, vector<8x64xf32>
    %cst_20 = arith.constant dense<0xFF800000> : vector<64xf32>
    %20 = vector.multi_reduction <maximumf>, %19, %cst_20 [0] : vector<8x64xf32> to vector<64xf32>
    %21 = vector.shape_cast %20 : vector<64xf32> to vector<1x64xf32>
    %22 = vector.broadcast %21 : vector<1x64xf32> to vector<8x64xf32>
    %23 = arith.subf %19, %22 : vector<8x64xf32>
    %24 = math.exp %23 : vector<8x64xf32>
    %cst_21 = arith.constant dense<0.000000e+00> : vector<64xf32>
    %25 = vector.multi_reduction <add>, %24, %cst_21 [0] : vector<8x64xf32> to vector<64xf32>
    %26 = vector.shape_cast %25 : vector<64xf32> to vector<1x64xf32>
    %27 = tpu.reciprocal %26 {approx = true} : vector<1x64xf32> -> vector<1x64xf32>
    %28 = vector.broadcast %27 : vector<1x64xf32> to vector<8x64xf32>
    %29 = arith.mulf %24, %28 : vector<8x64xf32>
    %c0_22 = arith.constant 0 : index
    %c0_23 = arith.constant 0 : index
    %c0_24 = arith.constant 0 : index
    %30 = vector.load %arg23[%c0_22, %c0_23, %c0_24] : memref<1x8x64xf32, #tpu.memory_space<vmem>>, vector<1x8x64xf32>
    %31 = vector.shape_cast %30 : vector<1x8x64xf32> to vector<8x64xf32>
    %32 = vector.shape_cast %29 : vector<8x64xf32> to vector<1x8x64xf32>
    tpu.vector_store %arg23[%c0_22, %c0_23, %c0_24], %32 {strides = array<i32>} : memref<1x8x64xf32, #tpu.memory_space<vmem>>, vector<1x8x64xf32>,
    %cst_25 = arith.constant dense<0.000000e+00> : vector<64x32xf32>
    %33 = tpu.matmul %29, %10, %cst_25 {dimension_numbers = #tpu.dot_dimension_numbers<[0], [1], [1], [0], [0, 1, 1, 0], [], []>} : vector<8x64xf32>, vector<32x8xf32>, vector<64x32xf32> -> vector<64x32xf32>
    %34 = tpu.concatenate %6, %33 in 1 : vector<64x32xf32>, vector<64x32xf32> -> vector<64x64xf32>
    %35 = vector.extract_strided_slice %34 {offsets = [0, 0], sizes = [8, 64], strides = [1, 1]} : vector<64x64xf32> to vector<8x64xf32>
    %c17 = arith.constant 17 : index
    %c0_26 = arith.constant 0 : index
    %36 = vector.load %arg24[%c17, %c0_26] : memref<168x64xf32, #tpu.memory_space<vmem>>, vector<8x64xf32>
    tpu.vector_store %arg24[%c17, %c0_26], %35 {strides = array<i32>} : memref<168x64xf32, #tpu.memory_space<vmem>>, vector<8x64xf32>,
    %37 = vector.extract_strided_slice %34 {offsets = [8, 0], sizes = [8, 64], strides = [1, 1]} : vector<64x64xf32> to vector<8x64xf32>
    %c33 = arith.constant 33 : index
    %c0_27 = arith.constant 0 : index
    %38 = vector.load %arg24[%c33, %c0_27] : memref<168x64xf32, #tpu.memory_space<vmem>>, vector<8x64xf32>
    tpu.vector_store %arg24[%c33, %c0_27], %37 {strides = array<i32>} : memref<168x64xf32, #tpu.memory_space<vmem>>, vector<8x64xf32>,
    %39 = vector.extract_strided_slice %34 {offsets = [16, 0], sizes = [8, 64], strides = [1, 1]} : vector<64x64xf32> to vector<8x64xf32>
    %c49 = arith.constant 49 : index
    %c0_28 = arith.constant 0 : index
    %40 = vector.load %arg24[%c49, %c0_28] : memref<168x64xf32, #tpu.memory_space<vmem>>, vector<8x64xf32>
    tpu.vector_store %arg24[%c49, %c0_28], %39 {strides = array<i32>} : memref<168x64xf32, #tpu.memory_space<vmem>>, vector<8x64xf32>,
    %41 = vector.extract_strided_slice %34 {offsets = [24, 0], sizes = [8, 64], strides = [1, 1]} : vector<64x64xf32> to vector<8x64xf32>
    %c65 = arith.constant 65 : index
    %c0_29 = arith.constant 0 : index
    %42 = vector.load %arg24[%c65, %c0_29] : memref<168x64xf32, #tpu.memory_space<vmem>>, vector<8x64xf32>
    tpu.vector_store %arg24[%c65, %c0_29], %41 {strides = array<i32>} : memref<168x64xf32, #tpu.memory_space<vmem>>, vector<8x64xf32>,
    %43 = vector.extract_strided_slice %34 {offsets = [32, 0], sizes = [8, 64], strides = [1, 1]} : vector<64x64xf32> to vector<8x64xf32>
    %c81 = arith.constant 81 : index
    %c0_30 = arith.constant 0 : index
    %44 = vector.load %arg24[%c81, %c0_30] : memref<168x64xf32, #tpu.memory_space<vmem>>, vector<8x64xf32>
    tpu.vector_store %arg24[%c81, %c0_30], %43 {strides = array<i32>} : memref<168x64xf32, #tpu.memory_space<vmem>>, vector<8x64xf32>,
    %45 = vector.extract_strided_slice %34 {offsets = [40, 0], sizes = [8, 64], strides = [1, 1]} : vector<64x64xf32> to vector<8x64xf32>
    %c97 = arith.constant 97 : index
    %c0_31 = arith.constant 0 : index
    %46 = vector.load %arg24[%c97, %c0_31] : memref<168x64xf32, #tpu.memory_space<vmem>>, vector<8x64xf32>
    tpu.vector_store %arg24[%c97, %c0_31], %45 {strides = array<i32>} : memref<168x64xf32, #tpu.memory_space<vmem>>, vector<8x64xf32>,
    %47 = vector.extract_strided_slice %34 {offsets = [48, 0], sizes = [8, 64], strides = [1, 1]} : vector<64x64xf32> to vector<8x64xf32>
    %c113 = arith.constant 113 : index
    %c0_32 = arith.constant 0 : index
    %48 = vector.load %arg24[%c113, %c0_32] : memref<168x64xf32, #tpu.memory_space<vmem>>, vector<8x64xf32>
    tpu.vector_store %arg24[%c113, %c0_32], %47 {strides = array<i32>} : memref<168x64xf32, #tpu.memory_space<vmem>>, vector<8x64xf32>,
    %49 = vector.extract_strided_slice %34 {offsets = [56, 0], sizes = [8, 64], strides = [1, 1]} : vector<64x64xf32> to vector<8x64xf32>
    %c129 = arith.constant 129 : index
    %c0_33 = arith.constant 0 : index
    %50 = vector.load %arg24[%c129, %c0_33] : memref<168x64xf32, #tpu.memory_space<vmem>>, vector<8x64xf32>
    tpu.vector_store %arg24[%c129, %c0_33], %49 {strides = array<i32>} : memref<168x64xf32, #tpu.memory_space<vmem>>, vector<8x64xf32>,
    %c0_34 = arith.constant 0 : index
    %c0_35 = arith.constant 0 : index
    %51 = vector.load %arg24[%c0_34, %c0_35] : memref<168x64xf32, #tpu.memory_space<vmem>>, vector<168x64xf32>
    %52 = arith.truncf %51 : vector<168x64xf32> to vector<168x64xbf16>
    %cst_36 = arith.constant 0.000000e+00 : f32
    %53 = vector.broadcast %cst_36 : f32 to vector<128x128xf32>
    %54 = vector.extract_strided_slice %52 {offsets = [0, 0], sizes = [128, 64], strides = [1, 1]} : vector<168x64xbf16> to vector<128x64xbf16>
    %55 = vector.extract_strided_slice %52 {offsets = [1, 0], sizes = [128, 64], strides = [1, 1]} : vector<168x64xbf16> to vector<128x64xbf16>
    %56 = vector.extract_strided_slice %52 {offsets = [2, 0], sizes = [128, 64], strides = [1, 1]} : vector<168x64xbf16> to vector<128x64xbf16>
    %57 = tpu.concatenate %54, %55, %56 in 1 : vector<128x64xbf16>, vector<128x64xbf16>, vector<128x64xbf16> -> vector<128x192xbf16>
    %c0_37 = arith.constant 0 : index
    %c0_38 = arith.constant 0 : index
    %c0_39 = arith.constant 0 : index
    %58 = vector.load %arg8[%c0_37, %c0_38, %c0_39] : memref<3x192x128xbf16, #tpu.memory_space<vmem>>, vector<1x192x128xbf16>
    %59 = vector.shape_cast %58 : vector<1x192x128xbf16> to vector<192x128xbf16>
    %cst_40 = arith.constant dense<0.000000e+00> : vector<128x128xf32>
    %60 = tpu.matmul %57, %59, %cst_40 {dimension_numbers = #tpu.dot_dimension_numbers<[1], [0], [0], [1], [0, 0, 1, 1], [], []>} : vector<128x192xbf16>, vector<192x128xbf16>, vector<128x128xf32> -> vector<128x128xf32>
    %61 = arith.addf %53, %60 : vector<128x128xf32>
    %62 = vector.extract_strided_slice %52 {offsets = [16, 0], sizes = [128, 64], strides = [1, 1]} : vector<168x64xbf16> to vector<128x64xbf16>
    %63 = vector.extract_strided_slice %52 {offsets = [17, 0], sizes = [128, 64], strides = [1, 1]} : vector<168x64xbf16> to vector<128x64xbf16>
    %64 = vector.extract_strided_slice %52 {offsets = [18, 0], sizes = [128, 64], strides = [1, 1]} : vector<168x64xbf16> to vector<128x64xbf16>
    %65 = tpu.concatenate %62, %63, %64 in 1 : vector<128x64xbf16>, vector<128x64xbf16>, vector<128x64xbf16> -> vector<128x192xbf16>
    %c1 = arith.constant 1 : index
    %c0_41 = arith.constant 0 : index
    %c0_42 = arith.constant 0 : index
    %66 = vector.load %arg8[%c1, %c0_41, %c0_42] : memref<3x192x128xbf16, #tpu.memory_space<vmem>>, vector<1x192x128xbf16>
    %67 = vector.shape_cast %66 : vector<1x192x128xbf16> to vector<192x128xbf16>
    %cst_43 = arith.constant dense<0.000000e+00> : vector<128x128xf32>
    %68 = tpu.matmul %65, %67, %cst_43 {dimension_numbers = #tpu.dot_dimension_numbers<[1], [0], [0], [1], [0, 0, 1, 1], [], []>} : vector<128x192xbf16>, vector<192x128xbf16>, vector<128x128xf32> -> vector<128x128xf32>
    %69 = arith.addf %61, %68 : vector<128x128xf32>
    %70 = vector.extract_strided_slice %52 {offsets = [32, 0], sizes = [128, 64], strides = [1, 1]} : vector<168x64xbf16> to vector<128x64xbf16>
    %71 = vector.extract_strided_slice %52 {offsets = [33, 0], sizes = [128, 64], strides = [1, 1]} : vector<168x64xbf16> to vector<128x64xbf16>
    %72 = vector.extract_strided_slice %52 {offsets = [34, 0], sizes = [128, 64], strides = [1, 1]} : vector<168x64xbf16> to vector<128x64xbf16>
    %73 = tpu.concatenate %70, %71, %72 in 1 : vector<128x64xbf16>, vector<128x64xbf16>, vector<128x64xbf16> -> vector<128x192xbf16>
    %c2 = arith.constant 2 : index
    %c0_44 = arith.constant 0 : index
    %c0_45 = arith.constant 0 : index
    %74 = vector.load %arg8[%c2, %c0_44, %c0_45] : memref<3x192x128xbf16, #tpu.memory_space<vmem>>, vector<1x192x128xbf16>
    %75 = vector.shape_cast %74 : vector<1x192x128xbf16> to vector<192x128xbf16>
    %cst_46 = arith.constant dense<0.000000e+00> : vector<128x128xf32>
    %76 = tpu.matmul %73, %75, %cst_46 {dimension_numbers = #tpu.dot_dimension_numbers<[1], [0], [0], [1], [0, 0, 1, 1], [], []>} : vector<128x192xbf16>, vector<192x128xbf16>, vector<128x128xf32> -> vector<128x128xf32>
    %77 = arith.addf %69, %76 : vector<128x128xf32>
    %78 = vector.shape_cast %77 : vector<128x128xf32> to vector<8x16x128xf32>
    %79 = vector.extract_strided_slice %78 {offsets = [0, 0, 0], sizes = [8, 8, 128], strides = [1, 1, 1]} : vector<8x16x128xf32> to vector<8x8x128xf32>
    %80 = vector.shape_cast %79 : vector<8x8x128xf32> to vector<64x128xf32>
    %c0_47 = arith.constant 0 : index
    %c0_48 = arith.constant 0 : index
    %81 = vector.load %arg9[%c0_47, %c0_48] : memref<1x128xf32, #tpu.memory_space<vmem>>, vector<1x128xf32>
    %82 = vector.broadcast %81 : vector<1x128xf32> to vector<64x128xf32>
    %83 = arith.addf %80, %82 : vector<64x128xf32>
    %84 = vector.extract_strided_slice %83 {offsets = [0, 0], sizes = [64, 64], strides = [1, 1]} : vector<64x128xf32> to vector<64x64xf32>
    %85 = vector.extract_strided_slice %83 {offsets = [0, 64], sizes = [64, 64], strides = [1, 1]} : vector<64x128xf32> to vector<64x64xf32>
    %86 = arith.negf %85 : vector<64x64xf32>
    %87 = math.exp %86 : vector<64x64xf32>
    %cst_49 = arith.constant 1.000000e+00 : f32
    %88 = vector.broadcast %cst_49 : f32 to vector<64x64xf32>
    %89 = arith.addf %88, %87 : vector<64x64xf32>
    %90 = arith.divf %88, %89 : vector<64x64xf32>
    %91 = arith.mulf %84, %90 : vector<64x64xf32>
    %92 = vector.extract_strided_slice %91 {offsets = [0, 0], sizes = [8, 64], strides = [1, 1]} : vector<64x64xf32> to vector<8x64xf32>
    %c17_50 = arith.constant 17 : index
    %c0_51 = arith.constant 0 : index
    %93 = vector.load %arg24[%c17_50, %c0_51] : memref<168x64xf32, #tpu.memory_space<vmem>>, vector<8x64xf32>
    tpu.vector_store %arg24[%c17_50, %c0_51], %92 {strides = array<i32>} : memref<168x64xf32, #tpu.memory_space<vmem>>, vector<8x64xf32>,
    %94 = vector.extract_strided_slice %91 {offsets = [8, 0], sizes = [8, 64], strides = [1, 1]} : vector<64x64xf32> to vector<8x64xf32>
    %c33_52 = arith.constant 33 : index
    %c0_53 = arith.constant 0 : index
    %95 = vector.load %arg24[%c33_52, %c0_53] : memref<168x64xf32, #tpu.memory_space<vmem>>, vector<8x64xf32>
    tpu.vector_store %arg24[%c33_52, %c0_53], %94 {strides = array<i32>} : memref<168x64xf32, #tpu.memory_space<vmem>>, vector<8x64xf32>,
    %96 = vector.extract_strided_slice %91 {offsets = [16, 0], sizes = [8, 64], strides = [1, 1]} : vector<64x64xf32> to vector<8x64xf32>
    %c49_54 = arith.constant 49 : index
    %c0_55 = arith.constant 0 : index
    %97 = vector.load %arg24[%c49_54, %c0_55] : memref<168x64xf32, #tpu.memory_space<vmem>>, vector<8x64xf32>
    tpu.vector_store %arg24[%c49_54, %c0_55], %96 {strides = array<i32>} : memref<168x64xf32, #tpu.memory_space<vmem>>, vector<8x64xf32>,
    %98 = vector.extract_strided_slice %91 {offsets = [24, 0], sizes = [8, 64], strides = [1, 1]} : vector<64x64xf32> to vector<8x64xf32>
    %c65_56 = arith.constant 65 : index
    %c0_57 = arith.constant 0 : index
    %99 = vector.load %arg24[%c65_56, %c0_57] : memref<168x64xf32, #tpu.memory_space<vmem>>, vector<8x64xf32>
    tpu.vector_store %arg24[%c65_56, %c0_57], %98 {strides = array<i32>} : memref<168x64xf32, #tpu.memory_space<vmem>>, vector<8x64xf32>,
    %100 = vector.extract_strided_slice %91 {offsets = [32, 0], sizes = [8, 64], strides = [1, 1]} : vector<64x64xf32> to vector<8x64xf32>
    %c81_58 = arith.constant 81 : index
    %c0_59 = arith.constant 0 : index
    %101 = vector.load %arg24[%c81_58, %c0_59] : memref<168x64xf32, #tpu.memory_space<vmem>>, vector<8x64xf32>
    tpu.vector_store %arg24[%c81_58, %c0_59], %100 {strides = array<i32>} : memref<168x64xf32, #tpu.memory_space<vmem>>, vector<8x64xf32>,
    %102 = vector.extract_strided_slice %91 {offsets = [40, 0], sizes = [8, 64], strides = [1, 1]} : vector<64x64xf32> to vector<8x64xf32>
    %c97_60 = arith.constant 97 : index
    %c0_61 = arith.constant 0 : index
    %103 = vector.load %arg24[%c97_60, %c0_61] : memref<168x64xf32, #tpu.memory_space<vmem>>, vector<8x64xf32>
    tpu.vector_store %arg24[%c97_60, %c0_61], %102 {strides = array<i32>} : memref<168x64xf32, #tpu.memory_space<vmem>>, vector<8x64xf32>,
    %104 = vector.extract_strided_slice %91 {offsets = [48, 0], sizes = [8, 64], strides = [1, 1]} : vector<64x64xf32> to vector<8x64xf32>
    %c113_62 = arith.constant 113 : index
    %c0_63 = arith.constant 0 : index
    %105 = vector.load %arg24[%c113_62, %c0_63] : memref<168x64xf32, #tpu.memory_space<vmem>>, vector<8x64xf32>
    tpu.vector_store %arg24[%c113_62, %c0_63], %104 {strides = array<i32>} : memref<168x64xf32, #tpu.memory_space<vmem>>, vector<8x64xf32>,
    %106 = vector.extract_strided_slice %91 {offsets = [56, 0], sizes = [8, 64], strides = [1, 1]} : vector<64x64xf32> to vector<8x64xf32>
    %c129_64 = arith.constant 129 : index
    %c0_65 = arith.constant 0 : index
    %107 = vector.load %arg24[%c129_64, %c0_65] : memref<168x64xf32, #tpu.memory_space<vmem>>, vector<8x64xf32>
    tpu.vector_store %arg24[%c129_64, %c0_65], %106 {strides = array<i32>} : memref<168x64xf32, #tpu.memory_space<vmem>>, vector<8x64xf32>,
    %c0_66 = arith.constant 0 : index
    %c0_67 = arith.constant 0 : index
    %108 = vector.load %arg24[%c0_66, %c0_67] : memref<168x64xf32, #tpu.memory_space<vmem>>, vector<168x64xf32>
    %109 = arith.truncf %108 : vector<168x64xf32> to vector<168x64xbf16>
    %cst_68 = arith.constant 0.000000e+00 : f32
    %110 = vector.broadcast %cst_68 : f32 to vector<128x64xf32>
    %111 = vector.extract_strided_slice %109 {offsets = [0, 0], sizes = [128, 64], strides = [1, 1]} : vector<168x64xbf16> to vector<128x64xbf16>
    %112 = vector.extract_strided_slice %109 {offsets = [1, 0], sizes = [128, 64], strides = [1, 1]} : vector<168x64xbf16> to vector<128x64xbf16>
    %113 = vector.extract_strided_slice %109 {offsets = [2, 0], sizes = [128, 64], strides = [1, 1]} : vector<168x64xbf16> to vector<128x64xbf16>
    %114 = tpu.concatenate %111, %112, %113 in 1 : vector<128x64xbf16>, vector<128x64xbf16>, vector<128x64xbf16> -> vector<128x192xbf16>
    %c0_69 = arith.constant 0 : index
    %c0_70 = arith.constant 0 : index
    %c0_71 = arith.constant 0 : index
    %115 = vector.load %arg10[%c0_69, %c0_70, %c0_71] : memref<3x192x64xbf16, #tpu.memory_space<vmem>>, vector<1x192x64xbf16>
    %116 = vector.shape_cast %115 : vector<1x192x64xbf16> to vector<192x64xbf16>
    %cst_72 = arith.constant dense<0.000000e+00> : vector<128x64xf32>
    %117 = tpu.matmul %114, %116, %cst_72 {dimension_numbers = #tpu.dot_dimension_numbers<[1], [0], [0], [1], [0, 0, 1, 1], [], []>} : vector<128x192xbf16>, vector<192x64xbf16>, vector<128x64xf32> -> vector<128x64xf32>
    %118 = arith.addf %110, %117 : vector<128x64xf32>
    %119 = vector.extract_strided_slice %109 {offsets = [16, 0], sizes = [128, 64], strides = [1, 1]} : vector<168x64xbf16> to vector<128x64xbf16>
    %120 = vector.extract_strided_slice %109 {offsets = [17, 0], sizes = [128, 64], strides = [1, 1]} : vector<168x64xbf16> to vector<128x64xbf16>
    %121 = vector.extract_strided_slice %109 {offsets = [18, 0], sizes = [128, 64], strides = [1, 1]} : vector<168x64xbf16> to vector<128x64xbf16>
    %122 = tpu.concatenate %119, %120, %121 in 1 : vector<128x64xbf16>, vector<128x64xbf16>, vector<128x64xbf16> -> vector<128x192xbf16>
    %c1_73 = arith.constant 1 : index
    %c0_74 = arith.constant 0 : index
    %c0_75 = arith.constant 0 : index
    %123 = vector.load %arg10[%c1_73, %c0_74, %c0_75] : memref<3x192x64xbf16, #tpu.memory_space<vmem>>, vector<1x192x64xbf16>
    %124 = vector.shape_cast %123 : vector<1x192x64xbf16> to vector<192x64xbf16>
    %cst_76 = arith.constant dense<0.000000e+00> : vector<128x64xf32>
    %125 = tpu.matmul %122, %124, %cst_76 {dimension_numbers = #tpu.dot_dimension_numbers<[1], [0], [0], [1], [0, 0, 1, 1], [], []>} : vector<128x192xbf16>, vector<192x64xbf16>, vector<128x64xf32> -> vector<128x64xf32>
    %126 = arith.addf %118, %125 : vector<128x64xf32>
    %127 = vector.extract_strided_slice %109 {offsets = [32, 0], sizes = [128, 64], strides = [1, 1]} : vector<168x64xbf16> to vector<128x64xbf16>
    %128 = vector.extract_strided_slice %109 {offsets = [33, 0], sizes = [128, 64], strides = [1, 1]} : vector<168x64xbf16> to vector<128x64xbf16>
    %129 = vector.extract_strided_slice %109 {offsets = [34, 0], sizes = [128, 64], strides = [1, 1]} : vector<168x64xbf16> to vector<128x64xbf16>
    %130 = tpu.concatenate %127, %128, %129 in 1 : vector<128x64xbf16>, vector<128x64xbf16>, vector<128x64xbf16> -> vector<128x192xbf16>
    %c2_77 = arith.constant 2 : index
    %c0_78 = arith.constant 0 : index
    %c0_79 = arith.constant 0 : index
    %131 = vector.load %arg10[%c2_77, %c0_78, %c0_79] : memref<3x192x64xbf16, #tpu.memory_space<vmem>>, vector<1x192x64xbf16>
    %132 = vector.shape_cast %131 : vector<1x192x64xbf16> to vector<192x64xbf16>
    %cst_80 = arith.constant dense<0.000000e+00> : vector<128x64xf32>
    %133 = tpu.matmul %130, %132, %cst_80 {dimension_numbers = #tpu.dot_dimension_numbers<[1], [0], [0], [1], [0, 0, 1, 1], [], []>} : vector<128x192xbf16>, vector<192x64xbf16>, vector<128x64xf32> -> vector<128x64xf32>
    %134 = arith.addf %126, %133 : vector<128x64xf32>
    %135 = vector.shape_cast %134 : vector<128x64xf32> to vector<8x16x64xf32>
    %136 = vector.extract_strided_slice %135 {offsets = [0, 0, 0], sizes = [8, 8, 64], strides = [1, 1, 1]} : vector<8x16x64xf32> to vector<8x8x64xf32>
    %137 = vector.shape_cast %136 : vector<8x8x64xf32> to vector<64x64xf32>
    %c0_81 = arith.constant 0 : index
    %c0_82 = arith.constant 0 : index
    %138 = vector.load %arg11[%c0_81, %c0_82] : memref<1x64xf32, #tpu.memory_space<vmem>>, vector<1x64xf32>
    %139 = vector.broadcast %138 : vector<1x64xf32> to vector<64x64xf32>
    %140 = arith.addf %137, %139 : vector<64x64xf32>
    %141 = arith.addf %34, %140 : vector<64x64xf32>
    %c0_83 = arith.constant 0 : index
    %c0_84 = arith.constant 0 : index
    %c0_85 = arith.constant 0 : index
    %142 = vector.load %arg4[%c0_83, %c0_84, %c0_85] : memref<1x1x32xf32, #tpu.memory_space<vmem>>, vector<1x1x32xf32>
    %143 = vector.shape_cast %142 : vector<1x1x32xf32> to vector<1x32xf32>
    %c0_86 = arith.constant 0 : index
    %c0_87 = arith.constant 0 : index
    %c0_88 = arith.constant 0 : index
    %144 = vector.load %arg5[%c0_86, %c0_87, %c0_88] : memref<1x8x256xf32, #tpu.memory_space<vmem>>, vector<1x8x256xf32>
    %145 = vector.shape_cast %144 : vector<1x8x256xf32> to vector<8x256xf32>
    %146 = arith.truncf %145 : vector<8x256xf32> to vector<8x256xbf16>
    %c0_89 = arith.constant 0 : index
    %c0_90 = arith.constant 0 : index
    %147 = vector.load %arg6[%c0_89, %c0_90] : memref<440x64xbf16, #tpu.memory_space<vmem>>, vector<440x64xbf16>
    %148 = arith.truncf %141 : vector<64x64xf32> to vector<64x64xbf16>
    %cst_91 = arith.constant dense<0.000000e+00> : vector<440x64xf32>
    %149 = tpu.matmul %147, %148, %cst_91 {dimension_numbers = #tpu.dot_dimension_numbers<[1], [0], [0], [1], [0, 0, 1, 1], [], []>} : vector<440x64xbf16>, vector<64x64xbf16>, vector<440x64xf32> -> vector<440x64xf32>
    %150 = arith.truncf %149 : vector<440x64xf32> to vector<440x64xbf16>
    %cst_92 = arith.constant 0.000000e+00 : f32
    %151 = vector.broadcast %cst_92 : f32 to vector<384x32xf32>
    %152 = vector.extract_strided_slice %150 {offsets = [0, 0], sizes = [384, 64], strides = [1, 1]} : vector<440x64xbf16> to vector<384x64xbf16>
    %153 = vector.extract_strided_slice %150 {offsets = [1, 0], sizes = [384, 64], strides = [1, 1]} : vector<440x64xbf16> to vector<384x64xbf16>
    %154 = vector.extract_strided_slice %150 {offsets = [2, 0], sizes = [384, 64], strides = [1, 1]} : vector<440x64xbf16> to vector<384x64xbf16>
    %155 = tpu.concatenate %152, %153, %154 in 1 : vector<384x64xbf16>, vector<384x64xbf16>, vector<384x64xbf16> -> vector<384x192xbf16>
    %c0_93 = arith.constant 0 : index
    %c0_94 = arith.constant 0 : index
    %c0_95 = arith.constant 0 : index
    %156 = vector.load %arg12[%c0_93, %c0_94, %c0_95] : memref<3x192x32xbf16, #tpu.memory_space<vmem>>, vector<1x192x32xbf16>
    %157 = vector.shape_cast %156 : vector<1x192x32xbf16> to vector<192x32xbf16>
    %cst_96 = arith.constant dense<0.000000e+00> : vector<384x32xf32>
    %158 = tpu.matmul %155, %157, %cst_96 {dimension_numbers = #tpu.dot_dimension_numbers<[1], [0], [0], [1], [0, 0, 1, 1], [], []>} : vector<384x192xbf16>, vector<192x32xbf16>, vector<384x32xf32> -> vector<384x32xf32>
    %159 = arith.addf %151, %158 : vector<384x32xf32>
    %160 = vector.extract_strided_slice %150 {offsets = [24, 0], sizes = [384, 64], strides = [1, 1]} : vector<440x64xbf16> to vector<384x64xbf16>
    %161 = vector.extract_strided_slice %150 {offsets = [25, 0], sizes = [384, 64], strides = [1, 1]} : vector<440x64xbf16> to vector<384x64xbf16>
    %162 = vector.extract_strided_slice %150 {offsets = [26, 0], sizes = [384, 64], strides = [1, 1]} : vector<440x64xbf16> to vector<384x64xbf16>
    %163 = tpu.concatenate %160, %161, %162 in 1 : vector<384x64xbf16>, vector<384x64xbf16>, vector<384x64xbf16> -> vector<384x192xbf16>
    %c1_97 = arith.constant 1 : index
    %c0_98 = arith.constant 0 : index
    %c0_99 = arith.constant 0 : index
    %164 = vector.load %arg12[%c1_97, %c0_98, %c0_99] : memref<3x192x32xbf16, #tpu.memory_space<vmem>>, vector<1x192x32xbf16>
    %165 = vector.shape_cast %164 : vector<1x192x32xbf16> to vector<192x32xbf16>
    %cst_100 = arith.constant dense<0.000000e+00> : vector<384x32xf32>
    %166 = tpu.matmul %163, %165, %cst_100 {dimension_numbers = #tpu.dot_dimension_numbers<[1], [0], [0], [1], [0, 0, 1, 1], [], []>} : vector<384x192xbf16>, vector<192x32xbf16>, vector<384x32xf32> -> vector<384x32xf32>
    %167 = arith.addf %159, %166 : vector<384x32xf32>
    %168 = vector.extract_strided_slice %150 {offsets = [48, 0], sizes = [384, 64], strides = [1, 1]} : vector<440x64xbf16> to vector<384x64xbf16>
    %169 = vector.extract_strided_slice %150 {offsets = [49, 0], sizes = [384, 64], strides = [1, 1]} : vector<440x64xbf16> to vector<384x64xbf16>
    %170 = vector.extract_strided_slice %150 {offsets = [50, 0], sizes = [384, 64], strides = [1, 1]} : vector<440x64xbf16> to vector<384x64xbf16>
    %171 = tpu.concatenate %168, %169, %170 in 1 : vector<384x64xbf16>, vector<384x64xbf16>, vector<384x64xbf16> -> vector<384x192xbf16>
    %c2_101 = arith.constant 2 : index
    %c0_102 = arith.constant 0 : index
    %c0_103 = arith.constant 0 : index
    %172 = vector.load %arg12[%c2_101, %c0_102, %c0_103] : memref<3x192x32xbf16, #tpu.memory_space<vmem>>, vector<1x192x32xbf16>
    %173 = vector.shape_cast %172 : vector<1x192x32xbf16> to vector<192x32xbf16>
    %cst_104 = arith.constant dense<0.000000e+00> : vector<384x32xf32>
    %174 = tpu.matmul %171, %173, %cst_104 {dimension_numbers = #tpu.dot_dimension_numbers<[1], [0], [0], [1], [0, 0, 1, 1], [], []>} : vector<384x192xbf16>, vector<192x32xbf16>, vector<384x32xf32> -> vector<384x32xf32>
    %175 = arith.addf %167, %174 : vector<384x32xf32>
    %176 = vector.shape_cast %175 : vector<384x32xf32> to vector<16x24x32xf32>
    %177 = vector.extract_strided_slice %176 {offsets = [0, 0, 0], sizes = [16, 16, 32], strides = [1, 1, 1]} : vector<16x24x32xf32> to vector<16x16x32xf32>
    %178 = vector.shape_cast %177 : vector<16x16x32xf32> to vector<256x32xf32>
    %c0_105 = arith.constant 0 : index
    %c0_106 = arith.constant 0 : index
    %179 = vector.load %arg13[%c0_105, %c0_106] : memref<8x32xbf16, #tpu.memory_space<vmem>>, vector<8x32xbf16>
    %cst_107 = arith.constant dense<0.000000e+00> : vector<256x32xf32>
    %180 = tpu.matmul %146, %179, %cst_107 {dimension_numbers = #tpu.dot_dimension_numbers<[0], [0], [1], [1], [0, 1, 1, 1], [], []>} : vector<8x256xbf16>, vector<8x32xbf16>, vector<256x32xf32> -> vector<256x32xf32>
    %c0_108 = arith.constant 0 : index
    %c0_109 = arith.constant 0 : index
    %181 = vector.load %arg15[%c0_108, %c0_109] : memref<32x64xf32, #tpu.memory_space<vmem>>, vector<32x64xf32>
    %cst_110 = arith.constant dense<0.000000e+00> : vector<1x64xf32>
    %182 = tpu.matmul %143, %181, %cst_110 {dimension_numbers = #tpu.dot_dimension_numbers<[1], [0], [0], [1], [0, 0, 1, 1], [], []>} : vector<1x32xf32>, vector<32x64xf32>, vector<1x64xf32> -> vector<1x64xf32>
    %c0_111 = arith.constant 0 : index
    %c0_112 = arith.constant 0 : index
    %183 = vector.load %arg16[%c0_111, %c0_112] : memref<1x64xf32, #tpu.memory_space<vmem>>, vector<1x64xf32>
    %184 = arith.addf %182, %183 : vector<1x64xf32>
    %c0_113 = arith.constant 0 : index
    %c0_114 = arith.constant 0 : index
    %185 = vector.load %arg14[%c0_113, %c0_114] : memref<1x32xf32, #tpu.memory_space<vmem>>, vector<1x32xf32>
    %186 = vector.extract_strided_slice %184 {offsets = [0, 0], sizes = [1, 32], strides = [1, 1]} : vector<1x64xf32> to vector<1x32xf32>
    %187 = vector.extract_strided_slice %184 {offsets = [0, 32], sizes = [1, 32], strides = [1, 1]} : vector<1x64xf32> to vector<1x32xf32>
    %188 = arith.addf %178, %180 : vector<256x32xf32>
    %189 = vector.broadcast %185 : vector<1x32xf32> to vector<256x32xf32>
    %190 = arith.addf %188, %189 : vector<256x32xf32>
    %cst_115 = arith.constant 0.000000e+00 : f32
    %191 = vector.broadcast %cst_115 : f32 to vector<256x32xf32>
    %192 = arith.cmpf oge, %190, %191 : vector<256x32xf32>
    %cst_116 = arith.constant 2.000000e-01 : f32
    %193 = vector.broadcast %cst_116 : f32 to vector<256x32xf32>
    %194 = arith.mulf %193, %190 : vector<256x32xf32>
    %195 = arith.select %192, %190, %194 : vector<256x32xi1>, vector<256x32xf32>
    %cst_117 = arith.constant dense<0.000000e+00> : vector<32xf32>
    %196 = vector.multi_reduction <add>, %195, %cst_117 [0] : vector<256x32xf32> to vector<32xf32>
    %197 = vector.shape_cast %196 : vector<32xf32> to vector<1x32xf32>
    %cst_118 = arith.constant 2.560000e+02 : f32
    %198 = vector.broadcast %cst_118 : f32 to vector<1x32xf32>
    %199 = arith.divf %197, %198 : vector<1x32xf32>
    %200 = vector.broadcast %199 : vector<1x32xf32> to vector<256x32xf32>
    %201 = arith.subf %195, %200 : vector<256x32xf32>
    %202 = arith.mulf %201, %201 : vector<256x32xf32>
    %cst_119 = arith.constant dense<0.000000e+00> : vector<32xf32>
    %203 = vector.multi_reduction <add>, %202, %cst_119 [0] : vector<256x32xf32> to vector<32xf32>
    %204 = vector.shape_cast %203 : vector<32xf32> to vector<1x32xf32>
    %cst_120 = arith.constant 2.560000e+02 : f32
    %205 = vector.broadcast %cst_120 : f32 to vector<1x32xf32>
    %206 = arith.divf %204, %205 : vector<1x32xf32>
    %cst_121 = arith.constant 9.99999974E-6 : f32
    %207 = vector.broadcast %cst_121 : f32 to vector<1x32xf32>
    %208 = arith.addf %206, %207 : vector<1x32xf32>
    %209 = math.rsqrt %208 : vector<1x32xf32>
    %210 = vector.broadcast %209 : vector<1x32xf32> to vector<256x32xf32>
    %211 = arith.mulf %201, %210 : vector<256x32xf32>
    %cst_122 = arith.constant 1.000000e+00 : f32
    %212 = vector.broadcast %cst_122 : f32 to vector<1x32xf32>
    %213 = arith.addf %186, %212 : vector<1x32xf32>
    %214 = vector.broadcast %213 : vector<1x32xf32> to vector<256x32xf32>
    %215 = arith.mulf %211, %214 : vector<256x32xf32>
    %216 = vector.broadcast %187 : vector<1x32xf32> to vector<256x32xf32>
    %217 = arith.addf %215, %216 : vector<256x32xf32>
    %218 = vector.extract_strided_slice %217 {offsets = [0, 0], sizes = [16, 32], strides = [1, 1]} : vector<256x32xf32> to vector<16x32xf32>
    %c25 = arith.constant 25 : index
    %c0_123 = arith.constant 0 : index
    %219 = vector.load %arg25[%c25, %c0_123] : memref<440x32xf32, #tpu.memory_space<vmem>>, vector<16x32xf32>
    tpu.vector_store %arg25[%c25, %c0_123], %218 {strides = array<i32>} : memref<440x32xf32, #tpu.memory_space<vmem>>, vector<16x32xf32>,
    %220 = vector.extract_strided_slice %217 {offsets = [16, 0], sizes = [16, 32], strides = [1, 1]} : vector<256x32xf32> to vector<16x32xf32>
    %c49_124 = arith.constant 49 : index
    %c0_125 = arith.constant 0 : index
    %221 = vector.load %arg25[%c49_124, %c0_125] : memref<440x32xf32, #tpu.memory_space<vmem>>, vector<16x32xf32>
    tpu.vector_store %arg25[%c49_124, %c0_125], %220 {strides = array<i32>} : memref<440x32xf32, #tpu.memory_space<vmem>>, vector<16x32xf32>,
    %222 = vector.extract_strided_slice %217 {offsets = [32, 0], sizes = [16, 32], strides = [1, 1]} : vector<256x32xf32> to vector<16x32xf32>
    %c73 = arith.constant 73 : index
    %c0_126 = arith.constant 0 : index
    %223 = vector.load %arg25[%c73, %c0_126] : memref<440x32xf32, #tpu.memory_space<vmem>>, vector<16x32xf32>
    tpu.vector_store %arg25[%c73, %c0_126], %222 {strides = array<i32>} : memref<440x32xf32, #tpu.memory_space<vmem>>, vector<16x32xf32>,
    %224 = vector.extract_strided_slice %217 {offsets = [48, 0], sizes = [16, 32], strides = [1, 1]} : vector<256x32xf32> to vector<16x32xf32>
    %c97_127 = arith.constant 97 : index
    %c0_128 = arith.constant 0 : index
    %225 = vector.load %arg25[%c97_127, %c0_128] : memref<440x32xf32, #tpu.memory_space<vmem>>, vector<16x32xf32>
    tpu.vector_store %arg25[%c97_127, %c0_128], %224 {strides = array<i32>} : memref<440x32xf32, #tpu.memory_space<vmem>>, vector<16x32xf32>,
    %226 = vector.extract_strided_slice %217 {offsets = [64, 0], sizes = [16, 32], strides = [1, 1]} : vector<256x32xf32> to vector<16x32xf32>
    %c121 = arith.constant 121 : index
    %c0_129 = arith.constant 0 : index
    %227 = vector.load %arg25[%c121, %c0_129] : memref<440x32xf32, #tpu.memory_space<vmem>>, vector<16x32xf32>
    tpu.vector_store %arg25[%c121, %c0_129], %226 {strides = array<i32>} : memref<440x32xf32, #tpu.memory_space<vmem>>, vector<16x32xf32>,
    %228 = vector.extract_strided_slice %217 {offsets = [80, 0], sizes = [16, 32], strides = [1, 1]} : vector<256x32xf32> to vector<16x32xf32>
    %c145 = arith.constant 145 : index
    %c0_130 = arith.constant 0 : index
    %229 = vector.load %arg25[%c145, %c0_130] : memref<440x32xf32, #tpu.memory_space<vmem>>, vector<16x32xf32>
    tpu.vector_store %arg25[%c145, %c0_130], %228 {strides = array<i32>} : memref<440x32xf32, #tpu.memory_space<vmem>>, vector<16x32xf32>,
    %230 = vector.extract_strided_slice %217 {offsets = [96, 0], sizes = [16, 32], strides = [1, 1]} : vector<256x32xf32> to vector<16x32xf32>
    %c169 = arith.constant 169 : index
    %c0_131 = arith.constant 0 : index
    %231 = vector.load %arg25[%c169, %c0_131] : memref<440x32xf32, #tpu.memory_space<vmem>>, vector<16x32xf32>
    tpu.vector_store %arg25[%c169, %c0_131], %230 {strides = array<i32>} : memref<440x32xf32, #tpu.memory_space<vmem>>, vector<16x32xf32>,
    %232 = vector.extract_strided_slice %217 {offsets = [112, 0], sizes = [16, 32], strides = [1, 1]} : vector<256x32xf32> to vector<16x32xf32>
    %c193 = arith.constant 193 : index
    %c0_132 = arith.constant 0 : index
    %233 = vector.load %arg25[%c193, %c0_132] : memref<440x32xf32, #tpu.memory_space<vmem>>, vector<16x32xf32>
    tpu.vector_store %arg25[%c193, %c0_132], %232 {strides = array<i32>} : memref<440x32xf32, #tpu.memory_space<vmem>>, vector<16x32xf32>,
    %234 = vector.extract_strided_slice %217 {offsets = [128, 0], sizes = [16, 32], strides = [1, 1]} : vector<256x32xf32> to vector<16x32xf32>
    %c217 = arith.constant 217 : index
    %c0_133 = arith.constant 0 : index
    %235 = vector.load %arg25[%c217, %c0_133] : memref<440x32xf32, #tpu.memory_space<vmem>>, vector<16x32xf32>
    tpu.vector_store %arg25[%c217, %c0_133], %234 {strides = array<i32>} : memref<440x32xf32, #tpu.memory_space<vmem>>, vector<16x32xf32>,
    %236 = vector.extract_strided_slice %217 {offsets = [144, 0], sizes = [16, 32], strides = [1, 1]} : vector<256x32xf32> to vector<16x32xf32>
    %c241 = arith.constant 241 : index
    %c0_134 = arith.constant 0 : index
    %237 = vector.load %arg25[%c241, %c0_134] : memref<440x32xf32, #tpu.memory_space<vmem>>, vector<16x32xf32>
    tpu.vector_store %arg25[%c241, %c0_134], %236 {strides = array<i32>} : memref<440x32xf32, #tpu.memory_space<vmem>>, vector<16x32xf32>,
    %238 = vector.extract_strided_slice %217 {offsets = [160, 0], sizes = [16, 32], strides = [1, 1]} : vector<256x32xf32> to vector<16x32xf32>
    %c265 = arith.constant 265 : index
    %c0_135 = arith.constant 0 : index
    %239 = vector.load %arg25[%c265, %c0_135] : memref<440x32xf32, #tpu.memory_space<vmem>>, vector<16x32xf32>
    tpu.vector_store %arg25[%c265, %c0_135], %238 {strides = array<i32>} : memref<440x32xf32, #tpu.memory_space<vmem>>, vector<16x32xf32>,
    %240 = vector.extract_strided_slice %217 {offsets = [176, 0], sizes = [16, 32], strides = [1, 1]} : vector<256x32xf32> to vector<16x32xf32>
    %c289 = arith.constant 289 : index
    %c0_136 = arith.constant 0 : index
    %241 = vector.load %arg25[%c289, %c0_136] : memref<440x32xf32, #tpu.memory_space<vmem>>, vector<16x32xf32>
    tpu.vector_store %arg25[%c289, %c0_136], %240 {strides = array<i32>} : memref<440x32xf32, #tpu.memory_space<vmem>>, vector<16x32xf32>,
    %242 = vector.extract_strided_slice %217 {offsets = [192, 0], sizes = [16, 32], strides = [1, 1]} : vector<256x32xf32> to vector<16x32xf32>
    %c313 = arith.constant 313 : index
    %c0_137 = arith.constant 0 : index
    %243 = vector.load %arg25[%c313, %c0_137] : memref<440x32xf32, #tpu.memory_space<vmem>>, vector<16x32xf32>
    tpu.vector_store %arg25[%c313, %c0_137], %242 {strides = array<i32>} : memref<440x32xf32, #tpu.memory_space<vmem>>, vector<16x32xf32>,
    %244 = vector.extract_strided_slice %217 {offsets = [208, 0], sizes = [16, 32], strides = [1, 1]} : vector<256x32xf32> to vector<16x32xf32>
    %c337 = arith.constant 337 : index
    %c0_138 = arith.constant 0 : index
    %245 = vector.load %arg25[%c337, %c0_138] : memref<440x32xf32, #tpu.memory_space<vmem>>, vector<16x32xf32>
    tpu.vector_store %arg25[%c337, %c0_138], %244 {strides = array<i32>} : memref<440x32xf32, #tpu.memory_space<vmem>>, vector<16x32xf32>,
    %246 = vector.extract_strided_slice %217 {offsets = [224, 0], sizes = [16, 32], strides = [1, 1]} : vector<256x32xf32> to vector<16x32xf32>
    %c361 = arith.constant 361 : index
    %c0_139 = arith.constant 0 : index
    %247 = vector.load %arg25[%c361, %c0_139] : memref<440x32xf32, #tpu.memory_space<vmem>>, vector<16x32xf32>
    tpu.vector_store %arg25[%c361, %c0_139], %246 {strides = array<i32>} : memref<440x32xf32, #tpu.memory_space<vmem>>, vector<16x32xf32>,
    %248 = vector.extract_strided_slice %217 {offsets = [240, 0], sizes = [16, 32], strides = [1, 1]} : vector<256x32xf32> to vector<16x32xf32>
    %c385 = arith.constant 385 : index
    %c0_140 = arith.constant 0 : index
    %249 = vector.load %arg25[%c385, %c0_140] : memref<440x32xf32, #tpu.memory_space<vmem>>, vector<16x32xf32>
    tpu.vector_store %arg25[%c385, %c0_140], %248 {strides = array<i32>} : memref<440x32xf32, #tpu.memory_space<vmem>>, vector<16x32xf32>,
    %c0_141 = arith.constant 0 : index
    %c0_142 = arith.constant 0 : index
    %250 = vector.load %arg25[%c0_141, %c0_142] : memref<440x32xf32, #tpu.memory_space<vmem>>, vector<440x32xf32>
    %251 = arith.truncf %250 : vector<440x32xf32> to vector<440x32xbf16>
    %cst_143 = arith.constant 0.000000e+00 : f32
    %252 = vector.broadcast %cst_143 : f32 to vector<384x32xf32>
    %253 = vector.extract_strided_slice %251 {offsets = [0, 0], sizes = [384, 32], strides = [1, 1]} : vector<440x32xbf16> to vector<384x32xbf16>
    %254 = vector.extract_strided_slice %251 {offsets = [1, 0], sizes = [384, 32], strides = [1, 1]} : vector<440x32xbf16> to vector<384x32xbf16>
    %255 = vector.extract_strided_slice %251 {offsets = [2, 0], sizes = [384, 32], strides = [1, 1]} : vector<440x32xbf16> to vector<384x32xbf16>
    %256 = tpu.concatenate %253, %254, %255 in 1 : vector<384x32xbf16>, vector<384x32xbf16>, vector<384x32xbf16> -> vector<384x96xbf16>
    %c0_144 = arith.constant 0 : index
    %c0_145 = arith.constant 0 : index
    %c0_146 = arith.constant 0 : index
    %257 = vector.load %arg17[%c0_144, %c0_145, %c0_146] : memref<3x96x32xbf16, #tpu.memory_space<vmem>>, vector<1x96x32xbf16>
    %258 = vector.shape_cast %257 : vector<1x96x32xbf16> to vector<96x32xbf16>
    %cst_147 = arith.constant dense<0.000000e+00> : vector<384x32xf32>
    %259 = tpu.matmul %256, %258, %cst_147 {dimension_numbers = #tpu.dot_dimension_numbers<[1], [0], [0], [1], [0, 0, 1, 1], [], []>} : vector<384x96xbf16>, vector<96x32xbf16>, vector<384x32xf32> -> vector<384x32xf32>
    %260 = arith.addf %252, %259 : vector<384x32xf32>
    %261 = vector.extract_strided_slice %251 {offsets = [24, 0], sizes = [384, 32], strides = [1, 1]} : vector<440x32xbf16> to vector<384x32xbf16>
    %262 = vector.extract_strided_slice %251 {offsets = [25, 0], sizes = [384, 32], strides = [1, 1]} : vector<440x32xbf16> to vector<384x32xbf16>
    %263 = vector.extract_strided_slice %251 {offsets = [26, 0], sizes = [384, 32], strides = [1, 1]} : vector<440x32xbf16> to vector<384x32xbf16>
    %264 = tpu.concatenate %261, %262, %263 in 1 : vector<384x32xbf16>, vector<384x32xbf16>, vector<384x32xbf16> -> vector<384x96xbf16>
    %c1_148 = arith.constant 1 : index
    %c0_149 = arith.constant 0 : index
    %c0_150 = arith.constant 0 : index
    %265 = vector.load %arg17[%c1_148, %c0_149, %c0_150] : memref<3x96x32xbf16, #tpu.memory_space<vmem>>, vector<1x96x32xbf16>
    %266 = vector.shape_cast %265 : vector<1x96x32xbf16> to vector<96x32xbf16>
    %cst_151 = arith.constant dense<0.000000e+00> : vector<384x32xf32>
    %267 = tpu.matmul %264, %266, %cst_151 {dimension_numbers = #tpu.dot_dimension_numbers<[1], [0], [0], [1], [0, 0, 1, 1], [], []>} : vector<384x96xbf16>, vector<96x32xbf16>, vector<384x32xf32> -> vector<384x32xf32>
    %268 = arith.addf %260, %267 : vector<384x32xf32>
    %269 = vector.extract_strided_slice %251 {offsets = [48, 0], sizes = [384, 32], strides = [1, 1]} : vector<440x32xbf16> to vector<384x32xbf16>
    %270 = vector.extract_strided_slice %251 {offsets = [49, 0], sizes = [384, 32], strides = [1, 1]} : vector<440x32xbf16> to vector<384x32xbf16>
    %271 = vector.extract_strided_slice %251 {offsets = [50, 0], sizes = [384, 32], strides = [1, 1]} : vector<440x32xbf16> to vector<384x32xbf16>
    %272 = tpu.concatenate %269, %270, %271 in 1 : vector<384x32xbf16>, vector<384x32xbf16>, vector<384x32xbf16> -> vector<384x96xbf16>
    %c2_152 = arith.constant 2 : index
    %c0_153 = arith.constant 0 : index
    %c0_154 = arith.constant 0 : index
    %273 = vector.load %arg17[%c2_152, %c0_153, %c0_154] : memref<3x96x32xbf16, #tpu.memory_space<vmem>>, vector<1x96x32xbf16>
    %274 = vector.shape_cast %273 : vector<1x96x32xbf16> to vector<96x32xbf16>
    %cst_155 = arith.constant dense<0.000000e+00> : vector<384x32xf32>
    %275 = tpu.matmul %272, %274, %cst_155 {dimension_numbers = #tpu.dot_dimension_numbers<[1], [0], [0], [1], [0, 0, 1, 1], [], []>} : vector<384x96xbf16>, vector<96x32xbf16>, vector<384x32xf32> -> vector<384x32xf32>
    %276 = arith.addf %268, %275 : vector<384x32xf32>
    %277 = vector.shape_cast %276 : vector<384x32xf32> to vector<16x24x32xf32>
    %278 = vector.extract_strided_slice %277 {offsets = [0, 0, 0], sizes = [16, 16, 32], strides = [1, 1, 1]} : vector<16x24x32xf32> to vector<16x16x32xf32>
    %279 = vector.shape_cast %278 : vector<16x16x32xf32> to vector<256x32xf32>
    %c0_156 = arith.constant 0 : index
    %c0_157 = arith.constant 0 : index
    %280 = vector.load %arg18[%c0_156, %c0_157] : memref<8x32xbf16, #tpu.memory_space<vmem>>, vector<8x32xbf16>
    %cst_158 = arith.constant dense<0.000000e+00> : vector<256x32xf32>
    %281 = tpu.matmul %146, %280, %cst_158 {dimension_numbers = #tpu.dot_dimension_numbers<[0], [0], [1], [1], [0, 1, 1, 1], [], []>} : vector<8x256xbf16>, vector<8x32xbf16>, vector<256x32xf32> -> vector<256x32xf32>
    %c0_159 = arith.constant 0 : index
    %c0_160 = arith.constant 0 : index
    %282 = vector.load %arg20[%c0_159, %c0_160] : memref<32x64xf32, #tpu.memory_space<vmem>>, vector<32x64xf32>
    %cst_161 = arith.constant dense<0.000000e+00> : vector<1x64xf32>
    %283 = tpu.matmul %143, %282, %cst_161 {dimension_numbers = #tpu.dot_dimension_numbers<[1], [0], [0], [1], [0, 0, 1, 1], [], []>} : vector<1x32xf32>, vector<32x64xf32>, vector<1x64xf32> -> vector<1x64xf32>
    %c0_162 = arith.constant 0 : index
    %c0_163 = arith.constant 0 : index
    %284 = vector.load %arg21[%c0_162, %c0_163] : memref<1x64xf32, #tpu.memory_space<vmem>>, vector<1x64xf32>
    %285 = arith.addf %283, %284 : vector<1x64xf32>
    %c0_164 = arith.constant 0 : index
    %c0_165 = arith.constant 0 : index
    %286 = vector.load %arg19[%c0_164, %c0_165] : memref<1x32xf32, #tpu.memory_space<vmem>>, vector<1x32xf32>
    %287 = vector.extract_strided_slice %285 {offsets = [0, 0], sizes = [1, 32], strides = [1, 1]} : vector<1x64xf32> to vector<1x32xf32>
    %288 = vector.extract_strided_slice %285 {offsets = [0, 32], sizes = [1, 32], strides = [1, 1]} : vector<1x64xf32> to vector<1x32xf32>
    %289 = arith.addf %279, %281 : vector<256x32xf32>
    %290 = vector.broadcast %286 : vector<1x32xf32> to vector<256x32xf32>
    %291 = arith.addf %289, %290 : vector<256x32xf32>
    %cst_166 = arith.constant 0.000000e+00 : f32
    %292 = vector.broadcast %cst_166 : f32 to vector<256x32xf32>
    %293 = arith.cmpf oge, %291, %292 : vector<256x32xf32>
    %cst_167 = arith.constant 2.000000e-01 : f32
    %294 = vector.broadcast %cst_167 : f32 to vector<256x32xf32>
    %295 = arith.mulf %294, %291 : vector<256x32xf32>
    %296 = arith.select %293, %291, %295 : vector<256x32xi1>, vector<256x32xf32>
    %cst_168 = arith.constant dense<0.000000e+00> : vector<32xf32>
    %297 = vector.multi_reduction <add>, %296, %cst_168 [0] : vector<256x32xf32> to vector<32xf32>
    %298 = vector.shape_cast %297 : vector<32xf32> to vector<1x32xf32>
    %cst_169 = arith.constant 2.560000e+02 : f32
    %299 = vector.broadcast %cst_169 : f32 to vector<1x32xf32>
    %300 = arith.divf %298, %299 : vector<1x32xf32>
    %301 = vector.broadcast %300 : vector<1x32xf32> to vector<256x32xf32>
    %302 = arith.subf %296, %301 : vector<256x32xf32>
    %303 = arith.mulf %302, %302 : vector<256x32xf32>
    %cst_170 = arith.constant dense<0.000000e+00> : vector<32xf32>
    %304 = vector.multi_reduction <add>, %303, %cst_170 [0] : vector<256x32xf32> to vector<32xf32>
    %305 = vector.shape_cast %304 : vector<32xf32> to vector<1x32xf32>
    %cst_171 = arith.constant 2.560000e+02 : f32
    %306 = vector.broadcast %cst_171 : f32 to vector<1x32xf32>
    %307 = arith.divf %305, %306 : vector<1x32xf32>
    %cst_172 = arith.constant 9.99999974E-6 : f32
    %308 = vector.broadcast %cst_172 : f32 to vector<1x32xf32>
    %309 = arith.addf %307, %308 : vector<1x32xf32>
    %310 = math.rsqrt %309 : vector<1x32xf32>
    %311 = vector.broadcast %310 : vector<1x32xf32> to vector<256x32xf32>
    %312 = arith.mulf %302, %311 : vector<256x32xf32>
    %cst_173 = arith.constant 1.000000e+00 : f32
    %313 = vector.broadcast %cst_173 : f32 to vector<1x32xf32>
    %314 = arith.addf %287, %313 : vector<1x32xf32>
    %315 = vector.broadcast %314 : vector<1x32xf32> to vector<256x32xf32>
    %316 = arith.mulf %312, %315 : vector<256x32xf32>
    %317 = vector.broadcast %288 : vector<1x32xf32> to vector<256x32xf32>
    %318 = arith.addf %316, %317 : vector<256x32xf32>
    %319 = vector.shape_cast %318 : vector<256x32xf32> to vector<16x16x32xf32>
    %c0_174 = arith.constant 0 : index
    %c0_175 = arith.constant 0 : index
    %c0_176 = arith.constant 0 : index
    %c0_177 = arith.constant 0 : index
    %320 = vector.load %arg22[%c0_174, %c0_175, %c0_176, %c0_177] : memref<1x16x16x32xf32, #tpu.memory_space<vmem>>, vector<1x16x16x32xf32>
    %321 = vector.shape_cast %320 : vector<1x16x16x32xf32> to vector<16x16x32xf32>
    %322 = vector.shape_cast %319 : vector<16x16x32xf32> to vector<1x16x16x32xf32>
    tpu.vector_store %arg22[%c0_174, %c0_175, %c0_176, %c0_177], %322 {strides = array<i32>} : memref<1x16x16x32xf32, #tpu.memory_space<vmem>>, vector<1x16x16x32xf32>,
    return
  }
  func.func @transform_0(%arg0: i32) -> (i32, i32, i32, i32) {
    %c0_i32 = arith.constant 0 : i32
    %c0_i32_0 = arith.constant 0 : i32
    %c0_i32_1 = arith.constant 0 : i32
    %c0_i32_2 = arith.constant 0 : i32
    return %arg0, %c0_i32, %c0_i32_0, %c0_i32_1 : i32, i32, i32, i32
  }
  func.func @transform_1(%arg0: i32) -> (i32, i32, i32) {
    %c0_i32 = arith.constant 0 : i32
    %c0_i32_0 = arith.constant 0 : i32
    %c0_i32_1 = arith.constant 0 : i32
    return %arg0, %c0_i32, %c0_i32_0 : i32, i32, i32
  }
  func.func @transform_2(%arg0: i32) -> (i32, i32, i32) {
    %c0_i32 = arith.constant 0 : i32
    %c0_i32_0 = arith.constant 0 : i32
    %c0_i32_1 = arith.constant 0 : i32
    return %arg0, %c0_i32, %c0_i32_0 : i32, i32, i32
  }
  func.func @transform_3(%arg0: i32) -> (i32, i32, i32) {
    %c0_i32 = arith.constant 0 : i32
    %c0_i32_0 = arith.constant 0 : i32
    %c0_i32_1 = arith.constant 0 : i32
    return %arg0, %c0_i32, %c0_i32_0 : i32, i32, i32
  }
  func.func @transform_4(%arg0: i32) -> (i32, i32, i32) {
    %c0_i32 = arith.constant 0 : i32
    %c0_i32_0 = arith.constant 0 : i32
    %c0_i32_1 = arith.constant 0 : i32
    return %arg0, %c0_i32, %c0_i32_0 : i32, i32, i32
  }
  func.func @transform_5(%arg0: i32) -> (i32, i32) {
    %c0_i32 = arith.constant 0 : i32
    %c0_i32_0 = arith.constant 0 : i32
    %c0_i32_1 = arith.constant 0 : i32
    return %c0_i32, %c0_i32_0 : i32, i32
  }
  func.func @transform_6(%arg0: i32) -> (i32, i32) {
    %c0_i32 = arith.constant 0 : i32
    %c0_i32_0 = arith.constant 0 : i32
    %c0_i32_1 = arith.constant 0 : i32
    return %c0_i32, %c0_i32_0 : i32, i32
  }
  func.func @transform_7(%arg0: i32) -> (i32, i32, i32) {
    %c0_i32 = arith.constant 0 : i32
    %c0_i32_0 = arith.constant 0 : i32
    %c0_i32_1 = arith.constant 0 : i32
    %c0_i32_2 = arith.constant 0 : i32
    return %c0_i32, %c0_i32_0, %c0_i32_1 : i32, i32, i32
  }
  func.func @transform_8(%arg0: i32) -> (i32, i32) {
    %c0_i32 = arith.constant 0 : i32
    %c0_i32_0 = arith.constant 0 : i32
    %c0_i32_1 = arith.constant 0 : i32
    return %c0_i32, %c0_i32_0 : i32, i32
  }
  func.func @transform_9(%arg0: i32) -> (i32, i32, i32) {
    %c0_i32 = arith.constant 0 : i32
    %c0_i32_0 = arith.constant 0 : i32
    %c0_i32_1 = arith.constant 0 : i32
    %c0_i32_2 = arith.constant 0 : i32
    return %c0_i32, %c0_i32_0, %c0_i32_1 : i32, i32, i32
  }
  func.func @transform_10(%arg0: i32) -> (i32, i32) {
    %c0_i32 = arith.constant 0 : i32
    %c0_i32_0 = arith.constant 0 : i32
    %c0_i32_1 = arith.constant 0 : i32
    return %c0_i32, %c0_i32_0 : i32, i32
  }
  func.func @transform_11(%arg0: i32) -> (i32, i32, i32) {
    %c0_i32 = arith.constant 0 : i32
    %c0_i32_0 = arith.constant 0 : i32
    %c0_i32_1 = arith.constant 0 : i32
    %c0_i32_2 = arith.constant 0 : i32
    return %c0_i32, %c0_i32_0, %c0_i32_1 : i32, i32, i32
  }
  func.func @transform_12(%arg0: i32) -> (i32, i32) {
    %c0_i32 = arith.constant 0 : i32
    %c0_i32_0 = arith.constant 0 : i32
    %c0_i32_1 = arith.constant 0 : i32
    return %c0_i32, %c0_i32_0 : i32, i32
  }
  func.func @transform_13(%arg0: i32) -> (i32, i32) {
    %c0_i32 = arith.constant 0 : i32
    %c0_i32_0 = arith.constant 0 : i32
    %c0_i32_1 = arith.constant 0 : i32
    return %c0_i32, %c0_i32_0 : i32, i32
  }
  func.func @transform_14(%arg0: i32) -> (i32, i32) {
    %c0_i32 = arith.constant 0 : i32
    %c0_i32_0 = arith.constant 0 : i32
    %c0_i32_1 = arith.constant 0 : i32
    return %c0_i32, %c0_i32_0 : i32, i32
  }
  func.func @transform_15(%arg0: i32) -> (i32, i32) {
    %c0_i32 = arith.constant 0 : i32
    %c0_i32_0 = arith.constant 0 : i32
    %c0_i32_1 = arith.constant 0 : i32
    return %c0_i32, %c0_i32_0 : i32, i32
  }
  func.func @transform_16(%arg0: i32) -> (i32, i32, i32) {
    %c0_i32 = arith.constant 0 : i32
    %c0_i32_0 = arith.constant 0 : i32
    %c0_i32_1 = arith.constant 0 : i32
    %c0_i32_2 = arith.constant 0 : i32
    return %c0_i32, %c0_i32_0, %c0_i32_1 : i32, i32, i32
  }
  func.func @transform_17(%arg0: i32) -> (i32, i32) {
    %c0_i32 = arith.constant 0 : i32
    %c0_i32_0 = arith.constant 0 : i32
    %c0_i32_1 = arith.constant 0 : i32
    return %c0_i32, %c0_i32_0 : i32, i32
  }
  func.func @transform_18(%arg0: i32) -> (i32, i32) {
    %c0_i32 = arith.constant 0 : i32
    %c0_i32_0 = arith.constant 0 : i32
    %c0_i32_1 = arith.constant 0 : i32
    return %c0_i32, %c0_i32_0 : i32, i32
  }
  func.func @transform_19(%arg0: i32) -> (i32, i32) {
    %c0_i32 = arith.constant 0 : i32
    %c0_i32_0 = arith.constant 0 : i32
    %c0_i32_1 = arith.constant 0 : i32
    return %c0_i32, %c0_i32_0 : i32, i32
  }
  func.func @transform_20(%arg0: i32) -> (i32, i32) {
    %c0_i32 = arith.constant 0 : i32
    %c0_i32_0 = arith.constant 0 : i32
    %c0_i32_1 = arith.constant 0 : i32
    return %c0_i32, %c0_i32_0 : i32, i32
  }
  func.func @transform_21(%arg0: i32) -> (i32, i32, i32, i32) {
    %c0_i32 = arith.constant 0 : i32
    %c0_i32_0 = arith.constant 0 : i32
    %c0_i32_1 = arith.constant 0 : i32
    %c0_i32_2 = arith.constant 0 : i32
    return %arg0, %c0_i32, %c0_i32_0, %c0_i32_1 : i32, i32, i32, i32
  }
  func.func @transform_22(%arg0: i32) -> (i32, i32, i32) {
    %c0_i32 = arith.constant 0 : i32
    %c0_i32_0 = arith.constant 0 : i32
    %c0_i32_1 = arith.constant 0 : i32
    return %arg0, %c0_i32, %c0_i32_0 : i32, i32, i32
  }
}

</mosaic_0001>

<llo_original>
// kernel: next_stage_g_styled_forward.1
$region0: #{next_stage_g_styled_forward.1}
  #allocation0 [shape = 'u32[]', space=smem, size = 0x4, offset = 0x4, fixed_abs, tag = 'smem constant byte address 0x4 - core index']
  #allocation1 [shape = 'u32[144,128]{1,0:T(1,128)}', space=vmem, size = 0x12000, scoped, tag = 'internal scratch']
  #allocation2 [shape = 'f32[168,64]{1,0:T(8,128)}', space=vmem, size = 0x15000, scoped, tag = 'scratch operand']
  #allocation3 [shape = 'f32[440,32]{1,0:T(8,128)}', space=vmem, size = 0x37000, scoped, tag = 'scratch operand']
  %s0 = inlined_call_operand.vmem [shape: f32[2,8,8,32], index: 0, kind: input, shape index: {}]
  %s1 = inlined_call_operand.vmem [shape: f32[2,16,8], index: 1, kind: input, shape index: {}]
  %s2 = inlined_call_operand.vmem [shape: f32[2,8,1], index: 2, kind: input, shape index: {}]
  %s3 = inlined_call_operand.vmem [shape: f32[2,1,32], index: 3, kind: input, shape index: {}]
  %s4 = inlined_call_operand.vmem [shape: f32[2,8,256], index: 4, kind: input, shape index: {}]
  %s5 = inlined_call_operand.vmem [shape: bf16[440,64], index: 5, kind: input, shape index: {}]
  %s6 = inlined_call_operand.vmem [shape: f32[32,16], index: 6, kind: input, shape index: {}]
  %s7 = inlined_call_operand.vmem [shape: bf16[3,192,128], index: 7, kind: input, shape index: {}]
  %s8 = inlined_call_operand.vmem [shape: f32[1,128], index: 8, kind: input, shape index: {}]
  %s9 = inlined_call_operand.vmem [shape: bf16[3,192,64], index: 9, kind: input, shape index: {}]
  %s10 = inlined_call_operand.vmem [shape: f32[1,64], index: 10, kind: input, shape index: {}]
  %s11 = inlined_call_operand.vmem [shape: bf16[3,192,32], index: 11, kind: input, shape index: {}]
  %s12 = inlined_call_operand.vmem [shape: bf16[8,32], index: 12, kind: input, shape index: {}]
  %s13 = inlined_call_operand.vmem [shape: f32[1,32], index: 13, kind: input, shape index: {}]
  %s14 = inlined_call_operand.vmem [shape: f32[32,64], index: 14, kind: input, shape index: {}]
  %s15 = inlined_call_operand.vmem [shape: f32[1,64], index: 15, kind: input, shape index: {}]
  %s16 = inlined_call_operand.vmem [shape: bf16[3,96,32], index: 16, kind: input, shape index: {}]
  %s17 = inlined_call_operand.vmem [shape: bf16[8,32], index: 17, kind: input, shape index: {}]
  %s18 = inlined_call_operand.vmem [shape: f32[1,32], index: 18, kind: input, shape index: {}]
  %s19 = inlined_call_operand.vmem [shape: f32[32,64], index: 19, kind: input, shape index: {}]
  %s20 = inlined_call_operand.vmem [shape: f32[1,64], index: 20, kind: input, shape index: {}]
  %s21 = inlined_call_operand.hbm [shape: f32[2,16,16,32], index: 21, kind: output, shape index: {0}]
  %s22 = inlined_call_operand.vmem [shape: f32[2,8,64], index: 22, kind: output, shape index: {1}]
  %23 = xla_tuple %s21, %s22
  %s24 = sld [smem:[#allocation0]]
  $region125: #{next_stage_g_styled_forward.1} parent=0
    _
  %s26 = ssub.s32 1, %s24
  %s27 = scalar_select 0, %s26, %s24
  $region1: #{next_stage_g_styled_forward.1} parent=0
    #allocation4 [shape = 'u8[262144]{0}', space=vmem, size = 0x40000, scoped, tag = 'output window, operand 0']
    #allocation5 [shape = 's32[2]{0}', space=sflag, size = 0x8, scoped, tag = 'scoped memory for next_stage_g_styled_forward.1']
    %28 = vsyncpa [#allocation5], 0
    %s29 = scalar_lea.sflag [#allocation5], 1
    %30 = vsyncpa %s29, 0
    loop: start=0, step=1, limit=4
    $region2: #{next_stage_g_styled_forward.1} parent=1 // loop_pre_header
      _
    $region3: #{next_stage_g_styled_forward.1} parent=1 // loop_header
      %s32 = sphi 0, %s36
      %p33 = scmp.ge.s32.totalorder %s32, 4
      %s42 = sphi 0, %s44
      %s45 = sphi 0, %s42
      %s46 = sphi 0, %s45
      %s62 = sphi 0, %s46
      %s68 = sphi 0, %s70
      %s71 = sphi 0, %s68
      %s72 = sphi 0, %s71
      %s88 = sphi 0, %s72
      %s94 = sphi 0, %s96
      %s97 = sphi 0, %s94
      %s98 = sphi 0, %s97
      %s114 = sphi 0, %s98
      %s120 = sphi 0, %s122
      %s123 = sphi 0, %s120
      %s124 = sphi 0, %s123
      %s140 = sphi 0, %s124
      %s146 = sphi 0, %s148
      %s149 = sphi 0, %s146
      %s150 = sphi 0, %s149
      %s166 = sphi 0, %s150
      %s170 = sphi 0, %s170
      %s172 = sphi 0, %s170
      %s173 = sphi 0, %s172
      %s187 = sphi 0, %s173
      %s191 = sphi 0, %s191
      %s193 = sphi 0, %s191
      %s194 = sphi 0, %s193
      %s208 = sphi 0, %s194
      %s212 = sphi 0, %s212
      %s214 = sphi 0, %s212
      %s215 = sphi 0, %s214
      %s229 = sphi 0, %s215
      %s233 = sphi 0, %s233
      %s235 = sphi 0, %s233
      %s236 = sphi 0, %s235
      %s250 = sphi 0, %s236
      %s254 = sphi 0, %s254
      %s256 = sphi 0, %s254
      %s257 = sphi 0, %s256
      %s271 = sphi 0, %s257
      %s275 = sphi 0, %s275
      %s277 = sphi 0, %s275
      %s278 = sphi 0, %s277
      %s292 = sphi 0, %s278
      %s296 = sphi 0, %s296
      %s298 = sphi 0, %s296
      %s299 = sphi 0, %s298
      %s313 = sphi 0, %s299
      %s317 = sphi 0, %s317
      %s319 = sphi 0, %s317
      %s320 = sphi 0, %s319
      %s334 = sphi 0, %s320
      %s338 = sphi 0, %s338
      %s340 = sphi 0, %s338
      %s341 = sphi 0, %s340
      %s355 = sphi 0, %s341
      %s359 = sphi 0, %s359
      %s361 = sphi 0, %s359
      %s362 = sphi 0, %s361
      %s376 = sphi 0, %s362
      %s380 = sphi 0, %s380
      %s382 = sphi 0, %s380
      %s383 = sphi 0, %s382
      %s397 = sphi 0, %s383
      %s401 = sphi 0, %s401
      %s403 = sphi 0, %s401
      %s404 = sphi 0, %s403
      %s418 = sphi 0, %s404
      %s422 = sphi 0, %s422
      %s424 = sphi 0, %s422
      %s425 = sphi 0, %s424
      %s439 = sphi 0, %s425
      %s443 = sphi 0, %s443
      %s445 = sphi 0, %s443
      %s446 = sphi 0, %s445
      %s460 = sphi 0, %s446
      %s464 = sphi 0, %s464
      %s466 = sphi 0, %s464
      %s467 = sphi 0, %s466
      %s481 = sphi 0, %s467
      %s485 = sphi 0, %s485
      %s487 = sphi 0, %s485
      %s488 = sphi 0, %s487
      %s502 = sphi 0, %s488
      %s508 = sphi 0, %s510
      %s511 = sphi 0, %s508
      %s512 = sphi 0, %s511
      %s528 = sphi 0, %s512
      %s534 = sphi 0, %s536
      %s537 = sphi 0, %s534
      %s538 = sphi 0, %s537
      %s554 = sphi 0, %s538
    $region4: #{next_stage_g_styled_forward.1} parent=1 // loop_header_branch
      %35 = sbr.rel (%p33) target = $region8
    $region5: #{next_stage_g_styled_forward.1} parent=1 // loop_body
      %s37 = ssub.s32 %s32, 1
      %s38 = ssub.s32 %s32, 2
      %s39 = sadd.s32 %s32, 1
      %s40 = ssub.s32 %s32, %s39
      %p41 = scmp.eq.s32.totalorder %s40, 0
      %s43 = sadd.s32 %s42, 1
      %s44 = scalar_select %p41, %s42, %s43
      %p47 = pneg %p41
      %p48 = scmp.eq.s32.totalorder %s32, 1
      %p49 = por %p47, %p48
      %p50 = scmp.ne.s32.totalorder %s42, %s45
      %p51 = scmp.eq.s32.totalorder %s32, 0
      %p52 = por %p50, %p51
      %p53 = scmp.ne.s32.totalorder %s42, %s45
      %p54 = scmp.eq.s32.totalorder %s37, 1
      %p55 = por %p53, %p54
      %p56 = scmp.ne.s32.totalorder %s45, %s46
      %p57 = scmp.eq.s32.totalorder %s37, 0
      %p58 = por %p56, %p57
      %p59 = scmp.ne.s32.totalorder %s45, %s46
      %p60 = scmp.eq.s32.totalorder %s38, 1
      %p61 = por %p59, %p60
      %p63 = scmp.ne.s32.totalorder %s46, %s62
      %p64 = scmp.eq.s32.totalorder %s38, 0
      %p65 = por %p63, %p64
      %s66 = ssub.s32 %s32, %s39
      %p67 = scmp.eq.s32.totalorder %s66, 0
      %s69 = sadd.s32 %s68, 1
      %s70 = scalar_select %p67, %s68, %s69
      %p73 = pneg %p67
      %p74 = scmp.eq.s32.totalorder %s32, 1
      %p75 = por %p73, %p74
      %p76 = scmp.ne.s32.totalorder %s68, %s71
      %p77 = scmp.eq.s32.totalorder %s32, 0
      %p78 = por %p76, %p77
      %p79 = scmp.ne.s32.totalorder %s68, %s71
      %p80 = scmp.eq.s32.totalorder %s37, 1
      %p81 = por %p79, %p80
      %p82 = scmp.ne.s32.totalorder %s71, %s72
      %p83 = scmp.eq.s32.totalorder %s37, 0
      %p84 = por %p82, %p83
      %p85 = scmp.ne.s32.totalorder %s71, %s72
      %p86 = scmp.eq.s32.totalorder %s38, 1
      %p87 = por %p85, %p86
      %p89 = scmp.ne.s32.totalorder %s72, %s88
      %p90 = scmp.eq.s32.totalorder %s38, 0
      %p91 = por %p89, %p90
      %s92 = ssub.s32 %s32, %s39
      %p93 = scmp.eq.s32.totalorder %s92, 0
      %s95 = sadd.s32 %s94, 1
      %s96 = scalar_select %p93, %s94, %s95
      %p99 = pneg %p93
      %p100 = scmp.eq.s32.totalorder %s32, 1
      %p101 = por %p99, %p100
      %p102 = scmp.ne.s32.totalorder %s94, %s97
      %p103 = scmp.eq.s32.totalorder %s32, 0
      %p104 = por %p102, %p103
      %p105 = scmp.ne.s32.totalorder %s94, %s97
      %p106 = scmp.eq.s32.totalorder %s37, 1
      %p107 = por %p105, %p106
      %p108 = scmp.ne.s32.totalorder %s97, %s98
      %p109 = scmp.eq.s32.totalorder %s37, 0
      %p110 = por %p108, %p109
      %p111 = scmp.ne.s32.totalorder %s97, %s98
      %p112 = scmp.eq.s32.totalorder %s38, 1
      %p113 = por %p111, %p112
      %p115 = scmp.ne.s32.totalorder %s98, %s114
      %p116 = scmp.eq.s32.totalorder %s38, 0
      %p117 = por %p115, %p116
      %s118 = ssub.s32 %s32, %s39
      %p119 = scmp.eq.s32.totalorder %s118, 0
      %s121 = sadd.s32 %s120, 1
      %s122 = scalar_select %p119, %s120, %s121
      %p125 = pneg %p119
      %p126 = scmp.eq.s32.totalorder %s32, 1
      %p127 = por %p125, %p126
      %p128 = scmp.ne.s32.totalorder %s120, %s123
      %p129 = scmp.eq.s32.totalorder %s32, 0
      %p130 = por %p128, %p129
      %p131 = scmp.ne.s32.totalorder %s120, %s123
      %p132 = scmp.eq.s32.totalorder %s37, 1
      %p133 = por %p131, %p132
      %p134 = scmp.ne.s32.totalorder %s123, %s124
      %p135 = scmp.eq.s32.totalorder %s37, 0
      %p136 = por %p134, %p135
      %p137 = scmp.ne.s32.totalorder %s123, %s124
      %p138 = scmp.eq.s32.totalorder %s38, 1
      %p139 = por %p137, %p138
      %p141 = scmp.ne.s32.totalorder %s124, %s140
      %p142 = scmp.eq.s32.totalorder %s38, 0
      %p143 = por %p141, %p142
      %s144 = ssub.s32 %s32, %s39
      %p145 = scmp.eq.s32.totalorder %s144, 0
      %s147 = sadd.s32 %s146, 1
      %s148 = scalar_select %p145, %s146, %s147
      %p151 = pneg %p145
      %p152 = scmp.eq.s32.totalorder %s32, 1
      %p153 = por %p151, %p152
      %p154 = scmp.ne.s32.totalorder %s146, %s149
      %p155 = scmp.eq.s32.totalorder %s32, 0
      %p156 = por %p154, %p155
      %p157 = scmp.ne.s32.totalorder %s146, %s149
      %p158 = scmp.eq.s32.totalorder %s37, 1
      %p159 = por %p157, %p158
      %p160 = scmp.ne.s32.totalorder %s149, %s150
      %p161 = scmp.eq.s32.totalorder %s37, 0
      %p162 = por %p160, %p161
      %p163 = scmp.ne.s32.totalorder %s149, %s150
      %p164 = scmp.eq.s32.totalorder %s38, 1
      %p165 = por %p163, %p164
      %p167 = scmp.ne.s32.totalorder %s150, %s166
      %p168 = scmp.eq.s32.totalorder %s38, 0
      %p169 = por %p167, %p168
      %s171 = sadd.s32 %s170, 1
      %p174 = scmp.eq.s32.totalorder %s32, 1
      %p175 = scmp.ne.s32.totalorder %s170, %s172
      %p176 = scmp.eq.s32.totalorder %s32, 0
      %p177 = por %p175, %p176
      %p178 = scmp.ne.s32.totalorder %s170, %s172
      %p179 = scmp.eq.s32.totalorder %s37, 1
      %p180 = por %p178, %p179
      %p181 = scmp.ne.s32.totalorder %s172, %s173
      %p182 = scmp.eq.s32.totalorder %s37, 0
      %p183 = por %p181, %p182
      %p184 = scmp.ne.s32.totalorder %s172, %s173
      %p185 = scmp.eq.s32.totalorder %s38, 1
      %p186 = por %p184, %p185
      %p188 = scmp.ne.s32.totalorder %s173, %s187
      %p189 = scmp.eq.s32.totalorder %s38, 0
      %p190 = por %p188, %p189
      %s192 = sadd.s32 %s191, 1
      %p195 = scmp.eq.s32.totalorder %s32, 1
      %p196 = scmp.ne.s32.totalorder %s191, %s193
      %p197 = scmp.eq.s32.totalorder %s32, 0
      %p198 = por %p196, %p197
      %p199 = scmp.ne.s32.totalorder %s191, %s193
      %p200 = scmp.eq.s32.totalorder %s37, 1
      %p201 = por %p199, %p200
      %p202 = scmp.ne.s32.totalorder %s193, %s194
      %p203 = scmp.eq.s32.totalorder %s37, 0
      %p204 = por %p202, %p203
      %p205 = scmp.ne.s32.totalorder %s193, %s194
      %p206 = scmp.eq.s32.totalorder %s38, 1
      %p207 = por %p205, %p206
      %p209 = scmp.ne.s32.totalorder %s194, %s208
      %p210 = scmp.eq.s32.totalorder %s38, 0
      %p211 = por %p209, %p210
      %s213 = sadd.s32 %s212, 1
      %p216 = scmp.eq.s32.totalorder %s32, 1
      %p217 = scmp.ne.s32.totalorder %s212, %s214
      %p218 = scmp.eq.s32.totalorder %s32, 0
      %p219 = por %p217, %p218
      %p220 = scmp.ne.s32.totalorder %s212, %s214
      %p221 = scmp.eq.s32.totalorder %s37, 1
      %p222 = por %p220, %p221
      %p223 = scmp.ne.s32.totalorder %s214, %s215
      %p224 = scmp.eq.s32.totalorder %s37, 0
      %p225 = por %p223, %p224
      %p226 = scmp.ne.s32.totalorder %s214, %s215
      %p227 = scmp.eq.s32.totalorder %s38, 1
      %p228 = por %p226, %p227
      %p230 = scmp.ne.s32.totalorder %s215, %s229
      %p231 = scmp.eq.s32.totalorder %s38, 0
      %p232 = por %p230, %p231
      %s234 = sadd.s32 %s233, 1
      %p237 = scmp.eq.s32.totalorder %s32, 1
      %p238 = scmp.ne.s32.totalorder %s233, %s235
      %p239 = scmp.eq.s32.totalorder %s32, 0
      %p240 = por %p238, %p239
      %p241 = scmp.ne.s32.totalorder %s233, %s235
      %p242 = scmp.eq.s32.totalorder %s37, 1
      %p243 = por %p241, %p242
      %p244 = scmp.ne.s32.totalorder %s235, %s236
      %p245 = scmp.eq.s32.totalorder %s37, 0
      %p246 = por %p244, %p245
      %p247 = scmp.ne.s32.totalorder %s235, %s236
      %p248 = scmp.eq.s32.totalorder %s38, 1
      %p249 = por %p247, %p248
      %p251 = scmp.ne.s32.totalorder %s236, %s250
      %p252 = scmp.eq.s32.totalorder %s38, 0
      %p253 = por %p251, %p252
      %s255 = sadd.s32 %s254, 1
      %p258 = scmp.eq.s32.totalorder %s32, 1
      %p259 = scmp.ne.s32.totalorder %s254, %s256
      %p260 = scmp.eq.s32.totalorder %s32, 0
      %p261 = por %p259, %p260
      %p262 = scmp.ne.s32.totalorder %s254, %s256
      %p263 = scmp.eq.s32.totalorder %s37, 1
      %p264 = por %p262, %p263
      %p265 = scmp.ne.s32.totalorder %s256, %s257
      %p266 = scmp.eq.s32.totalorder %s37, 0
      %p267 = por %p265, %p266
      %p268 = scmp.ne.s32.totalorder %s256, %s257
      %p269 = scmp.eq.s32.totalorder %s38, 1
      %p270 = por %p268, %p269
      %p272 = scmp.ne.s32.totalorder %s257, %s271
      %p273 = scmp.eq.s32.totalorder %s38, 0
      %p274 = por %p272, %p273
      %s276 = sadd.s32 %s275, 1
      %p279 = scmp.eq.s32.totalorder %s32, 1
      %p280 = scmp.ne.s32.totalorder %s275, %s277
      %p281 = scmp.eq.s32.totalorder %s32, 0
      %p282 = por %p280, %p281
      %p283 = scmp.ne.s32.totalorder %s275, %s277
      %p284 = scmp.eq.s32.totalorder %s37, 1
      %p285 = por %p283, %p284
      %p286 = scmp.ne.s32.totalorder %s277, %s278
      %p287 = scmp.eq.s32.totalorder %s37, 0
      %p288 = por %p286, %p287
      %p289 = scmp.ne.s32.totalorder %s277, %s278
      %p290 = scmp.eq.s32.totalorder %s38, 1
      %p291 = por %p289, %p290
      %p293 = scmp.ne.s32.totalorder %s278, %s292
      %p294 = scmp.eq.s32.totalorder %s38, 0
      %p295 = por %p293, %p294
      %s297 = sadd.s32 %s296, 1
      %p300 = scmp.eq.s32.totalorder %s32, 1
      %p301 = scmp.ne.s32.totalorder %s296, %s298
      %p302 = scmp.eq.s32.totalorder %s32, 0
      %p303 = por %p301, %p302
      %p304 = scmp.ne.s32.totalorder %s296, %s298
      %p305 = scmp.eq.s32.totalorder %s37, 1
      %p306 = por %p304, %p305
      %p307 = scmp.ne.s32.totalorder %s298, %s299
      %p308 = scmp.eq.s32.totalorder %s37, 0
      %p309 = por %p307, %p308
      %p310 = scmp.ne.s32.totalorder %s298, %s299
      %p311 = scmp.eq.s32.totalorder %s38, 1
      %p312 = por %p310, %p311
      %p314 = scmp.ne.s32.totalorder %s299, %s313
      %p315 = scmp.eq.s32.totalorder %s38, 0
      %p316 = por %p314, %p315
      %s318 = sadd.s32 %s317, 1
      %p321 = scmp.eq.s32.totalorder %s32, 1
      %p322 = scmp.ne.s32.totalorder %s317, %s319
      %p323 = scmp.eq.s32.totalorder %s32, 0
      %p324 = por %p322, %p323
      %p325 = scmp.ne.s32.totalorder %s317, %s319
      %p326 = scmp.eq.s32.totalorder %s37, 1
      %p327 = por %p325, %p326
      %p328 = scmp.ne.s32.totalorder %s319, %s320
      %p329 = scmp.eq.s32.totalorder %s37, 0
      %p330 = por %p328, %p329
      %p331 = scmp.ne.s32.totalorder %s319, %s320
      %p332 = scmp.eq.s32.totalorder %s38, 1
      %p333 = por %p331, %p332
      %p335 = scmp.ne.s32.totalorder %s320, %s334
      %p336 = scmp.eq.s32.totalorder %s38, 0
      %p337 = por %p335, %p336
      %s339 = sadd.s32 %s338, 1
      %p342 = scmp.eq.s32.totalorder %s32, 1
      %p343 = scmp.ne.s32.totalorder %s338, %s340
      %p344 = scmp.eq.s32.totalorder %s32, 0
      %p345 = por %p343, %p344
      %p346 = scmp.ne.s32.totalorder %s338, %s340
      %p347 = scmp.eq.s32.totalorder %s37, 1
      %p348 = por %p346, %p347
      %p349 = scmp.ne.s32.totalorder %s340, %s341
      %p350 = scmp.eq.s32.totalorder %s37, 0
      %p351 = por %p349, %p350
      %p352 = scmp.ne.s32.totalorder %s340, %s341
      %p353 = scmp.eq.s32.totalorder %s38, 1
      %p354 = por %p352, %p353
      %p356 = scmp.ne.s32.totalorder %s341, %s355
      %p357 = scmp.eq.s32.totalorder %s38, 0
      %p358 = por %p356, %p357
      %s360 = sadd.s32 %s359, 1
      %p363 = scmp.eq.s32.totalorder %s32, 1
      %p364 = scmp.ne.s32.totalorder %s359, %s361
      %p365 = scmp.eq.s32.totalorder %s32, 0
      %p366 = por %p364, %p365
      %p367 = scmp.ne.s32.totalorder %s359, %s361
      %p368 = scmp.eq.s32.totalorder %s37, 1
      %p369 = por %p367, %p368
      %p370 = scmp.ne.s32.totalorder %s361, %s362
      %p371 = scmp.eq.s32.totalorder %s37, 0
      %p372 = por %p370, %p371
      %p373 = scmp.ne.s32.totalorder %s361, %s362
      %p374 = scmp.eq.s32.totalorder %s38, 1
      %p375 = por %p373, %p374
      %p377 = scmp.ne.s32.totalorder %s362, %s376
      %p378 = scmp.eq.s32.totalorder %s38, 0
      %p379 = por %p377, %p378
      %s381 = sadd.s32 %s380, 1
      %p384 = scmp.eq.s32.totalorder %s32, 1
      %p385 = scmp.ne.s32.totalorder %s380, %s382
      %p386 = scmp.eq.s32.totalorder %s32, 0
      %p387 = por %p385, %p386
      %p388 = scmp.ne.s32.totalorder %s380, %s382
      %p389 = scmp.eq.s32.totalorder %s37, 1
      %p390 = por %p388, %p389
      %p391 = scmp.ne.s32.totalorder %s382, %s383
      %p392 = scmp.eq.s32.totalorder %s37, 0
      %p393 = por %p391, %p392
      %p394 = scmp.ne.s32.totalorder %s382, %s383
      %p395 = scmp.eq.s32.totalorder %s38, 1
      %p396 = por %p394, %p395
      %p398 = scmp.ne.s32.totalorder %s383, %s397
      %p399 = scmp.eq.s32.totalorder %s38, 0
      %p400 = por %p398, %p399
      %s402 = sadd.s32 %s401, 1
      %p405 = scmp.eq.s32.totalorder %s32, 1
      %p406 = scmp.ne.s32.totalorder %s401, %s403
      %p407 = scmp.eq.s32.totalorder %s32, 0
      %p408 = por %p406, %p407
      %p409 = scmp.ne.s32.totalorder %s401, %s403
      %p410 = scmp.eq.s32.totalorder %s37, 1
      %p411 = por %p409, %p410
      %p412 = scmp.ne.s32.totalorder %s403, %s404
      %p413 = scmp.eq.s32.totalorder %s37, 0
      %p414 = por %p412, %p413
      %p415 = scmp.ne.s32.totalorder %s403, %s404
      %p416 = scmp.eq.s32.totalorder %s38, 1
      %p417 = por %p415, %p416
      %p419 = scmp.ne.s32.totalorder %s404, %s418
      %p420 = scmp.eq.s32.totalorder %s38, 0
      %p421 = por %p419, %p420
      %s423 = sadd.s32 %s422, 1
      %p426 = scmp.eq.s32.totalorder %s32, 1
      %p427 = scmp.ne.s32.totalorder %s422, %s424
      %p428 = scmp.eq.s32.totalorder %s32, 0
      %p429 = por %p427, %p428
      %p430 = scmp.ne.s32.totalorder %s422, %s424
      %p431 = scmp.eq.s32.totalorder %s37, 1
      %p432 = por %p430, %p431
      %p433 = scmp.ne.s32.totalorder %s424, %s425
      %p434 = scmp.eq.s32.totalorder %s37, 0
      %p435 = por %p433, %p434
      %p436 = scmp.ne.s32.totalorder %s424, %s425
      %p437 = scmp.eq.s32.totalorder %s38, 1
      %p438 = por %p436, %p437
      %p440 = scmp.ne.s32.totalorder %s425, %s439
      %p441 = scmp.eq.s32.totalorder %s38, 0
      %p442 = por %p440, %p441
      %s444 = sadd.s32 %s443, 1
      %p447 = scmp.eq.s32.totalorder %s32, 1
      %p448 = scmp.ne.s32.totalorder %s443, %s445
      %p449 = scmp.eq.s32.totalorder %s32, 0
      %p450 = por %p448, %p449
      %p451 = scmp.ne.s32.totalorder %s443, %s445
      %p452 = scmp.eq.s32.totalorder %s37, 1
      %p453 = por %p451, %p452
      %p454 = scmp.ne.s32.totalorder %s445, %s446
      %p455 = scmp.eq.s32.totalorder %s37, 0
      %p456 = por %p454, %p455
      %p457 = scmp.ne.s32.totalorder %s445, %s446
      %p458 = scmp.eq.s32.totalorder %s38, 1
      %p459 = por %p457, %p458
      %p461 = scmp.ne.s32.totalorder %s446, %s460
      %p462 = scmp.eq.s32.totalorder %s38, 0
      %p463 = por %p461, %p462
      %s465 = sadd.s32 %s464, 1
      %p468 = scmp.eq.s32.totalorder %s32, 1
      %p469 = scmp.ne.s32.totalorder %s464, %s466
      %p470 = scmp.eq.s32.totalorder %s32, 0
      %p471 = por %p469, %p470
      %p472 = scmp.ne.s32.totalorder %s464, %s466
      %p473 = scmp.eq.s32.totalorder %s37, 1
      %p474 = por %p472, %p473
      %p475 = scmp.ne.s32.totalorder %s466, %s467
      %p476 = scmp.eq.s32.totalorder %s37, 0
      %p477 = por %p475, %p476
      %p478 = scmp.ne.s32.totalorder %s466, %s467
      %p479 = scmp.eq.s32.totalorder %s38, 1
      %p480 = por %p478, %p479
      %p482 = scmp.ne.s32.totalorder %s467, %s481
      %p483 = scmp.eq.s32.totalorder %s38, 0
      %p484 = por %p482, %p483
      %s486 = sadd.s32 %s485, 1
      %p489 = scmp.eq.s32.totalorder %s32, 1
      %p490 = scmp.ne.s32.totalorder %s485, %s487
      %p491 = scmp.eq.s32.totalorder %s32, 0
      %p492 = por %p490, %p491
      %p493 = scmp.ne.s32.totalorder %s485, %s487
      %p494 = scmp.eq.s32.totalorder %s37, 1
      %p495 = por %p493, %p494
      %p496 = scmp.ne.s32.totalorder %s487, %s488
      %p497 = scmp.eq.s32.totalorder %s37, 0
      %p498 = por %p496, %p497
      %p499 = scmp.ne.s32.totalorder %s487, %s488
      %p500 = scmp.eq.s32.totalorder %s38, 1
      %p501 = por %p499, %p500
      %p503 = scmp.ne.s32.totalorder %s488, %s502
      %p504 = scmp.eq.s32.totalorder %s38, 0
      %p505 = por %p503, %p504
      %s506 = ssub.s32 %s32, %s39
      %p507 = scmp.eq.s32.totalorder %s506, 0
      %s509 = sadd.s32 %s508, 1
      %s510 = scalar_select %p507, %s508, %s509
      %p513 = pneg %p507
      %p514 = scmp.eq.s32.totalorder %s32, 1
      %p515 = por %p513, %p514
      %p516 = scmp.ne.s32.totalorder %s508, %s511
      %p517 = scmp.eq.s32.totalorder %s32, 0
      %p518 = por %p516, %p517
      %p519 = scmp.ne.s32.totalorder %s508, %s511
      %p520 = scmp.eq.s32.totalorder %s37, 1
      %p521 = por %p519, %p520
      %p522 = scmp.ne.s32.totalorder %s511, %s512
      %p523 = scmp.eq.s32.totalorder %s37, 0
      %p524 = por %p522, %p523
      %p525 = scmp.ne.s32.totalorder %s511, %s512
      %p526 = scmp.eq.s32.totalorder %s38, 1
      %p527 = por %p525, %p526
      %p529 = scmp.ne.s32.totalorder %s512, %s528
      %p530 = scmp.eq.s32.totalorder %s38, 0
      %p531 = por %p529, %p530
      %s532 = ssub.s32 %s32, %s39
      %p533 = scmp.eq.s32.totalorder %s532, 0
      %s535 = sadd.s32 %s534, 1
      %s536 = scalar_select %p533, %s534, %s535
      %p539 = pneg %p533
      %p540 = scmp.eq.s32.totalorder %s32, 1
      %p541 = por %p539, %p540
      %p542 = scmp.ne.s32.totalorder %s534, %s537
      %p543 = scmp.eq.s32.totalorder %s32, 0
      %p544 = por %p542, %p543
      %p545 = scmp.ne.s32.totalorder %s534, %s537
      %p546 = scmp.eq.s32.totalorder %s37, 1
      %p547 = por %p545, %p546
      %p548 = scmp.ne.s32.totalorder %s537, %s538
      %p549 = scmp.eq.s32.totalorder %s37, 0
      %p550 = por %p548, %p549
      %p551 = scmp.ne.s32.totalorder %s537, %s538
      %p552 = scmp.eq.s32.totalorder %s38, 1
      %p553 = por %p551, %p552
      %p555 = scmp.ne.s32.totalorder %s538, %s554
      %p556 = scmp.eq.s32.totalorder %s38, 0
      %p557 = por %p555, %p556
      %p558 = scmp.le.s32.totalorder 1, %s32
      %p559 = scmp.lt.s32.totalorder %s32, 3
      %p560 = pnand %p558, %p559
      %p561 = pneg %p560
      // Predicated region
      $region9: #{next_stage_g_styled_forward.1} parent=5 // pred_check
        _
      $region10: #{next_stage_g_styled_forward.1} parent=5 // pred_check_branch
        %563 = sbr.rel (%p560) target = $region12
      $region11: #{next_stage_g_styled_forward.1} parent=5 // pred_region
        %s564 = ssub.s32 %s32, 1
        // Predicated region
        $region13: #{next_stage_g_styled_forward.1} parent=11 // pred_check
          %p565 = pneg %p183
        $region14: #{next_stage_g_styled_forward.1} parent=11 // pred_check_branch
          %567 = sbr.rel (%p565) target = $region16
        $region15: #{next_stage_g_styled_forward.1} parent=11 // pred_region
          _
        $region16: #{next_stage_g_styled_forward.1} parent=11 // pred_fallthru
          _
        // Predicated region
        $region17: #{next_stage_g_styled_forward.1} parent=11 // pred_check
          %p568 = pneg %p204
        $region18: #{next_stage_g_styled_forward.1} parent=11 // pred_check_branch
          %570 = sbr.rel (%p568) target = $region20
        $region19: #{next_stage_g_styled_forward.1} parent=11 // pred_region
          _
        $region20: #{next_stage_g_styled_forward.1} parent=11 // pred_fallthru
          _
        // Predicated region
        $region21: #{next_stage_g_styled_forward.1} parent=11 // pred_check
          %p571 = pneg %p225
        $region22: #{next_stage_g_styled_forward.1} parent=11 // pred_check_branch
          %573 = sbr.rel (%p571) target = $region24
        $region23: #{next_stage_g_styled_forward.1} parent=11 // pred_region
          _
        $region24: #{next_stage_g_styled_forward.1} parent=11 // pred_fallthru
          _
        // Predicated region
        $region25: #{next_stage_g_styled_forward.1} parent=11 // pred_check
          %p574 = pneg %p246
        $region26: #{next_stage_g_styled_forward.1} parent=11 // pred_check_branch
          %576 = sbr.rel (%p574) target = $region28
        $region27: #{next_stage_g_styled_forward.1} parent=11 // pred_region
          _
        $region28: #{next_stage_g_styled_forward.1} parent=11 // pred_fallthru
          _
        // Predicated region
        $region29: #{next_stage_g_styled_forward.1} parent=11 // pred_check
          %p577 = pneg %p267
        $region30: #{next_stage_g_styled_forward.1} parent=11 // pred_check_branch
          %579 = sbr.rel (%p577) target = $region32
        $region31: #{next_stage_g_styled_forward.1} parent=11 // pred_region
          _
        $region32: #{next_stage_g_styled_forward.1} parent=11 // pred_fallthru
          _
        // Predicated region
        $region33: #{next_stage_g_styled_forward.1} parent=11 // pred_check
          %p580 = pneg %p288
        $region34: #{next_stage_g_styled_forward.1} parent=11 // pred_check_branch
          %582 = sbr.rel (%p580) target = $region36
        $region35: #{next_stage_g_styled_forward.1} parent=11 // pred_region
          _
        $region36: #{next_stage_g_styled_forward.1} parent=11 // pred_fallthru
          _
        // Predicated region
        $region37: #{next_stage_g_styled_forward.1} parent=11 // pred_check
          %p583 = pneg %p309
        $region38: #{next_stage_g_styled_forward.1} parent=11 // pred_check_branch
          %585 = sbr.rel (%p583) target = $region40
        $region39: #{next_stage_g_styled_forward.1} parent=11 // pred_region
          _
        $region40: #{next_stage_g_styled_forward.1} parent=11 // pred_fallthru
          _
        // Predicated region
        $region41: #{next_stage_g_styled_forward.1} parent=11 // pred_check
          %p586 = pneg %p330
        $region42: #{next_stage_g_styled_forward.1} parent=11 // pred_check_branch
          %588 = sbr.rel (%p586) target = $region44
        $region43: #{next_stage_g_styled_forward.1} parent=11 // pred_region
          _
        $region44: #{next_stage_g_styled_forward.1} parent=11 // pred_fallthru
          _
        // Predicated region
        $region45: #{next_stage_g_styled_forward.1} parent=11 // pred_check
          %p589 = pneg %p351
        $region46: #{next_stage_g_styled_forward.1} parent=11 // pred_check_branch
          %591 = sbr.rel (%p589) target = $region48
        $region47: #{next_stage_g_styled_forward.1} parent=11 // pred_region
          _
        $region48: #{next_stage_g_styled_forward.1} parent=11 // pred_fallthru
          _
        // Predicated region
        $region49: #{next_stage_g_styled_forward.1} parent=11 // pred_check
          %p592 = pneg %p372
        $region50: #{next_stage_g_styled_forward.1} parent=11 // pred_check_branch
          %594 = sbr.rel (%p592) target = $region52
        $region51: #{next_stage_g_styled_forward.1} parent=11 // pred_region
          _
        $region52: #{next_stage_g_styled_forward.1} parent=11 // pred_fallthru
          _
        // Predicated region
        $region53: #{next_stage_g_styled_forward.1} parent=11 // pred_check
          %p595 = pneg %p393
        $region54: #{next_stage_g_styled_forward.1} parent=11 // pred_check_branch
          %597 = sbr.rel (%p595) target = $region56
        $region55: #{next_stage_g_styled_forward.1} parent=11 // pred_region
          _
        $region56: #{next_stage_g_styled_forward.1} parent=11 // pred_fallthru
          _
        // Predicated region
        $region57: #{next_stage_g_styled_forward.1} parent=11 // pred_check
          %p598 = pneg %p414
        $region58: #{next_stage_g_styled_forward.1} parent=11 // pred_check_branch
          %600 = sbr.rel (%p598) target = $region60
        $region59: #{next_stage_g_styled_forward.1} parent=11 // pred_region
          _
        $region60: #{next_stage_g_styled_forward.1} parent=11 // pred_fallthru
          _
        // Predicated region
        $region61: #{next_stage_g_styled_forward.1} parent=11 // pred_check
          %p601 = pneg %p435
        $region62: #{next_stage_g_styled_forward.1} parent=11 // pred_check_branch
          %603 = sbr.rel (%p601) target = $region64
        $region63: #{next_stage_g_styled_forward.1} parent=11 // pred_region
          _
        $region64: #{next_stage_g_styled_forward.1} parent=11 // pred_fallthru
          _
        // Predicated region
        $region65: #{next_stage_g_styled_forward.1} parent=11 // pred_check
          %p604 = pneg %p456
        $region66: #{next_stage_g_styled_forward.1} parent=11 // pred_check_branch
          %606 = sbr.rel (%p604) target = $region68
        $region67: #{next_stage_g_styled_forward.1} parent=11 // pred_region
          _
        $region68: #{next_stage_g_styled_forward.1} parent=11 // pred_fallthru
          _
        // Predicated region
        $region69: #{next_stage_g_styled_forward.1} parent=11 // pred_check
          %p607 = pneg %p477
        $region70: #{next_stage_g_styled_forward.1} parent=11 // pred_check_branch
          %609 = sbr.rel (%p607) target = $region72
        $region71: #{next_stage_g_styled_forward.1} parent=11 // pred_region
          _
        $region72: #{next_stage_g_styled_forward.1} parent=11 // pred_fallthru
          _
        // Predicated region
        $region73: #{next_stage_g_styled_forward.1} parent=11 // pred_check
          %p610 = pneg %p498
        $region74: #{next_stage_g_styled_forward.1} parent=11 // pred_check_branch
          %612 = sbr.rel (%p610) target = $region76
        $region75: #{next_stage_g_styled_forward.1} parent=11 // pred_region
          _
        $region76: #{next_stage_g_styled_forward.1} parent=11 // pred_fallthru
          _
      $region12: #{next_stage_g_styled_forward.1} parent=5 // pred_fallthru
        _
      %p613 = scmp.lt.s32.totalorder %s32, 2
      // Predicated region
      $region77: #{next_stage_g_styled_forward.1} parent=5 // pred_check
        %p614 = pneg %p613
      $region78: #{next_stage_g_styled_forward.1} parent=5 // pred_check_branch
        %616 = sbr.rel (%p614) target = $region80
      $region79: #{next_stage_g_styled_forward.1} parent=5 // pred_region
        // Predicated region
        $region81: #{next_stage_g_styled_forward.1} parent=79 // pred_check
          %p617 = pneg %p52
        $region82: #{next_stage_g_styled_forward.1} parent=79 // pred_check_branch
          %619 = sbr.rel (%p617) target = $region84
        $region83: #{next_stage_g_styled_forward.1} parent=79 // pred_region
          %p620 = scmp.lt.s32.totalorder %s32, 1
          %s621 = scalar_select %p620, %s32, 1
          %s622 = smul.addr %s621, 8
          %s623 = smul.addr %s622, 8
          %s624 = scalar_lea.vmem %s0, %s623
        $region84: #{next_stage_g_styled_forward.1} parent=79 // pred_fallthru
          _
        // Predicated region
        $region85: #{next_stage_g_styled_forward.1} parent=79 // pred_check
          %p625 = pneg %p78
        $region86: #{next_stage_g_styled_forward.1} parent=79 // pred_check_branch
          %627 = sbr.rel (%p625) target = $region88
        $region87: #{next_stage_g_styled_forward.1} parent=79 // pred_region
          %p628 = scmp.lt.s32.totalorder %s32, 1
          %s629 = scalar_select %p628, %s32, 1
          %s630 = smul.addr %s629, 2
          %s631 = smul.addr %s630, 8
          %s632 = scalar_lea.vmem %s1, %s631
        $region88: #{next_stage_g_styled_forward.1} parent=79 // pred_fallthru
          _
        // Predicated region
        $region89: #{next_stage_g_styled_forward.1} parent=79 // pred_check
          %p633 = pneg %p104
        $region90: #{next_stage_g_styled_forward.1} parent=79 // pred_check_branch
          %635 = sbr.rel (%p633) target = $region92
        $region91: #{next_stage_g_styled_forward.1} parent=79 // pred_region
          %p636 = scmp.lt.s32.totalorder %s32, 1
          %s637 = scalar_select %p636, %s32, 1
          %s638 = smul.addr %s637, 8
          %s639 = scalar_lea.vmem %s2, %s638
        $region92: #{next_stage_g_styled_forward.1} parent=79 // pred_fallthru
          _
        // Predicated region
        $region93: #{next_stage_g_styled_forward.1} parent=79 // pred_check
          %p640 = pneg %p130
        $region94: #{next_stage_g_styled_forward.1} parent=79 // pred_check_branch
          %642 = sbr.rel (%p640) target = $region96
        $region95: #{next_stage_g_styled_forward.1} parent=79 // pred_region
          %p643 = scmp.lt.s32.totalorder %s32, 1
          %s644 = scalar_select %p643, %s32, 1
          %s645 = scalar_lea.vmem %s3, %s644
        $region96: #{next_stage_g_styled_forward.1} parent=79 // pred_fallthru
          _
        // Predicated region
        $region97: #{next_stage_g_styled_forward.1} parent=79 // pred_check
          %p646 = pneg %p156
        $region98: #{next_stage_g_styled_forward.1} parent=79 // pred_check_branch
          %648 = sbr.rel (%p646) target = $region100
        $region99: #{next_stage_g_styled_forward.1} parent=79 // pred_region
          %p649 = scmp.lt.s32.totalorder %s32, 1
          %s650 = scalar_select %p649, %s32, 1
          %s651 = smul.addr %s650, 2
          %s652 = smul.addr %s651, 8
          %s653 = scalar_lea.vmem %s4, %s652
        $region100: #{next_stage_g_styled_forward.1} parent=79 // pred_fallthru
          _
      $region80: #{next_stage_g_styled_forward.1} parent=5 // pred_fallthru
        _
      %p654 = scmp.le.s32.totalorder 1, %s32
      %p655 = scmp.lt.s32.totalorder %s32, 3
      %p656 = pnand %p654, %p655
      %p657 = pneg %p656
      // Predicated region
      $region101: #{next_stage_g_styled_forward.1} parent=5 // pred_check
        _
      $region102: #{next_stage_g_styled_forward.1} parent=5 // pred_check_branch
        %659 = sbr.rel (%p656) target = $region104
      $region103: #{next_stage_g_styled_forward.1} parent=5 // pred_region
        %s660 = ssub.s32 %s32, 1
        %p661 = scmp.lt.s32.totalorder %s37, 1
        %s662 = scalar_select %p661, %s37, 1
        %s663 = smul.addr %s662, 8
        %s664 = smul.addr %s663, 8
        %s665 = scalar_lea.vmem %s0, %s664
        %p666 = pneg %p58
        %p667 = pneg %p55
        %p668 = scmp.lt.s32.totalorder %s37, 1
        %s669 = scalar_select %p668, %s37, 1
        %s670 = smul.addr %s669, 2
        %s671 = smul.addr %s670, 8
        %s672 = scalar_lea.vmem %s1, %s671
        %p673 = pneg %p84
        %p674 = pneg %p81
        %p675 = scmp.lt.s32.totalorder %s37, 1
        %s676 = scalar_select %p675, %s37, 1
        %s677 = smul.addr %s676, 8
        %s678 = scalar_lea.vmem %s2, %s677
        %p679 = pneg %p110
        %p680 = pneg %p107
        %p681 = scmp.lt.s32.totalorder %s37, 1
        %s682 = scalar_select %p681, %s37, 1
        %s683 = scalar_lea.vmem %s3, %s682
        %p684 = pneg %p136
        %p685 = pneg %p133
        %p686 = scmp.lt.s32.totalorder %s37, 1
        %s687 = scalar_select %p686, %s37, 1
        %s688 = smul.addr %s687, 2
        %s689 = smul.addr %s688, 8
        %s690 = scalar_lea.vmem %s4, %s689
        %p691 = pneg %p162
        %p692 = pneg %p159
        %p693 = pneg %p183
        %p694 = pneg %p180
        %p695 = pneg %p204
        %p696 = pneg %p201
        %p697 = pneg %p225
        %p698 = pneg %p222
        %p699 = pneg %p246
        %p700 = pneg %p243
        %p701 = pneg %p267
        %p702 = pneg %p264
        %p703 = pneg %p288
        %p704 = pneg %p285
        %p705 = pneg %p309
        %p706 = pneg %p306
        %p707 = pneg %p330
        %p708 = pneg %p327
        %p709 = pneg %p351
        %p710 = pneg %p348
        %p711 = pneg %p372
        %p712 = pneg %p369
        %p713 = pneg %p393
        %p714 = pneg %p390
        %p715 = pneg %p414
        %p716 = pneg %p411
        %p717 = pneg %p435
        %p718 = pneg %p432
        %p719 = pneg %p456
        %p720 = pneg %p453
        %p721 = pneg %p477
        %p722 = pneg %p474
        %p723 = pneg %p498
        %p724 = pneg %p495
        %p725 = pneg %p524
        %p726 = pneg %p521
        %s727 = sand.u32 %s511, 1
        %s728 = scalar_lea.sflag [#allocation5], %s727
        %s729 = sand.u32 %s511, 1
        %s730 = smul.addr %s729, 256
        %s731 = scalar_lea.vmem [#allocation4], %s730
        %p732 = pneg %p550
        %p733 = pneg %p547
        %p734 = scmp.lt.s32.totalorder %s37, 1
        %s735 = scalar_select %p734, %s37, 1
        %s736 = smul.addr %s735, 8
        %s737 = scalar_lea.vmem %s22, %s736
        %p738 = scmp.lt.s32.totalorder %s37, 1
        %s739 = scalar_select %p738, %s37, 1
        %s740 = smul.addr %s739, 8
        %s741 = smul.addr %s740, 8
        %s742 = scalar_lea.vmem %s0, %s741
        %p743 = scmp.lt.s32.totalorder %s37, 1
        %s744 = scalar_select %p743, %s37, 1
        %s745 = smul.addr %s744, 2
        %s746 = smul.addr %s745, 8
        %s747 = scalar_lea.vmem %s1, %s746
        %p748 = scmp.lt.s32.totalorder %s37, 1
        %s749 = scalar_select %p748, %s37, 1
        %s750 = smul.addr %s749, 8
        %s751 = scalar_lea.vmem %s2, %s750
        %p752 = scmp.lt.s32.totalorder %s37, 1
        %s753 = scalar_select %p752, %s37, 1
        %s754 = scalar_lea.vmem %s3, %s753
        %p755 = scmp.lt.s32.totalorder %s37, 1
        %s756 = scalar_select %p755, %s37, 1
        %s757 = smul.addr %s756, 2
        %s758 = smul.addr %s757, 8
        %s759 = scalar_lea.vmem %s4, %s758
        %p760 = scmp.lt.s32.totalorder %s37, 1
        %s761 = scalar_select %p760, %s37, 1
        %s762 = smul.addr %s761, 8
        %s763 = scalar_lea.vmem %s22, %s762
        %vm765 = vcmask 523264
        %766 = vst.msk [vmem:[#allocation2] sm:$0xff] %vm765, 0.0
        %767 = vst.msk [vmem:[#allocation2 + $0x8] sm:$0xff] %vm765, 0.0
        %768 = vst.msk [vmem:[#allocation2 + $0x10] sm:$0xff] %vm765, 0.0
        %769 = vst.msk [vmem:[#allocation2 + $0x18] sm:$0xff] %vm765, 0.0
        %770 = vst.msk [vmem:[#allocation2 + $0x20] sm:$0xff] %vm765, 0.0
        %771 = vst.msk [vmem:[#allocation2 + $0x28] sm:$0xff] %vm765, 0.0
        %772 = vst.msk [vmem:[#allocation2 + $0x30] sm:$0xff] %vm765, 0.0
        %773 = vst.msk [vmem:[#allocation2 + $0x38] sm:$0xff] %vm765, 0.0
        %774 = vst.msk [vmem:[#allocation2 + $0x40] sm:$0xff] %vm765, 0.0
        %775 = vst.msk [vmem:[#allocation2 + $0x48] sm:$0xff] %vm765, 0.0
        %776 = vst.msk [vmem:[#allocation2 + $0x50] sm:$0xff] %vm765, 0.0
        %777 = vst.msk [vmem:[#allocation2 + $0x58] sm:$0xff] %vm765, 0.0
        %778 = vst.msk [vmem:[#allocation2 + $0x60] sm:$0xff] %vm765, 0.0
        %779 = vst.msk [vmem:[#allocation2 + $0x68] sm:$0xff] %vm765, 0.0
        %780 = vst.msk [vmem:[#allocation2 + $0x70] sm:$0xff] %vm765, 0.0
        %781 = vst.msk [vmem:[#allocation2 + $0x78] sm:$0xff] %vm765, 0.0
        %782 = vst.msk [vmem:[#allocation2 + $0x80] sm:$0xff] %vm765, 0.0
        %783 = vst.msk [vmem:[#allocation2 + $0x88] sm:$0xff] %vm765, 0.0
        %784 = vst.msk [vmem:[#allocation2 + $0x90] sm:$0xff] %vm765, 0.0
        %785 = vst.msk [vmem:[#allocation2 + $0x98] sm:$0xff] %vm765, 0.0
        %786 = vst.msk [vmem:[#allocation2 + $0xa0] sm:$0xff] %vm765, 0.0
        %vm787 = vcmask 261120
        %788 = vst.msk [vmem:[#allocation3] sm:$0xff] %vm787, 0.0
        %789 = vst.msk [vmem:[#allocation3 + $0x8] sm:$0xff] %vm787, 0.0
        %790 = vst.msk [vmem:[#allocation3 + $0x10] sm:$0xff] %vm787, 0.0
        %791 = vst.msk [vmem:[#allocation3 + $0x18] sm:$0xff] %vm787, 0.0
        %792 = vst.msk [vmem:[#allocation3 + $0x20] sm:$0xff] %vm787, 0.0
        %793 = vst.msk [vmem:[#allocation3 + $0x28] sm:$0xff] %vm787, 0.0
        %794 = vst.msk [vmem:[#allocation3 + $0x30] sm:$0xff] %vm787, 0.0
        %795 = vst.msk [vmem:[#allocation3 + $0x38] sm:$0xff] %vm787, 0.0
        %796 = vst.msk [vmem:[#allocation3 + $0x40] sm:$0xff] %vm787, 0.0
        %797 = vst.msk [vmem:[#allocation3 + $0x48] sm:$0xff] %vm787, 0.0
        %798 = vst.msk [vmem:[#allocation3 + $0x50] sm:$0xff] %vm787, 0.0
        %799 = vst.msk [vmem:[#allocation3 + $0x58] sm:$0xff] %vm787, 0.0
        %800 = vst.msk [vmem:[#allocation3 + $0x60] sm:$0xff] %vm787, 0.0
        %801 = vst.msk [vmem:[#allocation3 + $0x68] sm:$0xff] %vm787, 0.0
        %802 = vst.msk [vmem:[#allocation3 + $0x70] sm:$0xff] %vm787, 0.0
        %803 = vst.msk [vmem:[#allocation3 + $0x78] sm:$0xff] %vm787, 0.0
        %804 = vst.msk [vmem:[#allocation3 + $0x80] sm:$0xff] %vm787, 0.0
        %805 = vst.msk [vmem:[#allocation3 + $0x88] sm:$0xff] %vm787, 0.0
        %806 = vst.msk [vmem:[#allocation3 + $0x90] sm:$0xff] %vm787, 0.0
        %807 = vst.msk [vmem:[#allocation3 + $0x98] sm:$0xff] %vm787, 0.0
        %808 = vst.msk [vmem:[#allocation3 + $0xa0] sm:$0xff] %vm787, 0.0
        %809 = vst.msk [vmem:[#allocation3 + $0xa8] sm:$0xff] %vm787, 0.0
        %810 = vst.msk [vmem:[#allocation3 + $0xb0] sm:$0xff] %vm787, 0.0
        %811 = vst.msk [vmem:[#allocation3 + $0xb8] sm:$0xff] %vm787, 0.0
        %812 = vst.msk [vmem:[#allocation3 + $0xc0] sm:$0xff] %vm787, 0.0
        %813 = vst.msk [vmem:[#allocation3 + $0xc8] sm:$0xff] %vm787, 0.0
        %814 = vst.msk [vmem:[#allocation3 + $0xd0] sm:$0xff] %vm787, 0.0
        %815 = vst.msk [vmem:[#allocation3 + $0xd8] sm:$0xff] %vm787, 0.0
        %816 = vst.msk [vmem:[#allocation3 + $0xe0] sm:$0xff] %vm787, 0.0
        %817 = vst.msk [vmem:[#allocation3 + $0xe8] sm:$0xff] %vm787, 0.0
        %818 = vst.msk [vmem:[#allocation3 + $0xf0] sm:$0xff] %vm787, 0.0
        %819 = vst.msk [vmem:[#allocation3 + $0xf8] sm:$0xff] %vm787, 0.0
        %820 = vst.msk [vmem:[#allocation3 + $0x100] sm:$0xff] %vm787, 0.0
        %821 = vst.msk [vmem:[#allocation3 + $0x108] sm:$0xff] %vm787, 0.0
        %822 = vst.msk [vmem:[#allocation3 + $0x110] sm:$0xff] %vm787, 0.0
        %823 = vst.msk [vmem:[#allocation3 + $0x118] sm:$0xff] %vm787, 0.0
        %824 = vst.msk [vmem:[#allocation3 + $0x120] sm:$0xff] %vm787, 0.0
        %825 = vst.msk [vmem:[#allocation3 + $0x128] sm:$0xff] %vm787, 0.0
        %826 = vst.msk [vmem:[#allocation3 + $0x130] sm:$0xff] %vm787, 0.0
        %827 = vst.msk [vmem:[#allocation3 + $0x138] sm:$0xff] %vm787, 0.0
        %828 = vst.msk [vmem:[#allocation3 + $0x140] sm:$0xff] %vm787, 0.0
        %829 = vst.msk [vmem:[#allocation3 + $0x148] sm:$0xff] %vm787, 0.0
        %830 = vst.msk [vmem:[#allocation3 + $0x150] sm:$0xff] %vm787, 0.0
        %831 = vst.msk [vmem:[#allocation3 + $0x158] sm:$0xff] %vm787, 0.0
        %832 = vst.msk [vmem:[#allocation3 + $0x160] sm:$0xff] %vm787, 0.0
        %833 = vst.msk [vmem:[#allocation3 + $0x168] sm:$0xff] %vm787, 0.0
        %834 = vst.msk [vmem:[#allocation3 + $0x170] sm:$0xff] %vm787, 0.0
        %835 = vst.msk [vmem:[#allocation3 + $0x178] sm:$0xff] %vm787, 0.0
        %836 = vst.msk [vmem:[#allocation3 + $0x180] sm:$0xff] %vm787, 0.0
        %837 = vst.msk [vmem:[#allocation3 + $0x188] sm:$0xff] %vm787, 0.0
        %838 = vst.msk [vmem:[#allocation3 + $0x190] sm:$0xff] %vm787, 0.0
        %839 = vst.msk [vmem:[#allocation3 + $0x198] sm:$0xff] %vm787, 0.0
        %840 = vst.msk [vmem:[#allocation3 + $0x1a0] sm:$0xff] %vm787, 0.0
        %841 = vst.msk [vmem:[#allocation3 + $0x1a8] sm:$0xff] %vm787, 0.0
        %842 = vst.msk [vmem:[#allocation3 + $0x1b0] sm:$0xff] %vm787, 0.0
        %v843 = vld [vmem:[%s742] sm:$0xff]
        %v844 = vld [vmem:[%s742 + $0x8] sm:$0xff]
        %v845 = vld [vmem:[%s742 + $0x10] sm:$0xff]
        %v846 = vld [vmem:[%s742 + $0x18] sm:$0xff]
        %v847 = vld [vmem:[%s742 + $0x20] sm:$0xff]
        %v848 = vld [vmem:[%s742 + $0x28] sm:$0xff]
        %v849 = vld [vmem:[%s742 + $0x30] sm:$0xff]
        %v850 = vld [vmem:[%s742 + $0x38] sm:$0xff]
        %v851 = vld [vmem:[%s6] sm:$0xff]
        %v852 = vld [vmem:[%s6 + $0x8] sm:$0xff]
        %v853 = vld [vmem:[%s6 + $0x10] sm:$0xff]
        %v854 = vld [vmem:[%s6 + $0x18] sm:$0xff]
        %v855 = vld [vmem:[%s747] sm:$0xff]
        %v856 = vld [vmem:[%s747 + $0x8] sm:$0xff]
        %vm857 = vcmask 130048
        %v859 = vsel %vm857, %v851, 0
        %v862 = vsel %vm857, %v852, 0
        %v865 = vsel %vm857, %v853, 0
        %v868 = vsel %vm857, %v854, 0
        %870 = vmatprep.subr.mxu0 0.0
        %871 = vmatpush1.msra.mxu0 0.0
        %872 = vmatprep.subr.mxu0 0.0
        %873 = vmatpush1.msra.mxu0 0.0
        %874 = vmatprep.subr.mxu0 0.0
        %875 = vmatpush1.msra.mxu0 0.0
        %876 = vmatprep.subr.mxu0 0.0
        %877 = vmatpush1.msra.mxu0 0.0
        %878 = vmatprep.subr.mxu0 0.0
        %879 = vmatpush1.msra.mxu0 0.0
        %880 = vmatprep.subr.mxu0 0.0
        %881 = vmatpush1.msra.mxu0 0.0
        %882 = vmatprep.subr.mxu0 0.0
        %883 = vmatpush1.msra.mxu0 0.0
        %884 = vmatprep.subr.mxu0 0.0
        %885 = vmatpush1.msra.mxu0 0.0
        %886 = vmatprep.subr.mxu0 0.0
        %887 = vmatpush1.msra.mxu0 0.0
        %888 = vmatprep.subr.mxu0 0.0
        %889 = vmatpush1.msra.mxu0 0.0
        %890 = vmatprep.subr.mxu0 0.0
        %891 = vmatpush1.msra.mxu0 0.0
        %892 = vmatprep.subr.mxu0 0.0
        %893 = vmatpush1.msra.mxu0 0.0
        %894 = vmatprep.subr.mxu0 0.0
        %895 = vmatpush1.msra.mxu0 0.0
        %896 = vmatprep.subr.mxu0 0.0
        %897 = vmatpush1.msra.mxu0 0.0
        %898 = vmatprep.subr.mxu0 0.0
        %899 = vmatpush1.msra.mxu0 %v856
        %900 = vmatprep.subr.mxu0 0.0
        %901 = vmatpush1.msra.mxu0 %v855
        %902 = vmatprep.subr.mxu0 0.0
        %903 = vmatpush2.msra.mxu0 0.0
        %904 = vmatprep.subr.mxu0 0.0
        %905 = vmatpush2.msra.mxu0 0.0
        %906 = vmatprep.subr.mxu0 0.0
        %907 = vmatpush2.msra.mxu0 0.0
        %908 = vmatprep.subr.mxu0 0.0
        %909 = vmatpush2.msra.mxu0 0.0
        %910 = vmatprep.subr.mxu0 0.0
        %911 = vmatpush2.msra.mxu0 0.0
        %912 = vmatprep.subr.mxu0 0.0
        %913 = vmatpush2.msra.mxu0 0.0
        %914 = vmatprep.subr.mxu0 0.0
        %915 = vmatpush2.msra.mxu0 0.0
        %916 = vmatprep.subr.mxu0 0.0
        %917 = vmatpush2.msra.mxu0 0.0
        %918 = vmatprep.subr.mxu0 0.0
        %919 = vmatpush2.msra.mxu0 0.0
        %920 = vmatprep.subr.mxu0 0.0
        %921 = vmatpush2.msra.mxu0 0.0
        %922 = vmatprep.subr.mxu0 0.0
        %923 = vmatpush2.msra.mxu0 0.0
        %924 = vmatprep.subr.mxu0 0.0
        %925 = vmatpush2.msra.mxu0 0.0
        %926 = vmatprep.subr.mxu0 0.0
        %927 = vmatpush2.msra.mxu0 0.0
        %928 = vmatprep.subr.mxu0 0.0
        %929 = vmatpush2.msra.mxu0 0.0
        %930 = vmatprep.subr.mxu0 0.0
        %931 = vmatpush2.msra.mxu0 0.0
        %932 = vmatprep.subr.mxu0 0.0
        %933 = vmatpush2.msra.mxu0 0.0
        %934 = vmatprep.mubr.f32.mxu0 0.0
        %935 = vmatmul.mubr.f32.gmra.mxu0 %v859
        %v936 = vpop.f32.mrf.mxu0
        %v937 = vadd.f32 0.0, %v936
        %v938 = vpop.f32.mrf.mxu0
        %939 = vmatprep.mubr.f32.mxu0 0.0
        %940 = vmatmul.mubr.f32.gmra.mxu0 %v862
        %v941 = vpop.f32.mrf.mxu0
        %v942 = vadd.f32 0.0, %v941
        %v943 = vpop.f32.mrf.mxu0
        %944 = vmatprep.mubr.f32.mxu0 0.0
        %945 = vmatmul.mubr.f32.gmra.mxu0 %v865
        %v946 = vpop.f32.mrf.mxu0
        %v947 = vadd.f32 0.0, %v946
        %v948 = vpop.f32.mrf.mxu0
        %949 = vmatprep.mubr.f32.mxu0 0.0
        %950 = vmatmul.mubr.f32.gmra.mxu0 %v868
        %v951 = vpop.f32.mrf.mxu0
        %v952 = vadd.f32 0.0, %v951
        %v953 = vpop.f32.mrf.mxu0
        %954 = vdwg.mxu0
        %955 = vxpose.xlu0.b32.start [1/16] %v937, 128
        %956 = vxpose.xlu0.b32.cont [2/16] %v942, 128
        %957 = vxpose.xlu0.b32.cont [3/16] %v947, 128
        %958 = vxpose.xlu0.b32.cont [4/16] %v952, 128
        %959 = vxpose.xlu0.b32.cont [5/16] 0.0, 128
        %960 = vxpose.xlu0.b32.cont [6/16] 0.0, 128
        %961 = vxpose.xlu0.b32.cont [7/16] 0.0, 128
        %962 = vxpose.xlu0.b32.cont [8/16] 0.0, 128
        %963 = vxpose.xlu0.b32.cont [9/16] 0.0, 128
        %964 = vxpose.xlu0.b32.cont [10/16] 0.0, 128
        %965 = vxpose.xlu0.b32.cont [11/16] 0.0, 128
        %966 = vxpose.xlu0.b32.cont [12/16] 0.0, 128
        %967 = vxpose.xlu0.b32.cont [13/16] 0.0, 128
        %968 = vxpose.xlu0.b32.cont [14/16] 0.0, 128
        %969 = vxpose.xlu0.b32.cont [15/16] 0.0, 128
        %970 = vxpose.xlu0.b32.end [16/16] 0.0, 128
        %v971 = vpop.trf.xlu0
        %v972 = vpop.trf.xlu0
        %v973 = vpop.trf.xlu0
        %v974 = vpop.trf.xlu0
        %v975 = vpop.trf.xlu0
        %v976 = vpop.trf.xlu0
        %v977 = vpop.trf.xlu0
        %v978 = vpop.trf.xlu0
        %v979 = vpop.trf.xlu0
        %v980 = vpop.trf.xlu0
        %v981 = vpop.trf.xlu0
        %v982 = vpop.trf.xlu0
        %v983 = vpop.trf.xlu0
        %v984 = vpop.trf.xlu0
        %v985 = vpop.trf.xlu0
        %v986 = vpop.trf.xlu0
        %v988 = vsel %vm787, %v971, 0
        %v991 = vsel %vm787, %v843, 0
        %v994 = vsel %vm787, %v844, 0
        %v997 = vsel %vm787, %v845, 0
        %v1000 = vsel %vm787, %v846, 0
        %v1003 = vsel %vm787, %v847, 0
        %v1006 = vsel %vm787, %v848, 0
        %v1009 = vsel %vm787, %v849, 0
        %v1012 = vsel %vm787, %v850, 0
        %1014 = vmatprep.subr.mxu0 0.0
        %1015 = vmatpush1.xpose.msra.mxu0 0.0
        %1016 = vmatprep.subr.mxu0 0.0
        %1017 = vmatpush1.xpose.msra.mxu0 0.0
        %1018 = vmatprep.subr.mxu0 0.0
        %1019 = vmatpush1.xpose.msra.mxu0 0.0
        %1020 = vmatprep.subr.mxu0 0.0
        %1021 = vmatpush1.xpose.msra.mxu0 0.0
        %1022 = vmatprep.subr.mxu0 0.0
        %1023 = vmatpush1.xpose.msra.mxu0 0.0
        %1024 = vmatprep.subr.mxu0 0.0
        %1025 = vmatpush1.xpose.msra.mxu0 0.0
        %1026 = vmatprep.subr.mxu0 0.0
        %1027 = vmatpush1.xpose.msra.mxu0 0.0
        %1028 = vmatprep.subr.mxu0 0.0
        %1029 = vmatpush1.xpose.msra.mxu0 0.0
        %1030 = vmatprep.subr.mxu0 0.0
        %1031 = vmatpush1.xpose.msra.mxu0 %v1012
        %1032 = vmatprep.subr.mxu0 0.0
        %1033 = vmatpush1.xpose.msra.mxu0 %v1009
        %1034 = vmatprep.subr.mxu0 0.0
        %1035 = vmatpush1.xpose.msra.mxu0 %v1006
        %1036 = vmatprep.subr.mxu0 0.0
        %1037 = vmatpush1.xpose.msra.mxu0 %v1003
        %1038 = vmatprep.subr.mxu0 0.0
        %1039 = vmatpush1.xpose.msra.mxu0 %v1000
        %1040 = vmatprep.subr.mxu0 0.0
        %1041 = vmatpush1.xpose.msra.mxu0 %v997
        %1042 = vmatprep.subr.mxu0 0.0
        %1043 = vmatpush1.xpose.msra.mxu0 %v994
        %1044 = vmatprep.subr.mxu0 0.0
        %1045 = vmatpush1.xpose.msra.mxu0 %v991
        %1046 = vmatprep.subr.mxu0 0.0
        %1047 = vmatpush2.xpose.msra.mxu0 0.0
        %1048 = vmatprep.subr.mxu0 0.0
        %1049 = vmatpush2.xpose.msra.mxu0 0.0
        %1050 = vmatprep.subr.mxu0 0.0
        %1051 = vmatpush2.xpose.msra.mxu0 0.0
        %1052 = vmatprep.subr.mxu0 0.0
        %1053 = vmatpush2.xpose.msra.mxu0 0.0
        %1054 = vmatprep.subr.mxu0 0.0
        %1055 = vmatpush2.xpose.msra.mxu0 0.0
        %1056 = vmatprep.subr.mxu0 0.0
        %1057 = vmatpush2.xpose.msra.mxu0 0.0
        %1058 = vmatprep.subr.mxu0 0.0
        %1059 = vmatpush2.xpose.msra.mxu0 0.0
        %1060 = vmatprep.subr.mxu0 0.0
        %1061 = vmatpush2.xpose.msra.mxu0 0.0
        %1062 = vmatprep.subr.mxu0 0.0
        %1063 = vmatpush2.xpose.msra.mxu0 0.0
        %1064 = vmatprep.subr.mxu0 0.0
        %1065 = vmatpush2.xpose.msra.mxu0 0.0
        %1066 = vmatprep.subr.mxu0 0.0
        %1067 = vmatpush2.xpose.msra.mxu0 0.0
        %1068 = vmatprep.subr.mxu0 0.0
        %1069 = vmatpush2.xpose.msra.mxu0 0.0
        %1070 = vmatprep.subr.mxu0 0.0
        %1071 = vmatpush2.xpose.msra.mxu0 0.0
        %1072 = vmatprep.subr.mxu0 0.0
        %1073 = vmatpush2.xpose.msra.mxu0 0.0
        %1074 = vmatprep.subr.mxu0 0.0
        %1075 = vmatpush2.xpose.msra.mxu0 0.0
        %1076 = vmatprep.subr.mxu0 0.0
        %1077 = vmatpush2.xpose.msra.mxu0 0.0
        %1078 = vmatprep.mubr.f32.mxu0 0.0
        %1079 = vmatmul.mubr.f32.gmra.mxu0 %v988
        %v1080 = vpop.f32.mrf.mxu0
        %v1081 = vadd.f32 0.0, %v1080
        %v1082 = vpop.f32.mrf.mxu0
        %1083 = vdwg.mxu0
        %v1084 = vld [vmem:[%s751] sm:$0xff]
        %vm1085 = vcmp.gt.f32.partialorder %v1084, 0.0
        %v1086 = vsel %vm1085, 1, 0
        %1087 = vset.pattern.permute.xlu0 0
        %1088 = vperm.xlu0 %1087, %v1086
        %v1089 = vpop.permute.xlu0 %1088
        %vm1090 = vcmp.eq.s32.totalorder %v1089, 1
        %v1091 = vsel %vm1090, -1e+30, %v1081
        %v1092 = vsel %vm765, %v1091, -inf
        %v1093 = vrot.slane %v1092, 4
        %v1094 = vmax.f32 %v1092, %v1093
        %v1095 = vrot.slane %v1094, 2
        %v1096 = vmax.f32 %v1094, %v1095
        %v1097 = vrot.slane %v1096, 1
        %v1098 = vmax.f32 %v1096, %v1097
        %v1099 = vsub.f32 %v1091, %v1098
        %v1100 = vmul.f32 %v1099, 1.442695
        %v1101 = vpow.pop %v1100
        %v1102 = vsel %vm765, %v1101, 0.0
        %v1103 = vrot.slane %v1102, 4
        %v1104 = vadd.f32 %v1102, %v1103
        %v1105 = vrot.slane %v1104, 2
        %v1106 = vadd.f32 %v1104, %v1105
        %v1107 = vrot.slane %v1106, 1
        %v1108 = vadd.f32 %v1106, %v1107
        %v1109 = vrcp.pop %v1108
        %v1110 = vmul.f32 %v1101, %v1109
        %1111 = vst.msk [vmem:[%s763] sm:$0xff] %vm765, %v1110
        %1112 = vxpose.xlu0.b32.start [1/16] %v1110, 128
        %1113 = vxpose.xlu0.b32.cont [2/16] 0.0, 128
        %1114 = vxpose.xlu0.b32.cont [3/16] 0.0, 128
        %1115 = vxpose.xlu0.b32.cont [4/16] 0.0, 128
        %1116 = vxpose.xlu0.b32.cont [5/16] 0.0, 128
        %1117 = vxpose.xlu0.b32.cont [6/16] 0.0, 128
        %1118 = vxpose.xlu0.b32.cont [7/16] 0.0, 128
        %1119 = vxpose.xlu0.b32.cont [8/16] 0.0, 128
        %1120 = vxpose.xlu0.b32.cont [9/16] 0.0, 128
        %1121 = vxpose.xlu0.b32.cont [10/16] 0.0, 128
        %1122 = vxpose.xlu0.b32.cont [11/16] 0.0, 128
        %1123 = vxpose.xlu0.b32.cont [12/16] 0.0, 128
        %1124 = vxpose.xlu0.b32.cont [13/16] 0.0, 128
        %1125 = vxpose.xlu0.b32.cont [14/16] 0.0, 128
        %1126 = vxpose.xlu0.b32.cont [15/16] 0.0, 128
        %1127 = vxpose.xlu0.b32.end [16/16] 0.0, 128
        %v1128 = vpop.trf.xlu0
        %v1129 = vpop.trf.xlu0
        %v1130 = vpop.trf.xlu0
        %v1131 = vpop.trf.xlu0
        %v1132 = vpop.trf.xlu0
        %v1133 = vpop.trf.xlu0
        %v1134 = vpop.trf.xlu0
        %v1135 = vpop.trf.xlu0
        %v1136 = vpop.trf.xlu0
        %v1137 = vpop.trf.xlu0
        %v1138 = vpop.trf.xlu0
        %v1139 = vpop.trf.xlu0
        %v1140 = vpop.trf.xlu0
        %v1141 = vpop.trf.xlu0
        %v1142 = vpop.trf.xlu0
        %v1143 = vpop.trf.xlu0
        %vm1144 = vcmask 64512
        %v1146 = vsel %vm1144, %v1128, 0
        %v1149 = vsel %vm1144, %v1129, 0
        %v1152 = vsel %vm1144, %v1130, 0
        %v1155 = vsel %vm1144, %v1131, 0
        %v1158 = vsel %vm1144, %v1132, 0
        %v1161 = vsel %vm1144, %v1133, 0
        %v1164 = vsel %vm1144, %v1134, 0
        %v1167 = vsel %vm1144, %v1135, 0
        %v1170 = vsel %vm1144, %v937, 0
        %v1173 = vsel %vm1144, %v942, 0
        %v1176 = vsel %vm1144, %v947, 0
        %v1179 = vsel %vm1144, %v952, 0
        %1181 = vmatprep.subr.mxu0 0.0
        %1182 = vmatpush1.xpose.msra.mxu0 0.0
        %1183 = vmatprep.subr.mxu0 0.0
        %1184 = vmatpush1.xpose.msra.mxu0 0.0
        %1185 = vmatprep.subr.mxu0 0.0
        %1186 = vmatpush1.xpose.msra.mxu0 0.0
        %1187 = vmatprep.subr.mxu0 0.0
        %1188 = vmatpush1.xpose.msra.mxu0 0.0
        %1189 = vmatprep.subr.mxu0 0.0
        %1190 = vmatpush1.xpose.msra.mxu0 0.0
        %1191 = vmatprep.subr.mxu0 0.0
        %1192 = vmatpush1.xpose.msra.mxu0 0.0
        %1193 = vmatprep.subr.mxu0 0.0
        %1194 = vmatpush1.xpose.msra.mxu0 0.0
        %1195 = vmatprep.subr.mxu0 0.0
        %1196 = vmatpush1.xpose.msra.mxu0 0.0
        %1197 = vmatprep.subr.mxu0 0.0
        %1198 = vmatpush1.xpose.msra.mxu0 0.0
        %1199 = vmatprep.subr.mxu0 0.0
        %1200 = vmatpush1.xpose.msra.mxu0 0.0
        %1201 = vmatprep.subr.mxu0 0.0
        %1202 = vmatpush1.xpose.msra.mxu0 0.0
        %1203 = vmatprep.subr.mxu0 0.0
        %1204 = vmatpush1.xpose.msra.mxu0 0.0
        %1205 = vmatprep.subr.mxu0 0.0
        %1206 = vmatpush1.xpose.msra.mxu0 %v1179
        %1207 = vmatprep.subr.mxu0 0.0
        %1208 = vmatpush1.xpose.msra.mxu0 %v1176
        %1209 = vmatprep.subr.mxu0 0.0
        %1210 = vmatpush1.xpose.msra.mxu0 %v1173
        %1211 = vmatprep.subr.mxu0 0.0
        %1212 = vmatpush1.xpose.msra.mxu0 %v1170
        %1213 = vmatprep.subr.mxu0 0.0
        %1214 = vmatpush2.xpose.msra.mxu0 0.0
        %1215 = vmatprep.subr.mxu0 0.0
        %1216 = vmatpush2.xpose.msra.mxu0 0.0
        %1217 = vmatprep.subr.mxu0 0.0
        %1218 = vmatpush2.xpose.msra.mxu0 0.0
        %1219 = vmatprep.subr.mxu0 0.0
        %1220 = vmatpush2.xpose.msra.mxu0 0.0
        %1221 = vmatprep.subr.mxu0 0.0
        %1222 = vmatpush2.xpose.msra.mxu0 0.0
        %1223 = vmatprep.subr.mxu0 0.0
        %1224 = vmatpush2.xpose.msra.mxu0 0.0
        %1225 = vmatprep.subr.mxu0 0.0
        %1226 = vmatpush2.xpose.msra.mxu0 0.0
        %1227 = vmatprep.subr.mxu0 0.0
        %1228 = vmatpush2.xpose.msra.mxu0 0.0
        %1229 = vmatprep.subr.mxu0 0.0
        %1230 = vmatpush2.xpose.msra.mxu0 0.0
        %1231 = vmatprep.subr.mxu0 0.0
        %1232 = vmatpush2.xpose.msra.mxu0 0.0
        %1233 = vmatprep.subr.mxu0 0.0
        %1234 = vmatpush2.xpose.msra.mxu0 0.0
        %1235 = vmatprep.subr.mxu0 0.0
        %1236 = vmatpush2.xpose.msra.mxu0 0.0
        %1237 = vmatprep.subr.mxu0 0.0
        %1238 = vmatpush2.xpose.msra.mxu0 0.0
        %1239 = vmatprep.subr.mxu0 0.0
        %1240 = vmatpush2.xpose.msra.mxu0 0.0
        %1241 = vmatprep.subr.mxu0 0.0
        %1242 = vmatpush2.xpose.msra.mxu0 0.0
        %1243 = vmatprep.subr.mxu0 0.0
        %1244 = vmatpush2.xpose.msra.mxu0 0.0
        %1245 = vmatprep.mubr.f32.mxu0 0.0
        %1246 = vmatmul.mubr.f32.gmra.mxu0 %v1146
        %v1247 = vpop.f32.mrf.mxu0
        %v1248 = vadd.f32 0.0, %v1247
        %v1249 = vpop.f32.mrf.mxu0
        %1250 = vmatprep.mubr.f32.mxu0 0.0
        %1251 = vmatmul.mubr.f32.gmra.mxu0 %v1149
        %v1252 = vpop.f32.mrf.mxu0
        %v1253 = vadd.f32 0.0, %v1252
        %v1254 = vpop.f32.mrf.mxu0
        %1255 = vmatprep.mubr.f32.mxu0 0.0
        %1256 = vmatmul.mubr.f32.gmra.mxu0 %v1152
        %v1257 = vpop.f32.mrf.mxu0
        %v1258 = vadd.f32 0.0, %v1257
        %v1259 = vpop.f32.mrf.mxu0
        %1260 = vmatprep.mubr.f32.mxu0 0.0
        %1261 = vmatmul.mubr.f32.gmra.mxu0 %v1155
        %v1262 = vpop.f32.mrf.mxu0
        %v1263 = vadd.f32 0.0, %v1262
        %v1264 = vpop.f32.mrf.mxu0
        %1265 = vmatprep.mubr.f32.mxu0 0.0
        %1266 = vmatmul.mubr.f32.gmra.mxu0 %v1158
        %v1267 = vpop.f32.mrf.mxu0
        %v1268 = vadd.f32 0.0, %v1267
        %v1269 = vpop.f32.mrf.mxu0
        %1270 = vmatprep.mubr.f32.mxu0 0.0
        %1271 = vmatmul.mubr.f32.gmra.mxu0 %v1161
        %v1272 = vpop.f32.mrf.mxu0
        %v1273 = vadd.f32 0.0, %v1272
        %v1274 = vpop.f32.mrf.mxu0
        %1275 = vmatprep.mubr.f32.mxu0 0.0
        %1276 = vmatmul.mubr.f32.gmra.mxu0 %v1164
        %v1277 = vpop.f32.mrf.mxu0
        %v1278 = vadd.f32 0.0, %v1277
        %v1279 = vpop.f32.mrf.mxu0
        %1280 = vmatprep.mubr.f32.mxu0 0.0
        %1281 = vmatmul.mubr.f32.gmra.mxu0 %v1167
        %v1282 = vpop.f32.mrf.mxu0
        %v1283 = vadd.f32 0.0, %v1282
        %v1284 = vpop.f32.mrf.mxu0
        %1285 = vdwg.mxu0
        %1294 = vrot.lane.b32.xlu0 %v1248, 32
        %v1295 = vpop.permute.xlu0 %1294
        %1296 = vrot.lane.b32.xlu0 %v1253, 32
        %v1297 = vpop.permute.xlu0 %1296
        %1298 = vrot.lane.b32.xlu0 %v1258, 32
        %v1299 = vpop.permute.xlu0 %1298
        %1300 = vrot.lane.b32.xlu0 %v1263, 32
        %v1301 = vpop.permute.xlu0 %1300
        %1302 = vrot.lane.b32.xlu0 %v1268, 32
        %v1303 = vpop.permute.xlu0 %1302
        %1304 = vrot.lane.b32.xlu0 %v1273, 32
        %v1305 = vpop.permute.xlu0 %1304
        %1306 = vrot.lane.b32.xlu0 %v1278, 32
        %v1307 = vpop.permute.xlu0 %1306
        %1308 = vrot.lane.b32.xlu0 %v1283, 32
        %v1309 = vpop.permute.xlu0 %1308
        %v1318 = vsel %vm787, %v843, %v1295
        %v1319 = vsel %vm787, %v844, %v1297
        %v1320 = vsel %vm787, %v845, %v1299
        %v1321 = vsel %vm787, %v846, %v1301
        %v1322 = vsel %vm787, %v847, %v1303
        %v1323 = vsel %vm787, %v848, %v1305
        %v1324 = vsel %vm787, %v849, %v1307
        %v1325 = vsel %vm787, %v850, %v1309
        %1326 = vst.msk [vmem:[#allocation2 + $0x11] sm:$0xff] %vm765, %v1318
        %1327 = vst.msk [vmem:[#allocation2 + $0x21] sm:$0xff] %vm765, %v1319
        %1328 = vst.msk [vmem:[#allocation2 + $0x31] sm:$0xff] %vm765, %v1320
        %1329 = vst.msk [vmem:[#allocation2 + $0x41] sm:$0xff] %vm765, %v1321
        %1330 = vst.msk [vmem:[#allocation2 + $0x51] sm:$0xff] %vm765, %v1322
        %1331 = vst.msk [vmem:[#allocation2 + $0x61] sm:$0xff] %vm765, %v1323
        %1332 = vst.msk [vmem:[#allocation2 + $0x71] sm:$0xff] %vm765, %v1324
        %1333 = vst.msk [vmem:[#allocation2 + $0x81] sm:$0xff] %vm765, %v1325
        %v1334 = vld [vmem:[#allocation2] sm:$0xff]
        %v1335 = vld [vmem:[#allocation2 + $0x8] sm:$0xff]
        %v1336 = vld [vmem:[#allocation2 + $0x10] sm:$0xff]
        %v1337 = vld [vmem:[#allocation2 + $0x18] sm:$0xff]
        %v1338 = vld [vmem:[#allocation2 + $0x20] sm:$0xff]
        %v1339 = vld [vmem:[#allocation2 + $0x28] sm:$0xff]
        %v1340 = vld [vmem:[#allocation2 + $0x30] sm:$0xff]
        %v1341 = vld [vmem:[#allocation2 + $0x38] sm:$0xff]
        %v1342 = vld [vmem:[#allocation2 + $0x40] sm:$0xff]
        %v1343 = vld [vmem:[#allocation2 + $0x48] sm:$0xff]
        %v1344 = vld [vmem:[#allocation2 + $0x50] sm:$0xff]
        %v1345 = vld [vmem:[#allocation2 + $0x58] sm:$0xff]
        %v1346 = vld [vmem:[#allocation2 + $0x60] sm:$0xff]
        %v1347 = vld [vmem:[#allocation2 + $0x68] sm:$0xff]
        %v1348 = vld [vmem:[#allocation2 + $0x70] sm:$0xff]
        %v1349 = vld [vmem:[#allocation2 + $0x78] sm:$0xff]
        %v1350 = vld [vmem:[#allocation2 + $0x80] sm:$0xff]
        %v1351 = vld [vmem:[#allocation2 + $0x88] sm:$0xff]
        %v1352 = vld [vmem:[#allocation2 + $0x90] sm:$0xff]
        %v1353 = vld [vmem:[#allocation2 + $0x98] sm:$0xff]
        %v1354 = vld [vmem:[#allocation2 + $0xa0] sm:$0xff]
        %v1355 = vpack.c.bf16 %v1335, %v1334
        %v1356 = vpack.c.bf16 %v1337, %v1336
        %v1357 = vpack.c.bf16 %v1339, %v1338
        %v1358 = vpack.c.bf16 %v1341, %v1340
        %v1359 = vpack.c.bf16 %v1343, %v1342
        %v1360 = vpack.c.bf16 %v1345, %v1344
        %v1361 = vpack.c.bf16 %v1347, %v1346
        %v1362 = vpack.c.bf16 %v1349, %v1348
        %v1363 = vpack.c.bf16 %v1351, %v1350
        %v1364 = vpack.c.bf16 %v1353, %v1352
        %v1365 = vpack.c.bf16 %v1354, %v1354
        %vm1366 = vsmask.f32 7424
        %v1368 = vshrl.u32 %v1355, 16
        %v1370 = vshll.u32 %v1355, 16
        %v1372 = vrot.slane %v1370, 1
        %v1373 = vor.u32 %v1368, %v1372
        %v1375 = vshll.u32 %v1356, 16
        %v1377 = vrot.slane %v1375, 1
        %v1378 = vsel %vm1366, %v1373, %v1377
        %v1379 = vshrl.u32 %v1356, 16
        %v1381 = vor.u32 %v1379, %v1377
        %v1383 = vshll.u32 %v1357, 16
        %v1385 = vrot.slane %v1383, 1
        %v1386 = vsel %vm1366, %v1381, %v1385
        %v1387 = vshrl.u32 %v1357, 16
        %v1389 = vor.u32 %v1387, %v1385
        %v1391 = vshll.u32 %v1358, 16
        %v1393 = vrot.slane %v1391, 1
        %v1394 = vsel %vm1366, %v1389, %v1393
        %v1395 = vshrl.u32 %v1358, 16
        %v1397 = vor.u32 %v1395, %v1393
        %v1399 = vshll.u32 %v1359, 16
        %v1401 = vrot.slane %v1399, 1
        %v1402 = vsel %vm1366, %v1397, %v1401
        %v1403 = vshrl.u32 %v1359, 16
        %v1405 = vor.u32 %v1403, %v1401
        %v1407 = vshll.u32 %v1360, 16
        %v1409 = vrot.slane %v1407, 1
        %v1410 = vsel %vm1366, %v1405, %v1409
        %v1411 = vshrl.u32 %v1360, 16
        %v1413 = vor.u32 %v1411, %v1409
        %v1415 = vshll.u32 %v1361, 16
        %v1417 = vrot.slane %v1415, 1
        %v1418 = vsel %vm1366, %v1413, %v1417
        %v1419 = vshrl.u32 %v1361, 16
        %v1421 = vor.u32 %v1419, %v1417
        %v1423 = vshll.u32 %v1362, 16
        %v1425 = vrot.slane %v1423, 1
        %v1426 = vsel %vm1366, %v1421, %v1425
        %v1427 = vshrl.u32 %v1362, 16
        %v1429 = vor.u32 %v1427, %v1425
        %v1431 = vshll.u32 %v1363, 16
        %v1433 = vrot.slane %v1431, 1
        %v1434 = vsel %vm1366, %v1429, %v1433
        %1435 = vrot.lane.b32.xlu0 %v1378, 64
        %v1436 = vpop.permute.xlu0 %1435
        %1437 = vrot.lane.b32.xlu0 %v1386, 64
        %v1438 = vpop.permute.xlu0 %1437
        %1439 = vrot.lane.b32.xlu0 %v1394, 64
        %v1440 = vpop.permute.xlu0 %1439
        %1441 = vrot.lane.b32.xlu0 %v1402, 64
        %v1442 = vpop.permute.xlu0 %1441
        %1443 = vrot.lane.b32.xlu0 %v1410, 64
        %v1444 = vpop.permute.xlu0 %1443
        %1445 = vrot.lane.b32.xlu0 %v1418, 64
        %v1446 = vpop.permute.xlu0 %1445
        %1447 = vrot.lane.b32.xlu0 %v1426, 64
        %v1448 = vpop.permute.xlu0 %1447
        %1449 = vrot.lane.b32.xlu0 %v1434, 64
        %v1450 = vpop.permute.xlu0 %1449
        %vm1460 = vcmask 1046528
        %v1461 = vrot.slane %v1355, 1
        %v1462 = vrot.slane %v1356, 1
        %v1463 = vsel %vm1460, %v1461, %v1462
        %v1464 = vrot.slane %v1357, 1
        %v1465 = vsel %vm1460, %v1462, %v1464
        %v1466 = vrot.slane %v1358, 1
        %v1467 = vsel %vm1460, %v1464, %v1466
        %v1468 = vrot.slane %v1359, 1
        %v1469 = vsel %vm1460, %v1466, %v1468
        %v1470 = vrot.slane %v1360, 1
        %v1471 = vsel %vm1460, %v1468, %v1470
        %v1472 = vrot.slane %v1361, 1
        %v1473 = vsel %vm1460, %v1470, %v1472
        %v1474 = vrot.slane %v1362, 1
        %v1475 = vsel %vm1460, %v1472, %v1474
        %v1476 = vrot.slane %v1363, 1
        %v1477 = vsel %vm1460, %v1474, %v1476
        %v1479 = vsel %vm765, %v1355, %v1436
        %v1482 = vsel %vm765, %v1356, %v1438
        %v1485 = vsel %vm765, %v1357, %v1440
        %v1488 = vsel %vm765, %v1358, %v1442
        %v1491 = vsel %vm765, %v1359, %v1444
        %v1494 = vsel %vm765, %v1360, %v1446
        %v1497 = vsel %vm765, %v1361, %v1448
        %v1500 = vsel %vm765, %v1362, %v1450
        %v1502 = vld [vmem:[%s7] sm:$0xf]
        %v1503 = vld [vmem:[%s7 + $0x4] sm:$0xf]
        %v1504 = vld [vmem:[%s7 + $0x8] sm:$0xf]
        %v1505 = vld [vmem:[%s7 + $0xc] sm:$0xf]
        %v1506 = vld [vmem:[%s7 + $0x10] sm:$0xf]
        %v1507 = vld [vmem:[%s7 + $0x14] sm:$0xf]
        %v1508 = vld [vmem:[%s7 + $0x18] sm:$0xf]
        %v1509 = vld [vmem:[%s7 + $0x1c] sm:$0xf]
        %v1510 = vld [vmem:[%s7 + $0x20] sm:$0xf]
        %v1511 = vld [vmem:[%s7 + $0x24] sm:$0xf]
        %v1512 = vld [vmem:[%s7 + $0x28] sm:$0xf]
        %v1513 = vld [vmem:[%s7 + $0x2c] sm:$0xf]
        %v1514 = vld [vmem:[%s7 + $0x30] sm:$0xf]
        %v1515 = vld [vmem:[%s7 + $0x34] sm:$0xf]
        %v1516 = vld [vmem:[%s7 + $0x38] sm:$0xf]
        %v1517 = vld [vmem:[%s7 + $0x3c] sm:$0xf]
        %v1518 = vld [vmem:[%s7 + $0x40] sm:$0xf]
        %v1519 = vld [vmem:[%s7 + $0x44] sm:$0xf]
        %v1520 = vld [vmem:[%s7 + $0x48] sm:$0xf]
        %v1521 = vld [vmem:[%s7 + $0x4c] sm:$0xf]
        %v1522 = vld [vmem:[%s7 + $0x50] sm:$0xf]
        %v1523 = vld [vmem:[%s7 + $0x54] sm:$0xf]
        %v1524 = vld [vmem:[%s7 + $0x58] sm:$0xf]
        %v1525 = vld [vmem:[%s7 + $0x5c] sm:$0xf]
        %v1526 = vshrl.u32 %v1363, 16
        %v1528 = vor.u32 %v1526, %v1433
        %v1530 = vshll.u32 %v1364, 16
        %v1532 = vrot.slane %v1530, 1
        %v1533 = vsel %vm1366, %v1528, %v1532
        %1534 = vrot.lane.b32.xlu0 %v1533, 64
        %v1535 = vpop.permute.xlu0 %1534
        %v1537 = vrot.slane %v1364, 1
        %v1538 = vsel %vm1460, %v1476, %v1537
        %v1540 = vsel %vm765, %v1363, %v1535
        %s1542 = scalar_lea.vmem %s7, 96
        %v1543 = vld [vmem:[%s1542] sm:$0xf]
        %v1544 = vld [vmem:[%s1542 + $0x4] sm:$0xf]
        %v1545 = vld [vmem:[%s1542 + $0x8] sm:$0xf]
        %v1546 = vld [vmem:[%s1542 + $0xc] sm:$0xf]
        %v1547 = vld [vmem:[%s1542 + $0x10] sm:$0xf]
        %v1548 = vld [vmem:[%s1542 + $0x14] sm:$0xf]
        %v1549 = vld [vmem:[%s1542 + $0x18] sm:$0xf]
        %v1550 = vld [vmem:[%s1542 + $0x1c] sm:$0xf]
        %v1551 = vld [vmem:[%s1542 + $0x20] sm:$0xf]
        %v1552 = vld [vmem:[%s1542 + $0x24] sm:$0xf]
        %v1553 = vld [vmem:[%s1542 + $0x28] sm:$0xf]
        %v1554 = vld [vmem:[%s1542 + $0x2c] sm:$0xf]
        %v1555 = vld [vmem:[%s1542 + $0x30] sm:$0xf]
        %v1556 = vld [vmem:[%s1542 + $0x34] sm:$0xf]
        %v1557 = vld [vmem:[%s1542 + $0x38] sm:$0xf]
        %v1558 = vld [vmem:[%s1542 + $0x3c] sm:$0xf]
        %v1559 = vld [vmem:[%s1542 + $0x40] sm:$0xf]
        %v1560 = vld [vmem:[%s1542 + $0x44] sm:$0xf]
        %v1561 = vld [vmem:[%s1542 + $0x48] sm:$0xf]
        %v1562 = vld [vmem:[%s1542 + $0x4c] sm:$0xf]
        %v1563 = vld [vmem:[%s1542 + $0x50] sm:$0xf]
        %v1564 = vld [vmem:[%s1542 + $0x54] sm:$0xf]
        %v1565 = vld [vmem:[%s1542 + $0x58] sm:$0xf]
        %v1566 = vld [vmem:[%s1542 + $0x5c] sm:$0xf]
        %v1591 = vunpack.c.l.b16 %v1543
        %v1592 = vunpack.c.l.b16 %v1544
        %v1593 = vunpack.c.l.b16 %v1545
        %v1594 = vunpack.c.l.b16 %v1546
        %v1595 = vunpack.c.l.b16 %v1547
        %v1596 = vunpack.c.l.b16 %v1548
        %v1597 = vunpack.c.l.b16 %v1549
        %v1598 = vunpack.c.l.b16 %v1550
        %v1599 = vunpack.c.l.b16 %v1551
        %v1600 = vunpack.c.l.b16 %v1552
        %v1601 = vunpack.c.l.b16 %v1553
        %v1602 = vunpack.c.l.b16 %v1554
        %v1603 = vunpack.c.l.b16 %v1555
        %v1604 = vunpack.c.l.b16 %v1556
        %v1605 = vunpack.c.l.b16 %v1557
        %v1606 = vunpack.c.l.b16 %v1558
        %v1607 = vunpack.c.l.b16 %v1559
        %v1608 = vunpack.c.l.b16 %v1560
        %v1609 = vunpack.c.l.b16 %v1561
        %v1610 = vunpack.c.l.b16 %v1562
        %v1611 = vunpack.c.l.b16 %v1563
        %v1612 = vunpack.c.l.b16 %v1564
        %v1613 = vunpack.c.l.b16 %v1565
        %v1614 = vunpack.c.l.b16 %v1566
        %v1615 = vpack.c.b16 %v1592, %v1591
        %v1616 = vpack.c.b16 %v1594, %v1593
        %v1617 = vpack.c.b16 %v1596, %v1595
        %v1618 = vpack.c.b16 %v1598, %v1597
        %v1619 = vpack.c.b16 %v1600, %v1599
        %v1620 = vpack.c.b16 %v1602, %v1601
        %v1621 = vpack.c.b16 %v1604, %v1603
        %v1622 = vpack.c.b16 %v1606, %v1605
        %v1623 = vpack.c.b16 %v1608, %v1607
        %v1624 = vpack.c.b16 %v1610, %v1609
        %v1625 = vpack.c.b16 %v1612, %v1611
        %v1626 = vpack.c.b16 %v1614, %v1613
        %v1640 = vsel %vm765, %v1465, 0
        %v1643 = vsel %vm765, %v1467, 0
        %v1646 = vsel %vm765, %v1469, 0
        %v1649 = vsel %vm765, %v1471, 0
        %v1652 = vsel %vm765, %v1473, 0
        %v1655 = vsel %vm765, %v1475, 0
        %v1658 = vsel %vm765, %v1477, 0
        %v1661 = vsel %vm765, %v1538, 0
        %1663 = vmatprep.subr.bf16.mxu0 0
        %1664 = vmatpush1.bf16.msra.mxu0 %v1622
        %1665 = vmatprep.subr.bf16.mxu0 0
        %1666 = vmatpush1.bf16.msra.mxu0 %v1621
        %1667 = vmatprep.subr.bf16.mxu0 0
        %1668 = vmatpush1.bf16.msra.mxu0 %v1620
        %1669 = vmatprep.subr.bf16.mxu0 0
        %1670 = vmatpush1.bf16.msra.mxu0 %v1619
        %1671 = vmatprep.subr.bf16.mxu0 0
        %1672 = vmatpush1.bf16.msra.mxu0 %v1618
        %1673 = vmatprep.subr.bf16.mxu0 0
        %1674 = vmatpush1.bf16.msra.mxu0 %v1617
        %1675 = vmatprep.subr.bf16.mxu0 0
        %1676 = vmatpush1.bf16.msra.mxu0 %v1616
        %1677 = vmatprep.subr.bf16.mxu0 0
        %1678 = vmatpush1.bf16.msra.mxu0 %v1615
        %1679 = vmatprep.subr.bf16.mxu0 0
        %1680 = vmatpush2.bf16.msra.mxu0 0
        %1681 = vmatprep.subr.bf16.mxu0 0
        %1682 = vmatpush2.bf16.msra.mxu0 0
        %1683 = vmatprep.subr.bf16.mxu0 0
        %1684 = vmatpush2.bf16.msra.mxu0 0
        %1685 = vmatprep.subr.bf16.mxu0 0
        %1686 = vmatpush2.bf16.msra.mxu0 0
        %1687 = vmatprep.subr.bf16.mxu0 0
        %1688 = vmatpush2.bf16.msra.mxu0 %v1626
        %1689 = vmatprep.subr.bf16.mxu0 0
        %1690 = vmatpush2.bf16.msra.mxu0 %v1625
        %1691 = vmatprep.subr.bf16.mxu0 0
        %1692 = vmatpush2.bf16.msra.mxu0 %v1624
        %1693 = vmatprep.subr.bf16.mxu0 0
        %1694 = vmatpush2.bf16.msra.mxu0 %v1623
        %1695 = vmatprep.mubr.bf16.mxu0 %v1640
        %1696 = vmatmul.mubr.bf16.gmra.mxu0 %v1482
        %v1697 = vpop.f32.mrf.mxu0
        %v1698 = vadd.f32 0.0, %v1697
        %v1699 = vpop.f32.mrf.mxu0
        %v1700 = vpop.f32.mrf.mxu0
        %v1701 = vpop.f32.mrf.mxu0
        %1702 = vmatprep.mubr.bf16.mxu0 %v1643
        %1703 = vmatmul.mubr.bf16.gmra.mxu0 %v1485
        %v1704 = vpop.f32.mrf.mxu0
        %v1705 = vadd.f32 0.0, %v1704
        %v1706 = vpop.f32.mrf.mxu0
        %v1707 = vpop.f32.mrf.mxu0
        %v1708 = vpop.f32.mrf.mxu0
        %1709 = vmatprep.mubr.bf16.mxu0 %v1646
        %1710 = vmatmul.mubr.bf16.gmra.mxu0 %v1488
        %v1711 = vpop.f32.mrf.mxu0
        %v1712 = vadd.f32 0.0, %v1711
        %v1713 = vpop.f32.mrf.mxu0
        %v1714 = vpop.f32.mrf.mxu0
        %v1715 = vpop.f32.mrf.mxu0
        %1716 = vmatprep.mubr.bf16.mxu0 %v1649
        %1717 = vmatmul.mubr.bf16.gmra.mxu0 %v1491
        %v1718 = vpop.f32.mrf.mxu0
        %v1719 = vadd.f32 0.0, %v1718
        %v1720 = vpop.f32.mrf.mxu0
        %v1721 = vpop.f32.mrf.mxu0
        %v1722 = vpop.f32.mrf.mxu0
        %1723 = vmatprep.mubr.bf16.mxu0 %v1652
        %1724 = vmatmul.mubr.bf16.gmra.mxu0 %v1494
        %v1725 = vpop.f32.mrf.mxu0
        %v1726 = vadd.f32 0.0, %v1725
        %v1727 = vpop.f32.mrf.mxu0
        %v1728 = vpop.f32.mrf.mxu0
        %v1729 = vpop.f32.mrf.mxu0
        %1730 = vmatprep.mubr.bf16.mxu0 %v1655
        %1731 = vmatmul.mubr.bf16.gmra.mxu0 %v1497
        %v1732 = vpop.f32.mrf.mxu0
        %v1733 = vadd.f32 0.0, %v1732
        %v1734 = vpop.f32.mrf.mxu0
        %v1735 = vpop.f32.mrf.mxu0
        %v1736 = vpop.f32.mrf.mxu0
        %1737 = vmatprep.mubr.bf16.mxu0 %v1658
        %1738 = vmatmul.mubr.bf16.gmra.mxu0 %v1500
        %v1739 = vpop.f32.mrf.mxu0
        %v1740 = vadd.f32 0.0, %v1739
        %v1741 = vpop.f32.mrf.mxu0
        %v1742 = vpop.f32.mrf.mxu0
        %v1743 = vpop.f32.mrf.mxu0
        %1744 = vmatprep.mubr.bf16.mxu0 %v1661
        %1745 = vmatmul.mubr.bf16.gmra.mxu0 %v1540
        %v1746 = vpop.f32.mrf.mxu0
        %v1747 = vadd.f32 0.0, %v1746
        %v1748 = vpop.f32.mrf.mxu0
        %v1749 = vpop.f32.mrf.mxu0
        %v1750 = vpop.f32.mrf.mxu0
        %1751 = vdwg.mxu0
        %v1776 = vunpack.c.l.b16 %v1502
        %v1777 = vunpack.c.l.b16 %v1503
        %v1778 = vunpack.c.l.b16 %v1504
        %v1779 = vunpack.c.l.b16 %v1505
        %v1780 = vunpack.c.l.b16 %v1506
        %v1781 = vunpack.c.l.b16 %v1507
        %v1782 = vunpack.c.l.b16 %v1508
        %v1783 = vunpack.c.l.b16 %v1509
        %v1784 = vunpack.c.l.b16 %v1510
        %v1785 = vunpack.c.l.b16 %v1511
        %v1786 = vunpack.c.l.b16 %v1512
        %v1787 = vunpack.c.l.b16 %v1513
        %v1788 = vunpack.c.l.b16 %v1514
        %v1789 = vunpack.c.l.b16 %v1515
        %v1790 = vunpack.c.l.b16 %v1516
        %v1791 = vunpack.c.l.b16 %v1517
        %v1792 = vunpack.c.l.b16 %v1518
        %v1793 = vunpack.c.l.b16 %v1519
        %v1794 = vunpack.c.l.b16 %v1520
        %v1795 = vunpack.c.l.b16 %v1521
        %v1796 = vunpack.c.l.b16 %v1522
        %v1797 = vunpack.c.l.b16 %v1523
        %v1798 = vunpack.c.l.b16 %v1524
        %v1799 = vunpack.c.l.b16 %v1525
        %v1800 = vpack.c.b16 %v1777, %v1776
        %v1801 = vpack.c.b16 %v1779, %v1778
        %v1802 = vpack.c.b16 %v1781, %v1780
        %v1803 = vpack.c.b16 %v1783, %v1782
        %v1804 = vpack.c.b16 %v1785, %v1784
        %v1805 = vpack.c.b16 %v1787, %v1786
        %v1806 = vpack.c.b16 %v1789, %v1788
        %v1807 = vpack.c.b16 %v1791, %v1790
        %v1808 = vpack.c.b16 %v1793, %v1792
        %v1809 = vpack.c.b16 %v1795, %v1794
        %v1810 = vpack.c.b16 %v1797, %v1796
        %v1811 = vpack.c.b16 %v1799, %v1798
        %v1825 = vsel %vm765, %v1463, 0
        %1827 = vmatprep.subr.bf16.mxu0 0
        %1828 = vmatpush1.bf16.msra.mxu0 %v1807
        %1829 = vmatprep.subr.bf16.mxu0 0
        %1830 = vmatpush1.bf16.msra.mxu0 %v1806
        %1831 = vmatprep.subr.bf16.mxu0 0
        %1832 = vmatpush1.bf16.msra.mxu0 %v1805
        %1833 = vmatprep.subr.bf16.mxu0 0
        %1834 = vmatpush1.bf16.msra.mxu0 %v1804
        %1835 = vmatprep.subr.bf16.mxu0 0
        %1836 = vmatpush1.bf16.msra.mxu0 %v1803
        %1837 = vmatprep.subr.bf16.mxu0 0
        %1838 = vmatpush1.bf16.msra.mxu0 %v1802
        %1839 = vmatprep.subr.bf16.mxu0 0
        %1840 = vmatpush1.bf16.msra.mxu0 %v1801
        %1841 = vmatprep.subr.bf16.mxu0 0
        %1842 = vmatpush1.bf16.msra.mxu0 %v1800
        %1843 = vmatprep.subr.bf16.mxu0 0
        %1844 = vmatpush2.bf16.msra.mxu0 0
        %1845 = vmatprep.subr.bf16.mxu0 0
        %1846 = vmatpush2.bf16.msra.mxu0 0
        %1847 = vmatprep.subr.bf16.mxu0 0
        %1848 = vmatpush2.bf16.msra.mxu0 0
        %1849 = vmatprep.subr.bf16.mxu0 0
        %1850 = vmatpush2.bf16.msra.mxu0 0
        %1851 = vmatprep.subr.bf16.mxu0 0
        %1852 = vmatpush2.bf16.msra.mxu0 %v1811
        %1853 = vmatprep.subr.bf16.mxu0 0
        %1854 = vmatpush2.bf16.msra.mxu0 %v1810
        %1855 = vmatprep.subr.bf16.mxu0 0
        %1856 = vmatpush2.bf16.msra.mxu0 %v1809
        %1857 = vmatprep.subr.bf16.mxu0 0
        %1858 = vmatpush2.bf16.msra.mxu0 %v1808
        %1859 = vmatprep.mubr.bf16.mxu0 %v1825
        %1860 = vmatmul.mubr.bf16.gmra.mxu0 %v1479
        %v1861 = vpop.f32.mrf.mxu0
        %v1862 = vadd.f32 %v1698, %v1861
        %v1863 = vpop.f32.mrf.mxu0
        %v1864 = vpop.f32.mrf.mxu0
        %v1865 = vpop.f32.mrf.mxu0
        %1866 = vmatprep.mubr.bf16.mxu0 %v1640
        %1867 = vmatmul.mubr.bf16.gmra.mxu0 %v1482
        %v1868 = vpop.f32.mrf.mxu0
        %v1869 = vadd.f32 %v1705, %v1868
        %v1870 = vpop.f32.mrf.mxu0
        %v1871 = vpop.f32.mrf.mxu0
        %v1872 = vpop.f32.mrf.mxu0
        %1873 = vmatprep.mubr.bf16.mxu0 %v1643
        %1874 = vmatmul.mubr.bf16.gmra.mxu0 %v1485
        %v1875 = vpop.f32.mrf.mxu0
        %v1876 = vadd.f32 %v1712, %v1875
        %v1877 = vpop.f32.mrf.mxu0
        %v1878 = vpop.f32.mrf.mxu0
        %v1879 = vpop.f32.mrf.mxu0
        %1880 = vmatprep.mubr.bf16.mxu0 %v1646
        %1881 = vmatmul.mubr.bf16.gmra.mxu0 %v1488
        %v1882 = vpop.f32.mrf.mxu0
        %v1883 = vadd.f32 %v1719, %v1882
        %v1884 = vpop.f32.mrf.mxu0
        %v1885 = vpop.f32.mrf.mxu0
        %v1886 = vpop.f32.mrf.mxu0
        %1887 = vmatprep.mubr.bf16.mxu0 %v1649
        %1888 = vmatmul.mubr.bf16.gmra.mxu0 %v1491
        %v1889 = vpop.f32.mrf.mxu0
        %v1890 = vadd.f32 %v1726, %v1889
        %v1891 = vpop.f32.mrf.mxu0
        %v1892 = vpop.f32.mrf.mxu0
        %v1893 = vpop.f32.mrf.mxu0
        %1894 = vmatprep.mubr.bf16.mxu0 %v1652
        %1895 = vmatmul.mubr.bf16.gmra.mxu0 %v1494
        %v1896 = vpop.f32.mrf.mxu0
        %v1897 = vadd.f32 %v1733, %v1896
        %v1898 = vpop.f32.mrf.mxu0
        %v1899 = vpop.f32.mrf.mxu0
        %v1900 = vpop.f32.mrf.mxu0
        %1901 = vmatprep.mubr.bf16.mxu0 %v1655
        %1902 = vmatmul.mubr.bf16.gmra.mxu0 %v1497
        %v1903 = vpop.f32.mrf.mxu0
        %v1904 = vadd.f32 %v1740, %v1903
        %v1905 = vpop.f32.mrf.mxu0
        %v1906 = vpop.f32.mrf.mxu0
        %v1907 = vpop.f32.mrf.mxu0
        %1908 = vmatprep.mubr.bf16.mxu0 %v1658
        %1909 = vmatmul.mubr.bf16.gmra.mxu0 %v1500
        %v1910 = vpop.f32.mrf.mxu0
        %v1911 = vadd.f32 %v1747, %v1910
        %v1912 = vpop.f32.mrf.mxu0
        %v1913 = vpop.f32.mrf.mxu0
        %v1914 = vpop.f32.mrf.mxu0
        %1915 = vdwg.mxu0
        %v1916 = vshrl.u32 %v1364, 16
        %v1918 = vor.u32 %v1916, %v1532
        %v1920 = vshll.u32 %v1365, 16
        %v1922 = vrot.slane %v1920, 1
        %v1923 = vsel %vm1366, %v1918, %v1922
        %1924 = vrot.lane.b32.xlu0 %v1923, 64
        %v1925 = vpop.permute.xlu0 %1924
        %v1927 = vrot.slane %v1365, 1
        %v1928 = vsel %vm1460, %v1537, %v1927
        %v1930 = vsel %vm765, %v1364, %v1925
        %s1932 = scalar_lea.vmem %s7, 192
        %v1933 = vld [vmem:[%s1932] sm:$0xf]
        %v1934 = vld [vmem:[%s1932 + $0x4] sm:$0xf]
        %v1935 = vld [vmem:[%s1932 + $0x8] sm:$0xf]
        %v1936 = vld [vmem:[%s1932 + $0xc] sm:$0xf]
        %v1937 = vld [vmem:[%s1932 + $0x10] sm:$0xf]
        %v1938 = vld [vmem:[%s1932 + $0x14] sm:$0xf]
        %v1939 = vld [vmem:[%s1932 + $0x18] sm:$0xf]
        %v1940 = vld [vmem:[%s1932 + $0x1c] sm:$0xf]
        %v1941 = vld [vmem:[%s1932 + $0x20] sm:$0xf]
        %v1942 = vld [vmem:[%s1932 + $0x24] sm:$0xf]
        %v1943 = vld [vmem:[%s1932 + $0x28] sm:$0xf]
        %v1944 = vld [vmem:[%s1932 + $0x2c] sm:$0xf]
        %v1945 = vld [vmem:[%s1932 + $0x30] sm:$0xf]
        %v1946 = vld [vmem:[%s1932 + $0x34] sm:$0xf]
        %v1947 = vld [vmem:[%s1932 + $0x38] sm:$0xf]
        %v1948 = vld [vmem:[%s1932 + $0x3c] sm:$0xf]
        %v1949 = vld [vmem:[%s1932 + $0x40] sm:$0xf]
        %v1950 = vld [vmem:[%s1932 + $0x44] sm:$0xf]
        %v1951 = vld [vmem:[%s1932 + $0x48] sm:$0xf]
        %v1952 = vld [vmem:[%s1932 + $0x4c] sm:$0xf]
        %v1953 = vld [vmem:[%s1932 + $0x50] sm:$0xf]
        %v1954 = vld [vmem:[%s1932 + $0x54] sm:$0xf]
        %v1955 = vld [vmem:[%s1932 + $0x58] sm:$0xf]
        %v1956 = vld [vmem:[%s1932 + $0x5c] sm:$0xf]
        %v1981 = vunpack.c.l.b16 %v1933
        %v1982 = vunpack.c.l.b16 %v1934
        %v1983 = vunpack.c.l.b16 %v1935
        %v1984 = vunpack.c.l.b16 %v1936
        %v1985 = vunpack.c.l.b16 %v1937
        %v1986 = vunpack.c.l.b16 %v1938
        %v1987 = vunpack.c.l.b16 %v1939
        %v1988 = vunpack.c.l.b16 %v1940
        %v1989 = vunpack.c.l.b16 %v1941
        %v1990 = vunpack.c.l.b16 %v1942
        %v1991 = vunpack.c.l.b16 %v1943
        %v1992 = vunpack.c.l.b16 %v1944
        %v1993 = vunpack.c.l.b16 %v1945
        %v1994 = vunpack.c.l.b16 %v1946
        %v1995 = vunpack.c.l.b16 %v1947
        %v1996 = vunpack.c.l.b16 %v1948
        %v1997 = vunpack.c.l.b16 %v1949
        %v1998 = vunpack.c.l.b16 %v1950
        %v1999 = vunpack.c.l.b16 %v1951
        %v2000 = vunpack.c.l.b16 %v1952
        %v2001 = vunpack.c.l.b16 %v1953
        %v2002 = vunpack.c.l.b16 %v1954
        %v2003 = vunpack.c.l.b16 %v1955
        %v2004 = vunpack.c.l.b16 %v1956
        %v2005 = vpack.c.b16 %v1982, %v1981
        %v2006 = vpack.c.b16 %v1984, %v1983
        %v2007 = vpack.c.b16 %v1986, %v1985
        %v2008 = vpack.c.b16 %v1988, %v1987
        %v2009 = vpack.c.b16 %v1990, %v1989
        %v2010 = vpack.c.b16 %v1992, %v1991
        %v2011 = vpack.c.b16 %v1994, %v1993
        %v2012 = vpack.c.b16 %v1996, %v1995
        %v2013 = vpack.c.b16 %v1998, %v1997
        %v2014 = vpack.c.b16 %v2000, %v1999
        %v2015 = vpack.c.b16 %v2002, %v2001
        %v2016 = vpack.c.b16 %v2004, %v2003
        %v2030 = vsel %vm765, %v1928, 0
        %2032 = vmatprep.subr.bf16.mxu0 0
        %2033 = vmatpush1.bf16.msra.mxu0 %v2012
        %2034 = vmatprep.subr.bf16.mxu0 0
        %2035 = vmatpush1.bf16.msra.mxu0 %v2011
        %2036 = vmatprep.subr.bf16.mxu0 0
        %2037 = vmatpush1.bf16.msra.mxu0 %v2010
        %2038 = vmatprep.subr.bf16.mxu0 0
        %2039 = vmatpush1.bf16.msra.mxu0 %v2009
        %2040 = vmatprep.subr.bf16.mxu0 0
        %2041 = vmatpush1.bf16.msra.mxu0 %v2008
        %2042 = vmatprep.subr.bf16.mxu0 0
        %2043 = vmatpush1.bf16.msra.mxu0 %v2007
        %2044 = vmatprep.subr.bf16.mxu0 0
        %2045 = vmatpush1.bf16.msra.mxu0 %v2006
        %2046 = vmatprep.subr.bf16.mxu0 0
        %2047 = vmatpush1.bf16.msra.mxu0 %v2005
        %2048 = vmatprep.subr.bf16.mxu0 0
        %2049 = vmatpush2.bf16.msra.mxu0 0
        %2050 = vmatprep.subr.bf16.mxu0 0
        %2051 = vmatpush2.bf16.msra.mxu0 0
        %2052 = vmatprep.subr.bf16.mxu0 0
        %2053 = vmatpush2.bf16.msra.mxu0 0
        %2054 = vmatprep.subr.bf16.mxu0 0
        %2055 = vmatpush2.bf16.msra.mxu0 0
        %2056 = vmatprep.subr.bf16.mxu0 0
        %2057 = vmatpush2.bf16.msra.mxu0 %v2016
        %2058 = vmatprep.subr.bf16.mxu0 0
        %2059 = vmatpush2.bf16.msra.mxu0 %v2015
        %2060 = vmatprep.subr.bf16.mxu0 0
        %2061 = vmatpush2.bf16.msra.mxu0 %v2014
        %2062 = vmatprep.subr.bf16.mxu0 0
        %2063 = vmatpush2.bf16.msra.mxu0 %v2013
        %2064 = vmatprep.mubr.bf16.mxu0 %v1643
        %2065 = vmatmul.mubr.bf16.gmra.mxu0 %v1485
        %v2066 = vpop.f32.mrf.mxu0
        %v2067 = vadd.f32 0.0, %v2066
        %v2068 = vpop.f32.mrf.mxu0
        %v2069 = vpop.f32.mrf.mxu0
        %v2070 = vpop.f32.mrf.mxu0
        %2071 = vmatprep.mubr.bf16.mxu0 %v1646
        %2072 = vmatmul.mubr.bf16.gmra.mxu0 %v1488
        %v2073 = vpop.f32.mrf.mxu0
        %v2074 = vadd.f32 0.0, %v2073
        %v2075 = vpop.f32.mrf.mxu0
        %v2076 = vpop.f32.mrf.mxu0
        %v2077 = vpop.f32.mrf.mxu0
        %2078 = vmatprep.mubr.bf16.mxu0 %v1649
        %2079 = vmatmul.mubr.bf16.gmra.mxu0 %v1491
        %v2080 = vpop.f32.mrf.mxu0
        %v2081 = vadd.f32 0.0, %v2080
        %v2082 = vpop.f32.mrf.mxu0
        %v2083 = vpop.f32.mrf.mxu0
        %v2084 = vpop.f32.mrf.mxu0
        %2085 = vmatprep.mubr.bf16.mxu0 %v1652
        %2086 = vmatmul.mubr.bf16.gmra.mxu0 %v1494
        %v2087 = vpop.f32.mrf.mxu0
        %v2088 = vadd.f32 0.0, %v2087
        %v2089 = vpop.f32.mrf.mxu0
        %v2090 = vpop.f32.mrf.mxu0
        %v2091 = vpop.f32.mrf.mxu0
        %2092 = vmatprep.mubr.bf16.mxu0 %v1655
        %2093 = vmatmul.mubr.bf16.gmra.mxu0 %v1497
        %v2094 = vpop.f32.mrf.mxu0
        %v2095 = vadd.f32 0.0, %v2094
        %v2096 = vpop.f32.mrf.mxu0
        %v2097 = vpop.f32.mrf.mxu0
        %v2098 = vpop.f32.mrf.mxu0
        %2099 = vmatprep.mubr.bf16.mxu0 %v1658
        %2100 = vmatmul.mubr.bf16.gmra.mxu0 %v1500
        %v2101 = vpop.f32.mrf.mxu0
        %v2102 = vadd.f32 0.0, %v2101
        %v2103 = vpop.f32.mrf.mxu0
        %v2104 = vpop.f32.mrf.mxu0
        %v2105 = vpop.f32.mrf.mxu0
        %2106 = vmatprep.mubr.bf16.mxu0 %v1661
        %2107 = vmatmul.mubr.bf16.gmra.mxu0 %v1540
        %v2108 = vpop.f32.mrf.mxu0
        %v2109 = vadd.f32 0.0, %v2108
        %v2110 = vpop.f32.mrf.mxu0
        %v2111 = vpop.f32.mrf.mxu0
        %v2112 = vpop.f32.mrf.mxu0
        %2113 = vmatprep.mubr.bf16.mxu0 %v2030
        %2114 = vmatmul.mubr.bf16.gmra.mxu0 %v1930
        %v2115 = vpop.f32.mrf.mxu0
        %v2116 = vadd.f32 0.0, %v2115
        %v2117 = vpop.f32.mrf.mxu0
        %v2118 = vpop.f32.mrf.mxu0
        %v2119 = vpop.f32.mrf.mxu0
        %2120 = vdwg.mxu0
        %v2121 = vadd.f32 %v1862, %v2067
        %v2122 = vadd.f32 %v1869, %v2074
        %v2123 = vadd.f32 %v1876, %v2081
        %v2124 = vadd.f32 %v1883, %v2088
        %v2125 = vadd.f32 %v1890, %v2095
        %v2126 = vadd.f32 %v1897, %v2102
        %v2127 = vadd.f32 %v1904, %v2109
        %v2128 = vadd.f32 %v1911, %v2116
        %v2129 = vld [vmem:[%s8] sm:$0x1]
        %v2131 = vlaneseq
        %v2132 = vshrl.u32 %v2131, 7
        %v2133 = vsub.s32 0, %v2132
        %v2134 = vrot.slane %v2129, %v2133
        %v2136 = vadd.f32 %v2121, %v2134
        %v2137 = vadd.f32 %v2122, %v2134
        %v2138 = vadd.f32 %v2123, %v2134
        %v2139 = vadd.f32 %v2124, %v2134
        %v2140 = vadd.f32 %v2125, %v2134
        %v2141 = vadd.f32 %v2126, %v2134
        %v2142 = vadd.f32 %v2127, %v2134
        %v2143 = vadd.f32 %v2128, %v2134
        %v2144 = vxor.u32 %v2136, 2147483648
        %v2145 = vxor.u32 %v2137, 2147483648
        %v2146 = vxor.u32 %v2138, 2147483648
        %v2147 = vxor.u32 %v2139, 2147483648
        %v2148 = vxor.u32 %v2140, 2147483648
        %v2149 = vxor.u32 %v2141, 2147483648
        %v2150 = vxor.u32 %v2142, 2147483648
        %v2151 = vxor.u32 %v2143, 2147483648
        %v2152 = vmul.f32 %v2144, 1.442695
        %v2153 = vpow.pop %v2152
        %v2154 = vmul.f32 %v2145, 1.442695
        %v2155 = vpow.pop %v2154
        %v2156 = vmul.f32 %v2146, 1.442695
        %v2157 = vpow.pop %v2156
        %v2158 = vmul.f32 %v2147, 1.442695
        %v2159 = vpow.pop %v2158
        %v2160 = vmul.f32 %v2148, 1.442695
        %v2161 = vpow.pop %v2160
        %v2162 = vmul.f32 %v2149, 1.442695
        %v2163 = vpow.pop %v2162
        %v2164 = vmul.f32 %v2150, 1.442695
        %v2165 = vpow.pop %v2164
        %v2166 = vmul.f32 %v2151, 1.442695
        %v2167 = vpow.pop %v2166
        %v2168 = vadd.f32 %v2153, 1.0
        %v2169 = vadd.f32 %v2155, 1.0
        %v2170 = vadd.f32 %v2157, 1.0
        %v2171 = vadd.f32 %v2159, 1.0
        %v2172 = vadd.f32 %v2161, 1.0
        %v2173 = vadd.f32 %v2163, 1.0
        %v2174 = vadd.f32 %v2165, 1.0
        %v2175 = vadd.f32 %v2167, 1.0
        %v2176 = vrcp.pop %v2168
        %v2177 = vmul.f32 1.0, %v2176
        %v2178 = vrcp.pop %v2169
        %v2179 = vmul.f32 1.0, %v2178
        %v2180 = vrcp.pop %v2170
        %v2181 = vmul.f32 1.0, %v2180
        %v2182 = vrcp.pop %v2171
        %v2183 = vmul.f32 1.0, %v2182
        %v2184 = vrcp.pop %v2172
        %v2185 = vmul.f32 1.0, %v2184
        %v2186 = vrcp.pop %v2173
        %v2187 = vmul.f32 1.0, %v2186
        %v2188 = vrcp.pop %v2174
        %v2189 = vmul.f32 1.0, %v2188
        %v2190 = vrcp.pop %v2175
        %v2191 = vmul.f32 1.0, %v2190
        %2200 = vrot.lane.b32.xlu0 %v2177, 64
        %v2201 = vpop.permute.xlu0 %2200
        %2202 = vrot.lane.b32.xlu0 %v2179, 64
        %v2203 = vpop.permute.xlu0 %2202
        %2204 = vrot.lane.b32.xlu0 %v2181, 64
        %v2205 = vpop.permute.xlu0 %2204
        %2206 = vrot.lane.b32.xlu0 %v2183, 64
        %v2207 = vpop.permute.xlu0 %2206
        %2208 = vrot.lane.b32.xlu0 %v2185, 64
        %v2209 = vpop.permute.xlu0 %2208
        %2210 = vrot.lane.b32.xlu0 %v2187, 64
        %v2211 = vpop.permute.xlu0 %2210
        %2212 = vrot.lane.b32.xlu0 %v2189, 64
        %v2213 = vpop.permute.xlu0 %2212
        %2214 = vrot.lane.b32.xlu0 %v2191, 64
        %v2215 = vpop.permute.xlu0 %2214
        %v2224 = vmul.f32 %v2136, %v2201
        %v2225 = vmul.f32 %v2137, %v2203
        %v2226 = vmul.f32 %v2138, %v2205
        %v2227 = vmul.f32 %v2139, %v2207
        %v2228 = vmul.f32 %v2140, %v2209
        %v2229 = vmul.f32 %v2141, %v2211
        %v2230 = vmul.f32 %v2142, %v2213
        %v2231 = vmul.f32 %v2143, %v2215
        %2232 = vst.msk [vmem:[#allocation2 + $0x11] sm:$0xff] %vm765, %v2224
        %2233 = vst.msk [vmem:[#allocation2 + $0x21] sm:$0xff] %vm765, %v2225
        %2234 = vst.msk [vmem:[#allocation2 + $0x31] sm:$0xff] %vm765, %v2226
        %2235 = vst.msk [vmem:[#allocation2 + $0x41] sm:$0xff] %vm765, %v2227
        %2236 = vst.msk [vmem:[#allocation2 + $0x51] sm:$0xff] %vm765, %v2228
        %2237 = vst.msk [vmem:[#allocation2 + $0x61] sm:$0xff] %vm765, %v2229
        %2238 = vst.msk [vmem:[#allocation2 + $0x71] sm:$0xff] %vm765, %v2230
        %2239 = vst.msk [vmem:[#allocation2 + $0x81] sm:$0xff] %vm765, %v2231
        %v2240 = vld [vmem:[#allocation2] sm:$0xff]
        %v2241 = vld [vmem:[#allocation2 + $0x8] sm:$0xff]
        %v2242 = vld [vmem:[#allocation2 + $0x10] sm:$0xff]
        %v2243 = vld [vmem:[#allocation2 + $0x18] sm:$0xff]
        %v2244 = vld [vmem:[#allocation2 + $0x20] sm:$0xff]
        %v2245 = vld [vmem:[#allocation2 + $0x28] sm:$0xff]
        %v2246 = vld [vmem:[#allocation2 + $0x30] sm:$0xff]
        %v2247 = vld [vmem:[#allocation2 + $0x38] sm:$0xff]
        %v2248 = vld [vmem:[#allocation2 + $0x40] sm:$0xff]
        %v2249 = vld [vmem:[#allocation2 + $0x48] sm:$0xff]
        %v2250 = vld [vmem:[#allocation2 + $0x50] sm:$0xff]
        %v2251 = vld [vmem:[#allocation2 + $0x58] sm:$0xff]
        %v2252 = vld [vmem:[#allocation2 + $0x60] sm:$0xff]
        %v2253 = vld [vmem:[#allocation2 + $0x68] sm:$0xff]
        %v2254 = vld [vmem:[#allocation2 + $0x70] sm:$0xff]
        %v2255 = vld [vmem:[#allocation2 + $0x78] sm:$0xff]
        %v2256 = vld [vmem:[#allocation2 + $0x80] sm:$0xff]
        %v2257 = vld [vmem:[#allocation2 + $0x88] sm:$0xff]
        %v2258 = vld [vmem:[#allocation2 + $0x90] sm:$0xff]
        %v2259 = vld [vmem:[#allocation2 + $0x98] sm:$0xff]
        %v2260 = vld [vmem:[#allocation2 + $0xa0] sm:$0xff]
        %v2261 = vpack.c.bf16 %v2241, %v2240
        %v2262 = vpack.c.bf16 %v2243, %v2242
        %v2263 = vpack.c.bf16 %v2245, %v2244
        %v2264 = vpack.c.bf16 %v2247, %v2246
        %v2265 = vpack.c.bf16 %v2249, %v2248
        %v2266 = vpack.c.bf16 %v2251, %v2250
        %v2267 = vpack.c.bf16 %v2253, %v2252
        %v2268 = vpack.c.bf16 %v2255, %v2254
        %v2269 = vpack.c.bf16 %v2257, %v2256
        %v2270 = vpack.c.bf16 %v2259, %v2258
        %v2271 = vpack.c.bf16 %v2260, %v2260
        %v2273 = vshrl.u32 %v2261, 16
        %v2275 = vshll.u32 %v2261, 16
        %v2277 = vrot.slane %v2275, 1
        %v2278 = vor.u32 %v2273, %v2277
        %v2280 = vshll.u32 %v2262, 16
        %v2282 = vrot.slane %v2280, 1
        %v2283 = vsel %vm1366, %v2278, %v2282
        %v2284 = vshrl.u32 %v2262, 16
        %v2286 = vor.u32 %v2284, %v2282
        %v2288 = vshll.u32 %v2263, 16
        %v2290 = vrot.slane %v2288, 1
        %v2291 = vsel %vm1366, %v2286, %v2290
        %v2292 = vshrl.u32 %v2263, 16
        %v2294 = vor.u32 %v2292, %v2290
        %v2296 = vshll.u32 %v2264, 16
        %v2298 = vrot.slane %v2296, 1
        %v2299 = vsel %vm1366, %v2294, %v2298
        %v2300 = vshrl.u32 %v2264, 16
        %v2302 = vor.u32 %v2300, %v2298
        %v2304 = vshll.u32 %v2265, 16
        %v2306 = vrot.slane %v2304, 1
        %v2307 = vsel %vm1366, %v2302, %v2306
        %v2308 = vshrl.u32 %v2265, 16
        %v2310 = vor.u32 %v2308, %v2306
        %v2312 = vshll.u32 %v2266, 16
        %v2314 = vrot.slane %v2312, 1
        %v2315 = vsel %vm1366, %v2310, %v2314
        %v2316 = vshrl.u32 %v2266, 16
        %v2318 = vor.u32 %v2316, %v2314
        %v2320 = vshll.u32 %v2267, 16
        %v2322 = vrot.slane %v2320, 1
        %v2323 = vsel %vm1366, %v2318, %v2322
        %v2324 = vshrl.u32 %v2267, 16
        %v2326 = vor.u32 %v2324, %v2322
        %v2328 = vshll.u32 %v2268, 16
        %v2330 = vrot.slane %v2328, 1
        %v2331 = vsel %vm1366, %v2326, %v2330
        %v2332 = vshrl.u32 %v2268, 16
        %v2334 = vor.u32 %v2332, %v2330
        %v2336 = vshll.u32 %v2269, 16
        %v2338 = vrot.slane %v2336, 1
        %v2339 = vsel %vm1366, %v2334, %v2338
        %2340 = vrot.lane.b32.xlu0 %v2283, 64
        %v2341 = vpop.permute.xlu0 %2340
        %2342 = vrot.lane.b32.xlu0 %v2291, 64
        %v2343 = vpop.permute.xlu0 %2342
        %2344 = vrot.lane.b32.xlu0 %v2299, 64
        %v2345 = vpop.permute.xlu0 %2344
        %2346 = vrot.lane.b32.xlu0 %v2307, 64
        %v2347 = vpop.permute.xlu0 %2346
        %2348 = vrot.lane.b32.xlu0 %v2315, 64
        %v2349 = vpop.permute.xlu0 %2348
        %2350 = vrot.lane.b32.xlu0 %v2323, 64
        %v2351 = vpop.permute.xlu0 %2350
        %2352 = vrot.lane.b32.xlu0 %v2331, 64
        %v2353 = vpop.permute.xlu0 %2352
        %2354 = vrot.lane.b32.xlu0 %v2339, 64
        %v2355 = vpop.permute.xlu0 %2354
        %v2365 = vrot.slane %v2261, 1
        %v2366 = vrot.slane %v2262, 1
        %v2367 = vsel %vm1460, %v2365, %v2366
        %v2368 = vrot.slane %v2263, 1
        %v2369 = vsel %vm1460, %v2366, %v2368
        %v2370 = vrot.slane %v2264, 1
        %v2371 = vsel %vm1460, %v2368, %v2370
        %v2372 = vrot.slane %v2265, 1
        %v2373 = vsel %vm1460, %v2370, %v2372
        %v2374 = vrot.slane %v2266, 1
        %v2375 = vsel %vm1460, %v2372, %v2374
        %v2376 = vrot.slane %v2267, 1
        %v2377 = vsel %vm1460, %v2374, %v2376
        %v2378 = vrot.slane %v2268, 1
        %v2379 = vsel %vm1460, %v2376, %v2378
        %v2380 = vrot.slane %v2269, 1
        %v2381 = vsel %vm1460, %v2378, %v2380
        %v2383 = vsel %vm765, %v2261, %v2341
        %v2386 = vsel %vm765, %v2262, %v2343
        %v2389 = vsel %vm765, %v2263, %v2345
        %v2392 = vsel %vm765, %v2264, %v2347
        %v2395 = vsel %vm765, %v2265, %v2349
        %v2398 = vsel %vm765, %v2266, %v2351
        %v2401 = vsel %vm765, %v2267, %v2353
        %v2404 = vsel %vm765, %v2268, %v2355
        %v2406 = vld [vmem:[%s9] sm:$0xf]
        %v2407 = vld [vmem:[%s9 + $0x4] sm:$0xf]
        %v2408 = vld [vmem:[%s9 + $0x8] sm:$0xf]
        %v2409 = vld [vmem:[%s9 + $0xc] sm:$0xf]
        %v2410 = vld [vmem:[%s9 + $0x10] sm:$0xf]
        %v2411 = vld [vmem:[%s9 + $0x14] sm:$0xf]
        %v2412 = vld [vmem:[%s9 + $0x18] sm:$0xf]
        %v2413 = vld [vmem:[%s9 + $0x1c] sm:$0xf]
        %v2414 = vld [vmem:[%s9 + $0x20] sm:$0xf]
        %v2415 = vld [vmem:[%s9 + $0x24] sm:$0xf]
        %v2416 = vld [vmem:[%s9 + $0x28] sm:$0xf]
        %v2417 = vld [vmem:[%s9 + $0x2c] sm:$0xf]
        %v2418 = vld [vmem:[%s9 + $0x30] sm:$0xf]
        %v2419 = vld [vmem:[%s9 + $0x34] sm:$0xf]
        %v2420 = vld [vmem:[%s9 + $0x38] sm:$0xf]
        %v2421 = vld [vmem:[%s9 + $0x3c] sm:$0xf]
        %v2422 = vld [vmem:[%s9 + $0x40] sm:$0xf]
        %v2423 = vld [vmem:[%s9 + $0x44] sm:$0xf]
        %v2424 = vld [vmem:[%s9 + $0x48] sm:$0xf]
        %v2425 = vld [vmem:[%s9 + $0x4c] sm:$0xf]
        %v2426 = vld [vmem:[%s9 + $0x50] sm:$0xf]
        %v2427 = vld [vmem:[%s9 + $0x54] sm:$0xf]
        %v2428 = vld [vmem:[%s9 + $0x58] sm:$0xf]
        %v2429 = vld [vmem:[%s9 + $0x5c] sm:$0xf]
        %v2430 = vshrl.u32 %v2269, 16
        %v2432 = vor.u32 %v2430, %v2338
        %v2434 = vshll.u32 %v2270, 16
        %v2436 = vrot.slane %v2434, 1
        %v2437 = vsel %vm1366, %v2432, %v2436
        %2438 = vrot.lane.b32.xlu0 %v2437, 64
        %v2439 = vpop.permute.xlu0 %2438
        %v2441 = vrot.slane %v2270, 1
        %v2442 = vsel %vm1460, %v2380, %v2441
        %v2444 = vsel %vm765, %v2269, %v2439
        %s2446 = scalar_lea.vmem %s9, 96
        %v2447 = vld [vmem:[%s2446] sm:$0xf]
        %v2448 = vld [vmem:[%s2446 + $0x4] sm:$0xf]
        %v2449 = vld [vmem:[%s2446 + $0x8] sm:$0xf]
        %v2450 = vld [vmem:[%s2446 + $0xc] sm:$0xf]
        %v2451 = vld [vmem:[%s2446 + $0x10] sm:$0xf]
        %v2452 = vld [vmem:[%s2446 + $0x14] sm:$0xf]
        %v2453 = vld [vmem:[%s2446 + $0x18] sm:$0xf]
        %v2454 = vld [vmem:[%s2446 + $0x1c] sm:$0xf]
        %v2455 = vld [vmem:[%s2446 + $0x20] sm:$0xf]
        %v2456 = vld [vmem:[%s2446 + $0x24] sm:$0xf]
        %v2457 = vld [vmem:[%s2446 + $0x28] sm:$0xf]
        %v2458 = vld [vmem:[%s2446 + $0x2c] sm:$0xf]
        %v2459 = vld [vmem:[%s2446 + $0x30] sm:$0xf]
        %v2460 = vld [vmem:[%s2446 + $0x34] sm:$0xf]
        %v2461 = vld [vmem:[%s2446 + $0x38] sm:$0xf]
        %v2462 = vld [vmem:[%s2446 + $0x3c] sm:$0xf]
        %v2463 = vld [vmem:[%s2446 + $0x40] sm:$0xf]
        %v2464 = vld [vmem:[%s2446 + $0x44] sm:$0xf]
        %v2465 = vld [vmem:[%s2446 + $0x48] sm:$0xf]
        %v2466 = vld [vmem:[%s2446 + $0x4c] sm:$0xf]
        %v2467 = vld [vmem:[%s2446 + $0x50] sm:$0xf]
        %v2468 = vld [vmem:[%s2446 + $0x54] sm:$0xf]
        %v2469 = vld [vmem:[%s2446 + $0x58] sm:$0xf]
        %v2470 = vld [vmem:[%s2446 + $0x5c] sm:$0xf]
        %v2495 = vunpack.c.l.b16 %v2447
        %v2496 = vunpack.c.l.b16 %v2448
        %v2497 = vunpack.c.l.b16 %v2449
        %v2498 = vunpack.c.l.b16 %v2450
        %v2499 = vunpack.c.l.b16 %v2451
        %v2500 = vunpack.c.l.b16 %v2452
        %v2501 = vunpack.c.l.b16 %v2453
        %v2502 = vunpack.c.l.b16 %v2454
        %v2503 = vunpack.c.l.b16 %v2455
        %v2504 = vunpack.c.l.b16 %v2456
        %v2505 = vunpack.c.l.b16 %v2457
        %v2506 = vunpack.c.l.b16 %v2458
        %v2507 = vunpack.c.l.b16 %v2459
        %v2508 = vunpack.c.l.b16 %v2460
        %v2509 = vunpack.c.l.b16 %v2461
        %v2510 = vunpack.c.l.b16 %v2462
        %v2511 = vunpack.c.l.b16 %v2463
        %v2512 = vunpack.c.l.b16 %v2464
        %v2513 = vunpack.c.l.b16 %v2465
        %v2514 = vunpack.c.l.b16 %v2466
        %v2515 = vunpack.c.l.b16 %v2467
        %v2516 = vunpack.c.l.b16 %v2468
        %v2517 = vunpack.c.l.b16 %v2469
        %v2518 = vunpack.c.l.b16 %v2470
        %v2519 = vpack.c.b16 %v2496, %v2495
        %v2520 = vpack.c.b16 %v2498, %v2497
        %v2521 = vpack.c.b16 %v2500, %v2499
        %v2522 = vpack.c.b16 %v2502, %v2501
        %v2523 = vpack.c.b16 %v2504, %v2503
        %v2524 = vpack.c.b16 %v2506, %v2505
        %v2525 = vpack.c.b16 %v2508, %v2507
        %v2526 = vpack.c.b16 %v2510, %v2509
        %v2527 = vpack.c.b16 %v2512, %v2511
        %v2528 = vpack.c.b16 %v2514, %v2513
        %v2529 = vpack.c.b16 %v2516, %v2515
        %v2530 = vpack.c.b16 %v2518, %v2517
        %v2544 = vsel %vm765, %v2369, 0
        %v2547 = vsel %vm765, %v2371, 0
        %v2550 = vsel %vm765, %v2373, 0
        %v2553 = vsel %vm765, %v2375, 0
        %v2556 = vsel %vm765, %v2377, 0
        %v2559 = vsel %vm765, %v2379, 0
        %v2562 = vsel %vm765, %v2381, 0
        %v2565 = vsel %vm765, %v2442, 0
        %2567 = vmatprep.subr.bf16.mxu0 0
        %2568 = vmatpush1.bf16.msra.mxu0 %v2526
        %2569 = vmatprep.subr.bf16.mxu0 0
        %2570 = vmatpush1.bf16.msra.mxu0 %v2525
        %2571 = vmatprep.subr.bf16.mxu0 0
        %2572 = vmatpush1.bf16.msra.mxu0 %v2524
        %2573 = vmatprep.subr.bf16.mxu0 0
        %2574 = vmatpush1.bf16.msra.mxu0 %v2523
        %2575 = vmatprep.subr.bf16.mxu0 0
        %2576 = vmatpush1.bf16.msra.mxu0 %v2522
        %2577 = vmatprep.subr.bf16.mxu0 0
        %2578 = vmatpush1.bf16.msra.mxu0 %v2521
        %2579 = vmatprep.subr.bf16.mxu0 0
        %2580 = vmatpush1.bf16.msra.mxu0 %v2520
        %2581 = vmatprep.subr.bf16.mxu0 0
        %2582 = vmatpush1.bf16.msra.mxu0 %v2519
        %2583 = vmatprep.subr.bf16.mxu0 0
        %2584 = vmatpush2.bf16.msra.mxu0 0
        %2585 = vmatprep.subr.bf16.mxu0 0
        %2586 = vmatpush2.bf16.msra.mxu0 0
        %2587 = vmatprep.subr.bf16.mxu0 0
        %2588 = vmatpush2.bf16.msra.mxu0 0
        %2589 = vmatprep.subr.bf16.mxu0 0
        %2590 = vmatpush2.bf16.msra.mxu0 0
        %2591 = vmatprep.subr.bf16.mxu0 0
        %2592 = vmatpush2.bf16.msra.mxu0 %v2530
        %2593 = vmatprep.subr.bf16.mxu0 0
        %2594 = vmatpush2.bf16.msra.mxu0 %v2529
        %2595 = vmatprep.subr.bf16.mxu0 0
        %2596 = vmatpush2.bf16.msra.mxu0 %v2528
        %2597 = vmatprep.subr.bf16.mxu0 0
        %2598 = vmatpush2.bf16.msra.mxu0 %v2527
        %2599 = vmatprep.mubr.bf16.mxu0 %v2544
        %2600 = vmatmul.mubr.bf16.gmra.mxu0 %v2386
        %v2601 = vpop.f32.mrf.mxu0
        %v2602 = vadd.f32 0.0, %v2601
        %v2603 = vpop.f32.mrf.mxu0
        %v2604 = vpop.f32.mrf.mxu0
        %v2605 = vpop.f32.mrf.mxu0
        %2606 = vmatprep.mubr.bf16.mxu0 %v2547
        %2607 = vmatmul.mubr.bf16.gmra.mxu0 %v2389
        %v2608 = vpop.f32.mrf.mxu0
        %v2609 = vadd.f32 0.0, %v2608
        %v2610 = vpop.f32.mrf.mxu0
        %v2611 = vpop.f32.mrf.mxu0
        %v2612 = vpop.f32.mrf.mxu0
        %2613 = vmatprep.mubr.bf16.mxu0 %v2550
        %2614 = vmatmul.mubr.bf16.gmra.mxu0 %v2392
        %v2615 = vpop.f32.mrf.mxu0
        %v2616 = vadd.f32 0.0, %v2615
        %v2617 = vpop.f32.mrf.mxu0
        %v2618 = vpop.f32.mrf.mxu0
        %v2619 = vpop.f32.mrf.mxu0
        %2620 = vmatprep.mubr.bf16.mxu0 %v2553
        %2621 = vmatmul.mubr.bf16.gmra.mxu0 %v2395
        %v2622 = vpop.f32.mrf.mxu0
        %v2623 = vadd.f32 0.0, %v2622
        %v2624 = vpop.f32.mrf.mxu0
        %v2625 = vpop.f32.mrf.mxu0
        %v2626 = vpop.f32.mrf.mxu0
        %2627 = vmatprep.mubr.bf16.mxu0 %v2556
        %2628 = vmatmul.mubr.bf16.gmra.mxu0 %v2398
        %v2629 = vpop.f32.mrf.mxu0
        %v2630 = vadd.f32 0.0, %v2629
        %v2631 = vpop.f32.mrf.mxu0
        %v2632 = vpop.f32.mrf.mxu0
        %v2633 = vpop.f32.mrf.mxu0
        %2634 = vmatprep.mubr.bf16.mxu0 %v2559
        %2635 = vmatmul.mubr.bf16.gmra.mxu0 %v2401
        %v2636 = vpop.f32.mrf.mxu0
        %v2637 = vadd.f32 0.0, %v2636
        %v2638 = vpop.f32.mrf.mxu0
        %v2639 = vpop.f32.mrf.mxu0
        %v2640 = vpop.f32.mrf.mxu0
        %2641 = vmatprep.mubr.bf16.mxu0 %v2562
        %2642 = vmatmul.mubr.bf16.gmra.mxu0 %v2404
        %v2643 = vpop.f32.mrf.mxu0
        %v2644 = vadd.f32 0.0, %v2643
        %v2645 = vpop.f32.mrf.mxu0
        %v2646 = vpop.f32.mrf.mxu0
        %v2647 = vpop.f32.mrf.mxu0
        %2648 = vmatprep.mubr.bf16.mxu0 %v2565
        %2649 = vmatmul.mubr.bf16.gmra.mxu0 %v2444
        %v2650 = vpop.f32.mrf.mxu0
        %v2651 = vadd.f32 0.0, %v2650
        %v2652 = vpop.f32.mrf.mxu0
        %v2653 = vpop.f32.mrf.mxu0
        %v2654 = vpop.f32.mrf.mxu0
        %2655 = vdwg.mxu0
        %v2680 = vunpack.c.l.b16 %v2406
        %v2681 = vunpack.c.l.b16 %v2407
        %v2682 = vunpack.c.l.b16 %v2408
        %v2683 = vunpack.c.l.b16 %v2409
        %v2684 = vunpack.c.l.b16 %v2410
        %v2685 = vunpack.c.l.b16 %v2411
        %v2686 = vunpack.c.l.b16 %v2412
        %v2687 = vunpack.c.l.b16 %v2413
        %v2688 = vunpack.c.l.b16 %v2414
        %v2689 = vunpack.c.l.b16 %v2415
        %v2690 = vunpack.c.l.b16 %v2416
        %v2691 = vunpack.c.l.b16 %v2417
        %v2692 = vunpack.c.l.b16 %v2418
        %v2693 = vunpack.c.l.b16 %v2419
        %v2694 = vunpack.c.l.b16 %v2420
        %v2695 = vunpack.c.l.b16 %v2421
        %v2696 = vunpack.c.l.b16 %v2422
        %v2697 = vunpack.c.l.b16 %v2423
        %v2698 = vunpack.c.l.b16 %v2424
        %v2699 = vunpack.c.l.b16 %v2425
        %v2700 = vunpack.c.l.b16 %v2426
        %v2701 = vunpack.c.l.b16 %v2427
        %v2702 = vunpack.c.l.b16 %v2428
        %v2703 = vunpack.c.l.b16 %v2429
        %v2704 = vpack.c.b16 %v2681, %v2680
        %v2705 = vpack.c.b16 %v2683, %v2682
        %v2706 = vpack.c.b16 %v2685, %v2684
        %v2707 = vpack.c.b16 %v2687, %v2686
        %v2708 = vpack.c.b16 %v2689, %v2688
        %v2709 = vpack.c.b16 %v2691, %v2690
        %v2710 = vpack.c.b16 %v2693, %v2692
        %v2711 = vpack.c.b16 %v2695, %v2694
        %v2712 = vpack.c.b16 %v2697, %v2696
        %v2713 = vpack.c.b16 %v2699, %v2698
        %v2714 = vpack.c.b16 %v2701, %v2700
        %v2715 = vpack.c.b16 %v2703, %v2702
        %v2729 = vsel %vm765, %v2367, 0
        %2731 = vmatprep.subr.bf16.mxu0 0
        %2732 = vmatpush1.bf16.msra.mxu0 %v2711
        %2733 = vmatprep.subr.bf16.mxu0 0
        %2734 = vmatpush1.bf16.msra.mxu0 %v2710
        %2735 = vmatprep.subr.bf16.mxu0 0
        %2736 = vmatpush1.bf16.msra.mxu0 %v2709
        %2737 = vmatprep.subr.bf16.mxu0 0
        %2738 = vmatpush1.bf16.msra.mxu0 %v2708
        %2739 = vmatprep.subr.bf16.mxu0 0
        %2740 = vmatpush1.bf16.msra.mxu0 %v2707
        %2741 = vmatprep.subr.bf16.mxu0 0
        %2742 = vmatpush1.bf16.msra.mxu0 %v2706
        %2743 = vmatprep.subr.bf16.mxu0 0
        %2744 = vmatpush1.bf16.msra.mxu0 %v2705
        %2745 = vmatprep.subr.bf16.mxu0 0
        %2746 = vmatpush1.bf16.msra.mxu0 %v2704
        %2747 = vmatprep.subr.bf16.mxu0 0
        %2748 = vmatpush2.bf16.msra.mxu0 0
        %2749 = vmatprep.subr.bf16.mxu0 0
        %2750 = vmatpush2.bf16.msra.mxu0 0
        %2751 = vmatprep.subr.bf16.mxu0 0
        %2752 = vmatpush2.bf16.msra.mxu0 0
        %2753 = vmatprep.subr.bf16.mxu0 0
        %2754 = vmatpush2.bf16.msra.mxu0 0
        %2755 = vmatprep.subr.bf16.mxu0 0
        %2756 = vmatpush2.bf16.msra.mxu0 %v2715
        %2757 = vmatprep.subr.bf16.mxu0 0
        %2758 = vmatpush2.bf16.msra.mxu0 %v2714
        %2759 = vmatprep.subr.bf16.mxu0 0
        %2760 = vmatpush2.bf16.msra.mxu0 %v2713
        %2761 = vmatprep.subr.bf16.mxu0 0
        %2762 = vmatpush2.bf16.msra.mxu0 %v2712
        %2763 = vmatprep.mubr.bf16.mxu0 %v2729
        %2764 = vmatmul.mubr.bf16.gmra.mxu0 %v2383
        %v2765 = vpop.f32.mrf.mxu0
        %v2766 = vadd.f32 %v2602, %v2765
        %v2767 = vpop.f32.mrf.mxu0
        %v2768 = vpop.f32.mrf.mxu0
        %v2769 = vpop.f32.mrf.mxu0
        %2770 = vmatprep.mubr.bf16.mxu0 %v2544
        %2771 = vmatmul.mubr.bf16.gmra.mxu0 %v2386
        %v2772 = vpop.f32.mrf.mxu0
        %v2773 = vadd.f32 %v2609, %v2772
        %v2774 = vpop.f32.mrf.mxu0
        %v2775 = vpop.f32.mrf.mxu0
        %v2776 = vpop.f32.mrf.mxu0
        %2777 = vmatprep.mubr.bf16.mxu0 %v2547
        %2778 = vmatmul.mubr.bf16.gmra.mxu0 %v2389
        %v2779 = vpop.f32.mrf.mxu0
        %v2780 = vadd.f32 %v2616, %v2779
        %v2781 = vpop.f32.mrf.mxu0
        %v2782 = vpop.f32.mrf.mxu0
        %v2783 = vpop.f32.mrf.mxu0
        %2784 = vmatprep.mubr.bf16.mxu0 %v2550
        %2785 = vmatmul.mubr.bf16.gmra.mxu0 %v2392
        %v2786 = vpop.f32.mrf.mxu0
        %v2787 = vadd.f32 %v2623, %v2786
        %v2788 = vpop.f32.mrf.mxu0
        %v2789 = vpop.f32.mrf.mxu0
        %v2790 = vpop.f32.mrf.mxu0
        %2791 = vmatprep.mubr.bf16.mxu0 %v2553
        %2792 = vmatmul.mubr.bf16.gmra.mxu0 %v2395
        %v2793 = vpop.f32.mrf.mxu0
        %v2794 = vadd.f32 %v2630, %v2793
        %v2795 = vpop.f32.mrf.mxu0
        %v2796 = vpop.f32.mrf.mxu0
        %v2797 = vpop.f32.mrf.mxu0
        %2798 = vmatprep.mubr.bf16.mxu0 %v2556
        %2799 = vmatmul.mubr.bf16.gmra.mxu0 %v2398
        %v2800 = vpop.f32.mrf.mxu0
        %v2801 = vadd.f32 %v2637, %v2800
        %v2802 = vpop.f32.mrf.mxu0
        %v2803 = vpop.f32.mrf.mxu0
        %v2804 = vpop.f32.mrf.mxu0
        %2805 = vmatprep.mubr.bf16.mxu0 %v2559
        %2806 = vmatmul.mubr.bf16.gmra.mxu0 %v2401
        %v2807 = vpop.f32.mrf.mxu0
        %v2808 = vadd.f32 %v2644, %v2807
        %v2809 = vpop.f32.mrf.mxu0
        %v2810 = vpop.f32.mrf.mxu0
        %v2811 = vpop.f32.mrf.mxu0
        %2812 = vmatprep.mubr.bf16.mxu0 %v2562
        %2813 = vmatmul.mubr.bf16.gmra.mxu0 %v2404
        %v2814 = vpop.f32.mrf.mxu0
        %v2815 = vadd.f32 %v2651, %v2814
        %v2816 = vpop.f32.mrf.mxu0
        %v2817 = vpop.f32.mrf.mxu0
        %v2818 = vpop.f32.mrf.mxu0
        %2819 = vdwg.mxu0
        %v2820 = vshrl.u32 %v2270, 16
        %v2822 = vor.u32 %v2820, %v2436
        %v2824 = vshll.u32 %v2271, 16
        %v2826 = vrot.slane %v2824, 1
        %v2827 = vsel %vm1366, %v2822, %v2826
        %2828 = vrot.lane.b32.xlu0 %v2827, 64
        %v2829 = vpop.permute.xlu0 %2828
        %v2831 = vrot.slane %v2271, 1
        %v2832 = vsel %vm1460, %v2441, %v2831
        %v2834 = vsel %vm765, %v2270, %v2829
        %s2836 = scalar_lea.vmem %s9, 192
        %v2837 = vld [vmem:[%s2836] sm:$0xf]
        %v2838 = vld [vmem:[%s2836 + $0x4] sm:$0xf]
        %v2839 = vld [vmem:[%s2836 + $0x8] sm:$0xf]
        %v2840 = vld [vmem:[%s2836 + $0xc] sm:$0xf]
        %v2841 = vld [vmem:[%s2836 + $0x10] sm:$0xf]
        %v2842 = vld [vmem:[%s2836 + $0x14] sm:$0xf]
        %v2843 = vld [vmem:[%s2836 + $0x18] sm:$0xf]
        %v2844 = vld [vmem:[%s2836 + $0x1c] sm:$0xf]
        %v2845 = vld [vmem:[%s2836 + $0x20] sm:$0xf]
        %v2846 = vld [vmem:[%s2836 + $0x24] sm:$0xf]
        %v2847 = vld [vmem:[%s2836 + $0x28] sm:$0xf]
        %v2848 = vld [vmem:[%s2836 + $0x2c] sm:$0xf]
        %v2849 = vld [vmem:[%s2836 + $0x30] sm:$0xf]
        %v2850 = vld [vmem:[%s2836 + $0x34] sm:$0xf]
        %v2851 = vld [vmem:[%s2836 + $0x38] sm:$0xf]
        %v2852 = vld [vmem:[%s2836 + $0x3c] sm:$0xf]
        %v2853 = vld [vmem:[%s2836 + $0x40] sm:$0xf]
        %v2854 = vld [vmem:[%s2836 + $0x44] sm:$0xf]
        %v2855 = vld [vmem:[%s2836 + $0x48] sm:$0xf]
        %v2856 = vld [vmem:[%s2836 + $0x4c] sm:$0xf]
        %v2857 = vld [vmem:[%s2836 + $0x50] sm:$0xf]
        %v2858 = vld [vmem:[%s2836 + $0x54] sm:$0xf]
        %v2859 = vld [vmem:[%s2836 + $0x58] sm:$0xf]
        %v2860 = vld [vmem:[%s2836 + $0x5c] sm:$0xf]
        %v2885 = vunpack.c.l.b16 %v2837
        %v2886 = vunpack.c.l.b16 %v2838
        %v2887 = vunpack.c.l.b16 %v2839
        %v2888 = vunpack.c.l.b16 %v2840
        %v2889 = vunpack.c.l.b16 %v2841
        %v2890 = vunpack.c.l.b16 %v2842
        %v2891 = vunpack.c.l.b16 %v2843
        %v2892 = vunpack.c.l.b16 %v2844
        %v2893 = vunpack.c.l.b16 %v2845
        %v2894 = vunpack.c.l.b16 %v2846
        %v2895 = vunpack.c.l.b16 %v2847
        %v2896 = vunpack.c.l.b16 %v2848
        %v2897 = vunpack.c.l.b16 %v2849
        %v2898 = vunpack.c.l.b16 %v2850
        %v2899 = vunpack.c.l.b16 %v2851
        %v2900 = vunpack.c.l.b16 %v2852
        %v2901 = vunpack.c.l.b16 %v2853
        %v2902 = vunpack.c.l.b16 %v2854
        %v2903 = vunpack.c.l.b16 %v2855
        %v2904 = vunpack.c.l.b16 %v2856
        %v2905 = vunpack.c.l.b16 %v2857
        %v2906 = vunpack.c.l.b16 %v2858
        %v2907 = vunpack.c.l.b16 %v2859
        %v2908 = vunpack.c.l.b16 %v2860
        %v2909 = vpack.c.b16 %v2886, %v2885
        %v2910 = vpack.c.b16 %v2888, %v2887
        %v2911 = vpack.c.b16 %v2890, %v2889
        %v2912 = vpack.c.b16 %v2892, %v2891
        %v2913 = vpack.c.b16 %v2894, %v2893
        %v2914 = vpack.c.b16 %v2896, %v2895
        %v2915 = vpack.c.b16 %v2898, %v2897
        %v2916 = vpack.c.b16 %v2900, %v2899
        %v2917 = vpack.c.b16 %v2902, %v2901
        %v2918 = vpack.c.b16 %v2904, %v2903
        %v2919 = vpack.c.b16 %v2906, %v2905
        %v2920 = vpack.c.b16 %v2908, %v2907
        %v2934 = vsel %vm765, %v2832, 0
        %2936 = vmatprep.subr.bf16.mxu0 0
        %2937 = vmatpush1.bf16.msra.mxu0 %v2916
        %2938 = vmatprep.subr.bf16.mxu0 0
        %2939 = vmatpush1.bf16.msra.mxu0 %v2915
        %2940 = vmatprep.subr.bf16.mxu0 0
        %2941 = vmatpush1.bf16.msra.mxu0 %v2914
        %2942 = vmatprep.subr.bf16.mxu0 0
        %2943 = vmatpush1.bf16.msra.mxu0 %v2913
        %2944 = vmatprep.subr.bf16.mxu0 0
        %2945 = vmatpush1.bf16.msra.mxu0 %v2912
        %2946 = vmatprep.subr.bf16.mxu0 0
        %2947 = vmatpush1.bf16.msra.mxu0 %v2911
        %2948 = vmatprep.subr.bf16.mxu0 0
        %2949 = vmatpush1.bf16.msra.mxu0 %v2910
        %2950 = vmatprep.subr.bf16.mxu0 0
        %2951 = vmatpush1.bf16.msra.mxu0 %v2909
        %2952 = vmatprep.subr.bf16.mxu0 0
        %2953 = vmatpush2.bf16.msra.mxu0 0
        %2954 = vmatprep.subr.bf16.mxu0 0
        %2955 = vmatpush2.bf16.msra.mxu0 0
        %2956 = vmatprep.subr.bf16.mxu0 0
        %2957 = vmatpush2.bf16.msra.mxu0 0
        %2958 = vmatprep.subr.bf16.mxu0 0
        %2959 = vmatpush2.bf16.msra.mxu0 0
        %2960 = vmatprep.subr.bf16.mxu0 0
        %2961 = vmatpush2.bf16.msra.mxu0 %v2920
        %2962 = vmatprep.subr.bf16.mxu0 0
        %2963 = vmatpush2.bf16.msra.mxu0 %v2919
        %2964 = vmatprep.subr.bf16.mxu0 0
        %2965 = vmatpush2.bf16.msra.mxu0 %v2918
        %2966 = vmatprep.subr.bf16.mxu0 0
        %2967 = vmatpush2.bf16.msra.mxu0 %v2917
        %2968 = vmatprep.mubr.bf16.mxu0 %v2547
        %2969 = vmatmul.mubr.bf16.gmra.mxu0 %v2389
        %v2970 = vpop.f32.mrf.mxu0
        %v2971 = vadd.f32 0.0, %v2970
        %v2972 = vpop.f32.mrf.mxu0
        %v2973 = vpop.f32.mrf.mxu0
        %v2974 = vpop.f32.mrf.mxu0
        %2975 = vmatprep.mubr.bf16.mxu0 %v2550
        %2976 = vmatmul.mubr.bf16.gmra.mxu0 %v2392
        %v2977 = vpop.f32.mrf.mxu0
        %v2978 = vadd.f32 0.0, %v2977
        %v2979 = vpop.f32.mrf.mxu0
        %v2980 = vpop.f32.mrf.mxu0
        %v2981 = vpop.f32.mrf.mxu0
        %2982 = vmatprep.mubr.bf16.mxu0 %v2553
        %2983 = vmatmul.mubr.bf16.gmra.mxu0 %v2395
        %v2984 = vpop.f32.mrf.mxu0
        %v2985 = vadd.f32 0.0, %v2984
        %v2986 = vpop.f32.mrf.mxu0
        %v2987 = vpop.f32.mrf.mxu0
        %v2988 = vpop.f32.mrf.mxu0
        %2989 = vmatprep.mubr.bf16.mxu0 %v2556
        %2990 = vmatmul.mubr.bf16.gmra.mxu0 %v2398
        %v2991 = vpop.f32.mrf.mxu0
        %v2992 = vadd.f32 0.0, %v2991
        %v2993 = vpop.f32.mrf.mxu0
        %v2994 = vpop.f32.mrf.mxu0
        %v2995 = vpop.f32.mrf.mxu0
        %2996 = vmatprep.mubr.bf16.mxu0 %v2559
        %2997 = vmatmul.mubr.bf16.gmra.mxu0 %v2401
        %v2998 = vpop.f32.mrf.mxu0
        %v2999 = vadd.f32 0.0, %v2998
        %v3000 = vpop.f32.mrf.mxu0
        %v3001 = vpop.f32.mrf.mxu0
        %v3002 = vpop.f32.mrf.mxu0
        %3003 = vmatprep.mubr.bf16.mxu0 %v2562
        %3004 = vmatmul.mubr.bf16.gmra.mxu0 %v2404
        %v3005 = vpop.f32.mrf.mxu0
        %v3006 = vadd.f32 0.0, %v3005
        %v3007 = vpop.f32.mrf.mxu0
        %v3008 = vpop.f32.mrf.mxu0
        %v3009 = vpop.f32.mrf.mxu0
        %3010 = vmatprep.mubr.bf16.mxu0 %v2565
        %3011 = vmatmul.mubr.bf16.gmra.mxu0 %v2444
        %v3012 = vpop.f32.mrf.mxu0
        %v3013 = vadd.f32 0.0, %v3012
        %v3014 = vpop.f32.mrf.mxu0
        %v3015 = vpop.f32.mrf.mxu0
        %v3016 = vpop.f32.mrf.mxu0
        %3017 = vmatprep.mubr.bf16.mxu0 %v2934
        %3018 = vmatmul.mubr.bf16.gmra.mxu0 %v2834
        %v3019 = vpop.f32.mrf.mxu0
        %v3020 = vadd.f32 0.0, %v3019
        %v3021 = vpop.f32.mrf.mxu0
        %v3022 = vpop.f32.mrf.mxu0
        %v3023 = vpop.f32.mrf.mxu0
        %3024 = vdwg.mxu0
        %v3025 = vadd.f32 %v2766, %v2971
        %v3026 = vadd.f32 %v2773, %v2978
        %v3027 = vadd.f32 %v2780, %v2985
        %v3028 = vadd.f32 %v2787, %v2992
        %v3029 = vadd.f32 %v2794, %v2999
        %v3030 = vadd.f32 %v2801, %v3006
        %v3031 = vadd.f32 %v2808, %v3013
        %v3032 = vadd.f32 %v2815, %v3020
        %v3033 = vld [vmem:[%s10] sm:$0x1]
        %v3035 = vlaneseq
        %v3036 = vshrl.u32 %v3035, 7
        %v3037 = vsub.s32 0, %v3036
        %v3038 = vrot.slane %v3033, %v3037
        %v3040 = vadd.f32 %v3025, %v3038
        %v3041 = vadd.f32 %v3026, %v3038
        %v3042 = vadd.f32 %v3027, %v3038
        %v3043 = vadd.f32 %v3028, %v3038
        %v3044 = vadd.f32 %v3029, %v3038
        %v3045 = vadd.f32 %v3030, %v3038
        %v3046 = vadd.f32 %v3031, %v3038
        %v3047 = vadd.f32 %v3032, %v3038
        %v3048 = vadd.f32 %v1318, %v3040
        %v3049 = vadd.f32 %v1319, %v3041
        %v3050 = vadd.f32 %v1320, %v3042
        %v3051 = vadd.f32 %v1321, %v3043
        %v3052 = vadd.f32 %v1322, %v3044
        %v3053 = vadd.f32 %v1323, %v3045
        %v3054 = vadd.f32 %v1324, %v3046
        %v3055 = vadd.f32 %v1325, %v3047
        %v3056 = vld [vmem:[%s754] sm:$0x1]
        %v3057 = vld [vmem:[%s759] sm:$0xff]
        %v3058 = vld [vmem:[%s759 + $0x8] sm:$0xff]
        %v3059 = vpack.c.bf16 %v3057, %v3057
        %v3060 = vpack.c.bf16 %v3058, %v3058
        %v3061 = vld [vmem:[%s5] sm:$0xf]
        %v3062 = vld [vmem:[%s5 + $0x4] sm:$0xf]
        %v3063 = vld [vmem:[%s5 + $0x8] sm:$0xf]
        %v3064 = vld [vmem:[%s5 + $0xc] sm:$0xf]
        %v3065 = vld [vmem:[%s5 + $0x10] sm:$0xf]
        %v3066 = vld [vmem:[%s5 + $0x14] sm:$0xf]
        %v3067 = vld [vmem:[%s5 + $0x18] sm:$0xf]
        %v3068 = vld [vmem:[%s5 + $0x1c] sm:$0xf]
        %v3069 = vld [vmem:[%s5 + $0x20] sm:$0xf]
        %v3070 = vld [vmem:[%s5 + $0x24] sm:$0xf]
        %v3071 = vld [vmem:[%s5 + $0x28] sm:$0xf]
        %v3072 = vld [vmem:[%s5 + $0x2c] sm:$0xf]
        %v3073 = vld [vmem:[%s5 + $0x30] sm:$0xf]
        %v3074 = vld [vmem:[%s5 + $0x34] sm:$0xf]
        %v3075 = vld [vmem:[%s5 + $0x38] sm:$0xf]
        %v3076 = vld [vmem:[%s5 + $0x3c] sm:$0xf]
        %v3077 = vld [vmem:[%s5 + $0x40] sm:$0xf]
        %v3078 = vld [vmem:[%s5 + $0x44] sm:$0xf]
        %v3079 = vld [vmem:[%s5 + $0x48] sm:$0xf]
        %v3080 = vld [vmem:[%s5 + $0x4c] sm:$0xf]
        %v3081 = vld [vmem:[%s5 + $0x50] sm:$0xf]
        %v3082 = vld [vmem:[%s5 + $0x54] sm:$0xf]
        %v3083 = vld [vmem:[%s5 + $0x58] sm:$0xf]
        %v3084 = vld [vmem:[%s5 + $0x5c] sm:$0xf]
        %v3085 = vld [vmem:[%s5 + $0x60] sm:$0xf]
        %v3086 = vld [vmem:[%s5 + $0x64] sm:$0xf]
        %v3087 = vld [vmem:[%s5 + $0x68] sm:$0xf]
        %v3088 = vld [vmem:[%s5 + $0x6c] sm:$0xf]
        %v3089 = vld [vmem:[%s5 + $0x70] sm:$0xf]
        %v3090 = vld [vmem:[%s5 + $0x74] sm:$0xf]
        %v3091 = vld [vmem:[%s5 + $0x78] sm:$0xf]
        %v3092 = vld [vmem:[%s5 + $0x7c] sm:$0xf]
        %v3093 = vld [vmem:[%s5 + $0x80] sm:$0xf]
        %v3094 = vld [vmem:[%s5 + $0x84] sm:$0xf]
        %v3095 = vld [vmem:[%s5 + $0x88] sm:$0xf]
        %v3096 = vld [vmem:[%s5 + $0x8c] sm:$0xf]
        %v3097 = vld [vmem:[%s5 + $0x90] sm:$0xf]
        %v3098 = vld [vmem:[%s5 + $0x94] sm:$0xf]
        %v3099 = vld [vmem:[%s5 + $0x98] sm:$0xf]
        %v3100 = vld [vmem:[%s5 + $0x9c] sm:$0xf]
        %v3101 = vld [vmem:[%s5 + $0xa0] sm:$0xf]
        %v3102 = vld [vmem:[%s5 + $0xa4] sm:$0xf]
        %v3103 = vld [vmem:[%s5 + $0xa8] sm:$0xf]
        %v3104 = vld [vmem:[%s5 + $0xac] sm:$0xf]
        %v3105 = vld [vmem:[%s5 + $0xb0] sm:$0xf]
        %v3106 = vld [vmem:[%s5 + $0xb4] sm:$0xf]
        %v3107 = vld [vmem:[%s5 + $0xb8] sm:$0xf]
        %v3108 = vld [vmem:[%s5 + $0xbc] sm:$0xf]
        %v3109 = vld [vmem:[%s5 + $0xc0] sm:$0xf]
        %v3110 = vld [vmem:[%s5 + $0xc4] sm:$0xf]
        %v3111 = vld [vmem:[%s5 + $0xc8] sm:$0xf]
        %v3112 = vld [vmem:[%s5 + $0xcc] sm:$0xf]
        %v3113 = vld [vmem:[%s5 + $0xd0] sm:$0xf]
        %v3114 = vld [vmem:[%s5 + $0xd4] sm:$0xf]
        %v3115 = vld [vmem:[%s5 + $0xd8] sm:$0xf]
        %v3116 = vpack.c.bf16 %v3049, %v3048
        %v3117 = vpack.c.bf16 %v3051, %v3050
        %v3118 = vpack.c.bf16 %v3053, %v3052
        %v3119 = vpack.c.bf16 %v3055, %v3054
        %v3175 = vunpack.c.l.b16 %v3061
        %v3176 = vunpack.c.l.b16 %v3062
        %v3177 = vunpack.c.l.b16 %v3063
        %v3178 = vunpack.c.l.b16 %v3064
        %v3179 = vunpack.c.l.b16 %v3065
        %v3180 = vunpack.c.l.b16 %v3066
        %v3181 = vunpack.c.l.b16 %v3067
        %v3182 = vunpack.c.l.b16 %v3068
        %v3183 = vunpack.c.l.b16 %v3069
        %v3184 = vunpack.c.l.b16 %v3070
        %v3185 = vunpack.c.l.b16 %v3071
        %v3186 = vunpack.c.l.b16 %v3072
        %v3187 = vunpack.c.l.b16 %v3073
        %v3188 = vunpack.c.l.b16 %v3074
        %v3189 = vunpack.c.l.b16 %v3075
        %v3190 = vunpack.c.l.b16 %v3076
        %v3191 = vunpack.c.l.b16 %v3077
        %v3192 = vunpack.c.l.b16 %v3078
        %v3193 = vunpack.c.l.b16 %v3079
        %v3194 = vunpack.c.l.b16 %v3080
        %v3195 = vunpack.c.l.b16 %v3081
        %v3196 = vunpack.c.l.b16 %v3082
        %v3197 = vunpack.c.l.b16 %v3083
        %v3198 = vunpack.c.l.b16 %v3084
        %v3199 = vunpack.c.l.b16 %v3085
        %v3200 = vunpack.c.l.b16 %v3086
        %v3201 = vunpack.c.l.b16 %v3087
        %v3202 = vunpack.c.l.b16 %v3088
        %v3203 = vunpack.c.l.b16 %v3089
        %v3204 = vunpack.c.l.b16 %v3090
        %v3205 = vunpack.c.l.b16 %v3091
        %v3206 = vunpack.c.l.b16 %v3092
        %v3207 = vunpack.c.l.b16 %v3093
        %v3208 = vunpack.c.l.b16 %v3094
        %v3209 = vunpack.c.l.b16 %v3095
        %v3210 = vunpack.c.l.b16 %v3096
        %v3211 = vunpack.c.l.b16 %v3097
        %v3212 = vunpack.c.l.b16 %v3098
        %v3213 = vunpack.c.l.b16 %v3099
        %v3214 = vunpack.c.l.b16 %v3100
        %v3215 = vunpack.c.l.b16 %v3101
        %v3216 = vunpack.c.l.b16 %v3102
        %v3217 = vunpack.c.l.b16 %v3103
        %v3218 = vunpack.c.l.b16 %v3104
        %v3219 = vunpack.c.l.b16 %v3105
        %v3220 = vunpack.c.l.b16 %v3106
        %v3221 = vunpack.c.l.b16 %v3107
        %v3222 = vunpack.c.l.b16 %v3108
        %v3223 = vunpack.c.l.b16 %v3109
        %v3224 = vunpack.c.l.b16 %v3110
        %v3225 = vunpack.c.l.b16 %v3111
        %v3226 = vunpack.c.l.b16 %v3112
        %v3227 = vunpack.c.l.b16 %v3113
        %v3228 = vunpack.c.l.b16 %v3114
        %v3229 = vunpack.c.l.b16 %v3115
        %v3230 = vpack.c.b16 %v3176, %v3175
        %v3231 = vpack.c.b16 %v3178, %v3177
        %v3232 = vpack.c.b16 %v3180, %v3179
        %v3233 = vpack.c.b16 %v3182, %v3181
        %v3234 = vpack.c.b16 %v3184, %v3183
        %v3235 = vpack.c.b16 %v3186, %v3185
        %v3236 = vpack.c.b16 %v3188, %v3187
        %v3237 = vpack.c.b16 %v3190, %v3189
        %v3238 = vpack.c.b16 %v3192, %v3191
        %v3239 = vpack.c.b16 %v3194, %v3193
        %v3240 = vpack.c.b16 %v3196, %v3195
        %v3241 = vpack.c.b16 %v3198, %v3197
        %v3242 = vpack.c.b16 %v3200, %v3199
        %v3243 = vpack.c.b16 %v3202, %v3201
        %v3244 = vpack.c.b16 %v3204, %v3203
        %v3245 = vpack.c.b16 %v3206, %v3205
        %v3246 = vpack.c.b16 %v3208, %v3207
        %v3247 = vpack.c.b16 %v3210, %v3209
        %v3248 = vpack.c.b16 %v3212, %v3211
        %v3249 = vpack.c.b16 %v3214, %v3213
        %v3250 = vpack.c.b16 %v3216, %v3215
        %v3251 = vpack.c.b16 %v3218, %v3217
        %v3252 = vpack.c.b16 %v3220, %v3219
        %v3253 = vpack.c.b16 %v3222, %v3221
        %v3254 = vpack.c.b16 %v3224, %v3223
        %v3255 = vpack.c.b16 %v3226, %v3225
        %v3256 = vpack.c.b16 %v3228, %v3227
        %v3257 = vpack.c.b16 %v3229, %v3229
        %v3259 = vsel %vm765, %v3230, 0
        %v3262 = vsel %vm765, %v3231, 0
        %v3265 = vsel %vm765, %v3232, 0
        %v3268 = vsel %vm765, %v3233, 0
        %v3271 = vsel %vm765, %v3234, 0
        %v3274 = vsel %vm765, %v3235, 0
        %v3277 = vsel %vm765, %v3236, 0
        %v3280 = vsel %vm765, %v3237, 0
        %v3283 = vsel %vm765, %v3238, 0
        %v3286 = vsel %vm765, %v3239, 0
        %v3289 = vsel %vm765, %v3240, 0
        %v3292 = vsel %vm765, %v3241, 0
        %v3295 = vsel %vm765, %v3242, 0
        %v3298 = vsel %vm765, %v3243, 0
        %v3301 = vsel %vm765, %v3244, 0
        %v3304 = vsel %vm765, %v3245, 0
        %v3307 = vsel %vm765, %v3246, 0
        %v3310 = vsel %vm765, %v3247, 0
        %v3313 = vsel %vm765, %v3248, 0
        %v3316 = vsel %vm765, %v3249, 0
        %v3319 = vsel %vm765, %v3250, 0
        %v3322 = vsel %vm765, %v3251, 0
        %v3325 = vsel %vm765, %v3252, 0
        %v3328 = vsel %vm765, %v3253, 0
        %v3331 = vsel %vm765, %v3254, 0
        %v3334 = vsel %vm765, %v3255, 0
        %v3337 = vsel %vm765, %v3256, 0
        %v3340 = vsel %vm765, %v3257, 0
        %3342 = vmatprep.subr.bf16.mxu0 0
        %3343 = vmatpush1.bf16.msra.mxu0 0
        %3344 = vmatprep.subr.bf16.mxu0 0
        %3345 = vmatpush1.bf16.msra.mxu0 0
        %3346 = vmatprep.subr.bf16.mxu0 0
        %3347 = vmatpush1.bf16.msra.mxu0 0
        %3348 = vmatprep.subr.bf16.mxu0 0
        %3349 = vmatpush1.bf16.msra.mxu0 0
        %3350 = vmatprep.subr.bf16.mxu0 0
        %3351 = vmatpush1.bf16.msra.mxu0 %v3119
        %3352 = vmatprep.subr.bf16.mxu0 0
        %3353 = vmatpush1.bf16.msra.mxu0 %v3118
        %3354 = vmatprep.subr.bf16.mxu0 0
        %3355 = vmatpush1.bf16.msra.mxu0 %v3117
        %3356 = vmatprep.subr.bf16.mxu0 0
        %3357 = vmatpush1.bf16.msra.mxu0 %v3116
        %3358 = vmatprep.subr.bf16.mxu0 0
        %3359 = vmatpush2.bf16.msra.mxu0 0
        %3360 = vmatprep.subr.bf16.mxu0 0
        %3361 = vmatpush2.bf16.msra.mxu0 0
        %3362 = vmatprep.subr.bf16.mxu0 0
        %3363 = vmatpush2.bf16.msra.mxu0 0
        %3364 = vmatprep.subr.bf16.mxu0 0
        %3365 = vmatpush2.bf16.msra.mxu0 0
        %3366 = vmatprep.subr.bf16.mxu0 0
        %3367 = vmatpush2.bf16.msra.mxu0 0
        %3368 = vmatprep.subr.bf16.mxu0 0
        %3369 = vmatpush2.bf16.msra.mxu0 0
        %3370 = vmatprep.subr.bf16.mxu0 0
        %3371 = vmatpush2.bf16.msra.mxu0 0
        %3372 = vmatprep.subr.bf16.mxu0 0
        %3373 = vmatpush2.bf16.msra.mxu0 0
        %3374 = vmatprep.mubr.bf16.mxu0 0
        %3375 = vmatmul.mubr.bf16.gmra.mxu0 %v3259
        %v3376 = vpop.f32.mrf.mxu0
        %v3377 = vadd.f32 0.0, %v3376
        %v3378 = vpop.f32.mrf.mxu0
        %v3379 = vpop.f32.mrf.mxu0
        %v3380 = vadd.f32 0.0, %v3379
        %v3381 = vpop.f32.mrf.mxu0
        %3382 = vmatprep.mubr.bf16.mxu0 0
        %3383 = vmatmul.mubr.bf16.gmra.mxu0 %v3262
        %v3384 = vpop.f32.mrf.mxu0
        %v3385 = vadd.f32 0.0, %v3384
        %v3386 = vpop.f32.mrf.mxu0
        %v3387 = vpop.f32.mrf.mxu0
        %v3388 = vadd.f32 0.0, %v3387
        %v3389 = vpop.f32.mrf.mxu0
        %3390 = vmatprep.mubr.bf16.mxu0 0
        %3391 = vmatmul.mubr.bf16.gmra.mxu0 %v3265
        %v3392 = vpop.f32.mrf.mxu0
        %v3393 = vadd.f32 0.0, %v3392
        %v3394 = vpop.f32.mrf.mxu0
        %v3395 = vpop.f32.mrf.mxu0
        %v3396 = vadd.f32 0.0, %v3395
        %v3397 = vpop.f32.mrf.mxu0
        %3398 = vmatprep.mubr.bf16.mxu0 0
        %3399 = vmatmul.mubr.bf16.gmra.mxu0 %v3268
        %v3400 = vpop.f32.mrf.mxu0
        %v3401 = vadd.f32 0.0, %v3400
        %v3402 = vpop.f32.mrf.mxu0
        %v3403 = vpop.f32.mrf.mxu0
        %v3404 = vadd.f32 0.0, %v3403
        %v3405 = vpop.f32.mrf.mxu0
        %3406 = vmatprep.mubr.bf16.mxu0 0
        %3407 = vmatmul.mubr.bf16.gmra.mxu0 %v3271
        %v3408 = vpop.f32.mrf.mxu0
        %v3409 = vadd.f32 0.0, %v3408
        %v3410 = vpop.f32.mrf.mxu0
        %v3411 = vpop.f32.mrf.mxu0
        %v3412 = vadd.f32 0.0, %v3411
        %v3413 = vpop.f32.mrf.mxu0
        %3414 = vmatprep.mubr.bf16.mxu0 0
        %3415 = vmatmul.mubr.bf16.gmra.mxu0 %v3274
        %v3416 = vpop.f32.mrf.mxu0
        %v3417 = vadd.f32 0.0, %v3416
        %v3418 = vpop.f32.mrf.mxu0
        %v3419 = vpop.f32.mrf.mxu0
        %v3420 = vadd.f32 0.0, %v3419
        %v3421 = vpop.f32.mrf.mxu0
        %3422 = vmatprep.mubr.bf16.mxu0 0
        %3423 = vmatmul.mubr.bf16.gmra.mxu0 %v3277
        %v3424 = vpop.f32.mrf.mxu0
        %v3425 = vadd.f32 0.0, %v3424
        %v3426 = vpop.f32.mrf.mxu0
        %v3427 = vpop.f32.mrf.mxu0
        %v3428 = vadd.f32 0.0, %v3427
        %v3429 = vpop.f32.mrf.mxu0
        %3430 = vmatprep.mubr.bf16.mxu0 0
        %3431 = vmatmul.mubr.bf16.gmra.mxu0 %v3280
        %v3432 = vpop.f32.mrf.mxu0
        %v3433 = vadd.f32 0.0, %v3432
        %v3434 = vpop.f32.mrf.mxu0
        %v3435 = vpop.f32.mrf.mxu0
        %v3436 = vadd.f32 0.0, %v3435
        %v3437 = vpop.f32.mrf.mxu0
        %3438 = vmatprep.mubr.bf16.mxu0 0
        %3439 = vmatmul.mubr.bf16.gmra.mxu0 %v3283
        %v3440 = vpop.f32.mrf.mxu0
        %v3441 = vadd.f32 0.0, %v3440
        %v3442 = vpop.f32.mrf.mxu0
        %v3443 = vpop.f32.mrf.mxu0
        %v3444 = vadd.f32 0.0, %v3443
        %v3445 = vpop.f32.mrf.mxu0
        %3446 = vmatprep.mubr.bf16.mxu0 0
        %3447 = vmatmul.mubr.bf16.gmra.mxu0 %v3286
        %v3448 = vpop.f32.mrf.mxu0
        %v3449 = vadd.f32 0.0, %v3448
        %v3450 = vpop.f32.mrf.mxu0
        %v3451 = vpop.f32.mrf.mxu0
        %v3452 = vadd.f32 0.0, %v3451
        %v3453 = vpop.f32.mrf.mxu0
        %3454 = vmatprep.mubr.bf16.mxu0 0
        %3455 = vmatmul.mubr.bf16.gmra.mxu0 %v3289
        %v3456 = vpop.f32.mrf.mxu0
        %v3457 = vadd.f32 0.0, %v3456
        %v3458 = vpop.f32.mrf.mxu0
        %v3459 = vpop.f32.mrf.mxu0
        %v3460 = vadd.f32 0.0, %v3459
        %v3461 = vpop.f32.mrf.mxu0
        %3462 = vmatprep.mubr.bf16.mxu0 0
        %3463 = vmatmul.mubr.bf16.gmra.mxu0 %v3292
        %v3464 = vpop.f32.mrf.mxu0
        %v3465 = vadd.f32 0.0, %v3464
        %v3466 = vpop.f32.mrf.mxu0
        %v3467 = vpop.f32.mrf.mxu0
        %v3468 = vadd.f32 0.0, %v3467
        %v3469 = vpop.f32.mrf.mxu0
        %3470 = vmatprep.mubr.bf16.mxu0 0
        %3471 = vmatmul.mubr.bf16.gmra.mxu0 %v3295
        %v3472 = vpop.f32.mrf.mxu0
        %v3473 = vadd.f32 0.0, %v3472
        %v3474 = vpop.f32.mrf.mxu0
        %v3475 = vpop.f32.mrf.mxu0
        %v3476 = vadd.f32 0.0, %v3475
        %v3477 = vpop.f32.mrf.mxu0
        %3478 = vmatprep.mubr.bf16.mxu0 0
        %3479 = vmatmul.mubr.bf16.gmra.mxu0 %v3298
        %v3480 = vpop.f32.mrf.mxu0
        %v3481 = vadd.f32 0.0, %v3480
        %v3482 = vpop.f32.mrf.mxu0
        %v3483 = vpop.f32.mrf.mxu0
        %v3484 = vadd.f32 0.0, %v3483
        %v3485 = vpop.f32.mrf.mxu0
        %3486 = vmatprep.mubr.bf16.mxu0 0
        %3487 = vmatmul.mubr.bf16.gmra.mxu0 %v3301
        %v3488 = vpop.f32.mrf.mxu0
        %v3489 = vadd.f32 0.0, %v3488
        %v3490 = vpop.f32.mrf.mxu0
        %v3491 = vpop.f32.mrf.mxu0
        %v3492 = vadd.f32 0.0, %v3491
        %v3493 = vpop.f32.mrf.mxu0
        %3494 = vmatprep.mubr.bf16.mxu0 0
        %3495 = vmatmul.mubr.bf16.gmra.mxu0 %v3304
        %v3496 = vpop.f32.mrf.mxu0
        %v3497 = vadd.f32 0.0, %v3496
        %v3498 = vpop.f32.mrf.mxu0
        %v3499 = vpop.f32.mrf.mxu0
        %v3500 = vadd.f32 0.0, %v3499
        %v3501 = vpop.f32.mrf.mxu0
        %3502 = vmatprep.mubr.bf16.mxu0 0
        %3503 = vmatmul.mubr.bf16.gmra.mxu0 %v3307
        %v3504 = vpop.f32.mrf.mxu0
        %v3505 = vadd.f32 0.0, %v3504
        %v3506 = vpop.f32.mrf.mxu0
        %v3507 = vpop.f32.mrf.mxu0
        %v3508 = vadd.f32 0.0, %v3507
        %v3509 = vpop.f32.mrf.mxu0
        %3510 = vmatprep.mubr.bf16.mxu0 0
        %3511 = vmatmul.mubr.bf16.gmra.mxu0 %v3310
        %v3512 = vpop.f32.mrf.mxu0
        %v3513 = vadd.f32 0.0, %v3512
        %v3514 = vpop.f32.mrf.mxu0
        %v3515 = vpop.f32.mrf.mxu0
        %v3516 = vadd.f32 0.0, %v3515
        %v3517 = vpop.f32.mrf.mxu0
        %3518 = vmatprep.mubr.bf16.mxu0 0
        %3519 = vmatmul.mubr.bf16.gmra.mxu0 %v3313
        %v3520 = vpop.f32.mrf.mxu0
        %v3521 = vadd.f32 0.0, %v3520
        %v3522 = vpop.f32.mrf.mxu0
        %v3523 = vpop.f32.mrf.mxu0
        %v3524 = vadd.f32 0.0, %v3523
        %v3525 = vpop.f32.mrf.mxu0
        %3526 = vmatprep.mubr.bf16.mxu0 0
        %3527 = vmatmul.mubr.bf16.gmra.mxu0 %v3316
        %v3528 = vpop.f32.mrf.mxu0
        %v3529 = vadd.f32 0.0, %v3528
        %v3530 = vpop.f32.mrf.mxu0
        %v3531 = vpop.f32.mrf.mxu0
        %v3532 = vadd.f32 0.0, %v3531
        %v3533 = vpop.f32.mrf.mxu0
        %3534 = vmatprep.mubr.bf16.mxu0 0
        %3535 = vmatmul.mubr.bf16.gmra.mxu0 %v3319
        %v3536 = vpop.f32.mrf.mxu0
        %v3537 = vadd.f32 0.0, %v3536
        %v3538 = vpop.f32.mrf.mxu0
        %v3539 = vpop.f32.mrf.mxu0
        %v3540 = vadd.f32 0.0, %v3539
        %v3541 = vpop.f32.mrf.mxu0
        %3542 = vmatprep.mubr.bf16.mxu0 0
        %3543 = vmatmul.mubr.bf16.gmra.mxu0 %v3322
        %v3544 = vpop.f32.mrf.mxu0
        %v3545 = vadd.f32 0.0, %v3544
        %v3546 = vpop.f32.mrf.mxu0
        %v3547 = vpop.f32.mrf.mxu0
        %v3548 = vadd.f32 0.0, %v3547
        %v3549 = vpop.f32.mrf.mxu0
        %3550 = vmatprep.mubr.bf16.mxu0 0
        %3551 = vmatmul.mubr.bf16.gmra.mxu0 %v3325
        %v3552 = vpop.f32.mrf.mxu0
        %v3553 = vadd.f32 0.0, %v3552
        %v3554 = vpop.f32.mrf.mxu0
        %v3555 = vpop.f32.mrf.mxu0
        %v3556 = vadd.f32 0.0, %v3555
        %v3557 = vpop.f32.mrf.mxu0
        %3558 = vmatprep.mubr.bf16.mxu0 0
        %3559 = vmatmul.mubr.bf16.gmra.mxu0 %v3328
        %v3560 = vpop.f32.mrf.mxu0
        %v3561 = vadd.f32 0.0, %v3560
        %v3562 = vpop.f32.mrf.mxu0
        %v3563 = vpop.f32.mrf.mxu0
        %v3564 = vadd.f32 0.0, %v3563
        %v3565 = vpop.f32.mrf.mxu0
        %3566 = vmatprep.mubr.bf16.mxu0 0
        %3567 = vmatmul.mubr.bf16.gmra.mxu0 %v3331
        %v3568 = vpop.f32.mrf.mxu0
        %v3569 = vadd.f32 0.0, %v3568
        %v3570 = vpop.f32.mrf.mxu0
        %v3571 = vpop.f32.mrf.mxu0
        %v3572 = vadd.f32 0.0, %v3571
        %v3573 = vpop.f32.mrf.mxu0
        %3574 = vmatprep.mubr.bf16.mxu0 0
        %3575 = vmatmul.mubr.bf16.gmra.mxu0 %v3334
        %v3576 = vpop.f32.mrf.mxu0
        %v3577 = vadd.f32 0.0, %v3576
        %v3578 = vpop.f32.mrf.mxu0
        %v3579 = vpop.f32.mrf.mxu0
        %v3580 = vadd.f32 0.0, %v3579
        %v3581 = vpop.f32.mrf.mxu0
        %3582 = vmatprep.mubr.bf16.mxu0 0
        %3583 = vmatmul.mubr.bf16.gmra.mxu0 %v3337
        %v3584 = vpop.f32.mrf.mxu0
        %v3585 = vadd.f32 0.0, %v3584
        %v3586 = vpop.f32.mrf.mxu0
        %v3587 = vpop.f32.mrf.mxu0
        %v3588 = vadd.f32 0.0, %v3587
        %v3589 = vpop.f32.mrf.mxu0
        %3590 = vmatprep.mubr.bf16.mxu0 0
        %3591 = vmatmul.mubr.bf16.gmra.mxu0 %v3340
        %v3592 = vpop.f32.mrf.mxu0
        %v3593 = vadd.f32 0.0, %v3592
        %v3594 = vpop.f32.mrf.mxu0
        %v3595 = vpop.f32.mrf.mxu0
        %v3596 = vpop.f32.mrf.mxu0
        %3597 = vdwg.mxu0
        %v3598 = vpack.c.bf16 %v3380, %v3377
        %v3599 = vpack.c.bf16 %v3388, %v3385
        %v3600 = vpack.c.bf16 %v3396, %v3393
        %v3601 = vpack.c.bf16 %v3404, %v3401
        %v3602 = vpack.c.bf16 %v3412, %v3409
        %v3603 = vpack.c.bf16 %v3420, %v3417
        %v3604 = vpack.c.bf16 %v3428, %v3425
        %v3605 = vpack.c.bf16 %v3436, %v3433
        %v3606 = vpack.c.bf16 %v3444, %v3441
        %v3607 = vpack.c.bf16 %v3452, %v3449
        %v3608 = vpack.c.bf16 %v3460, %v3457
        %v3609 = vpack.c.bf16 %v3468, %v3465
        %v3610 = vpack.c.bf16 %v3476, %v3473
        %v3611 = vpack.c.bf16 %v3484, %v3481
        %v3612 = vpack.c.bf16 %v3492, %v3489
        %v3613 = vpack.c.bf16 %v3500, %v3497
        %v3614 = vpack.c.bf16 %v3508, %v3505
        %v3615 = vpack.c.bf16 %v3516, %v3513
        %v3616 = vpack.c.bf16 %v3524, %v3521
        %v3617 = vpack.c.bf16 %v3532, %v3529
        %v3618 = vpack.c.bf16 %v3540, %v3537
        %v3619 = vpack.c.bf16 %v3548, %v3545
        %v3620 = vpack.c.bf16 %v3556, %v3553
        %v3621 = vpack.c.bf16 %v3564, %v3561
        %v3622 = vpack.c.bf16 %v3572, %v3569
        %v3623 = vpack.c.bf16 %v3580, %v3577
        %v3624 = vpack.c.bf16 %v3588, %v3585
        %v3625 = vpack.c.bf16 %v3593, %v3593
        %v3627 = vshrl.u32 %v3598, 16
        %v3629 = vshll.u32 %v3598, 16
        %v3631 = vrot.slane %v3629, 1
        %v3632 = vor.u32 %v3627, %v3631
        %v3634 = vshll.u32 %v3599, 16
        %v3636 = vrot.slane %v3634, 1
        %v3637 = vsel %vm1366, %v3632, %v3636
        %v3638 = vshrl.u32 %v3599, 16
        %v3640 = vor.u32 %v3638, %v3636
        %v3642 = vshll.u32 %v3600, 16
        %v3644 = vrot.slane %v3642, 1
        %v3645 = vsel %vm1366, %v3640, %v3644
        %v3646 = vshrl.u32 %v3600, 16
        %v3648 = vor.u32 %v3646, %v3644
        %v3650 = vshll.u32 %v3601, 16
        %v3652 = vrot.slane %v3650, 1
        %v3653 = vsel %vm1366, %v3648, %v3652
        %v3654 = vshrl.u32 %v3601, 16
        %v3656 = vor.u32 %v3654, %v3652
        %v3658 = vshll.u32 %v3602, 16
        %v3660 = vrot.slane %v3658, 1
        %v3661 = vsel %vm1366, %v3656, %v3660
        %v3662 = vshrl.u32 %v3602, 16
        %v3664 = vor.u32 %v3662, %v3660
        %v3666 = vshll.u32 %v3603, 16
        %v3668 = vrot.slane %v3666, 1
        %v3669 = vsel %vm1366, %v3664, %v3668
        %v3670 = vshrl.u32 %v3603, 16
        %v3672 = vor.u32 %v3670, %v3668
        %v3674 = vshll.u32 %v3604, 16
        %v3676 = vrot.slane %v3674, 1
        %v3677 = vsel %vm1366, %v3672, %v3676
        %v3678 = vshrl.u32 %v3604, 16
        %v3680 = vor.u32 %v3678, %v3676
        %v3682 = vshll.u32 %v3605, 16
        %v3684 = vrot.slane %v3682, 1
        %v3685 = vsel %vm1366, %v3680, %v3684
        %v3686 = vshrl.u32 %v3605, 16
        %v3688 = vor.u32 %v3686, %v3684
        %v3690 = vshll.u32 %v3606, 16
        %v3692 = vrot.slane %v3690, 1
        %v3693 = vsel %vm1366, %v3688, %v3692
        %v3694 = vshrl.u32 %v3606, 16
        %v3696 = vor.u32 %v3694, %v3692
        %v3698 = vshll.u32 %v3607, 16
        %v3700 = vrot.slane %v3698, 1
        %v3701 = vsel %vm1366, %v3696, %v3700
        %v3702 = vshrl.u32 %v3607, 16
        %v3704 = vor.u32 %v3702, %v3700
        %v3706 = vshll.u32 %v3608, 16
        %v3708 = vrot.slane %v3706, 1
        %v3709 = vsel %vm1366, %v3704, %v3708
        %v3710 = vshrl.u32 %v3608, 16
        %v3712 = vor.u32 %v3710, %v3708
        %v3714 = vshll.u32 %v3609, 16
        %v3716 = vrot.slane %v3714, 1
        %v3717 = vsel %vm1366, %v3712, %v3716
        %v3718 = vshrl.u32 %v3609, 16
        %v3720 = vor.u32 %v3718, %v3716
        %v3722 = vshll.u32 %v3610, 16
        %v3724 = vrot.slane %v3722, 1
        %v3725 = vsel %vm1366, %v3720, %v3724
        %v3726 = vshrl.u32 %v3610, 16
        %v3728 = vor.u32 %v3726, %v3724
        %v3730 = vshll.u32 %v3611, 16
        %v3732 = vrot.slane %v3730, 1
        %v3733 = vsel %vm1366, %v3728, %v3732
        %v3734 = vshrl.u32 %v3611, 16
        %v3736 = vor.u32 %v3734, %v3732
        %v3738 = vshll.u32 %v3612, 16
        %v3740 = vrot.slane %v3738, 1
        %v3741 = vsel %vm1366, %v3736, %v3740
        %v3742 = vshrl.u32 %v3612, 16
        %v3744 = vor.u32 %v3742, %v3740
        %v3746 = vshll.u32 %v3613, 16
        %v3748 = vrot.slane %v3746, 1
        %v3749 = vsel %vm1366, %v3744, %v3748
        %v3750 = vshrl.u32 %v3613, 16
        %v3752 = vor.u32 %v3750, %v3748
        %v3754 = vshll.u32 %v3614, 16
        %v3756 = vrot.slane %v3754, 1
        %v3757 = vsel %vm1366, %v3752, %v3756
        %v3758 = vshrl.u32 %v3614, 16
        %v3760 = vor.u32 %v3758, %v3756
        %v3762 = vshll.u32 %v3615, 16
        %v3764 = vrot.slane %v3762, 1
        %v3765 = vsel %vm1366, %v3760, %v3764
        %v3766 = vshrl.u32 %v3615, 16
        %v3768 = vor.u32 %v3766, %v3764
        %v3770 = vshll.u32 %v3616, 16
        %v3772 = vrot.slane %v3770, 1
        %v3773 = vsel %vm1366, %v3768, %v3772
        %v3774 = vshrl.u32 %v3616, 16
        %v3776 = vor.u32 %v3774, %v3772
        %v3778 = vshll.u32 %v3617, 16
        %v3780 = vrot.slane %v3778, 1
        %v3781 = vsel %vm1366, %v3776, %v3780
        %v3782 = vshrl.u32 %v3617, 16
        %v3784 = vor.u32 %v3782, %v3780
        %v3786 = vshll.u32 %v3618, 16
        %v3788 = vrot.slane %v3786, 1
        %v3789 = vsel %vm1366, %v3784, %v3788
        %v3790 = vshrl.u32 %v3618, 16
        %v3792 = vor.u32 %v3790, %v3788
        %v3794 = vshll.u32 %v3619, 16
        %v3796 = vrot.slane %v3794, 1
        %v3797 = vsel %vm1366, %v3792, %v3796
        %v3798 = vshrl.u32 %v3619, 16
        %v3800 = vor.u32 %v3798, %v3796
        %v3802 = vshll.u32 %v3620, 16
        %v3804 = vrot.slane %v3802, 1
        %v3805 = vsel %vm1366, %v3800, %v3804
        %v3806 = vshrl.u32 %v3620, 16
        %v3808 = vor.u32 %v3806, %v3804
        %v3810 = vshll.u32 %v3621, 16
        %v3812 = vrot.slane %v3810, 1
        %v3813 = vsel %vm1366, %v3808, %v3812
        %v3814 = vshrl.u32 %v3621, 16
        %v3816 = vor.u32 %v3814, %v3812
        %v3818 = vshll.u32 %v3622, 16
        %v3820 = vrot.slane %v3818, 1
        %v3821 = vsel %vm1366, %v3816, %v3820
        %3822 = vrot.lane.b32.xlu0 %v3637, 64
        %v3823 = vpop.permute.xlu0 %3822
        %3824 = vrot.lane.b32.xlu0 %v3645, 64
        %v3825 = vpop.permute.xlu0 %3824
        %3826 = vrot.lane.b32.xlu0 %v3653, 64
        %v3827 = vpop.permute.xlu0 %3826
        %3828 = vrot.lane.b32.xlu0 %v3661, 64
        %v3829 = vpop.permute.xlu0 %3828
        %3830 = vrot.lane.b32.xlu0 %v3669, 64
        %v3831 = vpop.permute.xlu0 %3830
        %3832 = vrot.lane.b32.xlu0 %v3677, 64
        %v3833 = vpop.permute.xlu0 %3832
        %3834 = vrot.lane.b32.xlu0 %v3685, 64
        %v3835 = vpop.permute.xlu0 %3834
        %3836 = vrot.lane.b32.xlu0 %v3693, 64
        %v3837 = vpop.permute.xlu0 %3836
        %3838 = vrot.lane.b32.xlu0 %v3701, 64
        %v3839 = vpop.permute.xlu0 %3838
        %3840 = vrot.lane.b32.xlu0 %v3709, 64
        %v3841 = vpop.permute.xlu0 %3840
        %3842 = vrot.lane.b32.xlu0 %v3717, 64
        %v3843 = vpop.permute.xlu0 %3842
        %3844 = vrot.lane.b32.xlu0 %v3725, 64
        %v3845 = vpop.permute.xlu0 %3844
        %3846 = vrot.lane.b32.xlu0 %v3733, 64
        %v3847 = vpop.permute.xlu0 %3846
        %3848 = vrot.lane.b32.xlu0 %v3741, 64
        %v3849 = vpop.permute.xlu0 %3848
        %3850 = vrot.lane.b32.xlu0 %v3749, 64
        %v3851 = vpop.permute.xlu0 %3850
        %3852 = vrot.lane.b32.xlu0 %v3757, 64
        %v3853 = vpop.permute.xlu0 %3852
        %3854 = vrot.lane.b32.xlu0 %v3765, 64
        %v3855 = vpop.permute.xlu0 %3854
        %3856 = vrot.lane.b32.xlu0 %v3773, 64
        %v3857 = vpop.permute.xlu0 %3856
        %3858 = vrot.lane.b32.xlu0 %v3781, 64
        %v3859 = vpop.permute.xlu0 %3858
        %3860 = vrot.lane.b32.xlu0 %v3789, 64
        %v3861 = vpop.permute.xlu0 %3860
        %3862 = vrot.lane.b32.xlu0 %v3797, 64
        %v3863 = vpop.permute.xlu0 %3862
        %3864 = vrot.lane.b32.xlu0 %v3805, 64
        %v3865 = vpop.permute.xlu0 %3864
        %3866 = vrot.lane.b32.xlu0 %v3813, 64
        %v3867 = vpop.permute.xlu0 %3866
        %3868 = vrot.lane.b32.xlu0 %v3821, 64
        %v3869 = vpop.permute.xlu0 %3868
        %v3895 = vrot.slane %v3598, 1
        %v3896 = vrot.slane %v3599, 1
        %v3897 = vsel %vm1460, %v3895, %v3896
        %v3898 = vrot.slane %v3600, 1
        %v3899 = vsel %vm1460, %v3896, %v3898
        %v3900 = vrot.slane %v3601, 1
        %v3901 = vsel %vm1460, %v3898, %v3900
        %v3902 = vrot.slane %v3602, 1
        %v3903 = vsel %vm1460, %v3900, %v3902
        %v3904 = vrot.slane %v3603, 1
        %v3905 = vsel %vm1460, %v3902, %v3904
        %v3906 = vrot.slane %v3604, 1
        %v3907 = vsel %vm1460, %v3904, %v3906
        %v3908 = vrot.slane %v3605, 1
        %v3909 = vsel %vm1460, %v3906, %v3908
        %v3910 = vrot.slane %v3606, 1
        %v3911 = vsel %vm1460, %v3908, %v3910
        %v3912 = vrot.slane %v3607, 1
        %v3913 = vsel %vm1460, %v3910, %v3912
        %v3914 = vrot.slane %v3608, 1
        %v3915 = vsel %vm1460, %v3912, %v3914
        %v3916 = vrot.slane %v3609, 1
        %v3917 = vsel %vm1460, %v3914, %v3916
        %v3918 = vrot.slane %v3610, 1
        %v3919 = vsel %vm1460, %v3916, %v3918
        %v3920 = vrot.slane %v3611, 1
        %v3921 = vsel %vm1460, %v3918, %v3920
        %v3922 = vrot.slane %v3612, 1
        %v3923 = vsel %vm1460, %v3920, %v3922
        %v3924 = vrot.slane %v3613, 1
        %v3925 = vsel %vm1460, %v3922, %v3924
        %v3926 = vrot.slane %v3614, 1
        %v3927 = vsel %vm1460, %v3924, %v3926
        %v3928 = vrot.slane %v3615, 1
        %v3929 = vsel %vm1460, %v3926, %v3928
        %v3930 = vrot.slane %v3616, 1
        %v3931 = vsel %vm1460, %v3928, %v3930
        %v3932 = vrot.slane %v3617, 1
        %v3933 = vsel %vm1460, %v3930, %v3932
        %v3934 = vrot.slane %v3618, 1
        %v3935 = vsel %vm1460, %v3932, %v3934
        %v3936 = vrot.slane %v3619, 1
        %v3937 = vsel %vm1460, %v3934, %v3936
        %v3938 = vrot.slane %v3620, 1
        %v3939 = vsel %vm1460, %v3936, %v3938
        %v3940 = vrot.slane %v3621, 1
        %v3941 = vsel %vm1460, %v3938, %v3940
        %v3942 = vrot.slane %v3622, 1
        %v3943 = vsel %vm1460, %v3940, %v3942
        %v3945 = vsel %vm765, %v3598, %v3823
        %v3948 = vsel %vm765, %v3599, %v3825
        %v3951 = vsel %vm765, %v3600, %v3827
        %v3954 = vsel %vm765, %v3601, %v3829
        %v3957 = vsel %vm765, %v3602, %v3831
        %v3960 = vsel %vm765, %v3603, %v3833
        %v3963 = vsel %vm765, %v3604, %v3835
        %v3966 = vsel %vm765, %v3605, %v3837
        %v3969 = vsel %vm765, %v3606, %v3839
        %v3972 = vsel %vm765, %v3607, %v3841
        %v3975 = vsel %vm765, %v3608, %v3843
        %v3978 = vsel %vm765, %v3609, %v3845
        %v3981 = vsel %vm765, %v3610, %v3847
        %v3984 = vsel %vm765, %v3611, %v3849
        %v3987 = vsel %vm765, %v3612, %v3851
        %v3990 = vsel %vm765, %v3613, %v3853
        %v3993 = vsel %vm765, %v3614, %v3855
        %v3996 = vsel %vm765, %v3615, %v3857
        %v3999 = vsel %vm765, %v3616, %v3859
        %v4002 = vsel %vm765, %v3617, %v3861
        %v4005 = vsel %vm765, %v3618, %v3863
        %v4008 = vsel %vm765, %v3619, %v3865
        %v4011 = vsel %vm765, %v3620, %v3867
        %v4014 = vsel %vm765, %v3621, %v3869
        %v4016 = vld [vmem:[%s11] sm:$0xf]
        %v4017 = vld [vmem:[%s11 + $0x4] sm:$0xf]
        %v4018 = vld [vmem:[%s11 + $0x8] sm:$0xf]
        %v4019 = vld [vmem:[%s11 + $0xc] sm:$0xf]
        %v4020 = vld [vmem:[%s11 + $0x10] sm:$0xf]
        %v4021 = vld [vmem:[%s11 + $0x14] sm:$0xf]
        %v4022 = vld [vmem:[%s11 + $0x18] sm:$0xf]
        %v4023 = vld [vmem:[%s11 + $0x1c] sm:$0xf]
        %v4024 = vld [vmem:[%s11 + $0x20] sm:$0xf]
        %v4025 = vld [vmem:[%s11 + $0x24] sm:$0xf]
        %v4026 = vld [vmem:[%s11 + $0x28] sm:$0xf]
        %v4027 = vld [vmem:[%s11 + $0x2c] sm:$0xf]
        %v4028 = vld [vmem:[%s11 + $0x30] sm:$0xf]
        %v4029 = vld [vmem:[%s11 + $0x34] sm:$0xf]
        %v4030 = vld [vmem:[%s11 + $0x38] sm:$0xf]
        %v4031 = vld [vmem:[%s11 + $0x3c] sm:$0xf]
        %v4032 = vld [vmem:[%s11 + $0x40] sm:$0xf]
        %v4033 = vld [vmem:[%s11 + $0x44] sm:$0xf]
        %v4034 = vld [vmem:[%s11 + $0x48] sm:$0xf]
        %v4035 = vld [vmem:[%s11 + $0x4c] sm:$0xf]
        %v4036 = vld [vmem:[%s11 + $0x50] sm:$0xf]
        %v4037 = vld [vmem:[%s11 + $0x54] sm:$0xf]
        %v4038 = vld [vmem:[%s11 + $0x58] sm:$0xf]
        %v4039 = vld [vmem:[%s11 + $0x5c] sm:$0xf]
        %v4040 = vshrl.u32 %v3622, 16
        %v4042 = vor.u32 %v4040, %v3820
        %v4044 = vshll.u32 %v3623, 16
        %v4046 = vrot.slane %v4044, 1
        %v4047 = vsel %vm1366, %v4042, %v4046
        %v4048 = vshrl.u32 %v3623, 16
        %v4050 = vor.u32 %v4048, %v4046
        %4051 = vrot.lane.b32.xlu0 %v4047, 64
        %v4052 = vpop.permute.xlu0 %4051
        %4053 = vrot.lane.b32.xlu0 %v4050, 64
        %v4054 = vpop.permute.xlu0 %4053
        %v4056 = vrot.slane %v3623, 1
        %v4057 = vsel %vm1460, %v3942, %v4056
        %v4059 = vsel %vm765, %v3622, %v4052
        %v4061 = vsel %vm765, %v3623, %v4054
        %s4062 = scalar_lea.vmem %s11, 96
        %v4063 = vld [vmem:[%s4062] sm:$0xf]
        %v4064 = vld [vmem:[%s4062 + $0x4] sm:$0xf]
        %v4065 = vld [vmem:[%s4062 + $0x8] sm:$0xf]
        %v4066 = vld [vmem:[%s4062 + $0xc] sm:$0xf]
        %v4067 = vld [vmem:[%s4062 + $0x10] sm:$0xf]
        %v4068 = vld [vmem:[%s4062 + $0x14] sm:$0xf]
        %v4069 = vld [vmem:[%s4062 + $0x18] sm:$0xf]
        %v4070 = vld [vmem:[%s4062 + $0x1c] sm:$0xf]
        %v4071 = vld [vmem:[%s4062 + $0x20] sm:$0xf]
        %v4072 = vld [vmem:[%s4062 + $0x24] sm:$0xf]
        %v4073 = vld [vmem:[%s4062 + $0x28] sm:$0xf]
        %v4074 = vld [vmem:[%s4062 + $0x2c] sm:$0xf]
        %v4075 = vld [vmem:[%s4062 + $0x30] sm:$0xf]
        %v4076 = vld [vmem:[%s4062 + $0x34] sm:$0xf]
        %v4077 = vld [vmem:[%s4062 + $0x38] sm:$0xf]
        %v4078 = vld [vmem:[%s4062 + $0x3c] sm:$0xf]
        %v4079 = vld [vmem:[%s4062 + $0x40] sm:$0xf]
        %v4080 = vld [vmem:[%s4062 + $0x44] sm:$0xf]
        %v4081 = vld [vmem:[%s4062 + $0x48] sm:$0xf]
        %v4082 = vld [vmem:[%s4062 + $0x4c] sm:$0xf]
        %v4083 = vld [vmem:[%s4062 + $0x50] sm:$0xf]
        %v4084 = vld [vmem:[%s4062 + $0x54] sm:$0xf]
        %v4085 = vld [vmem:[%s4062 + $0x58] sm:$0xf]
        %v4086 = vld [vmem:[%s4062 + $0x5c] sm:$0xf]
        %vm4112 = vcmask 1043456
        %v4113 = vrot.slane %v3948, 4
        %v4114 = vrot.slane %v3951, 4
        %v4115 = vsel %vm4112, %v4113, %v4114
        %v4116 = vrot.slane %v3899, 4
        %v4117 = vrot.slane %v3901, 4
        %v4118 = vsel %vm4112, %v4116, %v4117
        %v4119 = vrot.slane %v3954, 4
        %v4120 = vsel %vm4112, %v4114, %v4119
        %v4121 = vrot.slane %v3903, 4
        %v4122 = vsel %vm4112, %v4117, %v4121
        %v4123 = vrot.slane %v3957, 4
        %v4124 = vsel %vm4112, %v4119, %v4123
        %v4125 = vrot.slane %v3905, 4
        %v4126 = vsel %vm4112, %v4121, %v4125
        %v4127 = vrot.slane %v3960, 4
        %v4128 = vsel %vm4112, %v4123, %v4127
        %v4129 = vrot.slane %v3907, 4
        %v4130 = vsel %vm4112, %v4125, %v4129
        %v4131 = vrot.slane %v3963, 4
        %v4132 = vsel %vm4112, %v4127, %v4131
        %v4133 = vrot.slane %v3909, 4
        %v4134 = vsel %vm4112, %v4129, %v4133
        %v4135 = vrot.slane %v3966, 4
        %v4136 = vsel %vm4112, %v4131, %v4135
        %v4137 = vrot.slane %v3911, 4
        %v4138 = vsel %vm4112, %v4133, %v4137
        %v4139 = vrot.slane %v3969, 4
        %v4140 = vsel %vm4112, %v4135, %v4139
        %v4141 = vrot.slane %v3913, 4
        %v4142 = vsel %vm4112, %v4137, %v4141
        %v4143 = vrot.slane %v3972, 4
        %v4144 = vsel %vm4112, %v4139, %v4143
        %v4145 = vrot.slane %v3915, 4
        %v4146 = vsel %vm4112, %v4141, %v4145
        %v4147 = vrot.slane %v3975, 4
        %v4148 = vsel %vm4112, %v4143, %v4147
        %v4149 = vrot.slane %v3917, 4
        %v4150 = vsel %vm4112, %v4145, %v4149
        %v4151 = vrot.slane %v3978, 4
        %v4152 = vsel %vm4112, %v4147, %v4151
        %v4153 = vrot.slane %v3919, 4
        %v4154 = vsel %vm4112, %v4149, %v4153
        %v4155 = vrot.slane %v3981, 4
        %v4156 = vsel %vm4112, %v4151, %v4155
        %v4157 = vrot.slane %v3921, 4
        %v4158 = vsel %vm4112, %v4153, %v4157
        %v4159 = vrot.slane %v3984, 4
        %v4160 = vsel %vm4112, %v4155, %v4159
        %v4161 = vrot.slane %v3923, 4
        %v4162 = vsel %vm4112, %v4157, %v4161
        %v4163 = vrot.slane %v3987, 4
        %v4164 = vsel %vm4112, %v4159, %v4163
        %v4165 = vrot.slane %v3925, 4
        %v4166 = vsel %vm4112, %v4161, %v4165
        %v4167 = vrot.slane %v3990, 4
        %v4168 = vsel %vm4112, %v4163, %v4167
        %v4169 = vrot.slane %v3927, 4
        %v4170 = vsel %vm4112, %v4165, %v4169
        %v4171 = vrot.slane %v3993, 4
        %v4172 = vsel %vm4112, %v4167, %v4171
        %v4173 = vrot.slane %v3929, 4
        %v4174 = vsel %vm4112, %v4169, %v4173
        %v4175 = vrot.slane %v3996, 4
        %v4176 = vsel %vm4112, %v4171, %v4175
        %v4177 = vrot.slane %v3931, 4
        %v4178 = vsel %vm4112, %v4173, %v4177
        %v4179 = vrot.slane %v3999, 4
        %v4180 = vsel %vm4112, %v4175, %v4179
        %v4181 = vrot.slane %v3933, 4
        %v4182 = vsel %vm4112, %v4177, %v4181
        %v4183 = vrot.slane %v4002, 4
        %v4184 = vsel %vm4112, %v4179, %v4183
        %v4185 = vrot.slane %v3935, 4
        %v4186 = vsel %vm4112, %v4181, %v4185
        %v4187 = vrot.slane %v4005, 4
        %v4188 = vsel %vm4112, %v4183, %v4187
        %v4189 = vrot.slane %v3937, 4
        %v4190 = vsel %vm4112, %v4185, %v4189
        %v4191 = vrot.slane %v4008, 4
        %v4192 = vsel %vm4112, %v4187, %v4191
        %v4193 = vrot.slane %v3939, 4
        %v4194 = vsel %vm4112, %v4189, %v4193
        %v4195 = vrot.slane %v4011, 4
        %v4196 = vsel %vm4112, %v4191, %v4195
        %v4197 = vrot.slane %v3941, 4
        %v4198 = vsel %vm4112, %v4193, %v4197
        %v4199 = vrot.slane %v4014, 4
        %v4200 = vsel %vm4112, %v4195, %v4199
        %v4201 = vrot.slane %v3943, 4
        %v4202 = vsel %vm4112, %v4197, %v4201
        %v4203 = vrot.slane %v4059, 4
        %v4204 = vsel %vm4112, %v4199, %v4203
        %v4205 = vrot.slane %v4057, 4
        %v4206 = vsel %vm4112, %v4201, %v4205
        %v4207 = vrot.slane %v4061, 4
        %v4208 = vsel %vm4112, %v4203, %v4207
        %v4209 = vrot.slane %v4056, 4
        %v4210 = vsel %vm4112, %v4205, %v4209
        %v4259 = vunpack.c.l.b16 %v4063
        %v4260 = vunpack.c.l.b16 %v4064
        %v4261 = vunpack.c.l.b16 %v4065
        %v4262 = vunpack.c.l.b16 %v4066
        %v4263 = vunpack.c.l.b16 %v4067
        %v4264 = vunpack.c.l.b16 %v4068
        %v4265 = vunpack.c.l.b16 %v4069
        %v4266 = vunpack.c.l.b16 %v4070
        %v4267 = vunpack.c.l.b16 %v4071
        %v4268 = vunpack.c.l.b16 %v4072
        %v4269 = vunpack.c.l.b16 %v4073
        %v4270 = vunpack.c.l.b16 %v4074
        %v4271 = vunpack.c.l.b16 %v4075
        %v4272 = vunpack.c.l.b16 %v4076
        %v4273 = vunpack.c.l.b16 %v4077
        %v4274 = vunpack.c.l.b16 %v4078
        %v4275 = vunpack.c.l.b16 %v4079
        %v4276 = vunpack.c.l.b16 %v4080
        %v4277 = vunpack.c.l.b16 %v4081
        %v4278 = vunpack.c.l.b16 %v4082
        %v4279 = vunpack.c.l.b16 %v4083
        %v4280 = vunpack.c.l.b16 %v4084
        %v4281 = vunpack.c.l.b16 %v4085
        %v4282 = vunpack.c.l.b16 %v4086
        %v4283 = vpack.c.b16 %v4260, %v4259
        %v4284 = vpack.c.b16 %v4262, %v4261
        %v4285 = vpack.c.b16 %v4264, %v4263
        %v4286 = vpack.c.b16 %v4266, %v4265
        %v4287 = vpack.c.b16 %v4268, %v4267
        %v4288 = vpack.c.b16 %v4270, %v4269
        %v4289 = vpack.c.b16 %v4272, %v4271
        %v4290 = vpack.c.b16 %v4274, %v4273
        %v4291 = vpack.c.b16 %v4276, %v4275
        %v4292 = vpack.c.b16 %v4278, %v4277
        %v4293 = vpack.c.b16 %v4280, %v4279
        %v4294 = vpack.c.b16 %v4282, %v4281
        %v4308 = vsel %vm765, %v4118, 0
        %v4311 = vsel %vm765, %v4122, 0
        %v4314 = vsel %vm765, %v4126, 0
        %v4317 = vsel %vm765, %v4130, 0
        %v4320 = vsel %vm765, %v4134, 0
        %v4323 = vsel %vm765, %v4138, 0
        %v4326 = vsel %vm765, %v4142, 0
        %v4329 = vsel %vm765, %v4146, 0
        %v4332 = vsel %vm765, %v4150, 0
        %v4335 = vsel %vm765, %v4154, 0
        %v4338 = vsel %vm765, %v4158, 0
        %v4341 = vsel %vm765, %v4162, 0
        %v4344 = vsel %vm765, %v4166, 0
        %v4347 = vsel %vm765, %v4170, 0
        %v4350 = vsel %vm765, %v4174, 0
        %v4353 = vsel %vm765, %v4178, 0
        %v4356 = vsel %vm765, %v4182, 0
        %v4359 = vsel %vm765, %v4186, 0
        %v4362 = vsel %vm765, %v4190, 0
        %v4365 = vsel %vm765, %v4194, 0
        %v4368 = vsel %vm765, %v4198, 0
        %v4371 = vsel %vm765, %v4202, 0
        %v4374 = vsel %vm765, %v4206, 0
        %v4377 = vsel %vm765, %v4210, 0
        %4379 = vmatprep.subr.bf16.mxu0 0
        %4380 = vmatpush1.bf16.msra.mxu0 %v4290
        %4381 = vmatprep.subr.bf16.mxu0 0
        %4382 = vmatpush1.bf16.msra.mxu0 %v4289
        %4383 = vmatprep.subr.bf16.mxu0 0
        %4384 = vmatpush1.bf16.msra.mxu0 %v4288
        %4385 = vmatprep.subr.bf16.mxu0 0
        %4386 = vmatpush1.bf16.msra.mxu0 %v4287
        %4387 = vmatprep.subr.bf16.mxu0 0
        %4388 = vmatpush1.bf16.msra.mxu0 %v4286
        %4389 = vmatprep.subr.bf16.mxu0 0
        %4390 = vmatpush1.bf16.msra.mxu0 %v4285
        %4391 = vmatprep.subr.bf16.mxu0 0
        %4392 = vmatpush1.bf16.msra.mxu0 %v4284
        %4393 = vmatprep.subr.bf16.mxu0 0
        %4394 = vmatpush1.bf16.msra.mxu0 %v4283
        %4395 = vmatprep.subr.bf16.mxu0 0
        %4396 = vmatpush2.bf16.msra.mxu0 0
        %4397 = vmatprep.subr.bf16.mxu0 0
        %4398 = vmatpush2.bf16.msra.mxu0 0
        %4399 = vmatprep.subr.bf16.mxu0 0
        %4400 = vmatpush2.bf16.msra.mxu0 0
        %4401 = vmatprep.subr.bf16.mxu0 0
        %4402 = vmatpush2.bf16.msra.mxu0 0
        %4403 = vmatprep.subr.bf16.mxu0 0
        %4404 = vmatpush2.bf16.msra.mxu0 %v4294
        %4405 = vmatprep.subr.bf16.mxu0 0
        %4406 = vmatpush2.bf16.msra.mxu0 %v4293
        %4407 = vmatprep.subr.bf16.mxu0 0
        %4408 = vmatpush2.bf16.msra.mxu0 %v4292
        %4409 = vmatprep.subr.bf16.mxu0 0
        %4410 = vmatpush2.bf16.msra.mxu0 %v4291
        %4411 = vmatprep.mubr.bf16.mxu0 %v4308
        %4412 = vmatmul.mubr.bf16.gmra.mxu0 %v4115
        %v4413 = vpop.f32.mrf.mxu0
        %v4414 = vadd.f32 0.0, %v4413
        %v4415 = vpop.f32.mrf.mxu0
        %v4416 = vpop.f32.mrf.mxu0
        %v4417 = vadd.f32 0.0, %v4416
        %v4418 = vpop.f32.mrf.mxu0
        %4419 = vmatprep.mubr.bf16.mxu0 %v4311
        %4420 = vmatmul.mubr.bf16.gmra.mxu0 %v4120
        %v4421 = vpop.f32.mrf.mxu0
        %v4422 = vpop.f32.mrf.mxu0
        %v4423 = vpop.f32.mrf.mxu0
        %v4424 = vadd.f32 0.0, %v4423
        %v4425 = vpop.f32.mrf.mxu0
        %4426 = vmatprep.mubr.bf16.mxu0 %v4314
        %4427 = vmatmul.mubr.bf16.gmra.mxu0 %v4124
        %v4428 = vpop.f32.mrf.mxu0
        %v4429 = vadd.f32 0.0, %v4428
        %v4430 = vpop.f32.mrf.mxu0
        %v4431 = vpop.f32.mrf.mxu0
        %v4432 = vpop.f32.mrf.mxu0
        %4433 = vmatprep.mubr.bf16.mxu0 %v4317
        %4434 = vmatmul.mubr.bf16.gmra.mxu0 %v4128
        %v4435 = vpop.f32.mrf.mxu0
        %v4436 = vadd.f32 0.0, %v4435
        %v4437 = vpop.f32.mrf.mxu0
        %v4438 = vpop.f32.mrf.mxu0
        %v4439 = vadd.f32 0.0, %v4438
        %v4440 = vpop.f32.mrf.mxu0
        %4441 = vmatprep.mubr.bf16.mxu0 %v4320
        %4442 = vmatmul.mubr.bf16.gmra.mxu0 %v4132
        %v4443 = vpop.f32.mrf.mxu0
        %v4444 = vpop.f32.mrf.mxu0
        %v4445 = vpop.f32.mrf.mxu0
        %v4446 = vadd.f32 0.0, %v4445
        %v4447 = vpop.f32.mrf.mxu0
        %4448 = vmatprep.mubr.bf16.mxu0 %v4323
        %4449 = vmatmul.mubr.bf16.gmra.mxu0 %v4136
        %v4450 = vpop.f32.mrf.mxu0
        %v4451 = vadd.f32 0.0, %v4450
        %v4452 = vpop.f32.mrf.mxu0
        %v4453 = vpop.f32.mrf.mxu0
        %v4454 = vpop.f32.mrf.mxu0
        %4455 = vmatprep.mubr.bf16.mxu0 %v4326
        %4456 = vmatmul.mubr.bf16.gmra.mxu0 %v4140
        %v4457 = vpop.f32.mrf.mxu0
        %v4458 = vadd.f32 0.0, %v4457
        %v4459 = vpop.f32.mrf.mxu0
        %v4460 = vpop.f32.mrf.mxu0
        %v4461 = vadd.f32 0.0, %v4460
        %v4462 = vpop.f32.mrf.mxu0
        %4463 = vmatprep.mubr.bf16.mxu0 %v4329
        %4464 = vmatmul.mubr.bf16.gmra.mxu0 %v4144
        %v4465 = vpop.f32.mrf.mxu0
        %v4466 = vpop.f32.mrf.mxu0
        %v4467 = vpop.f32.mrf.mxu0
        %v4468 = vadd.f32 0.0, %v4467
        %v4469 = vpop.f32.mrf.mxu0
        %4470 = vmatprep.mubr.bf16.mxu0 %v4332
        %4471 = vmatmul.mubr.bf16.gmra.mxu0 %v4148
        %v4472 = vpop.f32.mrf.mxu0
        %v4473 = vadd.f32 0.0, %v4472
        %v4474 = vpop.f32.mrf.mxu0
        %v4475 = vpop.f32.mrf.mxu0
        %v4476 = vpop.f32.mrf.mxu0
        %4477 = vmatprep.mubr.bf16.mxu0 %v4335
        %4478 = vmatmul.mubr.bf16.gmra.mxu0 %v4152
        %v4479 = vpop.f32.mrf.mxu0
        %v4480 = vadd.f32 0.0, %v4479
        %v4481 = vpop.f32.mrf.mxu0
        %v4482 = vpop.f32.mrf.mxu0
        %v4483 = vadd.f32 0.0, %v4482
        %v4484 = vpop.f32.mrf.mxu0
        %4485 = vmatprep.mubr.bf16.mxu0 %v4338
        %4486 = vmatmul.mubr.bf16.gmra.mxu0 %v4156
        %v4487 = vpop.f32.mrf.mxu0
        %v4488 = vpop.f32.mrf.mxu0
        %v4489 = vpop.f32.mrf.mxu0
        %v4490 = vadd.f32 0.0, %v4489
        %v4491 = vpop.f32.mrf.mxu0
        %4492 = vmatprep.mubr.bf16.mxu0 %v4341
        %4493 = vmatmul.mubr.bf16.gmra.mxu0 %v4160
        %v4494 = vpop.f32.mrf.mxu0
        %v4495 = vadd.f32 0.0, %v4494
        %v4496 = vpop.f32.mrf.mxu0
        %v4497 = vpop.f32.mrf.mxu0
        %v4498 = vpop.f32.mrf.mxu0
        %4499 = vmatprep.mubr.bf16.mxu0 %v4344
        %4500 = vmatmul.mubr.bf16.gmra.mxu0 %v4164
        %v4501 = vpop.f32.mrf.mxu0
        %v4502 = vadd.f32 0.0, %v4501
        %v4503 = vpop.f32.mrf.mxu0
        %v4504 = vpop.f32.mrf.mxu0
        %v4505 = vadd.f32 0.0, %v4504
        %v4506 = vpop.f32.mrf.mxu0
        %4507 = vmatprep.mubr.bf16.mxu0 %v4347
        %4508 = vmatmul.mubr.bf16.gmra.mxu0 %v4168
        %v4509 = vpop.f32.mrf.mxu0
        %v4510 = vpop.f32.mrf.mxu0
        %v4511 = vpop.f32.mrf.mxu0
        %v4512 = vadd.f32 0.0, %v4511
        %v4513 = vpop.f32.mrf.mxu0
        %4514 = vmatprep.mubr.bf16.mxu0 %v4350
        %4515 = vmatmul.mubr.bf16.gmra.mxu0 %v4172
        %v4516 = vpop.f32.mrf.mxu0
        %v4517 = vadd.f32 0.0, %v4516
        %v4518 = vpop.f32.mrf.mxu0
        %v4519 = vpop.f32.mrf.mxu0
        %v4520 = vpop.f32.mrf.mxu0
        %4521 = vmatprep.mubr.bf16.mxu0 %v4353
        %4522 = vmatmul.mubr.bf16.gmra.mxu0 %v4176
        %v4523 = vpop.f32.mrf.mxu0
        %v4524 = vadd.f32 0.0, %v4523
        %v4525 = vpop.f32.mrf.mxu0
        %v4526 = vpop.f32.mrf.mxu0
        %v4527 = vadd.f32 0.0, %v4526
        %v4528 = vpop.f32.mrf.mxu0
        %4529 = vmatprep.mubr.bf16.mxu0 %v4356
        %4530 = vmatmul.mubr.bf16.gmra.mxu0 %v4180
        %v4531 = vpop.f32.mrf.mxu0
        %v4532 = vpop.f32.mrf.mxu0
        %v4533 = vpop.f32.mrf.mxu0
        %v4534 = vadd.f32 0.0, %v4533
        %v4535 = vpop.f32.mrf.mxu0
        %4536 = vmatprep.mubr.bf16.mxu0 %v4359
        %4537 = vmatmul.mubr.bf16.gmra.mxu0 %v4184
        %v4538 = vpop.f32.mrf.mxu0
        %v4539 = vadd.f32 0.0, %v4538
        %v4540 = vpop.f32.mrf.mxu0
        %v4541 = vpop.f32.mrf.mxu0
        %v4542 = vpop.f32.mrf.mxu0
        %4543 = vmatprep.mubr.bf16.mxu0 %v4362
        %4544 = vmatmul.mubr.bf16.gmra.mxu0 %v4188
        %v4545 = vpop.f32.mrf.mxu0
        %v4546 = vadd.f32 0.0, %v4545
        %v4547 = vpop.f32.mrf.mxu0
        %v4548 = vpop.f32.mrf.mxu0
        %v4549 = vadd.f32 0.0, %v4548
        %v4550 = vpop.f32.mrf.mxu0
        %4551 = vmatprep.mubr.bf16.mxu0 %v4365
        %4552 = vmatmul.mubr.bf16.gmra.mxu0 %v4192
        %v4553 = vpop.f32.mrf.mxu0
        %v4554 = vpop.f32.mrf.mxu0
        %v4555 = vpop.f32.mrf.mxu0
        %v4556 = vadd.f32 0.0, %v4555
        %v4557 = vpop.f32.mrf.mxu0
        %4558 = vmatprep.mubr.bf16.mxu0 %v4368
        %4559 = vmatmul.mubr.bf16.gmra.mxu0 %v4196
        %v4560 = vpop.f32.mrf.mxu0
        %v4561 = vadd.f32 0.0, %v4560
        %v4562 = vpop.f32.mrf.mxu0
        %v4563 = vpop.f32.mrf.mxu0
        %v4564 = vpop.f32.mrf.mxu0
        %4565 = vmatprep.mubr.bf16.mxu0 %v4371
        %4566 = vmatmul.mubr.bf16.gmra.mxu0 %v4200
        %v4567 = vpop.f32.mrf.mxu0
        %v4568 = vadd.f32 0.0, %v4567
        %v4569 = vpop.f32.mrf.mxu0
        %v4570 = vpop.f32.mrf.mxu0
        %v4571 = vadd.f32 0.0, %v4570
        %v4572 = vpop.f32.mrf.mxu0
        %4573 = vmatprep.mubr.bf16.mxu0 %v4374
        %4574 = vmatmul.mubr.bf16.gmra.mxu0 %v4204
        %v4575 = vpop.f32.mrf.mxu0
        %v4576 = vpop.f32.mrf.mxu0
        %v4577 = vpop.f32.mrf.mxu0
        %v4578 = vadd.f32 0.0, %v4577
        %v4579 = vpop.f32.mrf.mxu0
        %4580 = vmatprep.mubr.bf16.mxu0 %v4377
        %4581 = vmatmul.mubr.bf16.gmra.mxu0 %v4208
        %v4582 = vpop.f32.mrf.mxu0
        %v4583 = vadd.f32 0.0, %v4582
        %v4584 = vpop.f32.mrf.mxu0
        %v4585 = vpop.f32.mrf.mxu0
        %v4586 = vpop.f32.mrf.mxu0
        %4587 = vdwg.mxu0
        %v4612 = vunpack.c.l.b16 %v4016
        %v4613 = vunpack.c.l.b16 %v4017
        %v4614 = vunpack.c.l.b16 %v4018
        %v4615 = vunpack.c.l.b16 %v4019
        %v4616 = vunpack.c.l.b16 %v4020
        %v4617 = vunpack.c.l.b16 %v4021
        %v4618 = vunpack.c.l.b16 %v4022
        %v4619 = vunpack.c.l.b16 %v4023
        %v4620 = vunpack.c.l.b16 %v4024
        %v4621 = vunpack.c.l.b16 %v4025
        %v4622 = vunpack.c.l.b16 %v4026
        %v4623 = vunpack.c.l.b16 %v4027
        %v4624 = vunpack.c.l.b16 %v4028
        %v4625 = vunpack.c.l.b16 %v4029
        %v4626 = vunpack.c.l.b16 %v4030
        %v4627 = vunpack.c.l.b16 %v4031
        %v4628 = vunpack.c.l.b16 %v4032
        %v4629 = vunpack.c.l.b16 %v4033
        %v4630 = vunpack.c.l.b16 %v4034
        %v4631 = vunpack.c.l.b16 %v4035
        %v4632 = vunpack.c.l.b16 %v4036
        %v4633 = vunpack.c.l.b16 %v4037
        %v4634 = vunpack.c.l.b16 %v4038
        %v4635 = vunpack.c.l.b16 %v4039
        %v4636 = vpack.c.b16 %v4613, %v4612
        %v4637 = vpack.c.b16 %v4615, %v4614
        %v4638 = vpack.c.b16 %v4617, %v4616
        %v4639 = vpack.c.b16 %v4619, %v4618
        %v4640 = vpack.c.b16 %v4621, %v4620
        %v4641 = vpack.c.b16 %v4623, %v4622
        %v4642 = vpack.c.b16 %v4625, %v4624
        %v4643 = vpack.c.b16 %v4627, %v4626
        %v4644 = vpack.c.b16 %v4629, %v4628
        %v4645 = vpack.c.b16 %v4631, %v4630
        %v4646 = vpack.c.b16 %v4633, %v4632
        %v4647 = vpack.c.b16 %v4635, %v4634
        %v4661 = vsel %vm765, %v3897, 0
        %v4664 = vsel %vm765, %v3899, 0
        %v4667 = vsel %vm765, %v3901, 0
        %v4670 = vsel %vm765, %v3903, 0
        %v4673 = vsel %vm765, %v3905, 0
        %v4676 = vsel %vm765, %v3907, 0
        %v4679 = vsel %vm765, %v3909, 0
        %v4682 = vsel %vm765, %v3911, 0
        %v4685 = vsel %vm765, %v3913, 0
        %v4688 = vsel %vm765, %v3915, 0
        %v4691 = vsel %vm765, %v3917, 0
        %v4694 = vsel %vm765, %v3919, 0
        %v4697 = vsel %vm765, %v3921, 0
        %v4700 = vsel %vm765, %v3923, 0
        %v4703 = vsel %vm765, %v3925, 0
        %v4706 = vsel %vm765, %v3927, 0
        %v4709 = vsel %vm765, %v3929, 0
        %v4712 = vsel %vm765, %v3931, 0
        %v4715 = vsel %vm765, %v3933, 0
        %v4718 = vsel %vm765, %v3935, 0
        %v4721 = vsel %vm765, %v3937, 0
        %v4724 = vsel %vm765, %v3939, 0
        %v4727 = vsel %vm765, %v3941, 0
        %v4730 = vsel %vm765, %v3943, 0
        %4732 = vmatprep.subr.bf16.mxu0 0
        %4733 = vmatpush1.bf16.msra.mxu0 %v4643
        %4734 = vmatprep.subr.bf16.mxu0 0
        %4735 = vmatpush1.bf16.msra.mxu0 %v4642
        %4736 = vmatprep.subr.bf16.mxu0 0
        %4737 = vmatpush1.bf16.msra.mxu0 %v4641
        %4738 = vmatprep.subr.bf16.mxu0 0
        %4739 = vmatpush1.bf16.msra.mxu0 %v4640
        %4740 = vmatprep.subr.bf16.mxu0 0
        %4741 = vmatpush1.bf16.msra.mxu0 %v4639
        %4742 = vmatprep.subr.bf16.mxu0 0
        %4743 = vmatpush1.bf16.msra.mxu0 %v4638
        %4744 = vmatprep.subr.bf16.mxu0 0
        %4745 = vmatpush1.bf16.msra.mxu0 %v4637
        %4746 = vmatprep.subr.bf16.mxu0 0
        %4747 = vmatpush1.bf16.msra.mxu0 %v4636
        %4748 = vmatprep.subr.bf16.mxu0 0
        %4749 = vmatpush2.bf16.msra.mxu0 0
        %4750 = vmatprep.subr.bf16.mxu0 0
        %4751 = vmatpush2.bf16.msra.mxu0 0
        %4752 = vmatprep.subr.bf16.mxu0 0
        %4753 = vmatpush2.bf16.msra.mxu0 0
        %4754 = vmatprep.subr.bf16.mxu0 0
        %4755 = vmatpush2.bf16.msra.mxu0 0
        %4756 = vmatprep.subr.bf16.mxu0 0
        %4757 = vmatpush2.bf16.msra.mxu0 %v4647
        %4758 = vmatprep.subr.bf16.mxu0 0
        %4759 = vmatpush2.bf16.msra.mxu0 %v4646
        %4760 = vmatprep.subr.bf16.mxu0 0
        %4761 = vmatpush2.bf16.msra.mxu0 %v4645
        %4762 = vmatprep.subr.bf16.mxu0 0
        %4763 = vmatpush2.bf16.msra.mxu0 %v4644
        %4764 = vmatprep.mubr.bf16.mxu0 %v4661
        %4765 = vmatmul.mubr.bf16.gmra.mxu0 %v3945
        %v4766 = vpop.f32.mrf.mxu0
        %v4767 = vadd.f32 %v4414, %v4766
        %v4768 = vpop.f32.mrf.mxu0
        %v4769 = vpop.f32.mrf.mxu0
        %v4770 = vadd.f32 %v4417, %v4769
        %v4771 = vpop.f32.mrf.mxu0
        %4772 = vmatprep.mubr.bf16.mxu0 %v4664
        %4773 = vmatmul.mubr.bf16.gmra.mxu0 %v3948
        %v4774 = vpop.f32.mrf.mxu0
        %v4775 = vpop.f32.mrf.mxu0
        %v4776 = vpop.f32.mrf.mxu0
        %v4777 = vadd.f32 %v4424, %v4776
        %v4778 = vpop.f32.mrf.mxu0
        %4779 = vmatprep.mubr.bf16.mxu0 %v4667
        %4780 = vmatmul.mubr.bf16.gmra.mxu0 %v3951
        %v4781 = vpop.f32.mrf.mxu0
        %v4782 = vadd.f32 %v4429, %v4781
        %v4783 = vpop.f32.mrf.mxu0
        %v4784 = vpop.f32.mrf.mxu0
        %v4785 = vpop.f32.mrf.mxu0
        %4786 = vmatprep.mubr.bf16.mxu0 %v4670
        %4787 = vmatmul.mubr.bf16.gmra.mxu0 %v3954
        %v4788 = vpop.f32.mrf.mxu0
        %v4789 = vadd.f32 %v4436, %v4788
        %v4790 = vpop.f32.mrf.mxu0
        %v4791 = vpop.f32.mrf.mxu0
        %v4792 = vadd.f32 %v4439, %v4791
        %v4793 = vpop.f32.mrf.mxu0
        %4794 = vmatprep.mubr.bf16.mxu0 %v4673
        %4795 = vmatmul.mubr.bf16.gmra.mxu0 %v3957
        %v4796 = vpop.f32.mrf.mxu0
        %v4797 = vpop.f32.mrf.mxu0
        %v4798 = vpop.f32.mrf.mxu0
        %v4799 = vadd.f32 %v4446, %v4798
        %v4800 = vpop.f32.mrf.mxu0
        %4801 = vmatprep.mubr.bf16.mxu0 %v4676
        %4802 = vmatmul.mubr.bf16.gmra.mxu0 %v3960
        %v4803 = vpop.f32.mrf.mxu0
        %v4804 = vadd.f32 %v4451, %v4803
        %v4805 = vpop.f32.mrf.mxu0
        %v4806 = vpop.f32.mrf.mxu0
        %v4807 = vpop.f32.mrf.mxu0
        %4808 = vmatprep.mubr.bf16.mxu0 %v4679
        %4809 = vmatmul.mubr.bf16.gmra.mxu0 %v3963
        %v4810 = vpop.f32.mrf.mxu0
        %v4811 = vadd.f32 %v4458, %v4810
        %v4812 = vpop.f32.mrf.mxu0
        %v4813 = vpop.f32.mrf.mxu0
        %v4814 = vadd.f32 %v4461, %v4813
        %v4815 = vpop.f32.mrf.mxu0
        %4816 = vmatprep.mubr.bf16.mxu0 %v4682
        %4817 = vmatmul.mubr.bf16.gmra.mxu0 %v3966
        %v4818 = vpop.f32.mrf.mxu0
        %v4819 = vpop.f32.mrf.mxu0
        %v4820 = vpop.f32.mrf.mxu0
        %v4821 = vadd.f32 %v4468, %v4820
        %v4822 = vpop.f32.mrf.mxu0
        %4823 = vmatprep.mubr.bf16.mxu0 %v4685
        %4824 = vmatmul.mubr.bf16.gmra.mxu0 %v3969
        %v4825 = vpop.f32.mrf.mxu0
        %v4826 = vadd.f32 %v4473, %v4825
        %v4827 = vpop.f32.mrf.mxu0
        %v4828 = vpop.f32.mrf.mxu0
        %v4829 = vpop.f32.mrf.mxu0
        %4830 = vmatprep.mubr.bf16.mxu0 %v4688
        %4831 = vmatmul.mubr.bf16.gmra.mxu0 %v3972
        %v4832 = vpop.f32.mrf.mxu0
        %v4833 = vadd.f32 %v4480, %v4832
        %v4834 = vpop.f32.mrf.mxu0
        %v4835 = vpop.f32.mrf.mxu0
        %v4836 = vadd.f32 %v4483, %v4835
        %v4837 = vpop.f32.mrf.mxu0
        %4838 = vmatprep.mubr.bf16.mxu0 %v4691
        %4839 = vmatmul.mubr.bf16.gmra.mxu0 %v3975
        %v4840 = vpop.f32.mrf.mxu0
        %v4841 = vpop.f32.mrf.mxu0
        %v4842 = vpop.f32.mrf.mxu0
        %v4843 = vadd.f32 %v4490, %v4842
        %v4844 = vpop.f32.mrf.mxu0
        %4845 = vmatprep.mubr.bf16.mxu0 %v4694
        %4846 = vmatmul.mubr.bf16.gmra.mxu0 %v3978
        %v4847 = vpop.f32.mrf.mxu0
        %v4848 = vadd.f32 %v4495, %v4847
        %v4849 = vpop.f32.mrf.mxu0
        %v4850 = vpop.f32.mrf.mxu0
        %v4851 = vpop.f32.mrf.mxu0
        %4852 = vmatprep.mubr.bf16.mxu0 %v4697
        %4853 = vmatmul.mubr.bf16.gmra.mxu0 %v3981
        %v4854 = vpop.f32.mrf.mxu0
        %v4855 = vadd.f32 %v4502, %v4854
        %v4856 = vpop.f32.mrf.mxu0
        %v4857 = vpop.f32.mrf.mxu0
        %v4858 = vadd.f32 %v4505, %v4857
        %v4859 = vpop.f32.mrf.mxu0
        %4860 = vmatprep.mubr.bf16.mxu0 %v4700
        %4861 = vmatmul.mubr.bf16.gmra.mxu0 %v3984
        %v4862 = vpop.f32.mrf.mxu0
        %v4863 = vpop.f32.mrf.mxu0
        %v4864 = vpop.f32.mrf.mxu0
        %v4865 = vadd.f32 %v4512, %v4864
        %v4866 = vpop.f32.mrf.mxu0
        %4867 = vmatprep.mubr.bf16.mxu0 %v4703
        %4868 = vmatmul.mubr.bf16.gmra.mxu0 %v3987
        %v4869 = vpop.f32.mrf.mxu0
        %v4870 = vadd.f32 %v4517, %v4869
        %v4871 = vpop.f32.mrf.mxu0
        %v4872 = vpop.f32.mrf.mxu0
        %v4873 = vpop.f32.mrf.mxu0
        %4874 = vmatprep.mubr.bf16.mxu0 %v4706
        %4875 = vmatmul.mubr.bf16.gmra.mxu0 %v3990
        %v4876 = vpop.f32.mrf.mxu0
        %v4877 = vadd.f32 %v4524, %v4876
        %v4878 = vpop.f32.mrf.mxu0
        %v4879 = vpop.f32.mrf.mxu0
        %v4880 = vadd.f32 %v4527, %v4879
        %v4881 = vpop.f32.mrf.mxu0
        %4882 = vmatprep.mubr.bf16.mxu0 %v4709
        %4883 = vmatmul.mubr.bf16.gmra.mxu0 %v3993
        %v4884 = vpop.f32.mrf.mxu0
        %v4885 = vpop.f32.mrf.mxu0
        %v4886 = vpop.f32.mrf.mxu0
        %v4887 = vadd.f32 %v4534, %v4886
        %v4888 = vpop.f32.mrf.mxu0
        %4889 = vmatprep.mubr.bf16.mxu0 %v4712
        %4890 = vmatmul.mubr.bf16.gmra.mxu0 %v3996
        %v4891 = vpop.f32.mrf.mxu0
        %v4892 = vadd.f32 %v4539, %v4891
        %v4893 = vpop.f32.mrf.mxu0
        %v4894 = vpop.f32.mrf.mxu0
        %v4895 = vpop.f32.mrf.mxu0
        %4896 = vmatprep.mubr.bf16.mxu0 %v4715
        %4897 = vmatmul.mubr.bf16.gmra.mxu0 %v3999
        %v4898 = vpop.f32.mrf.mxu0
        %v4899 = vadd.f32 %v4546, %v4898
        %v4900 = vpop.f32.mrf.mxu0
        %v4901 = vpop.f32.mrf.mxu0
        %v4902 = vadd.f32 %v4549, %v4901
        %v4903 = vpop.f32.mrf.mxu0
        %4904 = vmatprep.mubr.bf16.mxu0 %v4718
        %4905 = vmatmul.mubr.bf16.gmra.mxu0 %v4002
        %v4906 = vpop.f32.mrf.mxu0
        %v4907 = vpop.f32.mrf.mxu0
        %v4908 = vpop.f32.mrf.mxu0
        %v4909 = vadd.f32 %v4556, %v4908
        %v4910 = vpop.f32.mrf.mxu0
        %4911 = vmatprep.mubr.bf16.mxu0 %v4721
        %4912 = vmatmul.mubr.bf16.gmra.mxu0 %v4005
        %v4913 = vpop.f32.mrf.mxu0
        %v4914 = vadd.f32 %v4561, %v4913
        %v4915 = vpop.f32.mrf.mxu0
        %v4916 = vpop.f32.mrf.mxu0
        %v4917 = vpop.f32.mrf.mxu0
        %4918 = vmatprep.mubr.bf16.mxu0 %v4724
        %4919 = vmatmul.mubr.bf16.gmra.mxu0 %v4008
        %v4920 = vpop.f32.mrf.mxu0
        %v4921 = vadd.f32 %v4568, %v4920
        %v4922 = vpop.f32.mrf.mxu0
        %v4923 = vpop.f32.mrf.mxu0
        %v4924 = vadd.f32 %v4571, %v4923
        %v4925 = vpop.f32.mrf.mxu0
        %4926 = vmatprep.mubr.bf16.mxu0 %v4727
        %4927 = vmatmul.mubr.bf16.gmra.mxu0 %v4011
        %v4928 = vpop.f32.mrf.mxu0
        %v4929 = vpop.f32.mrf.mxu0
        %v4930 = vpop.f32.mrf.mxu0
        %v4931 = vadd.f32 %v4578, %v4930
        %v4932 = vpop.f32.mrf.mxu0
        %4933 = vmatprep.mubr.bf16.mxu0 %v4730
        %4934 = vmatmul.mubr.bf16.gmra.mxu0 %v4014
        %v4935 = vpop.f32.mrf.mxu0
        %v4936 = vadd.f32 %v4583, %v4935
        %v4937 = vpop.f32.mrf.mxu0
        %v4938 = vpop.f32.mrf.mxu0
        %v4939 = vpop.f32.mrf.mxu0
        %4940 = vdwg.mxu0
        %v4942 = vshll.u32 %v3624, 16
        %v4944 = vrot.slane %v4942, 1
        %v4945 = vsel %vm1366, %v4050, %v4944
        %v4946 = vshrl.u32 %v3624, 16
        %v4948 = vor.u32 %v4946, %v4944
        %v4950 = vshll.u32 %v3625, 16
        %v4952 = vrot.slane %v4950, 1
        %v4953 = vsel %vm1366, %v4948, %v4952
        %4954 = vrot.lane.b32.xlu0 %v4945, 64
        %v4955 = vpop.permute.xlu0 %4954
        %4956 = vrot.lane.b32.xlu0 %v4953, 64
        %v4957 = vpop.permute.xlu0 %4956
        %v4960 = vrot.slane %v3624, 1
        %v4961 = vsel %vm1460, %v4056, %v4960
        %v4962 = vrot.slane %v3625, 1
        %v4963 = vsel %vm1460, %v4960, %v4962
        %v4966 = vsel %vm765, %v3623, %v4955
        %v4969 = vsel %vm765, %v3624, %v4957
        %s4971 = scalar_lea.vmem %s11, 192
        %v4972 = vld [vmem:[%s4971] sm:$0xf]
        %v4973 = vld [vmem:[%s4971 + $0x4] sm:$0xf]
        %v4974 = vld [vmem:[%s4971 + $0x8] sm:$0xf]
        %v4975 = vld [vmem:[%s4971 + $0xc] sm:$0xf]
        %v4976 = vld [vmem:[%s4971 + $0x10] sm:$0xf]
        %v4977 = vld [vmem:[%s4971 + $0x14] sm:$0xf]
        %v4978 = vld [vmem:[%s4971 + $0x18] sm:$0xf]
        %v4979 = vld [vmem:[%s4971 + $0x1c] sm:$0xf]
        %v4980 = vld [vmem:[%s4971 + $0x20] sm:$0xf]
        %v4981 = vld [vmem:[%s4971 + $0x24] sm:$0xf]
        %v4982 = vld [vmem:[%s4971 + $0x28] sm:$0xf]
        %v4983 = vld [vmem:[%s4971 + $0x2c] sm:$0xf]
        %v4984 = vld [vmem:[%s4971 + $0x30] sm:$0xf]
        %v4985 = vld [vmem:[%s4971 + $0x34] sm:$0xf]
        %v4986 = vld [vmem:[%s4971 + $0x38] sm:$0xf]
        %v4987 = vld [vmem:[%s4971 + $0x3c] sm:$0xf]
        %v4988 = vld [vmem:[%s4971 + $0x40] sm:$0xf]
        %v4989 = vld [vmem:[%s4971 + $0x44] sm:$0xf]
        %v4990 = vld [vmem:[%s4971 + $0x48] sm:$0xf]
        %v4991 = vld [vmem:[%s4971 + $0x4c] sm:$0xf]
        %v4992 = vld [vmem:[%s4971 + $0x50] sm:$0xf]
        %v4993 = vld [vmem:[%s4971 + $0x54] sm:$0xf]
        %v4994 = vld [vmem:[%s4971 + $0x58] sm:$0xf]
        %v4995 = vld [vmem:[%s4971 + $0x5c] sm:$0xf]
        %v5020 = vunpack.c.l.b16 %v4972
        %v5021 = vunpack.c.l.b16 %v4973
        %v5022 = vunpack.c.l.b16 %v4974
        %v5023 = vunpack.c.l.b16 %v4975
        %v5024 = vunpack.c.l.b16 %v4976
        %v5025 = vunpack.c.l.b16 %v4977
        %v5026 = vunpack.c.l.b16 %v4978
        %v5027 = vunpack.c.l.b16 %v4979
        %v5028 = vunpack.c.l.b16 %v4980
        %v5029 = vunpack.c.l.b16 %v4981
        %v5030 = vunpack.c.l.b16 %v4982
        %v5031 = vunpack.c.l.b16 %v4983
        %v5032 = vunpack.c.l.b16 %v4984
        %v5033 = vunpack.c.l.b16 %v4985
        %v5034 = vunpack.c.l.b16 %v4986
        %v5035 = vunpack.c.l.b16 %v4987
        %v5036 = vunpack.c.l.b16 %v4988
        %v5037 = vunpack.c.l.b16 %v4989
        %v5038 = vunpack.c.l.b16 %v4990
        %v5039 = vunpack.c.l.b16 %v4991
        %v5040 = vunpack.c.l.b16 %v4992
        %v5041 = vunpack.c.l.b16 %v4993
        %v5042 = vunpack.c.l.b16 %v4994
        %v5043 = vunpack.c.l.b16 %v4995
        %v5044 = vpack.c.b16 %v5021, %v5020
        %v5045 = vpack.c.b16 %v5023, %v5022
        %v5046 = vpack.c.b16 %v5025, %v5024
        %v5047 = vpack.c.b16 %v5027, %v5026
        %v5048 = vpack.c.b16 %v5029, %v5028
        %v5049 = vpack.c.b16 %v5031, %v5030
        %v5050 = vpack.c.b16 %v5033, %v5032
        %v5051 = vpack.c.b16 %v5035, %v5034
        %v5052 = vpack.c.b16 %v5037, %v5036
        %v5053 = vpack.c.b16 %v5039, %v5038
        %v5054 = vpack.c.b16 %v5041, %v5040
        %v5055 = vpack.c.b16 %v5043, %v5042
        %v5069 = vsel %vm765, %v4057, 0
        %v5072 = vsel %vm765, %v4961, 0
        %v5075 = vsel %vm765, %v4963, 0
        %5077 = vmatprep.subr.bf16.mxu0 0
        %5078 = vmatpush1.bf16.msra.mxu0 %v5051
        %5079 = vmatprep.subr.bf16.mxu0 0
        %5080 = vmatpush1.bf16.msra.mxu0 %v5050
        %5081 = vmatprep.subr.bf16.mxu0 0
        %5082 = vmatpush1.bf16.msra.mxu0 %v5049
        %5083 = vmatprep.subr.bf16.mxu0 0
        %5084 = vmatpush1.bf16.msra.mxu0 %v5048
        %5085 = vmatprep.subr.bf16.mxu0 0
        %5086 = vmatpush1.bf16.msra.mxu0 %v5047
        %5087 = vmatprep.subr.bf16.mxu0 0
        %5088 = vmatpush1.bf16.msra.mxu0 %v5046
        %5089 = vmatprep.subr.bf16.mxu0 0
        %5090 = vmatpush1.bf16.msra.mxu0 %v5045
        %5091 = vmatprep.subr.bf16.mxu0 0
        %5092 = vmatpush1.bf16.msra.mxu0 %v5044
        %5093 = vmatprep.subr.bf16.mxu0 0
        %5094 = vmatpush2.bf16.msra.mxu0 0
        %5095 = vmatprep.subr.bf16.mxu0 0
        %5096 = vmatpush2.bf16.msra.mxu0 0
        %5097 = vmatprep.subr.bf16.mxu0 0
        %5098 = vmatpush2.bf16.msra.mxu0 0
        %5099 = vmatprep.subr.bf16.mxu0 0
        %5100 = vmatpush2.bf16.msra.mxu0 0
        %5101 = vmatprep.subr.bf16.mxu0 0
        %5102 = vmatpush2.bf16.msra.mxu0 %v5055
        %5103 = vmatprep.subr.bf16.mxu0 0
        %5104 = vmatpush2.bf16.msra.mxu0 %v5054
        %5105 = vmatprep.subr.bf16.mxu0 0
        %5106 = vmatpush2.bf16.msra.mxu0 %v5053
        %5107 = vmatprep.subr.bf16.mxu0 0
        %5108 = vmatpush2.bf16.msra.mxu0 %v5052
        %5109 = vmatprep.mubr.bf16.mxu0 %v4670
        %5110 = vmatmul.mubr.bf16.gmra.mxu0 %v3954
        %v5111 = vpop.f32.mrf.mxu0
        %v5112 = vadd.f32 0.0, %v5111
        %v5113 = vpop.f32.mrf.mxu0
        %v5114 = vpop.f32.mrf.mxu0
        %v5115 = vadd.f32 0.0, %v5114
        %v5116 = vpop.f32.mrf.mxu0
        %5117 = vmatprep.mubr.bf16.mxu0 %v4673
        %5118 = vmatmul.mubr.bf16.gmra.mxu0 %v3957
        %v5119 = vpop.f32.mrf.mxu0
        %v5120 = vpop.f32.mrf.mxu0
        %v5121 = vpop.f32.mrf.mxu0
        %v5122 = vadd.f32 0.0, %v5121
        %v5123 = vpop.f32.mrf.mxu0
        %5124 = vmatprep.mubr.bf16.mxu0 %v4676
        %5125 = vmatmul.mubr.bf16.gmra.mxu0 %v3960
        %v5126 = vpop.f32.mrf.mxu0
        %v5127 = vadd.f32 0.0, %v5126
        %v5128 = vpop.f32.mrf.mxu0
        %v5129 = vpop.f32.mrf.mxu0
        %v5130 = vpop.f32.mrf.mxu0
        %5131 = vmatprep.mubr.bf16.mxu0 %v4679
        %5132 = vmatmul.mubr.bf16.gmra.mxu0 %v3963
        %v5133 = vpop.f32.mrf.mxu0
        %v5134 = vadd.f32 0.0, %v5133
        %v5135 = vpop.f32.mrf.mxu0
        %v5136 = vpop.f32.mrf.mxu0
        %v5137 = vadd.f32 0.0, %v5136
        %v5138 = vpop.f32.mrf.mxu0
        %5139 = vmatprep.mubr.bf16.mxu0 %v4682
        %5140 = vmatmul.mubr.bf16.gmra.mxu0 %v3966
        %v5141 = vpop.f32.mrf.mxu0
        %v5142 = vpop.f32.mrf.mxu0
        %v5143 = vpop.f32.mrf.mxu0
        %v5144 = vadd.f32 0.0, %v5143
        %v5145 = vpop.f32.mrf.mxu0
        %5146 = vmatprep.mubr.bf16.mxu0 %v4685
        %5147 = vmatmul.mubr.bf16.gmra.mxu0 %v3969
        %v5148 = vpop.f32.mrf.mxu0
        %v5149 = vadd.f32 0.0, %v5148
        %v5150 = vpop.f32.mrf.mxu0
        %v5151 = vpop.f32.mrf.mxu0
        %v5152 = vpop.f32.mrf.mxu0
        %5153 = vmatprep.mubr.bf16.mxu0 %v4688
        %5154 = vmatmul.mubr.bf16.gmra.mxu0 %v3972
        %v5155 = vpop.f32.mrf.mxu0
        %v5156 = vadd.f32 0.0, %v5155
        %v5157 = vpop.f32.mrf.mxu0
        %v5158 = vpop.f32.mrf.mxu0
        %v5159 = vadd.f32 0.0, %v5158
        %v5160 = vpop.f32.mrf.mxu0
        %5161 = vmatprep.mubr.bf16.mxu0 %v4691
        %5162 = vmatmul.mubr.bf16.gmra.mxu0 %v3975
        %v5163 = vpop.f32.mrf.mxu0
        %v5164 = vpop.f32.mrf.mxu0
        %v5165 = vpop.f32.mrf.mxu0
        %v5166 = vadd.f32 0.0, %v5165
        %v5167 = vpop.f32.mrf.mxu0
        %5168 = vmatprep.mubr.bf16.mxu0 %v4694
        %5169 = vmatmul.mubr.bf16.gmra.mxu0 %v3978
        %v5170 = vpop.f32.mrf.mxu0
        %v5171 = vadd.f32 0.0, %v5170
        %v5172 = vpop.f32.mrf.mxu0
        %v5173 = vpop.f32.mrf.mxu0
        %v5174 = vpop.f32.mrf.mxu0
        %5175 = vmatprep.mubr.bf16.mxu0 %v4697
        %5176 = vmatmul.mubr.bf16.gmra.mxu0 %v3981
        %v5177 = vpop.f32.mrf.mxu0
        %v5178 = vadd.f32 0.0, %v5177
        %v5179 = vpop.f32.mrf.mxu0
        %v5180 = vpop.f32.mrf.mxu0
        %v5181 = vadd.f32 0.0, %v5180
        %v5182 = vpop.f32.mrf.mxu0
        %5183 = vmatprep.mubr.bf16.mxu0 %v4700
        %5184 = vmatmul.mubr.bf16.gmra.mxu0 %v3984
        %v5185 = vpop.f32.mrf.mxu0
        %v5186 = vpop.f32.mrf.mxu0
        %v5187 = vpop.f32.mrf.mxu0
        %v5188 = vadd.f32 0.0, %v5187
        %v5189 = vpop.f32.mrf.mxu0
        %5190 = vmatprep.mubr.bf16.mxu0 %v4703
        %5191 = vmatmul.mubr.bf16.gmra.mxu0 %v3987
        %v5192 = vpop.f32.mrf.mxu0
        %v5193 = vadd.f32 0.0, %v5192
        %v5194 = vpop.f32.mrf.mxu0
        %v5195 = vpop.f32.mrf.mxu0
        %v5196 = vpop.f32.mrf.mxu0
        %5197 = vmatprep.mubr.bf16.mxu0 %v4706
        %5198 = vmatmul.mubr.bf16.gmra.mxu0 %v3990
        %v5199 = vpop.f32.mrf.mxu0
        %v5200 = vadd.f32 0.0, %v5199
        %v5201 = vpop.f32.mrf.mxu0
        %v5202 = vpop.f32.mrf.mxu0
        %v5203 = vadd.f32 0.0, %v5202
        %v5204 = vpop.f32.mrf.mxu0
        %5205 = vmatprep.mubr.bf16.mxu0 %v4709
        %5206 = vmatmul.mubr.bf16.gmra.mxu0 %v3993
        %v5207 = vpop.f32.mrf.mxu0
        %v5208 = vpop.f32.mrf.mxu0
        %v5209 = vpop.f32.mrf.mxu0
        %v5210 = vadd.f32 0.0, %v5209
        %v5211 = vpop.f32.mrf.mxu0
        %5212 = vmatprep.mubr.bf16.mxu0 %v4712
        %5213 = vmatmul.mubr.bf16.gmra.mxu0 %v3996
        %v5214 = vpop.f32.mrf.mxu0
        %v5215 = vadd.f32 0.0, %v5214
        %v5216 = vpop.f32.mrf.mxu0
        %v5217 = vpop.f32.mrf.mxu0
        %v5218 = vpop.f32.mrf.mxu0
        %5219 = vmatprep.mubr.bf16.mxu0 %v4715
        %5220 = vmatmul.mubr.bf16.gmra.mxu0 %v3999
        %v5221 = vpop.f32.mrf.mxu0
        %v5222 = vadd.f32 0.0, %v5221
        %v5223 = vpop.f32.mrf.mxu0
        %v5224 = vpop.f32.mrf.mxu0
        %v5225 = vadd.f32 0.0, %v5224
        %v5226 = vpop.f32.mrf.mxu0
        %5227 = vmatprep.mubr.bf16.mxu0 %v4718
        %5228 = vmatmul.mubr.bf16.gmra.mxu0 %v4002
        %v5229 = vpop.f32.mrf.mxu0
        %v5230 = vpop.f32.mrf.mxu0
        %v5231 = vpop.f32.mrf.mxu0
        %v5232 = vadd.f32 0.0, %v5231
        %v5233 = vpop.f32.mrf.mxu0
        %5234 = vmatprep.mubr.bf16.mxu0 %v4721
        %5235 = vmatmul.mubr.bf16.gmra.mxu0 %v4005
        %v5236 = vpop.f32.mrf.mxu0
        %v5237 = vadd.f32 0.0, %v5236
        %v5238 = vpop.f32.mrf.mxu0
        %v5239 = vpop.f32.mrf.mxu0
        %v5240 = vpop.f32.mrf.mxu0
        %5241 = vmatprep.mubr.bf16.mxu0 %v4724
        %5242 = vmatmul.mubr.bf16.gmra.mxu0 %v4008
        %v5243 = vpop.f32.mrf.mxu0
        %v5244 = vadd.f32 0.0, %v5243
        %v5245 = vpop.f32.mrf.mxu0
        %v5246 = vpop.f32.mrf.mxu0
        %v5247 = vadd.f32 0.0, %v5246
        %v5248 = vpop.f32.mrf.mxu0
        %5249 = vmatprep.mubr.bf16.mxu0 %v4727
        %5250 = vmatmul.mubr.bf16.gmra.mxu0 %v4011
        %v5251 = vpop.f32.mrf.mxu0
        %v5252 = vpop.f32.mrf.mxu0
        %v5253 = vpop.f32.mrf.mxu0
        %v5254 = vadd.f32 0.0, %v5253
        %v5255 = vpop.f32.mrf.mxu0
        %5256 = vmatprep.mubr.bf16.mxu0 %v4730
        %5257 = vmatmul.mubr.bf16.gmra.mxu0 %v4014
        %v5258 = vpop.f32.mrf.mxu0
        %v5259 = vadd.f32 0.0, %v5258
        %v5260 = vpop.f32.mrf.mxu0
        %v5261 = vpop.f32.mrf.mxu0
        %v5262 = vpop.f32.mrf.mxu0
        %5263 = vmatprep.mubr.bf16.mxu0 %v5069
        %5264 = vmatmul.mubr.bf16.gmra.mxu0 %v4059
        %v5265 = vpop.f32.mrf.mxu0
        %v5266 = vadd.f32 0.0, %v5265
        %v5267 = vpop.f32.mrf.mxu0
        %v5268 = vpop.f32.mrf.mxu0
        %v5269 = vadd.f32 0.0, %v5268
        %v5270 = vpop.f32.mrf.mxu0
        %5271 = vmatprep.mubr.bf16.mxu0 %v5072
        %5272 = vmatmul.mubr.bf16.gmra.mxu0 %v4966
        %v5273 = vpop.f32.mrf.mxu0
        %v5274 = vpop.f32.mrf.mxu0
        %v5275 = vpop.f32.mrf.mxu0
        %v5276 = vadd.f32 0.0, %v5275
        %v5277 = vpop.f32.mrf.mxu0
        %5278 = vmatprep.mubr.bf16.mxu0 %v5075
        %5279 = vmatmul.mubr.bf16.gmra.mxu0 %v4969
        %v5280 = vpop.f32.mrf.mxu0
        %v5281 = vadd.f32 0.0, %v5280
        %v5282 = vpop.f32.mrf.mxu0
        %v5283 = vpop.f32.mrf.mxu0
        %v5284 = vpop.f32.mrf.mxu0
        %5285 = vdwg.mxu0
        %v5286 = vadd.f32 %v4767, %v5112
        %v5287 = vadd.f32 %v4770, %v5115
        %v5288 = vadd.f32 %v4777, %v5122
        %v5289 = vadd.f32 %v4782, %v5127
        %v5290 = vadd.f32 %v4789, %v5134
        %v5291 = vadd.f32 %v4792, %v5137
        %v5292 = vadd.f32 %v4799, %v5144
        %v5293 = vadd.f32 %v4804, %v5149
        %v5294 = vadd.f32 %v4811, %v5156
        %v5295 = vadd.f32 %v4814, %v5159
        %v5296 = vadd.f32 %v4821, %v5166
        %v5297 = vadd.f32 %v4826, %v5171
        %v5298 = vadd.f32 %v4833, %v5178
        %v5299 = vadd.f32 %v4836, %v5181
        %v5300 = vadd.f32 %v4843, %v5188
        %v5301 = vadd.f32 %v4848, %v5193
        %v5302 = vadd.f32 %v4855, %v5200
        %v5303 = vadd.f32 %v4858, %v5203
        %v5304 = vadd.f32 %v4865, %v5210
        %v5305 = vadd.f32 %v4870, %v5215
        %v5306 = vadd.f32 %v4877, %v5222
        %v5307 = vadd.f32 %v4880, %v5225
        %v5308 = vadd.f32 %v4887, %v5232
        %v5309 = vadd.f32 %v4892, %v5237
        %v5310 = vadd.f32 %v4899, %v5244
        %v5311 = vadd.f32 %v4902, %v5247
        %v5312 = vadd.f32 %v4909, %v5254
        %v5313 = vadd.f32 %v4914, %v5259
        %v5314 = vadd.f32 %v4921, %v5266
        %v5315 = vadd.f32 %v4924, %v5269
        %v5316 = vadd.f32 %v4931, %v5276
        %v5317 = vadd.f32 %v4936, %v5281
        %v5318 = vld [vmem:[%s12] sm:$0xf]
        %5319 = vxpose.xlu0.c.b16.start [1/8] %v3059, 128
        %5320 = vxpose.xlu0.c.b16.cont [2/8] 0, 128
        %5321 = vxpose.xlu0.c.b16.cont [3/8] 0, 128
        %5322 = vxpose.xlu0.c.b16.cont [4/8] 0, 128
        %5323 = vxpose.xlu0.c.b16.cont [5/8] 0, 128
        %5324 = vxpose.xlu0.c.b16.cont [6/8] 0, 128
        %5325 = vxpose.xlu0.c.b16.cont [7/8] 0, 128
        %5326 = vxpose.xlu0.c.b16.end [8/8] 0, 128
        %v5327 = vpop.trf.xlu0
        %v5328 = vpop.trf.xlu0
        %v5329 = vpop.trf.xlu0
        %v5330 = vpop.trf.xlu0
        %v5331 = vpop.trf.xlu0
        %v5332 = vpop.trf.xlu0
        %v5333 = vpop.trf.xlu0
        %v5334 = vpop.trf.xlu0
        %5335 = vxpose.xlu0.c.b16.start [1/8] %v3060, 128
        %5336 = vxpose.xlu0.c.b16.cont [2/8] 0, 128
        %5337 = vxpose.xlu0.c.b16.cont [3/8] 0, 128
        %5338 = vxpose.xlu0.c.b16.cont [4/8] 0, 128
        %5339 = vxpose.xlu0.c.b16.cont [5/8] 0, 128
        %5340 = vxpose.xlu0.c.b16.cont [6/8] 0, 128
        %5341 = vxpose.xlu0.c.b16.cont [7/8] 0, 128
        %5342 = vxpose.xlu0.c.b16.end [8/8] 0, 128
        %v5343 = vpop.trf.xlu0
        %v5344 = vpop.trf.xlu0
        %v5345 = vpop.trf.xlu0
        %v5346 = vpop.trf.xlu0
        %v5347 = vpop.trf.xlu0
        %v5348 = vpop.trf.xlu0
        %v5349 = vpop.trf.xlu0
        %v5350 = vpop.trf.xlu0
        %v5352 = vsel %vm1144, %v5327, 0
        %v5355 = vsel %vm1144, %v5328, 0
        %v5358 = vsel %vm1144, %v5329, 0
        %v5361 = vsel %vm1144, %v5330, 0
        %v5364 = vsel %vm1144, %v5331, 0
        %v5367 = vsel %vm1144, %v5332, 0
        %v5370 = vsel %vm1144, %v5333, 0
        %v5373 = vsel %vm1144, %v5334, 0
        %v5376 = vsel %vm1144, %v5343, 0
        %v5379 = vsel %vm1144, %v5344, 0
        %v5382 = vsel %vm1144, %v5345, 0
        %v5385 = vsel %vm1144, %v5346, 0
        %v5388 = vsel %vm1144, %v5347, 0
        %v5391 = vsel %vm1144, %v5348, 0
        %v5394 = vsel %vm1144, %v5349, 0
        %v5397 = vsel %vm1144, %v5350, 0
        %vm5399 = vcmask 1043456
        %v5401 = vsel %vm5399, %v5318, 0
        %5403 = vmatprep.subr.bf16.mxu0 0
        %5404 = vmatpush1.bf16.msra.mxu0 0
        %5405 = vmatprep.subr.bf16.mxu0 0
        %5406 = vmatpush1.bf16.msra.mxu0 0
        %5407 = vmatprep.subr.bf16.mxu0 0
        %5408 = vmatpush1.bf16.msra.mxu0 0
        %5409 = vmatprep.subr.bf16.mxu0 0
        %5410 = vmatpush1.bf16.msra.mxu0 0
        %5411 = vmatprep.subr.bf16.mxu0 0
        %5412 = vmatpush1.bf16.msra.mxu0 0
        %5413 = vmatprep.subr.bf16.mxu0 0
        %5414 = vmatpush1.bf16.msra.mxu0 0
        %5415 = vmatprep.subr.bf16.mxu0 0
        %5416 = vmatpush1.bf16.msra.mxu0 0
        %5417 = vmatprep.subr.bf16.mxu0 0
        %5418 = vmatpush1.bf16.msra.mxu0 %v5401
        %5419 = vmatprep.subr.bf16.mxu0 0
        %5420 = vmatpush2.bf16.msra.mxu0 0
        %5421 = vmatprep.subr.bf16.mxu0 0
        %5422 = vmatpush2.bf16.msra.mxu0 0
        %5423 = vmatprep.subr.bf16.mxu0 0
        %5424 = vmatpush2.bf16.msra.mxu0 0
        %5425 = vmatprep.subr.bf16.mxu0 0
        %5426 = vmatpush2.bf16.msra.mxu0 0
        %5427 = vmatprep.subr.bf16.mxu0 0
        %5428 = vmatpush2.bf16.msra.mxu0 0
        %5429 = vmatprep.subr.bf16.mxu0 0
        %5430 = vmatpush2.bf16.msra.mxu0 0
        %5431 = vmatprep.subr.bf16.mxu0 0
        %5432 = vmatpush2.bf16.msra.mxu0 0
        %5433 = vmatprep.subr.bf16.mxu0 0
        %5434 = vmatpush2.bf16.msra.mxu0 0
        %5435 = vmatprep.mubr.bf16.mxu0 0
        %5436 = vmatmul.mubr.bf16.gmra.mxu0 %v5352
        %v5437 = vpop.f32.mrf.mxu0
        %v5438 = vadd.f32 0.0, %v5437
        %v5439 = vpop.f32.mrf.mxu0
        %v5440 = vpop.f32.mrf.mxu0
        %v5441 = vadd.f32 0.0, %v5440
        %v5442 = vpop.f32.mrf.mxu0
        %5443 = vmatprep.mubr.bf16.mxu0 0
        %5444 = vmatmul.mubr.bf16.gmra.mxu0 %v5355
        %v5445 = vpop.f32.mrf.mxu0
        %v5446 = vadd.f32 0.0, %v5445
        %v5447 = vpop.f32.mrf.mxu0
        %v5448 = vpop.f32.mrf.mxu0
        %v5449 = vadd.f32 0.0, %v5448
        %v5450 = vpop.f32.mrf.mxu0
        %5451 = vmatprep.mubr.bf16.mxu0 0
        %5452 = vmatmul.mubr.bf16.gmra.mxu0 %v5358
        %v5453 = vpop.f32.mrf.mxu0
        %v5454 = vadd.f32 0.0, %v5453
        %v5455 = vpop.f32.mrf.mxu0
        %v5456 = vpop.f32.mrf.mxu0
        %v5457 = vadd.f32 0.0, %v5456
        %v5458 = vpop.f32.mrf.mxu0
        %5459 = vmatprep.mubr.bf16.mxu0 0
        %5460 = vmatmul.mubr.bf16.gmra.mxu0 %v5361
        %v5461 = vpop.f32.mrf.mxu0
        %v5462 = vadd.f32 0.0, %v5461
        %v5463 = vpop.f32.mrf.mxu0
        %v5464 = vpop.f32.mrf.mxu0
        %v5465 = vadd.f32 0.0, %v5464
        %v5466 = vpop.f32.mrf.mxu0
        %5467 = vmatprep.mubr.bf16.mxu0 0
        %5468 = vmatmul.mubr.bf16.gmra.mxu0 %v5364
        %v5469 = vpop.f32.mrf.mxu0
        %v5470 = vadd.f32 0.0, %v5469
        %v5471 = vpop.f32.mrf.mxu0
        %v5472 = vpop.f32.mrf.mxu0
        %v5473 = vadd.f32 0.0, %v5472
        %v5474 = vpop.f32.mrf.mxu0
        %5475 = vmatprep.mubr.bf16.mxu0 0
        %5476 = vmatmul.mubr.bf16.gmra.mxu0 %v5367
        %v5477 = vpop.f32.mrf.mxu0
        %v5478 = vadd.f32 0.0, %v5477
        %v5479 = vpop.f32.mrf.mxu0
        %v5480 = vpop.f32.mrf.mxu0
        %v5481 = vadd.f32 0.0, %v5480
        %v5482 = vpop.f32.mrf.mxu0
        %5483 = vmatprep.mubr.bf16.mxu0 0
        %5484 = vmatmul.mubr.bf16.gmra.mxu0 %v5370
        %v5485 = vpop.f32.mrf.mxu0
        %v5486 = vadd.f32 0.0, %v5485
        %v5487 = vpop.f32.mrf.mxu0
        %v5488 = vpop.f32.mrf.mxu0
        %v5489 = vadd.f32 0.0, %v5488
        %v5490 = vpop.f32.mrf.mxu0
        %5491 = vmatprep.mubr.bf16.mxu0 0
        %5492 = vmatmul.mubr.bf16.gmra.mxu0 %v5373
        %v5493 = vpop.f32.mrf.mxu0
        %v5494 = vadd.f32 0.0, %v5493
        %v5495 = vpop.f32.mrf.mxu0
        %v5496 = vpop.f32.mrf.mxu0
        %v5497 = vadd.f32 0.0, %v5496
        %v5498 = vpop.f32.mrf.mxu0
        %5499 = vmatprep.mubr.bf16.mxu0 0
        %5500 = vmatmul.mubr.bf16.gmra.mxu0 %v5376
        %v5501 = vpop.f32.mrf.mxu0
        %v5502 = vadd.f32 0.0, %v5501
        %v5503 = vpop.f32.mrf.mxu0
        %v5504 = vpop.f32.mrf.mxu0
        %v5505 = vadd.f32 0.0, %v5504
        %v5506 = vpop.f32.mrf.mxu0
        %5507 = vmatprep.mubr.bf16.mxu0 0
        %5508 = vmatmul.mubr.bf16.gmra.mxu0 %v5379
        %v5509 = vpop.f32.mrf.mxu0
        %v5510 = vadd.f32 0.0, %v5509
        %v5511 = vpop.f32.mrf.mxu0
        %v5512 = vpop.f32.mrf.mxu0
        %v5513 = vadd.f32 0.0, %v5512
        %v5514 = vpop.f32.mrf.mxu0
        %5515 = vmatprep.mubr.bf16.mxu0 0
        %5516 = vmatmul.mubr.bf16.gmra.mxu0 %v5382
        %v5517 = vpop.f32.mrf.mxu0
        %v5518 = vadd.f32 0.0, %v5517
        %v5519 = vpop.f32.mrf.mxu0
        %v5520 = vpop.f32.mrf.mxu0
        %v5521 = vadd.f32 0.0, %v5520
        %v5522 = vpop.f32.mrf.mxu0
        %5523 = vmatprep.mubr.bf16.mxu0 0
        %5524 = vmatmul.mubr.bf16.gmra.mxu0 %v5385
        %v5525 = vpop.f32.mrf.mxu0
        %v5526 = vadd.f32 0.0, %v5525
        %v5527 = vpop.f32.mrf.mxu0
        %v5528 = vpop.f32.mrf.mxu0
        %v5529 = vadd.f32 0.0, %v5528
        %v5530 = vpop.f32.mrf.mxu0
        %5531 = vmatprep.mubr.bf16.mxu0 0
        %5532 = vmatmul.mubr.bf16.gmra.mxu0 %v5388
        %v5533 = vpop.f32.mrf.mxu0
        %v5534 = vadd.f32 0.0, %v5533
        %v5535 = vpop.f32.mrf.mxu0
        %v5536 = vpop.f32.mrf.mxu0
        %v5537 = vadd.f32 0.0, %v5536
        %v5538 = vpop.f32.mrf.mxu0
        %5539 = vmatprep.mubr.bf16.mxu0 0
        %5540 = vmatmul.mubr.bf16.gmra.mxu0 %v5391
        %v5541 = vpop.f32.mrf.mxu0
        %v5542 = vadd.f32 0.0, %v5541
        %v5543 = vpop.f32.mrf.mxu0
        %v5544 = vpop.f32.mrf.mxu0
        %v5545 = vadd.f32 0.0, %v5544
        %v5546 = vpop.f32.mrf.mxu0
        %5547 = vmatprep.mubr.bf16.mxu0 0
        %5548 = vmatmul.mubr.bf16.gmra.mxu0 %v5394
        %v5549 = vpop.f32.mrf.mxu0
        %v5550 = vadd.f32 0.0, %v5549
        %v5551 = vpop.f32.mrf.mxu0
        %v5552 = vpop.f32.mrf.mxu0
        %v5553 = vadd.f32 0.0, %v5552
        %v5554 = vpop.f32.mrf.mxu0
        %5555 = vmatprep.mubr.bf16.mxu0 0
        %5556 = vmatmul.mubr.bf16.gmra.mxu0 %v5397
        %v5557 = vpop.f32.mrf.mxu0
        %v5558 = vadd.f32 0.0, %v5557
        %v5559 = vpop.f32.mrf.mxu0
        %v5560 = vpop.f32.mrf.mxu0
        %v5561 = vadd.f32 0.0, %v5560
        %v5562 = vpop.f32.mrf.mxu0
        %5563 = vdwg.mxu0
        %v5564 = vld [vmem:[%s14] sm:$0xff]
        %v5565 = vld [vmem:[%s14 + $0x8] sm:$0xff]
        %v5566 = vld [vmem:[%s14 + $0x10] sm:$0xff]
        %v5567 = vld [vmem:[%s14 + $0x18] sm:$0xff]
        %v5568 = vld [vmem:[%s15] sm:$0x1]
        %v5570 = vsel %vm787, %v3056, 0
        %5572 = vmatprep.subr.mxu0 0.0
        %5573 = vmatpush1.msra.mxu0 0.0
        %5574 = vmatprep.subr.mxu0 0.0
        %5575 = vmatpush1.msra.mxu0 0.0
        %5576 = vmatprep.subr.mxu0 0.0
        %5577 = vmatpush1.msra.mxu0 0.0
        %5578 = vmatprep.subr.mxu0 0.0
        %5579 = vmatpush1.msra.mxu0 0.0
        %5580 = vmatprep.subr.mxu0 0.0
        %5581 = vmatpush1.msra.mxu0 0.0
        %5582 = vmatprep.subr.mxu0 0.0
        %5583 = vmatpush1.msra.mxu0 0.0
        %5584 = vmatprep.subr.mxu0 0.0
        %5585 = vmatpush1.msra.mxu0 0.0
        %5586 = vmatprep.subr.mxu0 0.0
        %5587 = vmatpush1.msra.mxu0 0.0
        %5588 = vmatprep.subr.mxu0 0.0
        %5589 = vmatpush1.msra.mxu0 0.0
        %5590 = vmatprep.subr.mxu0 0.0
        %5591 = vmatpush1.msra.mxu0 0.0
        %5592 = vmatprep.subr.mxu0 0.0
        %5593 = vmatpush1.msra.mxu0 0.0
        %5594 = vmatprep.subr.mxu0 0.0
        %5595 = vmatpush1.msra.mxu0 0.0
        %5596 = vmatprep.subr.mxu0 0.0
        %5597 = vmatpush1.msra.mxu0 %v5567
        %5598 = vmatprep.subr.mxu0 0.0
        %5599 = vmatpush1.msra.mxu0 %v5566
        %5600 = vmatprep.subr.mxu0 0.0
        %5601 = vmatpush1.msra.mxu0 %v5565
        %5602 = vmatprep.subr.mxu0 0.0
        %5603 = vmatpush1.msra.mxu0 %v5564
        %5604 = vmatprep.subr.mxu0 0.0
        %5605 = vmatpush2.msra.mxu0 0.0
        %5606 = vmatprep.subr.mxu0 0.0
        %5607 = vmatpush2.msra.mxu0 0.0
        %5608 = vmatprep.subr.mxu0 0.0
        %5609 = vmatpush2.msra.mxu0 0.0
        %5610 = vmatprep.subr.mxu0 0.0
        %5611 = vmatpush2.msra.mxu0 0.0
        %5612 = vmatprep.subr.mxu0 0.0
        %5613 = vmatpush2.msra.mxu0 0.0
        %5614 = vmatprep.subr.mxu0 0.0
        %5615 = vmatpush2.msra.mxu0 0.0
        %5616 = vmatprep.subr.mxu0 0.0
        %5617 = vmatpush2.msra.mxu0 0.0
        %5618 = vmatprep.subr.mxu0 0.0
        %5619 = vmatpush2.msra.mxu0 0.0
        %5620 = vmatprep.subr.mxu0 0.0
        %5621 = vmatpush2.msra.mxu0 0.0
        %5622 = vmatprep.subr.mxu0 0.0
        %5623 = vmatpush2.msra.mxu0 0.0
        %5624 = vmatprep.subr.mxu0 0.0
        %5625 = vmatpush2.msra.mxu0 0.0
        %5626 = vmatprep.subr.mxu0 0.0
        %5627 = vmatpush2.msra.mxu0 0.0
        %5628 = vmatprep.subr.mxu0 0.0
        %5629 = vmatpush2.msra.mxu0 0.0
        %5630 = vmatprep.subr.mxu0 0.0
        %5631 = vmatpush2.msra.mxu0 0.0
        %5632 = vmatprep.subr.mxu0 0.0
        %5633 = vmatpush2.msra.mxu0 0.0
        %5634 = vmatprep.subr.mxu0 0.0
        %5635 = vmatpush2.msra.mxu0 0.0
        %5636 = vmatprep.mubr.f32.mxu0 0.0
        %5637 = vmatmul.mubr.f32.gmra.mxu0 %v5570
        %v5638 = vpop.f32.mrf.mxu0
        %v5639 = vadd.f32 %v5568, %v5638
        %v5640 = vpop.f32.mrf.mxu0
        %5641 = vdwg.mxu0
        %v5642 = vld [vmem:[%s13] sm:$0x1]
        %v5643 = vadd.f32 %v5286, %v5438
        %v5644 = vadd.f32 %v5287, %v5441
        %v5645 = vadd.f32 %v5288, %v5446
        %v5646 = vadd.f32 %v5289, %v5449
        %v5647 = vadd.f32 %v5290, %v5454
        %v5648 = vadd.f32 %v5291, %v5457
        %v5649 = vadd.f32 %v5292, %v5462
        %v5650 = vadd.f32 %v5293, %v5465
        %v5651 = vadd.f32 %v5294, %v5470
        %v5652 = vadd.f32 %v5295, %v5473
        %v5653 = vadd.f32 %v5296, %v5478
        %v5654 = vadd.f32 %v5297, %v5481
        %v5655 = vadd.f32 %v5298, %v5486
        %v5656 = vadd.f32 %v5299, %v5489
        %v5657 = vadd.f32 %v5300, %v5494
        %v5658 = vadd.f32 %v5301, %v5497
        %v5659 = vadd.f32 %v5302, %v5502
        %v5660 = vadd.f32 %v5303, %v5505
        %v5661 = vadd.f32 %v5304, %v5510
        %v5662 = vadd.f32 %v5305, %v5513
        %v5663 = vadd.f32 %v5306, %v5518
        %v5664 = vadd.f32 %v5307, %v5521
        %v5665 = vadd.f32 %v5308, %v5526
        %v5666 = vadd.f32 %v5309, %v5529
        %v5667 = vadd.f32 %v5310, %v5534
        %v5668 = vadd.f32 %v5311, %v5537
        %v5669 = vadd.f32 %v5312, %v5542
        %v5670 = vadd.f32 %v5313, %v5545
        %v5671 = vadd.f32 %v5314, %v5550
        %v5672 = vadd.f32 %v5315, %v5553
        %v5673 = vadd.f32 %v5316, %v5558
        %v5674 = vadd.f32 %v5317, %v5561
        %v5676 = vlaneseq
        %v5677 = vshrl.u32 %v5676, 7
        %v5678 = vsub.s32 0, %v5677
        %v5679 = vrot.slane %v5642, %v5678
        %v5681 = vadd.f32 %v5643, %v5679
        %v5682 = vadd.f32 %v5644, %v5679
        %v5683 = vadd.f32 %v5645, %v5679
        %v5684 = vadd.f32 %v5646, %v5679
        %v5685 = vadd.f32 %v5647, %v5679
        %v5686 = vadd.f32 %v5648, %v5679
        %v5687 = vadd.f32 %v5649, %v5679
        %v5688 = vadd.f32 %v5650, %v5679
        %v5689 = vadd.f32 %v5651, %v5679
        %v5690 = vadd.f32 %v5652, %v5679
        %v5691 = vadd.f32 %v5653, %v5679
        %v5692 = vadd.f32 %v5654, %v5679
        %v5693 = vadd.f32 %v5655, %v5679
        %v5694 = vadd.f32 %v5656, %v5679
        %v5695 = vadd.f32 %v5657, %v5679
        %v5696 = vadd.f32 %v5658, %v5679
        %v5697 = vadd.f32 %v5659, %v5679
        %v5698 = vadd.f32 %v5660, %v5679
        %v5699 = vadd.f32 %v5661, %v5679
        %v5700 = vadd.f32 %v5662, %v5679
        %v5701 = vadd.f32 %v5663, %v5679
        %v5702 = vadd.f32 %v5664, %v5679
        %v5703 = vadd.f32 %v5665, %v5679
        %v5704 = vadd.f32 %v5666, %v5679
        %v5705 = vadd.f32 %v5667, %v5679
        %v5706 = vadd.f32 %v5668, %v5679
        %v5707 = vadd.f32 %v5669, %v5679
        %v5708 = vadd.f32 %v5670, %v5679
        %v5709 = vadd.f32 %v5671, %v5679
        %v5710 = vadd.f32 %v5672, %v5679
        %v5711 = vadd.f32 %v5673, %v5679
        %v5712 = vadd.f32 %v5674, %v5679
        %vm5713 = vcmp.ge.f32.partialorder %v5681, 0.0
        %vm5714 = vcmp.ge.f32.partialorder %v5682, 0.0
        %vm5715 = vcmp.ge.f32.partialorder %v5683, 0.0
        %vm5716 = vcmp.ge.f32.partialorder %v5684, 0.0
        %vm5717 = vcmp.ge.f32.partialorder %v5685, 0.0
        %vm5718 = vcmp.ge.f32.partialorder %v5686, 0.0
        %vm5719 = vcmp.ge.f32.partialorder %v5687, 0.0
        %vm5720 = vcmp.ge.f32.partialorder %v5688, 0.0
        %vm5721 = vcmp.ge.f32.partialorder %v5689, 0.0
        %vm5722 = vcmp.ge.f32.partialorder %v5690, 0.0
        %vm5723 = vcmp.ge.f32.partialorder %v5691, 0.0
        %vm5724 = vcmp.ge.f32.partialorder %v5692, 0.0
        %vm5725 = vcmp.ge.f32.partialorder %v5693, 0.0
        %vm5726 = vcmp.ge.f32.partialorder %v5694, 0.0
        %vm5727 = vcmp.ge.f32.partialorder %v5695, 0.0
        %vm5728 = vcmp.ge.f32.partialorder %v5696, 0.0
        %vm5729 = vcmp.ge.f32.partialorder %v5697, 0.0
        %vm5730 = vcmp.ge.f32.partialorder %v5698, 0.0
        %vm5731 = vcmp.ge.f32.partialorder %v5699, 0.0
        %vm5732 = vcmp.ge.f32.partialorder %v5700, 0.0
        %vm5733 = vcmp.ge.f32.partialorder %v5701, 0.0
        %vm5734 = vcmp.ge.f32.partialorder %v5702, 0.0
        %vm5735 = vcmp.ge.f32.partialorder %v5703, 0.0
        %vm5736 = vcmp.ge.f32.partialorder %v5704, 0.0
        %vm5737 = vcmp.ge.f32.partialorder %v5705, 0.0
        %vm5738 = vcmp.ge.f32.partialorder %v5706, 0.0
        %vm5739 = vcmp.ge.f32.partialorder %v5707, 0.0
        %vm5740 = vcmp.ge.f32.partialorder %v5708, 0.0
        %vm5741 = vcmp.ge.f32.partialorder %v5709, 0.0
        %vm5742 = vcmp.ge.f32.partialorder %v5710, 0.0
        %vm5743 = vcmp.ge.f32.partialorder %v5711, 0.0
        %vm5744 = vcmp.ge.f32.partialorder %v5712, 0.0
        %v5745 = vmul.f32 %v5681, 0.2
        %v5746 = vmul.f32 %v5682, 0.2
        %v5747 = vmul.f32 %v5683, 0.2
        %v5748 = vmul.f32 %v5684, 0.2
        %v5749 = vmul.f32 %v5685, 0.2
        %v5750 = vmul.f32 %v5686, 0.2
        %v5751 = vmul.f32 %v5687, 0.2
        %v5752 = vmul.f32 %v5688, 0.2
        %v5753 = vmul.f32 %v5689, 0.2
        %v5754 = vmul.f32 %v5690, 0.2
        %v5755 = vmul.f32 %v5691, 0.2
        %v5756 = vmul.f32 %v5692, 0.2
        %v5757 = vmul.f32 %v5693, 0.2
        %v5758 = vmul.f32 %v5694, 0.2
        %v5759 = vmul.f32 %v5695, 0.2
        %v5760 = vmul.f32 %v5696, 0.2
        %v5761 = vmul.f32 %v5697, 0.2
        %v5762 = vmul.f32 %v5698, 0.2
        %v5763 = vmul.f32 %v5699, 0.2
        %v5764 = vmul.f32 %v5700, 0.2
        %v5765 = vmul.f32 %v5701, 0.2
        %v5766 = vmul.f32 %v5702, 0.2
        %v5767 = vmul.f32 %v5703, 0.2
        %v5768 = vmul.f32 %v5704, 0.2
        %v5769 = vmul.f32 %v5705, 0.2
        %v5770 = vmul.f32 %v5706, 0.2
        %v5771 = vmul.f32 %v5707, 0.2
        %v5772 = vmul.f32 %v5708, 0.2
        %v5773 = vmul.f32 %v5709, 0.2
        %v5774 = vmul.f32 %v5710, 0.2
        %v5775 = vmul.f32 %v5711, 0.2
        %v5776 = vmul.f32 %v5712, 0.2
        %v5777 = vsel %vm5713, %v5681, %v5745
        %v5778 = vsel %vm5714, %v5682, %v5746
        %v5779 = vsel %vm5715, %v5683, %v5747
        %v5780 = vsel %vm5716, %v5684, %v5748
        %v5781 = vsel %vm5717, %v5685, %v5749
        %v5782 = vsel %vm5718, %v5686, %v5750
        %v5783 = vsel %vm5719, %v5687, %v5751
        %v5784 = vsel %vm5720, %v5688, %v5752
        %v5785 = vsel %vm5721, %v5689, %v5753
        %v5786 = vsel %vm5722, %v5690, %v5754
        %v5787 = vsel %vm5723, %v5691, %v5755
        %v5788 = vsel %vm5724, %v5692, %v5756
        %v5789 = vsel %vm5725, %v5693, %v5757
        %v5790 = vsel %vm5726, %v5694, %v5758
        %v5791 = vsel %vm5727, %v5695, %v5759
        %v5792 = vsel %vm5728, %v5696, %v5760
        %v5793 = vsel %vm5729, %v5697, %v5761
        %v5794 = vsel %vm5730, %v5698, %v5762
        %v5795 = vsel %vm5731, %v5699, %v5763
        %v5796 = vsel %vm5732, %v5700, %v5764
        %v5797 = vsel %vm5733, %v5701, %v5765
        %v5798 = vsel %vm5734, %v5702, %v5766
        %v5799 = vsel %vm5735, %v5703, %v5767
        %v5800 = vsel %vm5736, %v5704, %v5768
        %v5801 = vsel %vm5737, %v5705, %v5769
        %v5802 = vsel %vm5738, %v5706, %v5770
        %v5803 = vsel %vm5739, %v5707, %v5771
        %v5804 = vsel %vm5740, %v5708, %v5772
        %v5805 = vsel %vm5741, %v5709, %v5773
        %v5806 = vsel %vm5742, %v5710, %v5774
        %v5807 = vsel %vm5743, %v5711, %v5775
        %v5808 = vsel %vm5744, %v5712, %v5776
        %v5809 = vsel %vm787, %v5777, 0.0
        %v5810 = vsel %vm787, %v5778, 0.0
        %v5811 = vadd.f32 %v5809, %v5810
        %v5812 = vsel %vm787, %v5779, 0.0
        %v5813 = vadd.f32 %v5811, %v5812
        %v5814 = vsel %vm787, %v5780, 0.0
        %v5815 = vadd.f32 %v5813, %v5814
        %v5816 = vsel %vm787, %v5781, 0.0
        %v5817 = vadd.f32 %v5815, %v5816
        %v5818 = vsel %vm787, %v5782, 0.0
        %v5819 = vadd.f32 %v5817, %v5818
        %v5820 = vsel %vm787, %v5783, 0.0
        %v5821 = vadd.f32 %v5819, %v5820
        %v5822 = vsel %vm787, %v5784, 0.0
        %v5823 = vadd.f32 %v5821, %v5822
        %v5824 = vsel %vm787, %v5785, 0.0
        %v5825 = vadd.f32 %v5823, %v5824
        %v5826 = vsel %vm787, %v5786, 0.0
        %v5827 = vadd.f32 %v5825, %v5826
        %v5828 = vsel %vm787, %v5787, 0.0
        %v5829 = vadd.f32 %v5827, %v5828
        %v5830 = vsel %vm787, %v5788, 0.0
        %v5831 = vadd.f32 %v5829, %v5830
        %v5832 = vsel %vm787, %v5789, 0.0
        %v5833 = vadd.f32 %v5831, %v5832
        %v5834 = vsel %vm787, %v5790, 0.0
        %v5835 = vadd.f32 %v5833, %v5834
        %v5836 = vsel %vm787, %v5791, 0.0
        %v5837 = vadd.f32 %v5835, %v5836
        %v5838 = vsel %vm787, %v5792, 0.0
        %v5839 = vadd.f32 %v5837, %v5838
        %v5840 = vsel %vm787, %v5793, 0.0
        %v5841 = vadd.f32 %v5839, %v5840
        %v5842 = vsel %vm787, %v5794, 0.0
        %v5843 = vadd.f32 %v5841, %v5842
        %v5844 = vsel %vm787, %v5795, 0.0
        %v5845 = vadd.f32 %v5843, %v5844
        %v5846 = vsel %vm787, %v5796, 0.0
        %v5847 = vadd.f32 %v5845, %v5846
        %v5848 = vsel %vm787, %v5797, 0.0
        %v5849 = vadd.f32 %v5847, %v5848
        %v5850 = vsel %vm787, %v5798, 0.0
        %v5851 = vadd.f32 %v5849, %v5850
        %v5852 = vsel %vm787, %v5799, 0.0
        %v5853 = vadd.f32 %v5851, %v5852
        %v5854 = vsel %vm787, %v5800, 0.0
        %v5855 = vadd.f32 %v5853, %v5854
        %v5856 = vsel %vm787, %v5801, 0.0
        %v5857 = vadd.f32 %v5855, %v5856
        %v5858 = vsel %vm787, %v5802, 0.0
        %v5859 = vadd.f32 %v5857, %v5858
        %v5860 = vsel %vm787, %v5803, 0.0
        %v5861 = vadd.f32 %v5859, %v5860
        %v5862 = vsel %vm787, %v5804, 0.0
        %v5863 = vadd.f32 %v5861, %v5862
        %v5864 = vsel %vm787, %v5805, 0.0
        %v5865 = vadd.f32 %v5863, %v5864
        %v5866 = vsel %vm787, %v5806, 0.0
        %v5867 = vadd.f32 %v5865, %v5866
        %v5868 = vsel %vm787, %v5807, 0.0
        %v5869 = vadd.f32 %v5867, %v5868
        %v5870 = vsel %vm787, %v5808, 0.0
        %v5871 = vadd.f32 %v5869, %v5870
        %v5872 = vrot.slane %v5871, 4
        %v5873 = vadd.f32 %v5871, %v5872
        %v5874 = vrot.slane %v5873, 2
        %v5875 = vadd.f32 %v5873, %v5874
        %v5876 = vrot.slane %v5875, 1
        %v5877 = vadd.f32 %v5875, %v5876
        %v5878 = vrcp.pop 256.0
        %v5879 = vmul.f32 %v5877, %v5878
        %v5880 = vsub.f32 %v5777, %v5879
        %v5881 = vsub.f32 %v5778, %v5879
        %v5882 = vsub.f32 %v5779, %v5879
        %v5883 = vsub.f32 %v5780, %v5879
        %v5884 = vsub.f32 %v5781, %v5879
        %v5885 = vsub.f32 %v5782, %v5879
        %v5886 = vsub.f32 %v5783, %v5879
        %v5887 = vsub.f32 %v5784, %v5879
        %v5888 = vsub.f32 %v5785, %v5879
        %v5889 = vsub.f32 %v5786, %v5879
        %v5890 = vsub.f32 %v5787, %v5879
        %v5891 = vsub.f32 %v5788, %v5879
        %v5892 = vsub.f32 %v5789, %v5879
        %v5893 = vsub.f32 %v5790, %v5879
        %v5894 = vsub.f32 %v5791, %v5879
        %v5895 = vsub.f32 %v5792, %v5879
        %v5896 = vsub.f32 %v5793, %v5879
        %v5897 = vsub.f32 %v5794, %v5879
        %v5898 = vsub.f32 %v5795, %v5879
        %v5899 = vsub.f32 %v5796, %v5879
        %v5900 = vsub.f32 %v5797, %v5879
        %v5901 = vsub.f32 %v5798, %v5879
        %v5902 = vsub.f32 %v5799, %v5879
        %v5903 = vsub.f32 %v5800, %v5879
        %v5904 = vsub.f32 %v5801, %v5879
        %v5905 = vsub.f32 %v5802, %v5879
        %v5906 = vsub.f32 %v5803, %v5879
        %v5907 = vsub.f32 %v5804, %v5879
        %v5908 = vsub.f32 %v5805, %v5879
        %v5909 = vsub.f32 %v5806, %v5879
        %v5910 = vsub.f32 %v5807, %v5879
        %v5911 = vsub.f32 %v5808, %v5879
        %v5912 = vmul.f32 %v5880, %v5880
        %v5913 = vmul.f32 %v5881, %v5881
        %v5914 = vmul.f32 %v5882, %v5882
        %v5915 = vmul.f32 %v5883, %v5883
        %v5916 = vmul.f32 %v5884, %v5884
        %v5917 = vmul.f32 %v5885, %v5885
        %v5918 = vmul.f32 %v5886, %v5886
        %v5919 = vmul.f32 %v5887, %v5887
        %v5920 = vmul.f32 %v5888, %v5888
        %v5921 = vmul.f32 %v5889, %v5889
        %v5922 = vmul.f32 %v5890, %v5890
        %v5923 = vmul.f32 %v5891, %v5891
        %v5924 = vmul.f32 %v5892, %v5892
        %v5925 = vmul.f32 %v5893, %v5893
        %v5926 = vmul.f32 %v5894, %v5894
        %v5927 = vmul.f32 %v5895, %v5895
        %v5928 = vmul.f32 %v5896, %v5896
        %v5929 = vmul.f32 %v5897, %v5897
        %v5930 = vmul.f32 %v5898, %v5898
        %v5931 = vmul.f32 %v5899, %v5899
        %v5932 = vmul.f32 %v5900, %v5900
        %v5933 = vmul.f32 %v5901, %v5901
        %v5934 = vmul.f32 %v5902, %v5902
        %v5935 = vmul.f32 %v5903, %v5903
        %v5936 = vmul.f32 %v5904, %v5904
        %v5937 = vmul.f32 %v5905, %v5905
        %v5938 = vmul.f32 %v5906, %v5906
        %v5939 = vmul.f32 %v5907, %v5907
        %v5940 = vmul.f32 %v5908, %v5908
        %v5941 = vmul.f32 %v5909, %v5909
        %v5942 = vmul.f32 %v5910, %v5910
        %v5943 = vmul.f32 %v5911, %v5911
        %v5944 = vsel %vm787, %v5912, 0.0
        %v5945 = vsel %vm787, %v5913, 0.0
        %v5946 = vadd.f32 %v5944, %v5945
        %v5947 = vsel %vm787, %v5914, 0.0
        %v5948 = vadd.f32 %v5946, %v5947
        %v5949 = vsel %vm787, %v5915, 0.0
        %v5950 = vadd.f32 %v5948, %v5949
        %v5951 = vsel %vm787, %v5916, 0.0
        %v5952 = vadd.f32 %v5950, %v5951
        %v5953 = vsel %vm787, %v5917, 0.0
        %v5954 = vadd.f32 %v5952, %v5953
        %v5955 = vsel %vm787, %v5918, 0.0
        %v5956 = vadd.f32 %v5954, %v5955
        %v5957 = vsel %vm787, %v5919, 0.0
        %v5958 = vadd.f32 %v5956, %v5957
        %v5959 = vsel %vm787, %v5920, 0.0
        %v5960 = vadd.f32 %v5958, %v5959
        %v5961 = vsel %vm787, %v5921, 0.0
        %v5962 = vadd.f32 %v5960, %v5961
        %v5963 = vsel %vm787, %v5922, 0.0
        %v5964 = vadd.f32 %v5962, %v5963
        %v5965 = vsel %vm787, %v5923, 0.0
        %v5966 = vadd.f32 %v5964, %v5965
        %v5967 = vsel %vm787, %v5924, 0.0
        %v5968 = vadd.f32 %v5966, %v5967
        %v5969 = vsel %vm787, %v5925, 0.0
        %v5970 = vadd.f32 %v5968, %v5969
        %v5971 = vsel %vm787, %v5926, 0.0
        %v5972 = vadd.f32 %v5970, %v5971
        %v5973 = vsel %vm787, %v5927, 0.0
        %v5974 = vadd.f32 %v5972, %v5973
        %v5975 = vsel %vm787, %v5928, 0.0
        %v5976 = vadd.f32 %v5974, %v5975
        %v5977 = vsel %vm787, %v5929, 0.0
        %v5978 = vadd.f32 %v5976, %v5977
        %v5979 = vsel %vm787, %v5930, 0.0
        %v5980 = vadd.f32 %v5978, %v5979
        %v5981 = vsel %vm787, %v5931, 0.0
        %v5982 = vadd.f32 %v5980, %v5981
        %v5983 = vsel %vm787, %v5932, 0.0
        %v5984 = vadd.f32 %v5982, %v5983
        %v5985 = vsel %vm787, %v5933, 0.0
        %v5986 = vadd.f32 %v5984, %v5985
        %v5987 = vsel %vm787, %v5934, 0.0
        %v5988 = vadd.f32 %v5986, %v5987
        %v5989 = vsel %vm787, %v5935, 0.0
        %v5990 = vadd.f32 %v5988, %v5989
        %v5991 = vsel %vm787, %v5936, 0.0
        %v5992 = vadd.f32 %v5990, %v5991
        %v5993 = vsel %vm787, %v5937, 0.0
        %v5994 = vadd.f32 %v5992, %v5993
        %v5995 = vsel %vm787, %v5938, 0.0
        %v5996 = vadd.f32 %v5994, %v5995
        %v5997 = vsel %vm787, %v5939, 0.0
        %v5998 = vadd.f32 %v5996, %v5997
        %v5999 = vsel %vm787, %v5940, 0.0
        %v6000 = vadd.f32 %v5998, %v5999
        %v6001 = vsel %vm787, %v5941, 0.0
        %v6002 = vadd.f32 %v6000, %v6001
        %v6003 = vsel %vm787, %v5942, 0.0
        %v6004 = vadd.f32 %v6002, %v6003
        %v6005 = vsel %vm787, %v5943, 0.0
        %v6006 = vadd.f32 %v6004, %v6005
        %v6007 = vrot.slane %v6006, 4
        %v6008 = vadd.f32 %v6006, %v6007
        %v6009 = vrot.slane %v6008, 2
        %v6010 = vadd.f32 %v6008, %v6009
        %v6011 = vrot.slane %v6010, 1
        %v6012 = vadd.f32 %v6010, %v6011
        %v6013 = vmul.f32 %v6012, %v5878
        %v6014 = vadd.f32 %v6013, 1e-05
        %v6015 = vrsqrt.pop %v6014
        %v6016 = vmul.f32 %v5880, %v6015
        %v6017 = vmul.f32 %v5881, %v6015
        %v6018 = vmul.f32 %v5882, %v6015
        %v6019 = vmul.f32 %v5883, %v6015
        %v6020 = vmul.f32 %v5884, %v6015
        %v6021 = vmul.f32 %v5885, %v6015
        %v6022 = vmul.f32 %v5886, %v6015
        %v6023 = vmul.f32 %v5887, %v6015
        %v6024 = vmul.f32 %v5888, %v6015
        %v6025 = vmul.f32 %v5889, %v6015
        %v6026 = vmul.f32 %v5890, %v6015
        %v6027 = vmul.f32 %v5891, %v6015
        %v6028 = vmul.f32 %v5892, %v6015
        %v6029 = vmul.f32 %v5893, %v6015
        %v6030 = vmul.f32 %v5894, %v6015
        %v6031 = vmul.f32 %v5895, %v6015
        %v6032 = vmul.f32 %v5896, %v6015
        %v6033 = vmul.f32 %v5897, %v6015
        %v6034 = vmul.f32 %v5898, %v6015
        %v6035 = vmul.f32 %v5899, %v6015
        %v6036 = vmul.f32 %v5900, %v6015
        %v6037 = vmul.f32 %v5901, %v6015
        %v6038 = vmul.f32 %v5902, %v6015
        %v6039 = vmul.f32 %v5903, %v6015
        %v6040 = vmul.f32 %v5904, %v6015
        %v6041 = vmul.f32 %v5905, %v6015
        %v6042 = vmul.f32 %v5906, %v6015
        %v6043 = vmul.f32 %v5907, %v6015
        %v6044 = vmul.f32 %v5908, %v6015
        %v6045 = vmul.f32 %v5909, %v6015
        %v6046 = vmul.f32 %v5910, %v6015
        %v6047 = vmul.f32 %v5911, %v6015
        %v6048 = vadd.f32 %v5639, 1.0
        %v6049 = vlaneseq
        %v6050 = vshrl.u32 %v6049, 7
        %v6051 = vsub.s32 0, %v6050
        %v6052 = vrot.slane %v6048, %v6051
        %v6053 = vmul.f32 %v6016, %v6052
        %v6054 = vmul.f32 %v6017, %v6052
        %v6055 = vmul.f32 %v6018, %v6052
        %v6056 = vmul.f32 %v6019, %v6052
        %v6057 = vmul.f32 %v6020, %v6052
        %v6058 = vmul.f32 %v6021, %v6052
        %v6059 = vmul.f32 %v6022, %v6052
        %v6060 = vmul.f32 %v6023, %v6052
        %v6061 = vmul.f32 %v6024, %v6052
        %v6062 = vmul.f32 %v6025, %v6052
        %v6063 = vmul.f32 %v6026, %v6052
        %v6064 = vmul.f32 %v6027, %v6052
        %v6065 = vmul.f32 %v6028, %v6052
        %v6066 = vmul.f32 %v6029, %v6052
        %v6067 = vmul.f32 %v6030, %v6052
        %v6068 = vmul.f32 %v6031, %v6052
        %v6069 = vmul.f32 %v6032, %v6052
        %v6070 = vmul.f32 %v6033, %v6052
        %v6071 = vmul.f32 %v6034, %v6052
        %v6072 = vmul.f32 %v6035, %v6052
        %v6073 = vmul.f32 %v6036, %v6052
        %v6074 = vmul.f32 %v6037, %v6052
        %v6075 = vmul.f32 %v6038, %v6052
        %v6076 = vmul.f32 %v6039, %v6052
        %v6077 = vmul.f32 %v6040, %v6052
        %v6078 = vmul.f32 %v6041, %v6052
        %v6079 = vmul.f32 %v6042, %v6052
        %v6080 = vmul.f32 %v6043, %v6052
        %v6081 = vmul.f32 %v6044, %v6052
        %v6082 = vmul.f32 %v6045, %v6052
        %v6083 = vmul.f32 %v6046, %v6052
        %v6084 = vmul.f32 %v6047, %v6052
        %v6085 = vlaneseq
        %v6086 = vshrl.u32 %v6085, 7
        %v6087 = vsub.s32 0, %v6086
        %v6088 = vrot.slane %v5639, %v6087
        %6090 = vrot.lane.b32.xlu0 %v6088, 96
        %v6091 = vpop.permute.xlu0 %6090
        %v6093 = vadd.f32 %v6053, %v6091
        %v6094 = vadd.f32 %v6054, %v6091
        %v6095 = vadd.f32 %v6055, %v6091
        %v6096 = vadd.f32 %v6056, %v6091
        %v6097 = vadd.f32 %v6057, %v6091
        %v6098 = vadd.f32 %v6058, %v6091
        %v6099 = vadd.f32 %v6059, %v6091
        %v6100 = vadd.f32 %v6060, %v6091
        %v6101 = vadd.f32 %v6061, %v6091
        %v6102 = vadd.f32 %v6062, %v6091
        %v6103 = vadd.f32 %v6063, %v6091
        %v6104 = vadd.f32 %v6064, %v6091
        %v6105 = vadd.f32 %v6065, %v6091
        %v6106 = vadd.f32 %v6066, %v6091
        %v6107 = vadd.f32 %v6067, %v6091
        %v6108 = vadd.f32 %v6068, %v6091
        %v6109 = vadd.f32 %v6069, %v6091
        %v6110 = vadd.f32 %v6070, %v6091
        %v6111 = vadd.f32 %v6071, %v6091
        %v6112 = vadd.f32 %v6072, %v6091
        %v6113 = vadd.f32 %v6073, %v6091
        %v6114 = vadd.f32 %v6074, %v6091
        %v6115 = vadd.f32 %v6075, %v6091
        %v6116 = vadd.f32 %v6076, %v6091
        %v6117 = vadd.f32 %v6077, %v6091
        %v6118 = vadd.f32 %v6078, %v6091
        %v6119 = vadd.f32 %v6079, %v6091
        %v6120 = vadd.f32 %v6080, %v6091
        %v6121 = vadd.f32 %v6081, %v6091
        %v6122 = vadd.f32 %v6082, %v6091
        %v6123 = vadd.f32 %v6083, %v6091
        %v6124 = vadd.f32 %v6084, %v6091
        %6125 = vst.msk [vmem:[#allocation3 + $0x19] sm:$0xff] %vm787, %v6093
        %6126 = vst.msk [vmem:[#allocation3 + $0x21] sm:$0xff] %vm787, %v6094
        %6127 = vst.msk [vmem:[#allocation3 + $0x31] sm:$0xff] %vm787, %v6095
        %6128 = vst.msk [vmem:[#allocation3 + $0x39] sm:$0xff] %vm787, %v6096
        %6129 = vst.msk [vmem:[#allocation3 + $0x49] sm:$0xff] %vm787, %v6097
        %6130 = vst.msk [vmem:[#allocation3 + $0x51] sm:$0xff] %vm787, %v6098
        %6131 = vst.msk [vmem:[#allocation3 + $0x61] sm:$0xff] %vm787, %v6099
        %6132 = vst.msk [vmem:[#allocation3 + $0x69] sm:$0xff] %vm787, %v6100
        %6133 = vst.msk [vmem:[#allocation3 + $0x79] sm:$0xff] %vm787, %v6101
        %6134 = vst.msk [vmem:[#allocation3 + $0x81] sm:$0xff] %vm787, %v6102
        %6135 = vst.msk [vmem:[#allocation3 + $0x91] sm:$0xff] %vm787, %v6103
        %6136 = vst.msk [vmem:[#allocation3 + $0x99] sm:$0xff] %vm787, %v6104
        %6137 = vst.msk [vmem:[#allocation3 + $0xa9] sm:$0xff] %vm787, %v6105
        %6138 = vst.msk [vmem:[#allocation3 + $0xb1] sm:$0xff] %vm787, %v6106
        %6139 = vst.msk [vmem:[#allocation3 + $0xc1] sm:$0xff] %vm787, %v6107
        %6140 = vst.msk [vmem:[#allocation3 + $0xc9] sm:$0xff] %vm787, %v6108
        %6141 = vst.msk [vmem:[#allocation3 + $0xd9] sm:$0xff] %vm787, %v6109
        %6142 = vst.msk [vmem:[#allocation3 + $0xe1] sm:$0xff] %vm787, %v6110
        %6143 = vst.msk [vmem:[#allocation3 + $0xf1] sm:$0xff] %vm787, %v6111
        %6144 = vst.msk [vmem:[#allocation3 + $0xf9] sm:$0xff] %vm787, %v6112
        %6145 = vst.msk [vmem:[#allocation3 + $0x109] sm:$0xff] %vm787, %v6113
        %6146 = vst.msk [vmem:[#allocation3 + $0x111] sm:$0xff] %vm787, %v6114
        %6147 = vst.msk [vmem:[#allocation3 + $0x121] sm:$0xff] %vm787, %v6115
        %6148 = vst.msk [vmem:[#allocation3 + $0x129] sm:$0xff] %vm787, %v6116
        %6149 = vst.msk [vmem:[#allocation3 + $0x139] sm:$0xff] %vm787, %v6117
        %6150 = vst.msk [vmem:[#allocation3 + $0x141] sm:$0xff] %vm787, %v6118
        %6151 = vst.msk [vmem:[#allocation3 + $0x151] sm:$0xff] %vm787, %v6119
        %6152 = vst.msk [vmem:[#allocation3 + $0x159] sm:$0xff] %vm787, %v6120
        %6153 = vst.msk [vmem:[#allocation3 + $0x169] sm:$0xff] %vm787, %v6121
        %6154 = vst.msk [vmem:[#allocation3 + $0x171] sm:$0xff] %vm787, %v6122
        %6155 = vst.msk [vmem:[#allocation3 + $0x181] sm:$0xff] %vm787, %v6123
        %6156 = vst.msk [vmem:[#allocation3 + $0x189] sm:$0xff] %vm787, %v6124
        %v6157 = vld [vmem:[#allocation3] sm:$0xff]
        %v6158 = vld [vmem:[#allocation3 + $0x8] sm:$0xff]
        %v6159 = vld [vmem:[#allocation3 + $0x10] sm:$0xff]
        %v6160 = vld [vmem:[#allocation3 + $0x18] sm:$0xff]
        %v6161 = vld [vmem:[#allocation3 + $0x20] sm:$0xff]
        %v6162 = vld [vmem:[#allocation3 + $0x28] sm:$0xff]
        %v6163 = vld [vmem:[#allocation3 + $0x30] sm:$0xff]
        %v6164 = vld [vmem:[#allocation3 + $0x38] sm:$0xff]
        %v6165 = vld [vmem:[#allocation3 + $0x40] sm:$0xff]
        %v6166 = vld [vmem:[#allocation3 + $0x48] sm:$0xff]
        %v6167 = vld [vmem:[#allocation3 + $0x50] sm:$0xff]
        %v6168 = vld [vmem:[#allocation3 + $0x58] sm:$0xff]
        %v6169 = vld [vmem:[#allocation3 + $0x60] sm:$0xff]
        %v6170 = vld [vmem:[#allocation3 + $0x68] sm:$0xff]
        %v6171 = vld [vmem:[#allocation3 + $0x70] sm:$0xff]
        %v6172 = vld [vmem:[#allocation3 + $0x78] sm:$0xff]
        %v6173 = vld [vmem:[#allocation3 + $0x80] sm:$0xff]
        %v6174 = vld [vmem:[#allocation3 + $0x88] sm:$0xff]
        %v6175 = vld [vmem:[#allocation3 + $0x90] sm:$0xff]
        %v6176 = vld [vmem:[#allocation3 + $0x98] sm:$0xff]
        %v6177 = vld [vmem:[#allocation3 + $0xa0] sm:$0xff]
        %v6178 = vld [vmem:[#allocation3 + $0xa8] sm:$0xff]
        %v6179 = vld [vmem:[#allocation3 + $0xb0] sm:$0xff]
        %v6180 = vld [vmem:[#allocation3 + $0xb8] sm:$0xff]
        %v6181 = vld [vmem:[#allocation3 + $0xc0] sm:$0xff]
        %v6182 = vld [vmem:[#allocation3 + $0xc8] sm:$0xff]
        %v6183 = vld [vmem:[#allocation3 + $0xd0] sm:$0xff]
        %v6184 = vld [vmem:[#allocation3 + $0xd8] sm:$0xff]
        %v6185 = vld [vmem:[#allocation3 + $0xe0] sm:$0xff]
        %v6186 = vld [vmem:[#allocation3 + $0xe8] sm:$0xff]
        %v6187 = vld [vmem:[#allocation3 + $0xf0] sm:$0xff]
        %v6188 = vld [vmem:[#allocation3 + $0xf8] sm:$0xff]
        %v6189 = vld [vmem:[#allocation3 + $0x100] sm:$0xff]
        %v6190 = vld [vmem:[#allocation3 + $0x108] sm:$0xff]
        %v6191 = vld [vmem:[#allocation3 + $0x110] sm:$0xff]
        %v6192 = vld [vmem:[#allocation3 + $0x118] sm:$0xff]
        %v6193 = vld [vmem:[#allocation3 + $0x120] sm:$0xff]
        %v6194 = vld [vmem:[#allocation3 + $0x128] sm:$0xff]
        %v6195 = vld [vmem:[#allocation3 + $0x130] sm:$0xff]
        %v6196 = vld [vmem:[#allocation3 + $0x138] sm:$0xff]
        %v6197 = vld [vmem:[#allocation3 + $0x140] sm:$0xff]
        %v6198 = vld [vmem:[#allocation3 + $0x148] sm:$0xff]
        %v6199 = vld [vmem:[#allocation3 + $0x150] sm:$0xff]
        %v6200 = vld [vmem:[#allocation3 + $0x158] sm:$0xff]
        %v6201 = vld [vmem:[#allocation3 + $0x160] sm:$0xff]
        %v6202 = vld [vmem:[#allocation3 + $0x168] sm:$0xff]
        %v6203 = vld [vmem:[#allocation3 + $0x170] sm:$0xff]
        %v6204 = vld [vmem:[#allocation3 + $0x178] sm:$0xff]
        %v6205 = vld [vmem:[#allocation3 + $0x180] sm:$0xff]
        %v6206 = vld [vmem:[#allocation3 + $0x188] sm:$0xff]
        %v6207 = vld [vmem:[#allocation3 + $0x190] sm:$0xff]
        %v6208 = vld [vmem:[#allocation3 + $0x198] sm:$0xff]
        %v6209 = vld [vmem:[#allocation3 + $0x1a0] sm:$0xff]
        %v6210 = vld [vmem:[#allocation3 + $0x1a8] sm:$0xff]
        %v6211 = vld [vmem:[#allocation3 + $0x1b0] sm:$0xff]
        %v6212 = vpack.c.bf16 %v6158, %v6157
        %v6213 = vpack.c.bf16 %v6160, %v6159
        %v6214 = vpack.c.bf16 %v6162, %v6161
        %v6215 = vpack.c.bf16 %v6164, %v6163
        %v6216 = vpack.c.bf16 %v6166, %v6165
        %v6217 = vpack.c.bf16 %v6168, %v6167
        %v6218 = vpack.c.bf16 %v6170, %v6169
        %v6219 = vpack.c.bf16 %v6172, %v6171
        %v6220 = vpack.c.bf16 %v6174, %v6173
        %v6221 = vpack.c.bf16 %v6176, %v6175
        %v6222 = vpack.c.bf16 %v6178, %v6177
        %v6223 = vpack.c.bf16 %v6180, %v6179
        %v6224 = vpack.c.bf16 %v6182, %v6181
        %v6225 = vpack.c.bf16 %v6184, %v6183
        %v6226 = vpack.c.bf16 %v6186, %v6185
        %v6227 = vpack.c.bf16 %v6188, %v6187
        %v6228 = vpack.c.bf16 %v6190, %v6189
        %v6229 = vpack.c.bf16 %v6192, %v6191
        %v6230 = vpack.c.bf16 %v6194, %v6193
        %v6231 = vpack.c.bf16 %v6196, %v6195
        %v6232 = vpack.c.bf16 %v6198, %v6197
        %v6233 = vpack.c.bf16 %v6200, %v6199
        %v6234 = vpack.c.bf16 %v6202, %v6201
        %v6235 = vpack.c.bf16 %v6204, %v6203
        %v6236 = vpack.c.bf16 %v6206, %v6205
        %v6237 = vpack.c.bf16 %v6208, %v6207
        %v6238 = vpack.c.bf16 %v6210, %v6209
        %v6239 = vpack.c.bf16 %v6211, %v6211
        %v6241 = vshrl.u32 %v6212, 16
        %v6243 = vshll.u32 %v6212, 16
        %v6245 = vrot.slane %v6243, 1
        %v6246 = vor.u32 %v6241, %v6245
        %v6248 = vshll.u32 %v6213, 16
        %v6250 = vrot.slane %v6248, 1
        %v6251 = vsel %vm1366, %v6246, %v6250
        %v6252 = vshrl.u32 %v6213, 16
        %v6254 = vor.u32 %v6252, %v6250
        %v6256 = vshll.u32 %v6214, 16
        %v6258 = vrot.slane %v6256, 1
        %v6259 = vsel %vm1366, %v6254, %v6258
        %v6260 = vshrl.u32 %v6214, 16
        %v6262 = vor.u32 %v6260, %v6258
        %v6264 = vshll.u32 %v6215, 16
        %v6266 = vrot.slane %v6264, 1
        %v6267 = vsel %vm1366, %v6262, %v6266
        %v6268 = vshrl.u32 %v6215, 16
        %v6270 = vor.u32 %v6268, %v6266
        %v6272 = vshll.u32 %v6216, 16
        %v6274 = vrot.slane %v6272, 1
        %v6275 = vsel %vm1366, %v6270, %v6274
        %v6276 = vshrl.u32 %v6216, 16
        %v6278 = vor.u32 %v6276, %v6274
        %v6280 = vshll.u32 %v6217, 16
        %v6282 = vrot.slane %v6280, 1
        %v6283 = vsel %vm1366, %v6278, %v6282
        %v6284 = vshrl.u32 %v6217, 16
        %v6286 = vor.u32 %v6284, %v6282
        %v6288 = vshll.u32 %v6218, 16
        %v6290 = vrot.slane %v6288, 1
        %v6291 = vsel %vm1366, %v6286, %v6290
        %v6292 = vshrl.u32 %v6218, 16
        %v6294 = vor.u32 %v6292, %v6290
        %v6296 = vshll.u32 %v6219, 16
        %v6298 = vrot.slane %v6296, 1
        %v6299 = vsel %vm1366, %v6294, %v6298
        %v6300 = vshrl.u32 %v6219, 16
        %v6302 = vor.u32 %v6300, %v6298
        %v6304 = vshll.u32 %v6220, 16
        %v6306 = vrot.slane %v6304, 1
        %v6307 = vsel %vm1366, %v6302, %v6306
        %v6308 = vshrl.u32 %v6220, 16
        %v6310 = vor.u32 %v6308, %v6306
        %v6312 = vshll.u32 %v6221, 16
        %v6314 = vrot.slane %v6312, 1
        %v6315 = vsel %vm1366, %v6310, %v6314
        %v6316 = vshrl.u32 %v6221, 16
        %v6318 = vor.u32 %v6316, %v6314
        %v6320 = vshll.u32 %v6222, 16
        %v6322 = vrot.slane %v6320, 1
        %v6323 = vsel %vm1366, %v6318, %v6322
        %v6324 = vshrl.u32 %v6222, 16
        %v6326 = vor.u32 %v6324, %v6322
        %v6328 = vshll.u32 %v6223, 16
        %v6330 = vrot.slane %v6328, 1
        %v6331 = vsel %vm1366, %v6326, %v6330
        %v6332 = vshrl.u32 %v6223, 16
        %v6334 = vor.u32 %v6332, %v6330
        %v6336 = vshll.u32 %v6224, 16
        %v6338 = vrot.slane %v6336, 1
        %v6339 = vsel %vm1366, %v6334, %v6338
        %v6340 = vshrl.u32 %v6224, 16
        %v6342 = vor.u32 %v6340, %v6338
        %v6344 = vshll.u32 %v6225, 16
        %v6346 = vrot.slane %v6344, 1
        %v6347 = vsel %vm1366, %v6342, %v6346
        %v6348 = vshrl.u32 %v6225, 16
        %v6350 = vor.u32 %v6348, %v6346
        %v6352 = vshll.u32 %v6226, 16
        %v6354 = vrot.slane %v6352, 1
        %v6355 = vsel %vm1366, %v6350, %v6354
        %v6356 = vshrl.u32 %v6226, 16
        %v6358 = vor.u32 %v6356, %v6354
        %v6360 = vshll.u32 %v6227, 16
        %v6362 = vrot.slane %v6360, 1
        %v6363 = vsel %vm1366, %v6358, %v6362
        %v6364 = vshrl.u32 %v6227, 16
        %v6366 = vor.u32 %v6364, %v6362
        %v6368 = vshll.u32 %v6228, 16
        %v6370 = vrot.slane %v6368, 1
        %v6371 = vsel %vm1366, %v6366, %v6370
        %v6372 = vshrl.u32 %v6228, 16
        %v6374 = vor.u32 %v6372, %v6370
        %v6376 = vshll.u32 %v6229, 16
        %v6378 = vrot.slane %v6376, 1
        %v6379 = vsel %vm1366, %v6374, %v6378
        %v6380 = vshrl.u32 %v6229, 16
        %v6382 = vor.u32 %v6380, %v6378
        %v6384 = vshll.u32 %v6230, 16
        %v6386 = vrot.slane %v6384, 1
        %v6387 = vsel %vm1366, %v6382, %v6386
        %v6388 = vshrl.u32 %v6230, 16
        %v6390 = vor.u32 %v6388, %v6386
        %v6392 = vshll.u32 %v6231, 16
        %v6394 = vrot.slane %v6392, 1
        %v6395 = vsel %vm1366, %v6390, %v6394
        %v6396 = vshrl.u32 %v6231, 16
        %v6398 = vor.u32 %v6396, %v6394
        %v6400 = vshll.u32 %v6232, 16
        %v6402 = vrot.slane %v6400, 1
        %v6403 = vsel %vm1366, %v6398, %v6402
        %v6404 = vshrl.u32 %v6232, 16
        %v6406 = vor.u32 %v6404, %v6402
        %v6408 = vshll.u32 %v6233, 16
        %v6410 = vrot.slane %v6408, 1
        %v6411 = vsel %vm1366, %v6406, %v6410
        %v6412 = vshrl.u32 %v6233, 16
        %v6414 = vor.u32 %v6412, %v6410
        %v6416 = vshll.u32 %v6234, 16
        %v6418 = vrot.slane %v6416, 1
        %v6419 = vsel %vm1366, %v6414, %v6418
        %v6420 = vshrl.u32 %v6234, 16
        %v6422 = vor.u32 %v6420, %v6418
        %v6424 = vshll.u32 %v6235, 16
        %v6426 = vrot.slane %v6424, 1
        %v6427 = vsel %vm1366, %v6422, %v6426
        %v6428 = vshrl.u32 %v6235, 16
        %v6430 = vor.u32 %v6428, %v6426
        %v6432 = vshll.u32 %v6236, 16
        %v6434 = vrot.slane %v6432, 1
        %v6435 = vsel %vm1366, %v6430, %v6434
        %6436 = vrot.lane.b32.xlu0 %v6251, 32
        %v6437 = vpop.permute.xlu0 %6436
        %6438 = vrot.lane.b32.xlu0 %v6259, 32
        %v6439 = vpop.permute.xlu0 %6438
        %6440 = vrot.lane.b32.xlu0 %v6267, 32
        %v6441 = vpop.permute.xlu0 %6440
        %6442 = vrot.lane.b32.xlu0 %v6275, 32
        %v6443 = vpop.permute.xlu0 %6442
        %6444 = vrot.lane.b32.xlu0 %v6283, 32
        %v6445 = vpop.permute.xlu0 %6444
        %6446 = vrot.lane.b32.xlu0 %v6291, 32
        %v6447 = vpop.permute.xlu0 %6446
        %6448 = vrot.lane.b32.xlu0 %v6299, 32
        %v6449 = vpop.permute.xlu0 %6448
        %6450 = vrot.lane.b32.xlu0 %v6307, 32
        %v6451 = vpop.permute.xlu0 %6450
        %6452 = vrot.lane.b32.xlu0 %v6315, 32
        %v6453 = vpop.permute.xlu0 %6452
        %6454 = vrot.lane.b32.xlu0 %v6323, 32
        %v6455 = vpop.permute.xlu0 %6454
        %6456 = vrot.lane.b32.xlu0 %v6331, 32
        %v6457 = vpop.permute.xlu0 %6456
        %6458 = vrot.lane.b32.xlu0 %v6339, 32
        %v6459 = vpop.permute.xlu0 %6458
        %6460 = vrot.lane.b32.xlu0 %v6347, 32
        %v6461 = vpop.permute.xlu0 %6460
        %6462 = vrot.lane.b32.xlu0 %v6355, 32
        %v6463 = vpop.permute.xlu0 %6462
        %6464 = vrot.lane.b32.xlu0 %v6363, 32
        %v6465 = vpop.permute.xlu0 %6464
        %6466 = vrot.lane.b32.xlu0 %v6371, 32
        %v6467 = vpop.permute.xlu0 %6466
        %6468 = vrot.lane.b32.xlu0 %v6379, 32
        %v6469 = vpop.permute.xlu0 %6468
        %6470 = vrot.lane.b32.xlu0 %v6387, 32
        %v6471 = vpop.permute.xlu0 %6470
        %6472 = vrot.lane.b32.xlu0 %v6395, 32
        %v6473 = vpop.permute.xlu0 %6472
        %6474 = vrot.lane.b32.xlu0 %v6403, 32
        %v6475 = vpop.permute.xlu0 %6474
        %6476 = vrot.lane.b32.xlu0 %v6411, 32
        %v6477 = vpop.permute.xlu0 %6476
        %6478 = vrot.lane.b32.xlu0 %v6419, 32
        %v6479 = vpop.permute.xlu0 %6478
        %6480 = vrot.lane.b32.xlu0 %v6427, 32
        %v6481 = vpop.permute.xlu0 %6480
        %6482 = vrot.lane.b32.xlu0 %v6435, 32
        %v6483 = vpop.permute.xlu0 %6482
        %v6509 = vrot.slane %v6212, 1
        %v6510 = vrot.slane %v6213, 1
        %v6511 = vsel %vm1460, %v6509, %v6510
        %v6512 = vrot.slane %v6214, 1
        %v6513 = vsel %vm1460, %v6510, %v6512
        %v6514 = vrot.slane %v6215, 1
        %v6515 = vsel %vm1460, %v6512, %v6514
        %v6516 = vrot.slane %v6216, 1
        %v6517 = vsel %vm1460, %v6514, %v6516
        %v6518 = vrot.slane %v6217, 1
        %v6519 = vsel %vm1460, %v6516, %v6518
        %v6520 = vrot.slane %v6218, 1
        %v6521 = vsel %vm1460, %v6518, %v6520
        %v6522 = vrot.slane %v6219, 1
        %v6523 = vsel %vm1460, %v6520, %v6522
        %v6524 = vrot.slane %v6220, 1
        %v6525 = vsel %vm1460, %v6522, %v6524
        %v6526 = vrot.slane %v6221, 1
        %v6527 = vsel %vm1460, %v6524, %v6526
        %v6528 = vrot.slane %v6222, 1
        %v6529 = vsel %vm1460, %v6526, %v6528
        %v6530 = vrot.slane %v6223, 1
        %v6531 = vsel %vm1460, %v6528, %v6530
        %v6532 = vrot.slane %v6224, 1
        %v6533 = vsel %vm1460, %v6530, %v6532
        %v6534 = vrot.slane %v6225, 1
        %v6535 = vsel %vm1460, %v6532, %v6534
        %v6536 = vrot.slane %v6226, 1
        %v6537 = vsel %vm1460, %v6534, %v6536
        %v6538 = vrot.slane %v6227, 1
        %v6539 = vsel %vm1460, %v6536, %v6538
        %v6540 = vrot.slane %v6228, 1
        %v6541 = vsel %vm1460, %v6538, %v6540
        %v6542 = vrot.slane %v6229, 1
        %v6543 = vsel %vm1460, %v6540, %v6542
        %v6544 = vrot.slane %v6230, 1
        %v6545 = vsel %vm1460, %v6542, %v6544
        %v6546 = vrot.slane %v6231, 1
        %v6547 = vsel %vm1460, %v6544, %v6546
        %v6548 = vrot.slane %v6232, 1
        %v6549 = vsel %vm1460, %v6546, %v6548
        %v6550 = vrot.slane %v6233, 1
        %v6551 = vsel %vm1460, %v6548, %v6550
        %v6552 = vrot.slane %v6234, 1
        %v6553 = vsel %vm1460, %v6550, %v6552
        %v6554 = vrot.slane %v6235, 1
        %v6555 = vsel %vm1460, %v6552, %v6554
        %v6556 = vrot.slane %v6236, 1
        %v6557 = vsel %vm1460, %v6554, %v6556
        %6558 = vrot.lane.b32.xlu0 %v6511, 64
        %v6559 = vpop.permute.xlu0 %6558
        %6560 = vrot.lane.b32.xlu0 %v6513, 64
        %v6561 = vpop.permute.xlu0 %6560
        %6562 = vrot.lane.b32.xlu0 %v6515, 64
        %v6563 = vpop.permute.xlu0 %6562
        %6564 = vrot.lane.b32.xlu0 %v6517, 64
        %v6565 = vpop.permute.xlu0 %6564
        %6566 = vrot.lane.b32.xlu0 %v6519, 64
        %v6567 = vpop.permute.xlu0 %6566
        %6568 = vrot.lane.b32.xlu0 %v6521, 64
        %v6569 = vpop.permute.xlu0 %6568
        %6570 = vrot.lane.b32.xlu0 %v6523, 64
        %v6571 = vpop.permute.xlu0 %6570
        %6572 = vrot.lane.b32.xlu0 %v6525, 64
        %v6573 = vpop.permute.xlu0 %6572
        %6574 = vrot.lane.b32.xlu0 %v6527, 64
        %v6575 = vpop.permute.xlu0 %6574
        %6576 = vrot.lane.b32.xlu0 %v6529, 64
        %v6577 = vpop.permute.xlu0 %6576
        %6578 = vrot.lane.b32.xlu0 %v6531, 64
        %v6579 = vpop.permute.xlu0 %6578
        %6580 = vrot.lane.b32.xlu0 %v6533, 64
        %v6581 = vpop.permute.xlu0 %6580
        %6582 = vrot.lane.b32.xlu0 %v6535, 64
        %v6583 = vpop.permute.xlu0 %6582
        %6584 = vrot.lane.b32.xlu0 %v6537, 64
        %v6585 = vpop.permute.xlu0 %6584
        %6586 = vrot.lane.b32.xlu0 %v6539, 64
        %v6587 = vpop.permute.xlu0 %6586
        %6588 = vrot.lane.b32.xlu0 %v6541, 64
        %v6589 = vpop.permute.xlu0 %6588
        %6590 = vrot.lane.b32.xlu0 %v6543, 64
        %v6591 = vpop.permute.xlu0 %6590
        %6592 = vrot.lane.b32.xlu0 %v6545, 64
        %v6593 = vpop.permute.xlu0 %6592
        %6594 = vrot.lane.b32.xlu0 %v6547, 64
        %v6595 = vpop.permute.xlu0 %6594
        %6596 = vrot.lane.b32.xlu0 %v6549, 64
        %v6597 = vpop.permute.xlu0 %6596
        %6598 = vrot.lane.b32.xlu0 %v6551, 64
        %v6599 = vpop.permute.xlu0 %6598
        %6600 = vrot.lane.b32.xlu0 %v6553, 64
        %v6601 = vpop.permute.xlu0 %6600
        %6602 = vrot.lane.b32.xlu0 %v6555, 64
        %v6603 = vpop.permute.xlu0 %6602
        %6604 = vrot.lane.b32.xlu0 %v6557, 64
        %v6605 = vpop.permute.xlu0 %6604
        %v6607 = vsel %vm787, %v6212, %v6437
        %v6609 = vsel %vm787, %v6213, %v6439
        %v6611 = vsel %vm787, %v6214, %v6441
        %v6613 = vsel %vm787, %v6215, %v6443
        %v6615 = vsel %vm787, %v6216, %v6445
        %v6617 = vsel %vm787, %v6217, %v6447
        %v6619 = vsel %vm787, %v6218, %v6449
        %v6621 = vsel %vm787, %v6219, %v6451
        %v6623 = vsel %vm787, %v6220, %v6453
        %v6625 = vsel %vm787, %v6221, %v6455
        %v6627 = vsel %vm787, %v6222, %v6457
        %v6629 = vsel %vm787, %v6223, %v6459
        %v6631 = vsel %vm787, %v6224, %v6461
        %v6633 = vsel %vm787, %v6225, %v6463
        %v6635 = vsel %vm787, %v6226, %v6465
        %v6637 = vsel %vm787, %v6227, %v6467
        %v6639 = vsel %vm787, %v6228, %v6469
        %v6641 = vsel %vm787, %v6229, %v6471
        %v6643 = vsel %vm787, %v6230, %v6473
        %v6645 = vsel %vm787, %v6231, %v6475
        %v6647 = vsel %vm787, %v6232, %v6477
        %v6649 = vsel %vm787, %v6233, %v6479
        %v6651 = vsel %vm787, %v6234, %v6481
        %v6653 = vsel %vm787, %v6235, %v6483
        %v6655 = vsel %vm765, %v6607, %v6559
        %v6657 = vsel %vm765, %v6609, %v6561
        %v6659 = vsel %vm765, %v6611, %v6563
        %v6661 = vsel %vm765, %v6613, %v6565
        %v6663 = vsel %vm765, %v6615, %v6567
        %v6665 = vsel %vm765, %v6617, %v6569
        %v6667 = vsel %vm765, %v6619, %v6571
        %v6669 = vsel %vm765, %v6621, %v6573
        %v6671 = vsel %vm765, %v6623, %v6575
        %v6673 = vsel %vm765, %v6625, %v6577
        %v6675 = vsel %vm765, %v6627, %v6579
        %v6677 = vsel %vm765, %v6629, %v6581
        %v6679 = vsel %vm765, %v6631, %v6583
        %v6681 = vsel %vm765, %v6633, %v6585
        %v6683 = vsel %vm765, %v6635, %v6587
        %v6685 = vsel %vm765, %v6637, %v6589
        %v6687 = vsel %vm765, %v6639, %v6591
        %v6689 = vsel %vm765, %v6641, %v6593
        %v6691 = vsel %vm765, %v6643, %v6595
        %v6693 = vsel %vm765, %v6645, %v6597
        %v6695 = vsel %vm765, %v6647, %v6599
        %v6697 = vsel %vm765, %v6649, %v6601
        %v6699 = vsel %vm765, %v6651, %v6603
        %v6701 = vsel %vm765, %v6653, %v6605
        %v6702 = vld [vmem:[%s16] sm:$0xf]
        %v6703 = vld [vmem:[%s16 + $0x4] sm:$0xf]
        %v6704 = vld [vmem:[%s16 + $0x8] sm:$0xf]
        %v6705 = vld [vmem:[%s16 + $0xc] sm:$0xf]
        %v6706 = vld [vmem:[%s16 + $0x10] sm:$0xf]
        %v6707 = vld [vmem:[%s16 + $0x14] sm:$0xf]
        %v6708 = vld [vmem:[%s16 + $0x18] sm:$0xf]
        %v6709 = vld [vmem:[%s16 + $0x1c] sm:$0xf]
        %v6710 = vld [vmem:[%s16 + $0x20] sm:$0xf]
        %v6711 = vld [vmem:[%s16 + $0x24] sm:$0xf]
        %v6712 = vld [vmem:[%s16 + $0x28] sm:$0xf]
        %v6713 = vld [vmem:[%s16 + $0x2c] sm:$0xf]
        %v6714 = vshrl.u32 %v6236, 16
        %v6716 = vor.u32 %v6714, %v6434
        %v6718 = vshll.u32 %v6237, 16
        %v6720 = vrot.slane %v6718, 1
        %v6721 = vsel %vm1366, %v6716, %v6720
        %v6722 = vshrl.u32 %v6237, 16
        %v6724 = vor.u32 %v6722, %v6720
        %6725 = vrot.lane.b32.xlu0 %v6721, 32
        %v6726 = vpop.permute.xlu0 %6725
        %6727 = vrot.lane.b32.xlu0 %v6724, 32
        %v6728 = vpop.permute.xlu0 %6727
        %v6730 = vrot.slane %v6237, 1
        %v6731 = vsel %vm1460, %v6556, %v6730
        %6732 = vrot.lane.b32.xlu0 %v6731, 64
        %v6733 = vpop.permute.xlu0 %6732
        %6734 = vrot.lane.b32.xlu0 %v6730, 64
        %v6735 = vpop.permute.xlu0 %6734
        %v6737 = vsel %vm787, %v6236, %v6726
        %v6739 = vsel %vm787, %v6237, %v6728
        %v6741 = vsel %vm765, %v6737, %v6733
        %v6743 = vsel %vm765, %v6739, %v6735
        %s6744 = scalar_lea.vmem %s16, 48
        %v6745 = vld [vmem:[%s6744] sm:$0xf]
        %v6746 = vld [vmem:[%s6744 + $0x4] sm:$0xf]
        %v6747 = vld [vmem:[%s6744 + $0x8] sm:$0xf]
        %v6748 = vld [vmem:[%s6744 + $0xc] sm:$0xf]
        %v6749 = vld [vmem:[%s6744 + $0x10] sm:$0xf]
        %v6750 = vld [vmem:[%s6744 + $0x14] sm:$0xf]
        %v6751 = vld [vmem:[%s6744 + $0x18] sm:$0xf]
        %v6752 = vld [vmem:[%s6744 + $0x1c] sm:$0xf]
        %v6753 = vld [vmem:[%s6744 + $0x20] sm:$0xf]
        %v6754 = vld [vmem:[%s6744 + $0x24] sm:$0xf]
        %v6755 = vld [vmem:[%s6744 + $0x28] sm:$0xf]
        %v6756 = vld [vmem:[%s6744 + $0x2c] sm:$0xf]
        %v6782 = vrot.slane %v6657, 4
        %v6783 = vrot.slane %v6659, 4
        %v6784 = vsel %vm4112, %v6782, %v6783
        %v6785 = vrot.slane %v6661, 4
        %v6786 = vsel %vm4112, %v6783, %v6785
        %v6787 = vrot.slane %v6663, 4
        %v6788 = vsel %vm4112, %v6785, %v6787
        %v6789 = vrot.slane %v6665, 4
        %v6790 = vsel %vm4112, %v6787, %v6789
        %v6791 = vrot.slane %v6667, 4
        %v6792 = vsel %vm4112, %v6789, %v6791
        %v6793 = vrot.slane %v6669, 4
        %v6794 = vsel %vm4112, %v6791, %v6793
        %v6795 = vrot.slane %v6671, 4
        %v6796 = vsel %vm4112, %v6793, %v6795
        %v6797 = vrot.slane %v6673, 4
        %v6798 = vsel %vm4112, %v6795, %v6797
        %v6799 = vrot.slane %v6675, 4
        %v6800 = vsel %vm4112, %v6797, %v6799
        %v6801 = vrot.slane %v6677, 4
        %v6802 = vsel %vm4112, %v6799, %v6801
        %v6803 = vrot.slane %v6679, 4
        %v6804 = vsel %vm4112, %v6801, %v6803
        %v6805 = vrot.slane %v6681, 4
        %v6806 = vsel %vm4112, %v6803, %v6805
        %v6807 = vrot.slane %v6683, 4
        %v6808 = vsel %vm4112, %v6805, %v6807
        %v6809 = vrot.slane %v6685, 4
        %v6810 = vsel %vm4112, %v6807, %v6809
        %v6811 = vrot.slane %v6687, 4
        %v6812 = vsel %vm4112, %v6809, %v6811
        %v6813 = vrot.slane %v6689, 4
        %v6814 = vsel %vm4112, %v6811, %v6813
        %v6815 = vrot.slane %v6691, 4
        %v6816 = vsel %vm4112, %v6813, %v6815
        %v6817 = vrot.slane %v6693, 4
        %v6818 = vsel %vm4112, %v6815, %v6817
        %v6819 = vrot.slane %v6695, 4
        %v6820 = vsel %vm4112, %v6817, %v6819
        %v6821 = vrot.slane %v6697, 4
        %v6822 = vsel %vm4112, %v6819, %v6821
        %v6823 = vrot.slane %v6699, 4
        %v6824 = vsel %vm4112, %v6821, %v6823
        %v6825 = vrot.slane %v6701, 4
        %v6826 = vsel %vm4112, %v6823, %v6825
        %v6827 = vrot.slane %v6741, 4
        %v6828 = vsel %vm4112, %v6825, %v6827
        %v6829 = vrot.slane %v6743, 4
        %v6830 = vsel %vm4112, %v6827, %v6829
        %v6843 = vunpack.c.l.b16 %v6745
        %v6844 = vunpack.c.l.b16 %v6746
        %v6845 = vunpack.c.l.b16 %v6747
        %v6846 = vunpack.c.l.b16 %v6748
        %v6847 = vunpack.c.l.b16 %v6749
        %v6848 = vunpack.c.l.b16 %v6750
        %v6849 = vunpack.c.l.b16 %v6751
        %v6850 = vunpack.c.l.b16 %v6752
        %v6851 = vunpack.c.l.b16 %v6753
        %v6852 = vunpack.c.l.b16 %v6754
        %v6853 = vunpack.c.l.b16 %v6755
        %v6854 = vunpack.c.l.b16 %v6756
        %v6855 = vpack.c.b16 %v6844, %v6843
        %v6856 = vpack.c.b16 %v6846, %v6845
        %v6857 = vpack.c.b16 %v6848, %v6847
        %v6858 = vpack.c.b16 %v6850, %v6849
        %v6859 = vpack.c.b16 %v6852, %v6851
        %v6860 = vpack.c.b16 %v6854, %v6853
        %vm6867 = vcmask 785408
        %v6869 = vsel %vm6867, %v6784, 0
        %v6872 = vsel %vm6867, %v6786, 0
        %v6875 = vsel %vm6867, %v6788, 0
        %v6878 = vsel %vm6867, %v6790, 0
        %v6881 = vsel %vm6867, %v6792, 0
        %v6884 = vsel %vm6867, %v6794, 0
        %v6887 = vsel %vm6867, %v6796, 0
        %v6890 = vsel %vm6867, %v6798, 0
        %v6893 = vsel %vm6867, %v6800, 0
        %v6896 = vsel %vm6867, %v6802, 0
        %v6899 = vsel %vm6867, %v6804, 0
        %v6902 = vsel %vm6867, %v6806, 0
        %v6905 = vsel %vm6867, %v6808, 0
        %v6908 = vsel %vm6867, %v6810, 0
        %v6911 = vsel %vm6867, %v6812, 0
        %v6914 = vsel %vm6867, %v6814, 0
        %v6917 = vsel %vm6867, %v6816, 0
        %v6920 = vsel %vm6867, %v6818, 0
        %v6923 = vsel %vm6867, %v6820, 0
        %v6926 = vsel %vm6867, %v6822, 0
        %v6929 = vsel %vm6867, %v6824, 0
        %v6932 = vsel %vm6867, %v6826, 0
        %v6935 = vsel %vm6867, %v6828, 0
        %v6938 = vsel %vm6867, %v6830, 0
        %6940 = vmatprep.subr.bf16.mxu0 0
        %6941 = vmatpush1.bf16.msra.mxu0 0
        %6942 = vmatprep.subr.bf16.mxu0 0
        %6943 = vmatpush1.bf16.msra.mxu0 0
        %6944 = vmatprep.subr.bf16.mxu0 0
        %6945 = vmatpush1.bf16.msra.mxu0 %v6860
        %6946 = vmatprep.subr.bf16.mxu0 0
        %6947 = vmatpush1.bf16.msra.mxu0 %v6859
        %6948 = vmatprep.subr.bf16.mxu0 0
        %6949 = vmatpush1.bf16.msra.mxu0 %v6858
        %6950 = vmatprep.subr.bf16.mxu0 0
        %6951 = vmatpush1.bf16.msra.mxu0 %v6857
        %6952 = vmatprep.subr.bf16.mxu0 0
        %6953 = vmatpush1.bf16.msra.mxu0 %v6856
        %6954 = vmatprep.subr.bf16.mxu0 0
        %6955 = vmatpush1.bf16.msra.mxu0 %v6855
        %6956 = vmatprep.subr.bf16.mxu0 0
        %6957 = vmatpush2.bf16.msra.mxu0 0
        %6958 = vmatprep.subr.bf16.mxu0 0
        %6959 = vmatpush2.bf16.msra.mxu0 0
        %6960 = vmatprep.subr.bf16.mxu0 0
        %6961 = vmatpush2.bf16.msra.mxu0 0
        %6962 = vmatprep.subr.bf16.mxu0 0
        %6963 = vmatpush2.bf16.msra.mxu0 0
        %6964 = vmatprep.subr.bf16.mxu0 0
        %6965 = vmatpush2.bf16.msra.mxu0 0
        %6966 = vmatprep.subr.bf16.mxu0 0
        %6967 = vmatpush2.bf16.msra.mxu0 0
        %6968 = vmatprep.subr.bf16.mxu0 0
        %6969 = vmatpush2.bf16.msra.mxu0 0
        %6970 = vmatprep.subr.bf16.mxu0 0
        %6971 = vmatpush2.bf16.msra.mxu0 0
        %6972 = vmatprep.mubr.bf16.mxu0 0
        %6973 = vmatmul.mubr.bf16.gmra.mxu0 %v6869
        %v6974 = vpop.f32.mrf.mxu0
        %v6975 = vadd.f32 0.0, %v6974
        %v6976 = vpop.f32.mrf.mxu0
        %v6977 = vpop.f32.mrf.mxu0
        %v6978 = vadd.f32 0.0, %v6977
        %v6979 = vpop.f32.mrf.mxu0
        %6980 = vmatprep.mubr.bf16.mxu0 0
        %6981 = vmatmul.mubr.bf16.gmra.mxu0 %v6872
        %v6982 = vpop.f32.mrf.mxu0
        %v6983 = vpop.f32.mrf.mxu0
        %v6984 = vpop.f32.mrf.mxu0
        %v6985 = vadd.f32 0.0, %v6984
        %v6986 = vpop.f32.mrf.mxu0
        %6987 = vmatprep.mubr.bf16.mxu0 0
        %6988 = vmatmul.mubr.bf16.gmra.mxu0 %v6875
        %v6989 = vpop.f32.mrf.mxu0
        %v6990 = vadd.f32 0.0, %v6989
        %v6991 = vpop.f32.mrf.mxu0
        %v6992 = vpop.f32.mrf.mxu0
        %v6993 = vpop.f32.mrf.mxu0
        %6994 = vmatprep.mubr.bf16.mxu0 0
        %6995 = vmatmul.mubr.bf16.gmra.mxu0 %v6878
        %v6996 = vpop.f32.mrf.mxu0
        %v6997 = vadd.f32 0.0, %v6996
        %v6998 = vpop.f32.mrf.mxu0
        %v6999 = vpop.f32.mrf.mxu0
        %v7000 = vadd.f32 0.0, %v6999
        %v7001 = vpop.f32.mrf.mxu0
        %7002 = vmatprep.mubr.bf16.mxu0 0
        %7003 = vmatmul.mubr.bf16.gmra.mxu0 %v6881
        %v7004 = vpop.f32.mrf.mxu0
        %v7005 = vpop.f32.mrf.mxu0
        %v7006 = vpop.f32.mrf.mxu0
        %v7007 = vadd.f32 0.0, %v7006
        %v7008 = vpop.f32.mrf.mxu0
        %7009 = vmatprep.mubr.bf16.mxu0 0
        %7010 = vmatmul.mubr.bf16.gmra.mxu0 %v6884
        %v7011 = vpop.f32.mrf.mxu0
        %v7012 = vadd.f32 0.0, %v7011
        %v7013 = vpop.f32.mrf.mxu0
        %v7014 = vpop.f32.mrf.mxu0
        %v7015 = vpop.f32.mrf.mxu0
        %7016 = vmatprep.mubr.bf16.mxu0 0
        %7017 = vmatmul.mubr.bf16.gmra.mxu0 %v6887
        %v7018 = vpop.f32.mrf.mxu0
        %v7019 = vadd.f32 0.0, %v7018
        %v7020 = vpop.f32.mrf.mxu0
        %v7021 = vpop.f32.mrf.mxu0
        %v7022 = vadd.f32 0.0, %v7021
        %v7023 = vpop.f32.mrf.mxu0
        %7024 = vmatprep.mubr.bf16.mxu0 0
        %7025 = vmatmul.mubr.bf16.gmra.mxu0 %v6890
        %v7026 = vpop.f32.mrf.mxu0
        %v7027 = vpop.f32.mrf.mxu0
        %v7028 = vpop.f32.mrf.mxu0
        %v7029 = vadd.f32 0.0, %v7028
        %v7030 = vpop.f32.mrf.mxu0
        %7031 = vmatprep.mubr.bf16.mxu0 0
        %7032 = vmatmul.mubr.bf16.gmra.mxu0 %v6893
        %v7033 = vpop.f32.mrf.mxu0
        %v7034 = vadd.f32 0.0, %v7033
        %v7035 = vpop.f32.mrf.mxu0
        %v7036 = vpop.f32.mrf.mxu0
        %v7037 = vpop.f32.mrf.mxu0
        %7038 = vmatprep.mubr.bf16.mxu0 0
        %7039 = vmatmul.mubr.bf16.gmra.mxu0 %v6896
        %v7040 = vpop.f32.mrf.mxu0
        %v7041 = vadd.f32 0.0, %v7040
        %v7042 = vpop.f32.mrf.mxu0
        %v7043 = vpop.f32.mrf.mxu0
        %v7044 = vadd.f32 0.0, %v7043
        %v7045 = vpop.f32.mrf.mxu0
        %7046 = vmatprep.mubr.bf16.mxu0 0
        %7047 = vmatmul.mubr.bf16.gmra.mxu0 %v6899
        %v7048 = vpop.f32.mrf.mxu0
        %v7049 = vpop.f32.mrf.mxu0
        %v7050 = vpop.f32.mrf.mxu0
        %v7051 = vadd.f32 0.0, %v7050
        %v7052 = vpop.f32.mrf.mxu0
        %7053 = vmatprep.mubr.bf16.mxu0 0
        %7054 = vmatmul.mubr.bf16.gmra.mxu0 %v6902
        %v7055 = vpop.f32.mrf.mxu0
        %v7056 = vadd.f32 0.0, %v7055
        %v7057 = vpop.f32.mrf.mxu0
        %v7058 = vpop.f32.mrf.mxu0
        %v7059 = vpop.f32.mrf.mxu0
        %7060 = vmatprep.mubr.bf16.mxu0 0
        %7061 = vmatmul.mubr.bf16.gmra.mxu0 %v6905
        %v7062 = vpop.f32.mrf.mxu0
        %v7063 = vadd.f32 0.0, %v7062
        %v7064 = vpop.f32.mrf.mxu0
        %v7065 = vpop.f32.mrf.mxu0
        %v7066 = vadd.f32 0.0, %v7065
        %v7067 = vpop.f32.mrf.mxu0
        %7068 = vmatprep.mubr.bf16.mxu0 0
        %7069 = vmatmul.mubr.bf16.gmra.mxu0 %v6908
        %v7070 = vpop.f32.mrf.mxu0
        %v7071 = vpop.f32.mrf.mxu0
        %v7072 = vpop.f32.mrf.mxu0
        %v7073 = vadd.f32 0.0, %v7072
        %v7074 = vpop.f32.mrf.mxu0
        %7075 = vmatprep.mubr.bf16.mxu0 0
        %7076 = vmatmul.mubr.bf16.gmra.mxu0 %v6911
        %v7077 = vpop.f32.mrf.mxu0
        %v7078 = vadd.f32 0.0, %v7077
        %v7079 = vpop.f32.mrf.mxu0
        %v7080 = vpop.f32.mrf.mxu0
        %v7081 = vpop.f32.mrf.mxu0
        %7082 = vmatprep.mubr.bf16.mxu0 0
        %7083 = vmatmul.mubr.bf16.gmra.mxu0 %v6914
        %v7084 = vpop.f32.mrf.mxu0
        %v7085 = vadd.f32 0.0, %v7084
        %v7086 = vpop.f32.mrf.mxu0
        %v7087 = vpop.f32.mrf.mxu0
        %v7088 = vadd.f32 0.0, %v7087
        %v7089 = vpop.f32.mrf.mxu0
        %7090 = vmatprep.mubr.bf16.mxu0 0
        %7091 = vmatmul.mubr.bf16.gmra.mxu0 %v6917
        %v7092 = vpop.f32.mrf.mxu0
        %v7093 = vpop.f32.mrf.mxu0
        %v7094 = vpop.f32.mrf.mxu0
        %v7095 = vadd.f32 0.0, %v7094
        %v7096 = vpop.f32.mrf.mxu0
        %7097 = vmatprep.mubr.bf16.mxu0 0
        %7098 = vmatmul.mubr.bf16.gmra.mxu0 %v6920
        %v7099 = vpop.f32.mrf.mxu0
        %v7100 = vadd.f32 0.0, %v7099
        %v7101 = vpop.f32.mrf.mxu0
        %v7102 = vpop.f32.mrf.mxu0
        %v7103 = vpop.f32.mrf.mxu0
        %7104 = vmatprep.mubr.bf16.mxu0 0
        %7105 = vmatmul.mubr.bf16.gmra.mxu0 %v6923
        %v7106 = vpop.f32.mrf.mxu0
        %v7107 = vadd.f32 0.0, %v7106
        %v7108 = vpop.f32.mrf.mxu0
        %v7109 = vpop.f32.mrf.mxu0
        %v7110 = vadd.f32 0.0, %v7109
        %v7111 = vpop.f32.mrf.mxu0
        %7112 = vmatprep.mubr.bf16.mxu0 0
        %7113 = vmatmul.mubr.bf16.gmra.mxu0 %v6926
        %v7114 = vpop.f32.mrf.mxu0
        %v7115 = vpop.f32.mrf.mxu0
        %v7116 = vpop.f32.mrf.mxu0
        %v7117 = vadd.f32 0.0, %v7116
        %v7118 = vpop.f32.mrf.mxu0
        %7119 = vmatprep.mubr.bf16.mxu0 0
        %7120 = vmatmul.mubr.bf16.gmra.mxu0 %v6929
        %v7121 = vpop.f32.mrf.mxu0
        %v7122 = vadd.f32 0.0, %v7121
        %v7123 = vpop.f32.mrf.mxu0
        %v7124 = vpop.f32.mrf.mxu0
        %v7125 = vpop.f32.mrf.mxu0
        %7126 = vmatprep.mubr.bf16.mxu0 0
        %7127 = vmatmul.mubr.bf16.gmra.mxu0 %v6932
        %v7128 = vpop.f32.mrf.mxu0
        %v7129 = vadd.f32 0.0, %v7128
        %v7130 = vpop.f32.mrf.mxu0
        %v7131 = vpop.f32.mrf.mxu0
        %v7132 = vadd.f32 0.0, %v7131
        %v7133 = vpop.f32.mrf.mxu0
        %7134 = vmatprep.mubr.bf16.mxu0 0
        %7135 = vmatmul.mubr.bf16.gmra.mxu0 %v6935
        %v7136 = vpop.f32.mrf.mxu0
        %v7137 = vpop.f32.mrf.mxu0
        %v7138 = vpop.f32.mrf.mxu0
        %v7139 = vadd.f32 0.0, %v7138
        %v7140 = vpop.f32.mrf.mxu0
        %7141 = vmatprep.mubr.bf16.mxu0 0
        %7142 = vmatmul.mubr.bf16.gmra.mxu0 %v6938
        %v7143 = vpop.f32.mrf.mxu0
        %v7144 = vadd.f32 0.0, %v7143
        %v7145 = vpop.f32.mrf.mxu0
        %v7146 = vpop.f32.mrf.mxu0
        %v7147 = vpop.f32.mrf.mxu0
        %7148 = vdwg.mxu0
        %v7161 = vunpack.c.l.b16 %v6702
        %v7162 = vunpack.c.l.b16 %v6703
        %v7163 = vunpack.c.l.b16 %v6704
        %v7164 = vunpack.c.l.b16 %v6705
        %v7165 = vunpack.c.l.b16 %v6706
        %v7166 = vunpack.c.l.b16 %v6707
        %v7167 = vunpack.c.l.b16 %v6708
        %v7168 = vunpack.c.l.b16 %v6709
        %v7169 = vunpack.c.l.b16 %v6710
        %v7170 = vunpack.c.l.b16 %v6711
        %v7171 = vunpack.c.l.b16 %v6712
        %v7172 = vunpack.c.l.b16 %v6713
        %v7173 = vpack.c.b16 %v7162, %v7161
        %v7174 = vpack.c.b16 %v7164, %v7163
        %v7175 = vpack.c.b16 %v7166, %v7165
        %v7176 = vpack.c.b16 %v7168, %v7167
        %v7177 = vpack.c.b16 %v7170, %v7169
        %v7178 = vpack.c.b16 %v7172, %v7171
        %v7185 = vsel %vm6867, %v6655, 0
        %v7187 = vsel %vm6867, %v6657, 0
        %v7189 = vsel %vm6867, %v6659, 0
        %v7191 = vsel %vm6867, %v6661, 0
        %v7193 = vsel %vm6867, %v6663, 0
        %v7195 = vsel %vm6867, %v6665, 0
        %v7197 = vsel %vm6867, %v6667, 0
        %v7199 = vsel %vm6867, %v6669, 0
        %v7201 = vsel %vm6867, %v6671, 0
        %v7203 = vsel %vm6867, %v6673, 0
        %v7205 = vsel %vm6867, %v6675, 0
        %v7207 = vsel %vm6867, %v6677, 0
        %v7209 = vsel %vm6867, %v6679, 0
        %v7211 = vsel %vm6867, %v6681, 0
        %v7213 = vsel %vm6867, %v6683, 0
        %v7215 = vsel %vm6867, %v6685, 0
        %v7217 = vsel %vm6867, %v6687, 0
        %v7219 = vsel %vm6867, %v6689, 0
        %v7221 = vsel %vm6867, %v6691, 0
        %v7223 = vsel %vm6867, %v6693, 0
        %v7225 = vsel %vm6867, %v6695, 0
        %v7227 = vsel %vm6867, %v6697, 0
        %v7229 = vsel %vm6867, %v6699, 0
        %v7231 = vsel %vm6867, %v6701, 0
        %7233 = vmatprep.subr.bf16.mxu0 0
        %7234 = vmatpush1.bf16.msra.mxu0 0
        %7235 = vmatprep.subr.bf16.mxu0 0
        %7236 = vmatpush1.bf16.msra.mxu0 0
        %7237 = vmatprep.subr.bf16.mxu0 0
        %7238 = vmatpush1.bf16.msra.mxu0 %v7178
        %7239 = vmatprep.subr.bf16.mxu0 0
        %7240 = vmatpush1.bf16.msra.mxu0 %v7177
        %7241 = vmatprep.subr.bf16.mxu0 0
        %7242 = vmatpush1.bf16.msra.mxu0 %v7176
        %7243 = vmatprep.subr.bf16.mxu0 0
        %7244 = vmatpush1.bf16.msra.mxu0 %v7175
        %7245 = vmatprep.subr.bf16.mxu0 0
        %7246 = vmatpush1.bf16.msra.mxu0 %v7174
        %7247 = vmatprep.subr.bf16.mxu0 0
        %7248 = vmatpush1.bf16.msra.mxu0 %v7173
        %7249 = vmatprep.subr.bf16.mxu0 0
        %7250 = vmatpush2.bf16.msra.mxu0 0
        %7251 = vmatprep.subr.bf16.mxu0 0
        %7252 = vmatpush2.bf16.msra.mxu0 0
        %7253 = vmatprep.subr.bf16.mxu0 0
        %7254 = vmatpush2.bf16.msra.mxu0 0
        %7255 = vmatprep.subr.bf16.mxu0 0
        %7256 = vmatpush2.bf16.msra.mxu0 0
        %7257 = vmatprep.subr.bf16.mxu0 0
        %7258 = vmatpush2.bf16.msra.mxu0 0
        %7259 = vmatprep.subr.bf16.mxu0 0
        %7260 = vmatpush2.bf16.msra.mxu0 0
        %7261 = vmatprep.subr.bf16.mxu0 0
        %7262 = vmatpush2.bf16.msra.mxu0 0
        %7263 = vmatprep.subr.bf16.mxu0 0
        %7264 = vmatpush2.bf16.msra.mxu0 0
        %7265 = vmatprep.mubr.bf16.mxu0 0
        %7266 = vmatmul.mubr.bf16.gmra.mxu0 %v7185
        %v7267 = vpop.f32.mrf.mxu0
        %v7268 = vadd.f32 %v6975, %v7267
        %v7269 = vpop.f32.mrf.mxu0
        %v7270 = vpop.f32.mrf.mxu0
        %v7271 = vadd.f32 %v6978, %v7270
        %v7272 = vpop.f32.mrf.mxu0
        %7273 = vmatprep.mubr.bf16.mxu0 0
        %7274 = vmatmul.mubr.bf16.gmra.mxu0 %v7187
        %v7275 = vpop.f32.mrf.mxu0
        %v7276 = vpop.f32.mrf.mxu0
        %v7277 = vpop.f32.mrf.mxu0
        %v7278 = vadd.f32 %v6985, %v7277
        %v7279 = vpop.f32.mrf.mxu0
        %7280 = vmatprep.mubr.bf16.mxu0 0
        %7281 = vmatmul.mubr.bf16.gmra.mxu0 %v7189
        %v7282 = vpop.f32.mrf.mxu0
        %v7283 = vadd.f32 %v6990, %v7282
        %v7284 = vpop.f32.mrf.mxu0
        %v7285 = vpop.f32.mrf.mxu0
        %v7286 = vpop.f32.mrf.mxu0
        %7287 = vmatprep.mubr.bf16.mxu0 0
        %7288 = vmatmul.mubr.bf16.gmra.mxu0 %v7191
        %v7289 = vpop.f32.mrf.mxu0
        %v7290 = vadd.f32 %v6997, %v7289
        %v7291 = vpop.f32.mrf.mxu0
        %v7292 = vpop.f32.mrf.mxu0
        %v7293 = vadd.f32 %v7000, %v7292
        %v7294 = vpop.f32.mrf.mxu0
        %7295 = vmatprep.mubr.bf16.mxu0 0
        %7296 = vmatmul.mubr.bf16.gmra.mxu0 %v7193
        %v7297 = vpop.f32.mrf.mxu0
        %v7298 = vpop.f32.mrf.mxu0
        %v7299 = vpop.f32.mrf.mxu0
        %v7300 = vadd.f32 %v7007, %v7299
        %v7301 = vpop.f32.mrf.mxu0
        %7302 = vmatprep.mubr.bf16.mxu0 0
        %7303 = vmatmul.mubr.bf16.gmra.mxu0 %v7195
        %v7304 = vpop.f32.mrf.mxu0
        %v7305 = vadd.f32 %v7012, %v7304
        %v7306 = vpop.f32.mrf.mxu0
        %v7307 = vpop.f32.mrf.mxu0
        %v7308 = vpop.f32.mrf.mxu0
        %7309 = vmatprep.mubr.bf16.mxu0 0
        %7310 = vmatmul.mubr.bf16.gmra.mxu0 %v7197
        %v7311 = vpop.f32.mrf.mxu0
        %v7312 = vadd.f32 %v7019, %v7311
        %v7313 = vpop.f32.mrf.mxu0
        %v7314 = vpop.f32.mrf.mxu0
        %v7315 = vadd.f32 %v7022, %v7314
        %v7316 = vpop.f32.mrf.mxu0
        %7317 = vmatprep.mubr.bf16.mxu0 0
        %7318 = vmatmul.mubr.bf16.gmra.mxu0 %v7199
        %v7319 = vpop.f32.mrf.mxu0
        %v7320 = vpop.f32.mrf.mxu0
        %v7321 = vpop.f32.mrf.mxu0
        %v7322 = vadd.f32 %v7029, %v7321
        %v7323 = vpop.f32.mrf.mxu0
        %7324 = vmatprep.mubr.bf16.mxu0 0
        %7325 = vmatmul.mubr.bf16.gmra.mxu0 %v7201
        %v7326 = vpop.f32.mrf.mxu0
        %v7327 = vadd.f32 %v7034, %v7326
        %v7328 = vpop.f32.mrf.mxu0
        %v7329 = vpop.f32.mrf.mxu0
        %v7330 = vpop.f32.mrf.mxu0
        %7331 = vmatprep.mubr.bf16.mxu0 0
        %7332 = vmatmul.mubr.bf16.gmra.mxu0 %v7203
        %v7333 = vpop.f32.mrf.mxu0
        %v7334 = vadd.f32 %v7041, %v7333
        %v7335 = vpop.f32.mrf.mxu0
        %v7336 = vpop.f32.mrf.mxu0
        %v7337 = vadd.f32 %v7044, %v7336
        %v7338 = vpop.f32.mrf.mxu0
        %7339 = vmatprep.mubr.bf16.mxu0 0
        %7340 = vmatmul.mubr.bf16.gmra.mxu0 %v7205
        %v7341 = vpop.f32.mrf.mxu0
        %v7342 = vpop.f32.mrf.mxu0
        %v7343 = vpop.f32.mrf.mxu0
        %v7344 = vadd.f32 %v7051, %v7343
        %v7345 = vpop.f32.mrf.mxu0
        %7346 = vmatprep.mubr.bf16.mxu0 0
        %7347 = vmatmul.mubr.bf16.gmra.mxu0 %v7207
        %v7348 = vpop.f32.mrf.mxu0
        %v7349 = vadd.f32 %v7056, %v7348
        %v7350 = vpop.f32.mrf.mxu0
        %v7351 = vpop.f32.mrf.mxu0
        %v7352 = vpop.f32.mrf.mxu0
        %7353 = vmatprep.mubr.bf16.mxu0 0
        %7354 = vmatmul.mubr.bf16.gmra.mxu0 %v7209
        %v7355 = vpop.f32.mrf.mxu0
        %v7356 = vadd.f32 %v7063, %v7355
        %v7357 = vpop.f32.mrf.mxu0
        %v7358 = vpop.f32.mrf.mxu0
        %v7359 = vadd.f32 %v7066, %v7358
        %v7360 = vpop.f32.mrf.mxu0
        %7361 = vmatprep.mubr.bf16.mxu0 0
        %7362 = vmatmul.mubr.bf16.gmra.mxu0 %v7211
        %v7363 = vpop.f32.mrf.mxu0
        %v7364 = vpop.f32.mrf.mxu0
        %v7365 = vpop.f32.mrf.mxu0
        %v7366 = vadd.f32 %v7073, %v7365
        %v7367 = vpop.f32.mrf.mxu0
        %7368 = vmatprep.mubr.bf16.mxu0 0
        %7369 = vmatmul.mubr.bf16.gmra.mxu0 %v7213
        %v7370 = vpop.f32.mrf.mxu0
        %v7371 = vadd.f32 %v7078, %v7370
        %v7372 = vpop.f32.mrf.mxu0
        %v7373 = vpop.f32.mrf.mxu0
        %v7374 = vpop.f32.mrf.mxu0
        %7375 = vmatprep.mubr.bf16.mxu0 0
        %7376 = vmatmul.mubr.bf16.gmra.mxu0 %v7215
        %v7377 = vpop.f32.mrf.mxu0
        %v7378 = vadd.f32 %v7085, %v7377
        %v7379 = vpop.f32.mrf.mxu0
        %v7380 = vpop.f32.mrf.mxu0
        %v7381 = vadd.f32 %v7088, %v7380
        %v7382 = vpop.f32.mrf.mxu0
        %7383 = vmatprep.mubr.bf16.mxu0 0
        %7384 = vmatmul.mubr.bf16.gmra.mxu0 %v7217
        %v7385 = vpop.f32.mrf.mxu0
        %v7386 = vpop.f32.mrf.mxu0
        %v7387 = vpop.f32.mrf.mxu0
        %v7388 = vadd.f32 %v7095, %v7387
        %v7389 = vpop.f32.mrf.mxu0
        %7390 = vmatprep.mubr.bf16.mxu0 0
        %7391 = vmatmul.mubr.bf16.gmra.mxu0 %v7219
        %v7392 = vpop.f32.mrf.mxu0
        %v7393 = vadd.f32 %v7100, %v7392
        %v7394 = vpop.f32.mrf.mxu0
        %v7395 = vpop.f32.mrf.mxu0
        %v7396 = vpop.f32.mrf.mxu0
        %7397 = vmatprep.mubr.bf16.mxu0 0
        %7398 = vmatmul.mubr.bf16.gmra.mxu0 %v7221
        %v7399 = vpop.f32.mrf.mxu0
        %v7400 = vadd.f32 %v7107, %v7399
        %v7401 = vpop.f32.mrf.mxu0
        %v7402 = vpop.f32.mrf.mxu0
        %v7403 = vadd.f32 %v7110, %v7402
        %v7404 = vpop.f32.mrf.mxu0
        %7405 = vmatprep.mubr.bf16.mxu0 0
        %7406 = vmatmul.mubr.bf16.gmra.mxu0 %v7223
        %v7407 = vpop.f32.mrf.mxu0
        %v7408 = vpop.f32.mrf.mxu0
        %v7409 = vpop.f32.mrf.mxu0
        %v7410 = vadd.f32 %v7117, %v7409
        %v7411 = vpop.f32.mrf.mxu0
        %7412 = vmatprep.mubr.bf16.mxu0 0
        %7413 = vmatmul.mubr.bf16.gmra.mxu0 %v7225
        %v7414 = vpop.f32.mrf.mxu0
        %v7415 = vadd.f32 %v7122, %v7414
        %v7416 = vpop.f32.mrf.mxu0
        %v7417 = vpop.f32.mrf.mxu0
        %v7418 = vpop.f32.mrf.mxu0
        %7419 = vmatprep.mubr.bf16.mxu0 0
        %7420 = vmatmul.mubr.bf16.gmra.mxu0 %v7227
        %v7421 = vpop.f32.mrf.mxu0
        %v7422 = vadd.f32 %v7129, %v7421
        %v7423 = vpop.f32.mrf.mxu0
        %v7424 = vpop.f32.mrf.mxu0
        %v7425 = vadd.f32 %v7132, %v7424
        %v7426 = vpop.f32.mrf.mxu0
        %7427 = vmatprep.mubr.bf16.mxu0 0
        %7428 = vmatmul.mubr.bf16.gmra.mxu0 %v7229
        %v7429 = vpop.f32.mrf.mxu0
        %v7430 = vpop.f32.mrf.mxu0
        %v7431 = vpop.f32.mrf.mxu0
        %v7432 = vadd.f32 %v7139, %v7431
        %v7433 = vpop.f32.mrf.mxu0
        %7434 = vmatprep.mubr.bf16.mxu0 0
        %7435 = vmatmul.mubr.bf16.gmra.mxu0 %v7231
        %v7436 = vpop.f32.mrf.mxu0
        %v7437 = vadd.f32 %v7144, %v7436
        %v7438 = vpop.f32.mrf.mxu0
        %v7439 = vpop.f32.mrf.mxu0
        %v7440 = vpop.f32.mrf.mxu0
        %7441 = vdwg.mxu0
        %v7443 = vshll.u32 %v6238, 16
        %v7445 = vrot.slane %v7443, 1
        %v7446 = vsel %vm1366, %v6724, %v7445
        %v7447 = vshrl.u32 %v6238, 16
        %v7449 = vor.u32 %v7447, %v7445
        %v7451 = vshll.u32 %v6239, 16
        %v7453 = vrot.slane %v7451, 1
        %v7454 = vsel %vm1366, %v7449, %v7453
        %7455 = vrot.lane.b32.xlu0 %v7446, 32
        %v7456 = vpop.permute.xlu0 %7455
        %7457 = vrot.lane.b32.xlu0 %v7454, 32
        %v7458 = vpop.permute.xlu0 %7457
        %v7461 = vrot.slane %v6238, 1
        %v7462 = vsel %vm1460, %v6730, %v7461
        %v7463 = vrot.slane %v6239, 1
        %v7464 = vsel %vm1460, %v7461, %v7463
        %7465 = vrot.lane.b32.xlu0 %v7462, 64
        %v7466 = vpop.permute.xlu0 %7465
        %7467 = vrot.lane.b32.xlu0 %v7464, 64
        %v7468 = vpop.permute.xlu0 %7467
        %v7470 = vsel %vm787, %v6237, %v7456
        %v7472 = vsel %vm787, %v6238, %v7458
        %v7474 = vsel %vm765, %v7470, %v7466
        %v7476 = vsel %vm765, %v7472, %v7468
        %s7477 = scalar_lea.vmem %s16, 96
        %v7478 = vld [vmem:[%s7477] sm:$0xf]
        %v7479 = vld [vmem:[%s7477 + $0x4] sm:$0xf]
        %v7480 = vld [vmem:[%s7477 + $0x8] sm:$0xf]
        %v7481 = vld [vmem:[%s7477 + $0xc] sm:$0xf]
        %v7482 = vld [vmem:[%s7477 + $0x10] sm:$0xf]
        %v7483 = vld [vmem:[%s7477 + $0x14] sm:$0xf]
        %v7484 = vld [vmem:[%s7477 + $0x18] sm:$0xf]
        %v7485 = vld [vmem:[%s7477 + $0x1c] sm:$0xf]
        %v7486 = vld [vmem:[%s7477 + $0x20] sm:$0xf]
        %v7487 = vld [vmem:[%s7477 + $0x24] sm:$0xf]
        %v7488 = vld [vmem:[%s7477 + $0x28] sm:$0xf]
        %v7489 = vld [vmem:[%s7477 + $0x2c] sm:$0xf]
        %v7502 = vunpack.c.l.b16 %v7478
        %v7503 = vunpack.c.l.b16 %v7479
        %v7504 = vunpack.c.l.b16 %v7480
        %v7505 = vunpack.c.l.b16 %v7481
        %v7506 = vunpack.c.l.b16 %v7482
        %v7507 = vunpack.c.l.b16 %v7483
        %v7508 = vunpack.c.l.b16 %v7484
        %v7509 = vunpack.c.l.b16 %v7485
        %v7510 = vunpack.c.l.b16 %v7486
        %v7511 = vunpack.c.l.b16 %v7487
        %v7512 = vunpack.c.l.b16 %v7488
        %v7513 = vunpack.c.l.b16 %v7489
        %v7514 = vpack.c.b16 %v7503, %v7502
        %v7515 = vpack.c.b16 %v7505, %v7504
        %v7516 = vpack.c.b16 %v7507, %v7506
        %v7517 = vpack.c.b16 %v7509, %v7508
        %v7518 = vpack.c.b16 %v7511, %v7510
        %v7519 = vpack.c.b16 %v7513, %v7512
        %v7526 = vsel %vm6867, %v6741, 0
        %v7528 = vsel %vm6867, %v7474, 0
        %v7530 = vsel %vm6867, %v7476, 0
        %7532 = vmatprep.subr.bf16.mxu0 0
        %7533 = vmatpush1.bf16.msra.mxu0 0
        %7534 = vmatprep.subr.bf16.mxu0 0
        %7535 = vmatpush1.bf16.msra.mxu0 0
        %7536 = vmatprep.subr.bf16.mxu0 0
        %7537 = vmatpush1.bf16.msra.mxu0 %v7519
        %7538 = vmatprep.subr.bf16.mxu0 0
        %7539 = vmatpush1.bf16.msra.mxu0 %v7518
        %7540 = vmatprep.subr.bf16.mxu0 0
        %7541 = vmatpush1.bf16.msra.mxu0 %v7517
        %7542 = vmatprep.subr.bf16.mxu0 0
        %7543 = vmatpush1.bf16.msra.mxu0 %v7516
        %7544 = vmatprep.subr.bf16.mxu0 0
        %7545 = vmatpush1.bf16.msra.mxu0 %v7515
        %7546 = vmatprep.subr.bf16.mxu0 0
        %7547 = vmatpush1.bf16.msra.mxu0 %v7514
        %7548 = vmatprep.subr.bf16.mxu0 0
        %7549 = vmatpush2.bf16.msra.mxu0 0
        %7550 = vmatprep.subr.bf16.mxu0 0
        %7551 = vmatpush2.bf16.msra.mxu0 0
        %7552 = vmatprep.subr.bf16.mxu0 0
        %7553 = vmatpush2.bf16.msra.mxu0 0
        %7554 = vmatprep.subr.bf16.mxu0 0
        %7555 = vmatpush2.bf16.msra.mxu0 0
        %7556 = vmatprep.subr.bf16.mxu0 0
        %7557 = vmatpush2.bf16.msra.mxu0 0
        %7558 = vmatprep.subr.bf16.mxu0 0
        %7559 = vmatpush2.bf16.msra.mxu0 0
        %7560 = vmatprep.subr.bf16.mxu0 0
        %7561 = vmatpush2.bf16.msra.mxu0 0
        %7562 = vmatprep.subr.bf16.mxu0 0
        %7563 = vmatpush2.bf16.msra.mxu0 0
        %7564 = vmatprep.mubr.bf16.mxu0 0
        %7565 = vmatmul.mubr.bf16.gmra.mxu0 %v7191
        %v7566 = vpop.f32.mrf.mxu0
        %v7567 = vadd.f32 0.0, %v7566
        %v7568 = vpop.f32.mrf.mxu0
        %v7569 = vpop.f32.mrf.mxu0
        %v7570 = vadd.f32 0.0, %v7569
        %v7571 = vpop.f32.mrf.mxu0
        %7572 = vmatprep.mubr.bf16.mxu0 0
        %7573 = vmatmul.mubr.bf16.gmra.mxu0 %v7193
        %v7574 = vpop.f32.mrf.mxu0
        %v7575 = vpop.f32.mrf.mxu0
        %v7576 = vpop.f32.mrf.mxu0
        %v7577 = vadd.f32 0.0, %v7576
        %v7578 = vpop.f32.mrf.mxu0
        %7579 = vmatprep.mubr.bf16.mxu0 0
        %7580 = vmatmul.mubr.bf16.gmra.mxu0 %v7195
        %v7581 = vpop.f32.mrf.mxu0
        %v7582 = vadd.f32 0.0, %v7581
        %v7583 = vpop.f32.mrf.mxu0
        %v7584 = vpop.f32.mrf.mxu0
        %v7585 = vpop.f32.mrf.mxu0
        %7586 = vmatprep.mubr.bf16.mxu0 0
        %7587 = vmatmul.mubr.bf16.gmra.mxu0 %v7197
        %v7588 = vpop.f32.mrf.mxu0
        %v7589 = vadd.f32 0.0, %v7588
        %v7590 = vpop.f32.mrf.mxu0
        %v7591 = vpop.f32.mrf.mxu0
        %v7592 = vadd.f32 0.0, %v7591
        %v7593 = vpop.f32.mrf.mxu0
        %7594 = vmatprep.mubr.bf16.mxu0 0
        %7595 = vmatmul.mubr.bf16.gmra.mxu0 %v7199
        %v7596 = vpop.f32.mrf.mxu0
        %v7597 = vpop.f32.mrf.mxu0
        %v7598 = vpop.f32.mrf.mxu0
        %v7599 = vadd.f32 0.0, %v7598
        %v7600 = vpop.f32.mrf.mxu0
        %7601 = vmatprep.mubr.bf16.mxu0 0
        %7602 = vmatmul.mubr.bf16.gmra.mxu0 %v7201
        %v7603 = vpop.f32.mrf.mxu0
        %v7604 = vadd.f32 0.0, %v7603
        %v7605 = vpop.f32.mrf.mxu0
        %v7606 = vpop.f32.mrf.mxu0
        %v7607 = vpop.f32.mrf.mxu0
        %7608 = vmatprep.mubr.bf16.mxu0 0
        %7609 = vmatmul.mubr.bf16.gmra.mxu0 %v7203
        %v7610 = vpop.f32.mrf.mxu0
        %v7611 = vadd.f32 0.0, %v7610
        %v7612 = vpop.f32.mrf.mxu0
        %v7613 = vpop.f32.mrf.mxu0
        %v7614 = vadd.f32 0.0, %v7613
        %v7615 = vpop.f32.mrf.mxu0
        %7616 = vmatprep.mubr.bf16.mxu0 0
        %7617 = vmatmul.mubr.bf16.gmra.mxu0 %v7205
        %v7618 = vpop.f32.mrf.mxu0
        %v7619 = vpop.f32.mrf.mxu0
        %v7620 = vpop.f32.mrf.mxu0
        %v7621 = vadd.f32 0.0, %v7620
        %v7622 = vpop.f32.mrf.mxu0
        %7623 = vmatprep.mubr.bf16.mxu0 0
        %7624 = vmatmul.mubr.bf16.gmra.mxu0 %v7207
        %v7625 = vpop.f32.mrf.mxu0
        %v7626 = vadd.f32 0.0, %v7625
        %v7627 = vpop.f32.mrf.mxu0
        %v7628 = vpop.f32.mrf.mxu0
        %v7629 = vpop.f32.mrf.mxu0
        %7630 = vmatprep.mubr.bf16.mxu0 0
        %7631 = vmatmul.mubr.bf16.gmra.mxu0 %v7209
        %v7632 = vpop.f32.mrf.mxu0
        %v7633 = vadd.f32 0.0, %v7632
        %v7634 = vpop.f32.mrf.mxu0
        %v7635 = vpop.f32.mrf.mxu0
        %v7636 = vadd.f32 0.0, %v7635
        %v7637 = vpop.f32.mrf.mxu0
        %7638 = vmatprep.mubr.bf16.mxu0 0
        %7639 = vmatmul.mubr.bf16.gmra.mxu0 %v7211
        %v7640 = vpop.f32.mrf.mxu0
        %v7641 = vpop.f32.mrf.mxu0
        %v7642 = vpop.f32.mrf.mxu0
        %v7643 = vadd.f32 0.0, %v7642
        %v7644 = vpop.f32.mrf.mxu0
        %7645 = vmatprep.mubr.bf16.mxu0 0
        %7646 = vmatmul.mubr.bf16.gmra.mxu0 %v7213
        %v7647 = vpop.f32.mrf.mxu0
        %v7648 = vadd.f32 0.0, %v7647
        %v7649 = vpop.f32.mrf.mxu0
        %v7650 = vpop.f32.mrf.mxu0
        %v7651 = vpop.f32.mrf.mxu0
        %7652 = vmatprep.mubr.bf16.mxu0 0
        %7653 = vmatmul.mubr.bf16.gmra.mxu0 %v7215
        %v7654 = vpop.f32.mrf.mxu0
        %v7655 = vadd.f32 0.0, %v7654
        %v7656 = vpop.f32.mrf.mxu0
        %v7657 = vpop.f32.mrf.mxu0
        %v7658 = vadd.f32 0.0, %v7657
        %v7659 = vpop.f32.mrf.mxu0
        %7660 = vmatprep.mubr.bf16.mxu0 0
        %7661 = vmatmul.mubr.bf16.gmra.mxu0 %v7217
        %v7662 = vpop.f32.mrf.mxu0
        %v7663 = vpop.f32.mrf.mxu0
        %v7664 = vpop.f32.mrf.mxu0
        %v7665 = vadd.f32 0.0, %v7664
        %v7666 = vpop.f32.mrf.mxu0
        %7667 = vmatprep.mubr.bf16.mxu0 0
        %7668 = vmatmul.mubr.bf16.gmra.mxu0 %v7219
        %v7669 = vpop.f32.mrf.mxu0
        %v7670 = vadd.f32 0.0, %v7669
        %v7671 = vpop.f32.mrf.mxu0
        %v7672 = vpop.f32.mrf.mxu0
        %v7673 = vpop.f32.mrf.mxu0
        %7674 = vmatprep.mubr.bf16.mxu0 0
        %7675 = vmatmul.mubr.bf16.gmra.mxu0 %v7221
        %v7676 = vpop.f32.mrf.mxu0
        %v7677 = vadd.f32 0.0, %v7676
        %v7678 = vpop.f32.mrf.mxu0
        %v7679 = vpop.f32.mrf.mxu0
        %v7680 = vadd.f32 0.0, %v7679
        %v7681 = vpop.f32.mrf.mxu0
        %7682 = vmatprep.mubr.bf16.mxu0 0
        %7683 = vmatmul.mubr.bf16.gmra.mxu0 %v7223
        %v7684 = vpop.f32.mrf.mxu0
        %v7685 = vpop.f32.mrf.mxu0
        %v7686 = vpop.f32.mrf.mxu0
        %v7687 = vadd.f32 0.0, %v7686
        %v7688 = vpop.f32.mrf.mxu0
        %7689 = vmatprep.mubr.bf16.mxu0 0
        %7690 = vmatmul.mubr.bf16.gmra.mxu0 %v7225
        %v7691 = vpop.f32.mrf.mxu0
        %v7692 = vadd.f32 0.0, %v7691
        %v7693 = vpop.f32.mrf.mxu0
        %v7694 = vpop.f32.mrf.mxu0
        %v7695 = vpop.f32.mrf.mxu0
        %7696 = vmatprep.mubr.bf16.mxu0 0
        %7697 = vmatmul.mubr.bf16.gmra.mxu0 %v7227
        %v7698 = vpop.f32.mrf.mxu0
        %v7699 = vadd.f32 0.0, %v7698
        %v7700 = vpop.f32.mrf.mxu0
        %v7701 = vpop.f32.mrf.mxu0
        %v7702 = vadd.f32 0.0, %v7701
        %v7703 = vpop.f32.mrf.mxu0
        %7704 = vmatprep.mubr.bf16.mxu0 0
        %7705 = vmatmul.mubr.bf16.gmra.mxu0 %v7229
        %v7706 = vpop.f32.mrf.mxu0
        %v7707 = vpop.f32.mrf.mxu0
        %v7708 = vpop.f32.mrf.mxu0
        %v7709 = vadd.f32 0.0, %v7708
        %v7710 = vpop.f32.mrf.mxu0
        %7711 = vmatprep.mubr.bf16.mxu0 0
        %7712 = vmatmul.mubr.bf16.gmra.mxu0 %v7231
        %v7713 = vpop.f32.mrf.mxu0
        %v7714 = vadd.f32 0.0, %v7713
        %v7715 = vpop.f32.mrf.mxu0
        %v7716 = vpop.f32.mrf.mxu0
        %v7717 = vpop.f32.mrf.mxu0
        %7718 = vmatprep.mubr.bf16.mxu0 0
        %7719 = vmatmul.mubr.bf16.gmra.mxu0 %v7526
        %v7720 = vpop.f32.mrf.mxu0
        %v7721 = vadd.f32 0.0, %v7720
        %v7722 = vpop.f32.mrf.mxu0
        %v7723 = vpop.f32.mrf.mxu0
        %v7724 = vadd.f32 0.0, %v7723
        %v7725 = vpop.f32.mrf.mxu0
        %7726 = vmatprep.mubr.bf16.mxu0 0
        %7727 = vmatmul.mubr.bf16.gmra.mxu0 %v7528
        %v7728 = vpop.f32.mrf.mxu0
        %v7729 = vpop.f32.mrf.mxu0
        %v7730 = vpop.f32.mrf.mxu0
        %v7731 = vadd.f32 0.0, %v7730
        %v7732 = vpop.f32.mrf.mxu0
        %7733 = vmatprep.mubr.bf16.mxu0 0
        %7734 = vmatmul.mubr.bf16.gmra.mxu0 %v7530
        %v7735 = vpop.f32.mrf.mxu0
        %v7736 = vadd.f32 0.0, %v7735
        %v7737 = vpop.f32.mrf.mxu0
        %v7738 = vpop.f32.mrf.mxu0
        %v7739 = vpop.f32.mrf.mxu0
        %7740 = vdwg.mxu0
        %v7741 = vadd.f32 %v7268, %v7567
        %v7742 = vadd.f32 %v7271, %v7570
        %v7743 = vadd.f32 %v7278, %v7577
        %v7744 = vadd.f32 %v7283, %v7582
        %v7745 = vadd.f32 %v7290, %v7589
        %v7746 = vadd.f32 %v7293, %v7592
        %v7747 = vadd.f32 %v7300, %v7599
        %v7748 = vadd.f32 %v7305, %v7604
        %v7749 = vadd.f32 %v7312, %v7611
        %v7750 = vadd.f32 %v7315, %v7614
        %v7751 = vadd.f32 %v7322, %v7621
        %v7752 = vadd.f32 %v7327, %v7626
        %v7753 = vadd.f32 %v7334, %v7633
        %v7754 = vadd.f32 %v7337, %v7636
        %v7755 = vadd.f32 %v7344, %v7643
        %v7756 = vadd.f32 %v7349, %v7648
        %v7757 = vadd.f32 %v7356, %v7655
        %v7758 = vadd.f32 %v7359, %v7658
        %v7759 = vadd.f32 %v7366, %v7665
        %v7760 = vadd.f32 %v7371, %v7670
        %v7761 = vadd.f32 %v7378, %v7677
        %v7762 = vadd.f32 %v7381, %v7680
        %v7763 = vadd.f32 %v7388, %v7687
        %v7764 = vadd.f32 %v7393, %v7692
        %v7765 = vadd.f32 %v7400, %v7699
        %v7766 = vadd.f32 %v7403, %v7702
        %v7767 = vadd.f32 %v7410, %v7709
        %v7768 = vadd.f32 %v7415, %v7714
        %v7769 = vadd.f32 %v7422, %v7721
        %v7770 = vadd.f32 %v7425, %v7724
        %v7771 = vadd.f32 %v7432, %v7731
        %v7772 = vadd.f32 %v7437, %v7736
        %v7773 = vld [vmem:[%s17] sm:$0xf]
        %v7775 = vsel %vm5399, %v7773, 0
        %7777 = vmatprep.subr.bf16.mxu0 0
        %7778 = vmatpush1.bf16.msra.mxu0 0
        %7779 = vmatprep.subr.bf16.mxu0 0
        %7780 = vmatpush1.bf16.msra.mxu0 0
        %7781 = vmatprep.subr.bf16.mxu0 0
        %7782 = vmatpush1.bf16.msra.mxu0 0
        %7783 = vmatprep.subr.bf16.mxu0 0
        %7784 = vmatpush1.bf16.msra.mxu0 0
        %7785 = vmatprep.subr.bf16.mxu0 0
        %7786 = vmatpush1.bf16.msra.mxu0 0
        %7787 = vmatprep.subr.bf16.mxu0 0
        %7788 = vmatpush1.bf16.msra.mxu0 0
        %7789 = vmatprep.subr.bf16.mxu0 0
        %7790 = vmatpush1.bf16.msra.mxu0 0
        %7791 = vmatprep.subr.bf16.mxu0 0
        %7792 = vmatpush1.bf16.msra.mxu0 %v7775
        %7793 = vmatprep.subr.bf16.mxu0 0
        %7794 = vmatpush2.bf16.msra.mxu0 0
        %7795 = vmatprep.subr.bf16.mxu0 0
        %7796 = vmatpush2.bf16.msra.mxu0 0
        %7797 = vmatprep.subr.bf16.mxu0 0
        %7798 = vmatpush2.bf16.msra.mxu0 0
        %7799 = vmatprep.subr.bf16.mxu0 0
        %7800 = vmatpush2.bf16.msra.mxu0 0
        %7801 = vmatprep.subr.bf16.mxu0 0
        %7802 = vmatpush2.bf16.msra.mxu0 0
        %7803 = vmatprep.subr.bf16.mxu0 0
        %7804 = vmatpush2.bf16.msra.mxu0 0
        %7805 = vmatprep.subr.bf16.mxu0 0
        %7806 = vmatpush2.bf16.msra.mxu0 0
        %7807 = vmatprep.subr.bf16.mxu0 0
        %7808 = vmatpush2.bf16.msra.mxu0 0
        %7809 = vmatprep.mubr.bf16.mxu0 0
        %7810 = vmatmul.mubr.bf16.gmra.mxu0 %v5352
        %v7811 = vpop.f32.mrf.mxu0
        %v7812 = vadd.f32 0.0, %v7811
        %v7813 = vpop.f32.mrf.mxu0
        %v7814 = vpop.f32.mrf.mxu0
        %v7815 = vadd.f32 0.0, %v7814
        %v7816 = vpop.f32.mrf.mxu0
        %7817 = vmatprep.mubr.bf16.mxu0 0
        %7818 = vmatmul.mubr.bf16.gmra.mxu0 %v5355
        %v7819 = vpop.f32.mrf.mxu0
        %v7820 = vadd.f32 0.0, %v7819
        %v7821 = vpop.f32.mrf.mxu0
        %v7822 = vpop.f32.mrf.mxu0
        %v7823 = vadd.f32 0.0, %v7822
        %v7824 = vpop.f32.mrf.mxu0
        %7825 = vmatprep.mubr.bf16.mxu0 0
        %7826 = vmatmul.mubr.bf16.gmra.mxu0 %v5358
        %v7827 = vpop.f32.mrf.mxu0
        %v7828 = vadd.f32 0.0, %v7827
        %v7829 = vpop.f32.mrf.mxu0
        %v7830 = vpop.f32.mrf.mxu0
        %v7831 = vadd.f32 0.0, %v7830
        %v7832 = vpop.f32.mrf.mxu0
        %7833 = vmatprep.mubr.bf16.mxu0 0
        %7834 = vmatmul.mubr.bf16.gmra.mxu0 %v5361
        %v7835 = vpop.f32.mrf.mxu0
        %v7836 = vadd.f32 0.0, %v7835
        %v7837 = vpop.f32.mrf.mxu0
        %v7838 = vpop.f32.mrf.mxu0
        %v7839 = vadd.f32 0.0, %v7838
        %v7840 = vpop.f32.mrf.mxu0
        %7841 = vmatprep.mubr.bf16.mxu0 0
        %7842 = vmatmul.mubr.bf16.gmra.mxu0 %v5364
        %v7843 = vpop.f32.mrf.mxu0
        %v7844 = vadd.f32 0.0, %v7843
        %v7845 = vpop.f32.mrf.mxu0
        %v7846 = vpop.f32.mrf.mxu0
        %v7847 = vadd.f32 0.0, %v7846
        %v7848 = vpop.f32.mrf.mxu0
        %7849 = vmatprep.mubr.bf16.mxu0 0
        %7850 = vmatmul.mubr.bf16.gmra.mxu0 %v5367
        %v7851 = vpop.f32.mrf.mxu0
        %v7852 = vadd.f32 0.0, %v7851
        %v7853 = vpop.f32.mrf.mxu0
        %v7854 = vpop.f32.mrf.mxu0
        %v7855 = vadd.f32 0.0, %v7854
        %v7856 = vpop.f32.mrf.mxu0
        %7857 = vmatprep.mubr.bf16.mxu0 0
        %7858 = vmatmul.mubr.bf16.gmra.mxu0 %v5370
        %v7859 = vpop.f32.mrf.mxu0
        %v7860 = vadd.f32 0.0, %v7859
        %v7861 = vpop.f32.mrf.mxu0
        %v7862 = vpop.f32.mrf.mxu0
        %v7863 = vadd.f32 0.0, %v7862
        %v7864 = vpop.f32.mrf.mxu0
        %7865 = vmatprep.mubr.bf16.mxu0 0
        %7866 = vmatmul.mubr.bf16.gmra.mxu0 %v5373
        %v7867 = vpop.f32.mrf.mxu0
        %v7868 = vadd.f32 0.0, %v7867
        %v7869 = vpop.f32.mrf.mxu0
        %v7870 = vpop.f32.mrf.mxu0
        %v7871 = vadd.f32 0.0, %v7870
        %v7872 = vpop.f32.mrf.mxu0
        %7873 = vmatprep.mubr.bf16.mxu0 0
        %7874 = vmatmul.mubr.bf16.gmra.mxu0 %v5376
        %v7875 = vpop.f32.mrf.mxu0
        %v7876 = vadd.f32 0.0, %v7875
        %v7877 = vpop.f32.mrf.mxu0
        %v7878 = vpop.f32.mrf.mxu0
        %v7879 = vadd.f32 0.0, %v7878
        %v7880 = vpop.f32.mrf.mxu0
        %7881 = vmatprep.mubr.bf16.mxu0 0
        %7882 = vmatmul.mubr.bf16.gmra.mxu0 %v5379
        %v7883 = vpop.f32.mrf.mxu0
        %v7884 = vadd.f32 0.0, %v7883
        %v7885 = vpop.f32.mrf.mxu0
        %v7886 = vpop.f32.mrf.mxu0
        %v7887 = vadd.f32 0.0, %v7886
        %v7888 = vpop.f32.mrf.mxu0
        %7889 = vmatprep.mubr.bf16.mxu0 0
        %7890 = vmatmul.mubr.bf16.gmra.mxu0 %v5382
        %v7891 = vpop.f32.mrf.mxu0
        %v7892 = vadd.f32 0.0, %v7891
        %v7893 = vpop.f32.mrf.mxu0
        %v7894 = vpop.f32.mrf.mxu0
        %v7895 = vadd.f32 0.0, %v7894
        %v7896 = vpop.f32.mrf.mxu0
        %7897 = vmatprep.mubr.bf16.mxu0 0
        %7898 = vmatmul.mubr.bf16.gmra.mxu0 %v5385
        %v7899 = vpop.f32.mrf.mxu0
        %v7900 = vadd.f32 0.0, %v7899
        %v7901 = vpop.f32.mrf.mxu0
        %v7902 = vpop.f32.mrf.mxu0
        %v7903 = vadd.f32 0.0, %v7902
        %v7904 = vpop.f32.mrf.mxu0
        %7905 = vmatprep.mubr.bf16.mxu0 0
        %7906 = vmatmul.mubr.bf16.gmra.mxu0 %v5388
        %v7907 = vpop.f32.mrf.mxu0
        %v7908 = vadd.f32 0.0, %v7907
        %v7909 = vpop.f32.mrf.mxu0
        %v7910 = vpop.f32.mrf.mxu0
        %v7911 = vadd.f32 0.0, %v7910
        %v7912 = vpop.f32.mrf.mxu0
        %7913 = vmatprep.mubr.bf16.mxu0 0
        %7914 = vmatmul.mubr.bf16.gmra.mxu0 %v5391
        %v7915 = vpop.f32.mrf.mxu0
        %v7916 = vadd.f32 0.0, %v7915
        %v7917 = vpop.f32.mrf.mxu0
        %v7918 = vpop.f32.mrf.mxu0
        %v7919 = vadd.f32 0.0, %v7918
        %v7920 = vpop.f32.mrf.mxu0
        %7921 = vmatprep.mubr.bf16.mxu0 0
        %7922 = vmatmul.mubr.bf16.gmra.mxu0 %v5394
        %v7923 = vpop.f32.mrf.mxu0
        %v7924 = vadd.f32 0.0, %v7923
        %v7925 = vpop.f32.mrf.mxu0
        %v7926 = vpop.f32.mrf.mxu0
        %v7927 = vadd.f32 0.0, %v7926
        %v7928 = vpop.f32.mrf.mxu0
        %7929 = vmatprep.mubr.bf16.mxu0 0
        %7930 = vmatmul.mubr.bf16.gmra.mxu0 %v5397
        %v7931 = vpop.f32.mrf.mxu0
        %v7932 = vadd.f32 0.0, %v7931
        %v7933 = vpop.f32.mrf.mxu0
        %v7934 = vpop.f32.mrf.mxu0
        %v7935 = vadd.f32 0.0, %v7934
        %v7936 = vpop.f32.mrf.mxu0
        %7937 = vdwg.mxu0
        %v7938 = vld [vmem:[%s19] sm:$0xff]
        %v7939 = vld [vmem:[%s19 + $0x8] sm:$0xff]
        %v7940 = vld [vmem:[%s19 + $0x10] sm:$0xff]
        %v7941 = vld [vmem:[%s19 + $0x18] sm:$0xff]
        %v7942 = vld [vmem:[%s20] sm:$0x1]
        %7943 = vmatprep.subr.mxu0 0.0
        %7944 = vmatpush1.msra.mxu0 0.0
        %7945 = vmatprep.subr.mxu0 0.0
        %7946 = vmatpush1.msra.mxu0 0.0
        %7947 = vmatprep.subr.mxu0 0.0
        %7948 = vmatpush1.msra.mxu0 0.0
        %7949 = vmatprep.subr.mxu0 0.0
        %7950 = vmatpush1.msra.mxu0 0.0
        %7951 = vmatprep.subr.mxu0 0.0
        %7952 = vmatpush1.msra.mxu0 0.0
        %7953 = vmatprep.subr.mxu0 0.0
        %7954 = vmatpush1.msra.mxu0 0.0
        %7955 = vmatprep.subr.mxu0 0.0
        %7956 = vmatpush1.msra.mxu0 0.0
        %7957 = vmatprep.subr.mxu0 0.0
        %7958 = vmatpush1.msra.mxu0 0.0
        %7959 = vmatprep.subr.mxu0 0.0
        %7960 = vmatpush1.msra.mxu0 0.0
        %7961 = vmatprep.subr.mxu0 0.0
        %7962 = vmatpush1.msra.mxu0 0.0
        %7963 = vmatprep.subr.mxu0 0.0
        %7964 = vmatpush1.msra.mxu0 0.0
        %7965 = vmatprep.subr.mxu0 0.0
        %7966 = vmatpush1.msra.mxu0 0.0
        %7967 = vmatprep.subr.mxu0 0.0
        %7968 = vmatpush1.msra.mxu0 %v7941
        %7969 = vmatprep.subr.mxu0 0.0
        %7970 = vmatpush1.msra.mxu0 %v7940
        %7971 = vmatprep.subr.mxu0 0.0
        %7972 = vmatpush1.msra.mxu0 %v7939
        %7973 = vmatprep.subr.mxu0 0.0
        %7974 = vmatpush1.msra.mxu0 %v7938
        %7975 = vmatprep.subr.mxu0 0.0
        %7976 = vmatpush2.msra.mxu0 0.0
        %7977 = vmatprep.subr.mxu0 0.0
        %7978 = vmatpush2.msra.mxu0 0.0
        %7979 = vmatprep.subr.mxu0 0.0
        %7980 = vmatpush2.msra.mxu0 0.0
        %7981 = vmatprep.subr.mxu0 0.0
        %7982 = vmatpush2.msra.mxu0 0.0
        %7983 = vmatprep.subr.mxu0 0.0
        %7984 = vmatpush2.msra.mxu0 0.0
        %7985 = vmatprep.subr.mxu0 0.0
        %7986 = vmatpush2.msra.mxu0 0.0
        %7987 = vmatprep.subr.mxu0 0.0
        %7988 = vmatpush2.msra.mxu0 0.0
        %7989 = vmatprep.subr.mxu0 0.0
        %7990 = vmatpush2.msra.mxu0 0.0
        %7991 = vmatprep.subr.mxu0 0.0
        %7992 = vmatpush2.msra.mxu0 0.0
        %7993 = vmatprep.subr.mxu0 0.0
        %7994 = vmatpush2.msra.mxu0 0.0
        %7995 = vmatprep.subr.mxu0 0.0
        %7996 = vmatpush2.msra.mxu0 0.0
        %7997 = vmatprep.subr.mxu0 0.0
        %7998 = vmatpush2.msra.mxu0 0.0
        %7999 = vmatprep.subr.mxu0 0.0
        %8000 = vmatpush2.msra.mxu0 0.0
        %8001 = vmatprep.subr.mxu0 0.0
        %8002 = vmatpush2.msra.mxu0 0.0
        %8003 = vmatprep.subr.mxu0 0.0
        %8004 = vmatpush2.msra.mxu0 0.0
        %8005 = vmatprep.subr.mxu0 0.0
        %8006 = vmatpush2.msra.mxu0 0.0
        %8007 = vmatprep.mubr.f32.mxu0 0.0
        %8008 = vmatmul.mubr.f32.gmra.mxu0 %v5570
        %v8009 = vpop.f32.mrf.mxu0
        %v8010 = vadd.f32 %v7942, %v8009
        %v8011 = vpop.f32.mrf.mxu0
        %8012 = vdwg.mxu0
        %v8013 = vld [vmem:[%s18] sm:$0x1]
        %v8014 = vadd.f32 %v7741, %v7812
        %v8015 = vadd.f32 %v7742, %v7815
        %v8016 = vadd.f32 %v7743, %v7820
        %v8017 = vadd.f32 %v7744, %v7823
        %v8018 = vadd.f32 %v7745, %v7828
        %v8019 = vadd.f32 %v7746, %v7831
        %v8020 = vadd.f32 %v7747, %v7836
        %v8021 = vadd.f32 %v7748, %v7839
        %v8022 = vadd.f32 %v7749, %v7844
        %v8023 = vadd.f32 %v7750, %v7847
        %v8024 = vadd.f32 %v7751, %v7852
        %v8025 = vadd.f32 %v7752, %v7855
        %v8026 = vadd.f32 %v7753, %v7860
        %v8027 = vadd.f32 %v7754, %v7863
        %v8028 = vadd.f32 %v7755, %v7868
        %v8029 = vadd.f32 %v7756, %v7871
        %v8030 = vadd.f32 %v7757, %v7876
        %v8031 = vadd.f32 %v7758, %v7879
        %v8032 = vadd.f32 %v7759, %v7884
        %v8033 = vadd.f32 %v7760, %v7887
        %v8034 = vadd.f32 %v7761, %v7892
        %v8035 = vadd.f32 %v7762, %v7895
        %v8036 = vadd.f32 %v7763, %v7900
        %v8037 = vadd.f32 %v7764, %v7903
        %v8038 = vadd.f32 %v7765, %v7908
        %v8039 = vadd.f32 %v7766, %v7911
        %v8040 = vadd.f32 %v7767, %v7916
        %v8041 = vadd.f32 %v7768, %v7919
        %v8042 = vadd.f32 %v7769, %v7924
        %v8043 = vadd.f32 %v7770, %v7927
        %v8044 = vadd.f32 %v7771, %v7932
        %v8045 = vadd.f32 %v7772, %v7935
        %v8047 = vlaneseq
        %v8048 = vshrl.u32 %v8047, 7
        %v8049 = vsub.s32 0, %v8048
        %v8050 = vrot.slane %v8013, %v8049
        %v8052 = vadd.f32 %v8014, %v8050
        %v8053 = vadd.f32 %v8015, %v8050
        %v8054 = vadd.f32 %v8016, %v8050
        %v8055 = vadd.f32 %v8017, %v8050
        %v8056 = vadd.f32 %v8018, %v8050
        %v8057 = vadd.f32 %v8019, %v8050
        %v8058 = vadd.f32 %v8020, %v8050
        %v8059 = vadd.f32 %v8021, %v8050
        %v8060 = vadd.f32 %v8022, %v8050
        %v8061 = vadd.f32 %v8023, %v8050
        %v8062 = vadd.f32 %v8024, %v8050
        %v8063 = vadd.f32 %v8025, %v8050
        %v8064 = vadd.f32 %v8026, %v8050
        %v8065 = vadd.f32 %v8027, %v8050
        %v8066 = vadd.f32 %v8028, %v8050
        %v8067 = vadd.f32 %v8029, %v8050
        %v8068 = vadd.f32 %v8030, %v8050
        %v8069 = vadd.f32 %v8031, %v8050
        %v8070 = vadd.f32 %v8032, %v8050
        %v8071 = vadd.f32 %v8033, %v8050
        %v8072 = vadd.f32 %v8034, %v8050
        %v8073 = vadd.f32 %v8035, %v8050
        %v8074 = vadd.f32 %v8036, %v8050
        %v8075 = vadd.f32 %v8037, %v8050
        %v8076 = vadd.f32 %v8038, %v8050
        %v8077 = vadd.f32 %v8039, %v8050
        %v8078 = vadd.f32 %v8040, %v8050
        %v8079 = vadd.f32 %v8041, %v8050
        %v8080 = vadd.f32 %v8042, %v8050
        %v8081 = vadd.f32 %v8043, %v8050
        %v8082 = vadd.f32 %v8044, %v8050
        %v8083 = vadd.f32 %v8045, %v8050
        %vm8084 = vcmp.ge.f32.partialorder %v8052, 0.0
        %vm8085 = vcmp.ge.f32.partialorder %v8053, 0.0
        %vm8086 = vcmp.ge.f32.partialorder %v8054, 0.0
        %vm8087 = vcmp.ge.f32.partialorder %v8055, 0.0
        %vm8088 = vcmp.ge.f32.partialorder %v8056, 0.0
        %vm8089 = vcmp.ge.f32.partialorder %v8057, 0.0
        %vm8090 = vcmp.ge.f32.partialorder %v8058, 0.0
        %vm8091 = vcmp.ge.f32.partialorder %v8059, 0.0
        %vm8092 = vcmp.ge.f32.partialorder %v8060, 0.0
        %vm8093 = vcmp.ge.f32.partialorder %v8061, 0.0
        %vm8094 = vcmp.ge.f32.partialorder %v8062, 0.0
        %vm8095 = vcmp.ge.f32.partialorder %v8063, 0.0
        %vm8096 = vcmp.ge.f32.partialorder %v8064, 0.0
        %vm8097 = vcmp.ge.f32.partialorder %v8065, 0.0
        %vm8098 = vcmp.ge.f32.partialorder %v8066, 0.0
        %vm8099 = vcmp.ge.f32.partialorder %v8067, 0.0
        %vm8100 = vcmp.ge.f32.partialorder %v8068, 0.0
        %vm8101 = vcmp.ge.f32.partialorder %v8069, 0.0
        %vm8102 = vcmp.ge.f32.partialorder %v8070, 0.0
        %vm8103 = vcmp.ge.f32.partialorder %v8071, 0.0
        %vm8104 = vcmp.ge.f32.partialorder %v8072, 0.0
        %vm8105 = vcmp.ge.f32.partialorder %v8073, 0.0
        %vm8106 = vcmp.ge.f32.partialorder %v8074, 0.0
        %vm8107 = vcmp.ge.f32.partialorder %v8075, 0.0
        %vm8108 = vcmp.ge.f32.partialorder %v8076, 0.0
        %vm8109 = vcmp.ge.f32.partialorder %v8077, 0.0
        %vm8110 = vcmp.ge.f32.partialorder %v8078, 0.0
        %vm8111 = vcmp.ge.f32.partialorder %v8079, 0.0
        %vm8112 = vcmp.ge.f32.partialorder %v8080, 0.0
        %vm8113 = vcmp.ge.f32.partialorder %v8081, 0.0
        %vm8114 = vcmp.ge.f32.partialorder %v8082, 0.0
        %vm8115 = vcmp.ge.f32.partialorder %v8083, 0.0
        %v8116 = vmul.f32 %v8052, 0.2
        %v8117 = vmul.f32 %v8053, 0.2
        %v8118 = vmul.f32 %v8054, 0.2
        %v8119 = vmul.f32 %v8055, 0.2
        %v8120 = vmul.f32 %v8056, 0.2
        %v8121 = vmul.f32 %v8057, 0.2
        %v8122 = vmul.f32 %v8058, 0.2
        %v8123 = vmul.f32 %v8059, 0.2
        %v8124 = vmul.f32 %v8060, 0.2
        %v8125 = vmul.f32 %v8061, 0.2
        %v8126 = vmul.f32 %v8062, 0.2
        %v8127 = vmul.f32 %v8063, 0.2
        %v8128 = vmul.f32 %v8064, 0.2
        %v8129 = vmul.f32 %v8065, 0.2
        %v8130 = vmul.f32 %v8066, 0.2
        %v8131 = vmul.f32 %v8067, 0.2
        %v8132 = vmul.f32 %v8068, 0.2
        %v8133 = vmul.f32 %v8069, 0.2
        %v8134 = vmul.f32 %v8070, 0.2
        %v8135 = vmul.f32 %v8071, 0.2
        %v8136 = vmul.f32 %v8072, 0.2
        %v8137 = vmul.f32 %v8073, 0.2
        %v8138 = vmul.f32 %v8074, 0.2
        %v8139 = vmul.f32 %v8075, 0.2
        %v8140 = vmul.f32 %v8076, 0.2
        %v8141 = vmul.f32 %v8077, 0.2
        %v8142 = vmul.f32 %v8078, 0.2
        %v8143 = vmul.f32 %v8079, 0.2
        %v8144 = vmul.f32 %v8080, 0.2
        %v8145 = vmul.f32 %v8081, 0.2
        %v8146 = vmul.f32 %v8082, 0.2
        %v8147 = vmul.f32 %v8083, 0.2
        %v8148 = vsel %vm8084, %v8052, %v8116
        %v8149 = vsel %vm8085, %v8053, %v8117
        %v8150 = vsel %vm8086, %v8054, %v8118
        %v8151 = vsel %vm8087, %v8055, %v8119
        %v8152 = vsel %vm8088, %v8056, %v8120
        %v8153 = vsel %vm8089, %v8057, %v8121
        %v8154 = vsel %vm8090, %v8058, %v8122
        %v8155 = vsel %vm8091, %v8059, %v8123
        %v8156 = vsel %vm8092, %v8060, %v8124
        %v8157 = vsel %vm8093, %v8061, %v8125
        %v8158 = vsel %vm8094, %v8062, %v8126
        %v8159 = vsel %vm8095, %v8063, %v8127
        %v8160 = vsel %vm8096, %v8064, %v8128
        %v8161 = vsel %vm8097, %v8065, %v8129
        %v8162 = vsel %vm8098, %v8066, %v8130
        %v8163 = vsel %vm8099, %v8067, %v8131
        %v8164 = vsel %vm8100, %v8068, %v8132
        %v8165 = vsel %vm8101, %v8069, %v8133
        %v8166 = vsel %vm8102, %v8070, %v8134
        %v8167 = vsel %vm8103, %v8071, %v8135
        %v8168 = vsel %vm8104, %v8072, %v8136
        %v8169 = vsel %vm8105, %v8073, %v8137
        %v8170 = vsel %vm8106, %v8074, %v8138
        %v8171 = vsel %vm8107, %v8075, %v8139
        %v8172 = vsel %vm8108, %v8076, %v8140
        %v8173 = vsel %vm8109, %v8077, %v8141
        %v8174 = vsel %vm8110, %v8078, %v8142
        %v8175 = vsel %vm8111, %v8079, %v8143
        %v8176 = vsel %vm8112, %v8080, %v8144
        %v8177 = vsel %vm8113, %v8081, %v8145
        %v8178 = vsel %vm8114, %v8082, %v8146
        %v8179 = vsel %vm8115, %v8083, %v8147
        %v8180 = vsel %vm787, %v8148, 0.0
        %v8181 = vsel %vm787, %v8149, 0.0
        %v8182 = vadd.f32 %v8180, %v8181
        %v8183 = vsel %vm787, %v8150, 0.0
        %v8184 = vadd.f32 %v8182, %v8183
        %v8185 = vsel %vm787, %v8151, 0.0
        %v8186 = vadd.f32 %v8184, %v8185
        %v8187 = vsel %vm787, %v8152, 0.0
        %v8188 = vadd.f32 %v8186, %v8187
        %v8189 = vsel %vm787, %v8153, 0.0
        %v8190 = vadd.f32 %v8188, %v8189
        %v8191 = vsel %vm787, %v8154, 0.0
        %v8192 = vadd.f32 %v8190, %v8191
        %v8193 = vsel %vm787, %v8155, 0.0
        %v8194 = vadd.f32 %v8192, %v8193
        %v8195 = vsel %vm787, %v8156, 0.0
        %v8196 = vadd.f32 %v8194, %v8195
        %v8197 = vsel %vm787, %v8157, 0.0
        %v8198 = vadd.f32 %v8196, %v8197
        %v8199 = vsel %vm787, %v8158, 0.0
        %v8200 = vadd.f32 %v8198, %v8199
        %v8201 = vsel %vm787, %v8159, 0.0
        %v8202 = vadd.f32 %v8200, %v8201
        %v8203 = vsel %vm787, %v8160, 0.0
        %v8204 = vadd.f32 %v8202, %v8203
        %v8205 = vsel %vm787, %v8161, 0.0
        %v8206 = vadd.f32 %v8204, %v8205
        %v8207 = vsel %vm787, %v8162, 0.0
        %v8208 = vadd.f32 %v8206, %v8207
        %v8209 = vsel %vm787, %v8163, 0.0
        %v8210 = vadd.f32 %v8208, %v8209
        %v8211 = vsel %vm787, %v8164, 0.0
        %v8212 = vadd.f32 %v8210, %v8211
        %v8213 = vsel %vm787, %v8165, 0.0
        %v8214 = vadd.f32 %v8212, %v8213
        %v8215 = vsel %vm787, %v8166, 0.0
        %v8216 = vadd.f32 %v8214, %v8215
        %v8217 = vsel %vm787, %v8167, 0.0
        %v8218 = vadd.f32 %v8216, %v8217
        %v8219 = vsel %vm787, %v8168, 0.0
        %v8220 = vadd.f32 %v8218, %v8219
        %v8221 = vsel %vm787, %v8169, 0.0
        %v8222 = vadd.f32 %v8220, %v8221
        %v8223 = vsel %vm787, %v8170, 0.0
        %v8224 = vadd.f32 %v8222, %v8223
        %v8225 = vsel %vm787, %v8171, 0.0
        %v8226 = vadd.f32 %v8224, %v8225
        %v8227 = vsel %vm787, %v8172, 0.0
        %v8228 = vadd.f32 %v8226, %v8227
        %v8229 = vsel %vm787, %v8173, 0.0
        %v8230 = vadd.f32 %v8228, %v8229
        %v8231 = vsel %vm787, %v8174, 0.0
        %v8232 = vadd.f32 %v8230, %v8231
        %v8233 = vsel %vm787, %v8175, 0.0
        %v8234 = vadd.f32 %v8232, %v8233
        %v8235 = vsel %vm787, %v8176, 0.0
        %v8236 = vadd.f32 %v8234, %v8235
        %v8237 = vsel %vm787, %v8177, 0.0
        %v8238 = vadd.f32 %v8236, %v8237
        %v8239 = vsel %vm787, %v8178, 0.0
        %v8240 = vadd.f32 %v8238, %v8239
        %v8241 = vsel %vm787, %v8179, 0.0
        %v8242 = vadd.f32 %v8240, %v8241
        %v8243 = vrot.slane %v8242, 4
        %v8244 = vadd.f32 %v8242, %v8243
        %v8245 = vrot.slane %v8244, 2
        %v8246 = vadd.f32 %v8244, %v8245
        %v8247 = vrot.slane %v8246, 1
        %v8248 = vadd.f32 %v8246, %v8247
        %v8249 = vmul.f32 %v8248, %v5878
        %v8250 = vsub.f32 %v8148, %v8249
        %v8251 = vsub.f32 %v8149, %v8249
        %v8252 = vsub.f32 %v8150, %v8249
        %v8253 = vsub.f32 %v8151, %v8249
        %v8254 = vsub.f32 %v8152, %v8249
        %v8255 = vsub.f32 %v8153, %v8249
        %v8256 = vsub.f32 %v8154, %v8249
        %v8257 = vsub.f32 %v8155, %v8249
        %v8258 = vsub.f32 %v8156, %v8249
        %v8259 = vsub.f32 %v8157, %v8249
        %v8260 = vsub.f32 %v8158, %v8249
        %v8261 = vsub.f32 %v8159, %v8249
        %v8262 = vsub.f32 %v8160, %v8249
        %v8263 = vsub.f32 %v8161, %v8249
        %v8264 = vsub.f32 %v8162, %v8249
        %v8265 = vsub.f32 %v8163, %v8249
        %v8266 = vsub.f32 %v8164, %v8249
        %v8267 = vsub.f32 %v8165, %v8249
        %v8268 = vsub.f32 %v8166, %v8249
        %v8269 = vsub.f32 %v8167, %v8249
        %v8270 = vsub.f32 %v8168, %v8249
        %v8271 = vsub.f32 %v8169, %v8249
        %v8272 = vsub.f32 %v8170, %v8249
        %v8273 = vsub.f32 %v8171, %v8249
        %v8274 = vsub.f32 %v8172, %v8249
        %v8275 = vsub.f32 %v8173, %v8249
        %v8276 = vsub.f32 %v8174, %v8249
        %v8277 = vsub.f32 %v8175, %v8249
        %v8278 = vsub.f32 %v8176, %v8249
        %v8279 = vsub.f32 %v8177, %v8249
        %v8280 = vsub.f32 %v8178, %v8249
        %v8281 = vsub.f32 %v8179, %v8249
        %v8282 = vmul.f32 %v8250, %v8250
        %v8283 = vmul.f32 %v8251, %v8251
        %v8284 = vmul.f32 %v8252, %v8252
        %v8285 = vmul.f32 %v8253, %v8253
        %v8286 = vmul.f32 %v8254, %v8254
        %v8287 = vmul.f32 %v8255, %v8255
        %v8288 = vmul.f32 %v8256, %v8256
        %v8289 = vmul.f32 %v8257, %v8257
        %v8290 = vmul.f32 %v8258, %v8258
        %v8291 = vmul.f32 %v8259, %v8259
        %v8292 = vmul.f32 %v8260, %v8260
        %v8293 = vmul.f32 %v8261, %v8261
        %v8294 = vmul.f32 %v8262, %v8262
        %v8295 = vmul.f32 %v8263, %v8263
        %v8296 = vmul.f32 %v8264, %v8264
        %v8297 = vmul.f32 %v8265, %v8265
        %v8298 = vmul.f32 %v8266, %v8266
        %v8299 = vmul.f32 %v8267, %v8267
        %v8300 = vmul.f32 %v8268, %v8268
        %v8301 = vmul.f32 %v8269, %v8269
        %v8302 = vmul.f32 %v8270, %v8270
        %v8303 = vmul.f32 %v8271, %v8271
        %v8304 = vmul.f32 %v8272, %v8272
        %v8305 = vmul.f32 %v8273, %v8273
        %v8306 = vmul.f32 %v8274, %v8274
        %v8307 = vmul.f32 %v8275, %v8275
        %v8308 = vmul.f32 %v8276, %v8276
        %v8309 = vmul.f32 %v8277, %v8277
        %v8310 = vmul.f32 %v8278, %v8278
        %v8311 = vmul.f32 %v8279, %v8279
        %v8312 = vmul.f32 %v8280, %v8280
        %v8313 = vmul.f32 %v8281, %v8281
        %v8314 = vsel %vm787, %v8282, 0.0
        %v8315 = vsel %vm787, %v8283, 0.0
        %v8316 = vadd.f32 %v8314, %v8315
        %v8317 = vsel %vm787, %v8284, 0.0
        %v8318 = vadd.f32 %v8316, %v8317
        %v8319 = vsel %vm787, %v8285, 0.0
        %v8320 = vadd.f32 %v8318, %v8319
        %v8321 = vsel %vm787, %v8286, 0.0
        %v8322 = vadd.f32 %v8320, %v8321
        %v8323 = vsel %vm787, %v8287, 0.0
        %v8324 = vadd.f32 %v8322, %v8323
        %v8325 = vsel %vm787, %v8288, 0.0
        %v8326 = vadd.f32 %v8324, %v8325
        %v8327 = vsel %vm787, %v8289, 0.0
        %v8328 = vadd.f32 %v8326, %v8327
        %v8329 = vsel %vm787, %v8290, 0.0
        %v8330 = vadd.f32 %v8328, %v8329
        %v8331 = vsel %vm787, %v8291, 0.0
        %v8332 = vadd.f32 %v8330, %v8331
        %v8333 = vsel %vm787, %v8292, 0.0
        %v8334 = vadd.f32 %v8332, %v8333
        %v8335 = vsel %vm787, %v8293, 0.0
        %v8336 = vadd.f32 %v8334, %v8335
        %v8337 = vsel %vm787, %v8294, 0.0
        %v8338 = vadd.f32 %v8336, %v8337
        %v8339 = vsel %vm787, %v8295, 0.0
        %v8340 = vadd.f32 %v8338, %v8339
        %v8341 = vsel %vm787, %v8296, 0.0
        %v8342 = vadd.f32 %v8340, %v8341
        %v8343 = vsel %vm787, %v8297, 0.0
        %v8344 = vadd.f32 %v8342, %v8343
        %v8345 = vsel %vm787, %v8298, 0.0
        %v8346 = vadd.f32 %v8344, %v8345
        %v8347 = vsel %vm787, %v8299, 0.0
        %v8348 = vadd.f32 %v8346, %v8347
        %v8349 = vsel %vm787, %v8300, 0.0
        %v8350 = vadd.f32 %v8348, %v8349
        %v8351 = vsel %vm787, %v8301, 0.0
        %v8352 = vadd.f32 %v8350, %v8351
        %v8353 = vsel %vm787, %v8302, 0.0
        %v8354 = vadd.f32 %v8352, %v8353
        %v8355 = vsel %vm787, %v8303, 0.0
        %v8356 = vadd.f32 %v8354, %v8355
        %v8357 = vsel %vm787, %v8304, 0.0
        %v8358 = vadd.f32 %v8356, %v8357
        %v8359 = vsel %vm787, %v8305, 0.0
        %v8360 = vadd.f32 %v8358, %v8359
        %v8361 = vsel %vm787, %v8306, 0.0
        %v8362 = vadd.f32 %v8360, %v8361
        %v8363 = vsel %vm787, %v8307, 0.0
        %v8364 = vadd.f32 %v8362, %v8363
        %v8365 = vsel %vm787, %v8308, 0.0
        %v8366 = vadd.f32 %v8364, %v8365
        %v8367 = vsel %vm787, %v8309, 0.0
        %v8368 = vadd.f32 %v8366, %v8367
        %v8369 = vsel %vm787, %v8310, 0.0
        %v8370 = vadd.f32 %v8368, %v8369
        %v8371 = vsel %vm787, %v8311, 0.0
        %v8372 = vadd.f32 %v8370, %v8371
        %v8373 = vsel %vm787, %v8312, 0.0
        %v8374 = vadd.f32 %v8372, %v8373
        %v8375 = vsel %vm787, %v8313, 0.0
        %v8376 = vadd.f32 %v8374, %v8375
        %v8377 = vrot.slane %v8376, 4
        %v8378 = vadd.f32 %v8376, %v8377
        %v8379 = vrot.slane %v8378, 2
        %v8380 = vadd.f32 %v8378, %v8379
        %v8381 = vrot.slane %v8380, 1
        %v8382 = vadd.f32 %v8380, %v8381
        %v8383 = vmul.f32 %v8382, %v5878
        %v8384 = vadd.f32 %v8383, 1e-05
        %v8385 = vrsqrt.pop %v8384
        %v8386 = vmul.f32 %v8250, %v8385
        %v8387 = vmul.f32 %v8251, %v8385
        %v8388 = vmul.f32 %v8252, %v8385
        %v8389 = vmul.f32 %v8253, %v8385
        %v8390 = vmul.f32 %v8254, %v8385
        %v8391 = vmul.f32 %v8255, %v8385
        %v8392 = vmul.f32 %v8256, %v8385
        %v8393 = vmul.f32 %v8257, %v8385
        %v8394 = vmul.f32 %v8258, %v8385
        %v8395 = vmul.f32 %v8259, %v8385
        %v8396 = vmul.f32 %v8260, %v8385
        %v8397 = vmul.f32 %v8261, %v8385
        %v8398 = vmul.f32 %v8262, %v8385
        %v8399 = vmul.f32 %v8263, %v8385
        %v8400 = vmul.f32 %v8264, %v8385
        %v8401 = vmul.f32 %v8265, %v8385
        %v8402 = vmul.f32 %v8266, %v8385
        %v8403 = vmul.f32 %v8267, %v8385
        %v8404 = vmul.f32 %v8268, %v8385
        %v8405 = vmul.f32 %v8269, %v8385
        %v8406 = vmul.f32 %v8270, %v8385
        %v8407 = vmul.f32 %v8271, %v8385
        %v8408 = vmul.f32 %v8272, %v8385
        %v8409 = vmul.f32 %v8273, %v8385
        %v8410 = vmul.f32 %v8274, %v8385
        %v8411 = vmul.f32 %v8275, %v8385
        %v8412 = vmul.f32 %v8276, %v8385
        %v8413 = vmul.f32 %v8277, %v8385
        %v8414 = vmul.f32 %v8278, %v8385
        %v8415 = vmul.f32 %v8279, %v8385
        %v8416 = vmul.f32 %v8280, %v8385
        %v8417 = vmul.f32 %v8281, %v8385
        %v8418 = vadd.f32 %v8010, 1.0
        %v8419 = vlaneseq
        %v8420 = vshrl.u32 %v8419, 7
        %v8421 = vsub.s32 0, %v8420
        %v8422 = vrot.slane %v8418, %v8421
        %v8423 = vmul.f32 %v8386, %v8422
        %v8424 = vmul.f32 %v8387, %v8422
        %v8425 = vmul.f32 %v8388, %v8422
        %v8426 = vmul.f32 %v8389, %v8422
        %v8427 = vmul.f32 %v8390, %v8422
        %v8428 = vmul.f32 %v8391, %v8422
        %v8429 = vmul.f32 %v8392, %v8422
        %v8430 = vmul.f32 %v8393, %v8422
        %v8431 = vmul.f32 %v8394, %v8422
        %v8432 = vmul.f32 %v8395, %v8422
        %v8433 = vmul.f32 %v8396, %v8422
        %v8434 = vmul.f32 %v8397, %v8422
        %v8435 = vmul.f32 %v8398, %v8422
        %v8436 = vmul.f32 %v8399, %v8422
        %v8437 = vmul.f32 %v8400, %v8422
        %v8438 = vmul.f32 %v8401, %v8422
        %v8439 = vmul.f32 %v8402, %v8422
        %v8440 = vmul.f32 %v8403, %v8422
        %v8441 = vmul.f32 %v8404, %v8422
        %v8442 = vmul.f32 %v8405, %v8422
        %v8443 = vmul.f32 %v8406, %v8422
        %v8444 = vmul.f32 %v8407, %v8422
        %v8445 = vmul.f32 %v8408, %v8422
        %v8446 = vmul.f32 %v8409, %v8422
        %v8447 = vmul.f32 %v8410, %v8422
        %v8448 = vmul.f32 %v8411, %v8422
        %v8449 = vmul.f32 %v8412, %v8422
        %v8450 = vmul.f32 %v8413, %v8422
        %v8451 = vmul.f32 %v8414, %v8422
        %v8452 = vmul.f32 %v8415, %v8422
        %v8453 = vmul.f32 %v8416, %v8422
        %v8454 = vmul.f32 %v8417, %v8422
        %v8455 = vlaneseq
        %v8456 = vshrl.u32 %v8455, 7
        %v8457 = vsub.s32 0, %v8456
        %v8458 = vrot.slane %v8010, %v8457
        %8460 = vrot.lane.b32.xlu0 %v8458, 96
        %v8461 = vpop.permute.xlu0 %8460
        %v8463 = vadd.f32 %v8423, %v8461
        %v8464 = vadd.f32 %v8424, %v8461
        %v8465 = vadd.f32 %v8425, %v8461
        %v8466 = vadd.f32 %v8426, %v8461
        %v8467 = vadd.f32 %v8427, %v8461
        %v8468 = vadd.f32 %v8428, %v8461
        %v8469 = vadd.f32 %v8429, %v8461
        %v8470 = vadd.f32 %v8430, %v8461
        %v8471 = vadd.f32 %v8431, %v8461
        %v8472 = vadd.f32 %v8432, %v8461
        %v8473 = vadd.f32 %v8433, %v8461
        %v8474 = vadd.f32 %v8434, %v8461
        %v8475 = vadd.f32 %v8435, %v8461
        %v8476 = vadd.f32 %v8436, %v8461
        %v8477 = vadd.f32 %v8437, %v8461
        %v8478 = vadd.f32 %v8438, %v8461
        %v8479 = vadd.f32 %v8439, %v8461
        %v8480 = vadd.f32 %v8440, %v8461
        %v8481 = vadd.f32 %v8441, %v8461
        %v8482 = vadd.f32 %v8442, %v8461
        %v8483 = vadd.f32 %v8443, %v8461
        %v8484 = vadd.f32 %v8444, %v8461
        %v8485 = vadd.f32 %v8445, %v8461
        %v8486 = vadd.f32 %v8446, %v8461
        %v8487 = vadd.f32 %v8447, %v8461
        %v8488 = vadd.f32 %v8448, %v8461
        %v8489 = vadd.f32 %v8449, %v8461
        %v8490 = vadd.f32 %v8450, %v8461
        %v8491 = vadd.f32 %v8451, %v8461
        %v8492 = vadd.f32 %v8452, %v8461
        %v8493 = vadd.f32 %v8453, %v8461
        %v8494 = vadd.f32 %v8454, %v8461
        %8495 = vst.msk [vmem:[%s731] sm:$0xff] %vm787, %v8463
        %8496 = vst.msk [vmem:[%s731 + $0x8] sm:$0xff] %vm787, %v8464
        %8497 = vst.msk [vmem:[%s731 + $0x10] sm:$0xff] %vm787, %v8465
        %8498 = vst.msk [vmem:[%s731 + $0x18] sm:$0xff] %vm787, %v8466
        %8499 = vst.msk [vmem:[%s731 + $0x20] sm:$0xff] %vm787, %v8467
        %8500 = vst.msk [vmem:[%s731 + $0x28] sm:$0xff] %vm787, %v8468
        %8501 = vst.msk [vmem:[%s731 + $0x30] sm:$0xff] %vm787, %v8469
        %8502 = vst.msk [vmem:[%s731 + $0x38] sm:$0xff] %vm787, %v8470
        %8503 = vst.msk [vmem:[%s731 + $0x40] sm:$0xff] %vm787, %v8471
        %8504 = vst.msk [vmem:[%s731 + $0x48] sm:$0xff] %vm787, %v8472
        %8505 = vst.msk [vmem:[%s731 + $0x50] sm:$0xff] %vm787, %v8473
        %8506 = vst.msk [vmem:[%s731 + $0x58] sm:$0xff] %vm787, %v8474
        %8507 = vst.msk [vmem:[%s731 + $0x60] sm:$0xff] %vm787, %v8475
        %8508 = vst.msk [vmem:[%s731 + $0x68] sm:$0xff] %vm787, %v8476
        %8509 = vst.msk [vmem:[%s731 + $0x70] sm:$0xff] %vm787, %v8477
        %8510 = vst.msk [vmem:[%s731 + $0x78] sm:$0xff] %vm787, %v8478
        %8511 = vst.msk [vmem:[%s731 + $0x80] sm:$0xff] %vm787, %v8479
        %8512 = vst.msk [vmem:[%s731 + $0x88] sm:$0xff] %vm787, %v8480
        %8513 = vst.msk [vmem:[%s731 + $0x90] sm:$0xff] %vm787, %v8481
        %8514 = vst.msk [vmem:[%s731 + $0x98] sm:$0xff] %vm787, %v8482
        %8515 = vst.msk [vmem:[%s731 + $0xa0] sm:$0xff] %vm787, %v8483
        %8516 = vst.msk [vmem:[%s731 + $0xa8] sm:$0xff] %vm787, %v8484
        %8517 = vst.msk [vmem:[%s731 + $0xb0] sm:$0xff] %vm787, %v8485
        %8518 = vst.msk [vmem:[%s731 + $0xb8] sm:$0xff] %vm787, %v8486
        %8519 = vst.msk [vmem:[%s731 + $0xc0] sm:$0xff] %vm787, %v8487
        %8520 = vst.msk [vmem:[%s731 + $0xc8] sm:$0xff] %vm787, %v8488
        %8521 = vst.msk [vmem:[%s731 + $0xd0] sm:$0xff] %vm787, %v8489
        %8522 = vst.msk [vmem:[%s731 + $0xd8] sm:$0xff] %vm787, %v8490
        %8523 = vst.msk [vmem:[%s731 + $0xe0] sm:$0xff] %vm787, %v8491
        %8524 = vst.msk [vmem:[%s731 + $0xe8] sm:$0xff] %vm787, %v8492
        %8525 = vst.msk [vmem:[%s731 + $0xf0] sm:$0xff] %vm787, %v8493
        %8526 = vst.msk [vmem:[%s731 + $0xf8] sm:$0xff] %vm787, %v8494
        %s8527 = sand.u32 %s511, 1
        %s8528 = scalar_lea.sflag [#allocation5], %s8527
        %s8529 = sand.u32 %s511, 1
        %s8530 = smul.addr %s8529, 256
        %s8531 = scalar_lea.vmem [#allocation4], %s8530
        %p8532 = scmp.lt.s32.totalorder %s37, 1
        %s8533 = scalar_select %p8532, %s37, 1
        %s8534 = smul.addr %s8533, 8
        %s8535 = scalar_lea.vmem %s22, %s8534
        // Predicated region
        $region105: #{next_stage_g_styled_forward.1} parent=103 // pred_check
          %p8536 = pneg %p521
        $region106: #{next_stage_g_styled_forward.1} parent=103 // pred_check_branch
          %8538 = sbr.rel (%p8536) target = $region108
        $region107: #{next_stage_g_styled_forward.1} parent=103 // pred_region
          %s8540 = ssub.s32 4096, 4096
          %8541 = vsyncadd %s8528, %s8540
          %s8542 = smul.addr %s37, 32
          %s8543 = smul.addr %s8542, 128
          %s8544 = scalar_lea.hbm %s21, %s8543
          %s8545 = sshll.u32 %s8531, 4
          %s8546 = int_to_ptr.vmem [resolvable:$true] %s8545
          %8551 = dma.vmem_to_hbm [thread:$0]  %s8546, 4096, %s8544, %s8528, 128, 128, 8
        $region108: #{next_stage_g_styled_forward.1} parent=103 // pred_fallthru
          _
        // Predicated region
        $region109: #{next_stage_g_styled_forward.1} parent=103 // pred_check
          %p8552 = pneg %p547
        $region110: #{next_stage_g_styled_forward.1} parent=103 // pred_check_branch
          %8554 = sbr.rel (%p8552) target = $region112
        $region111: #{next_stage_g_styled_forward.1} parent=103 // pred_region
          _
        $region112: #{next_stage_g_styled_forward.1} parent=103 // pred_fallthru
          _
      $region104: #{next_stage_g_styled_forward.1} parent=5 // pred_fallthru
        _
      %p8555 = scmp.le.s32.totalorder 2, %s32
      // Predicated region
      $region113: #{next_stage_g_styled_forward.1} parent=5 // pred_check
        %p8556 = pneg %p8555
      $region114: #{next_stage_g_styled_forward.1} parent=5 // pred_check_branch
        %8558 = sbr.rel (%p8556) target = $region116
      $region115: #{next_stage_g_styled_forward.1} parent=5 // pred_region
        %s8559 = ssub.s32 %s32, 2
        // Predicated region
        $region117: #{next_stage_g_styled_forward.1} parent=115 // pred_check
          %p8560 = pneg %p527
        $region118: #{next_stage_g_styled_forward.1} parent=115 // pred_check_branch
          %8562 = sbr.rel (%p8560) target = $region120
        $region119: #{next_stage_g_styled_forward.1} parent=115 // pred_region
          %s8563 = sand.u32 %s512, 1
          %s8564 = scalar_lea.sflag [#allocation5], %s8563
          %s8565 = sand.u32 %s512, 1
          %s8566 = smul.addr %s8565, 256
          %s8567 = scalar_lea.vmem [#allocation4], %s8566
          %8568 = dma.done %s8564, 4096
        $region120: #{next_stage_g_styled_forward.1} parent=115 // pred_fallthru
          _
        // Predicated region
        $region121: #{next_stage_g_styled_forward.1} parent=115 // pred_check
          %p8569 = pneg %p553
        $region122: #{next_stage_g_styled_forward.1} parent=115 // pred_check_branch
          %8571 = sbr.rel (%p8569) target = $region124
        $region123: #{next_stage_g_styled_forward.1} parent=115 // pred_region
          %p8572 = scmp.lt.s32.totalorder %s38, 1
          %s8573 = scalar_select %p8572, %s38, 1
          %s8574 = smul.addr %s8573, 8
          %s8575 = scalar_lea.vmem %s22, %s8574
        $region124: #{next_stage_g_styled_forward.1} parent=115 // pred_fallthru
          _
      $region116: #{next_stage_g_styled_forward.1} parent=5 // pred_fallthru
        _
    $region6: #{next_stage_g_styled_forward.1} parent=1 // loop_footer
      %s36 = sadd.s32 1, %s32
    $region7: #{next_stage_g_styled_forward.1} parent=1 // loop_footer_branch
      %31 = sbr.rel target = $region3
    $region8: #{next_stage_g_styled_forward.1} parent=1 // loop_exit
      _
    %8576 = vsyncpa [#allocation5], 1
    %s8577 = scalar_lea.sflag [#allocation5], 1
    %8578 = vsyncpa %s8577, 1

</llo_original>
